<compile_context>
chip_gen: v5e
topology: v5e:2x2
jax: 0.10.0
libtpu: 0.0.40
codegen_flags: <defaults>
</compile_context>

<pallas_src>
import numpy as np
import jax
import jax.numpy as jnp
from jax.experimental import pallas as pl
from jax.experimental.pallas import tpu as pltpu

CAPTCHA_LEN = 4
ALPHABET_LEN = 36
LABEL_LEN = CAPTCHA_LEN * ALPHABET_LEN          # 144
IMG_H, IMG_W = 60, 160
FC_HIDDEN = 512
FC_OUT_PAD = 256                                # 144 padded to 2*128 lanes

# (Cin, Hin, Win, Cout) for the three conv stages.
_LAYERS = ((1, 60, 160, 4), (4, 29, 79, 8), (8, 13, 38, 16))


def _geom(layer):
    Cin, Hin, Win, Cout = layer
    Hc, Wc = Hin - 2, Win - 2
    Hp, Wp = Hc // 2, Wc // 2
    return dict(Cin=Cin, Hin=Hin, Win=Win, Cout=Cout, Hc=Hc, Wc=Wc, Hp=Hp, Wp=Wp,
                Kin=Cin * Hin, Nc=Cout * Hc, Nout=Cout * Hp)


_G = [_geom(l) for l in _LAYERS]        # L1: 158x232, L2: 77x216, L3: 36x176 conv maps


# --------------------------------------------------------------------------------------
# Host-side constants: stride-2 pooling selector matrices and banded-weight scatter idx.
# --------------------------------------------------------------------------------------
def _sel_w_np(g):
    # picks conv column w = 2*wp (stride-2 along the spatial-W/sublane axis)
    s = np.zeros((g["Wp"], g["Wc"] - 1), np.float32)
    s[np.arange(g["Wp"]), 2 * np.arange(g["Wp"])] = 1.0
    return s


def _sel_h_np(g):
    # picks conv lane n = co*Hc + 2*hp (stride-2 along H inside each channel block)
    s = np.zeros((g["Nc"] - 1, g["Nout"]), np.float32)
    for co in range(g["Cout"]):
        s[co * g["Hc"] + 2 * np.arange(g["Hp"]), co * g["Hp"] + np.arange(g["Hp"])] = 1.0
    return s


_SELW = [jnp.asarray(_sel_w_np(g)) for g in _G]
_SELH = [jnp.asarray(_sel_h_np(g)) for g in _G]

_BW_IDX = []
for g in _G:
    co_i, ci_i, kh_i, h_i = np.meshgrid(np.arange(g["Cout"]), np.arange(g["Cin"]),
                                        np.arange(3), np.arange(g["Hc"]), indexing="ij")
    _BW_IDX.append(((ci_i * g["Hin"] + h_i + kh_i).reshape(-1),
                    (co_i * g["Hc"] + h_i).reshape(-1)))


def _band_weights(w, li):
    """(Cout, Cin, 3, 3) conv weight -> (3, Cin*Hin, Cout*Hc) banded matrices (one per kw).

    bw[kw][ci*Hin + h + kh, co*Hc + h] = w[co, ci, kh, kw], so the shifted input slab
    A[kw : kw+Wc, :] @ bw[kw] produces the conv contribution of tap column kw for all
    (co, h) output positions at once (the kh shift lives inside the banded matrix)."""
    g = _G[li]
    rows, cols = _BW_IDX[li]
    mats = []
    for kw in range(3):
        vals = jnp.broadcast_to(w[:, :, :, kw][..., None],
                                (g["Cout"], g["Cin"], 3, g["Hc"])).reshape(-1)
        mats.append(jnp.zeros((g["Kin"], g["Nc"]), jnp.float32).at[rows, cols].set(vals))
    return jnp.stack(mats).astype(jnp.bfloat16)


# --------------------------------------------------------------------------------------
# Fused kernel: conv1+pool+relu -> conv2+pool+relu -> conv3+pool+relu -> fc1+relu -> fc2
# One grid step == one image.  Activation layout: (W, C*H), channels*height on lanes.
# --------------------------------------------------------------------------------------
def _fused_kernel(x_ref,
                  bw1_ref, br1_ref, sw1_ref, sh1_ref,
                  bw2_ref, br2_ref, sw2_ref, sh2_ref,
                  bw3_ref, br3_ref, sw3_ref, sh3_ref,
                  g_ref, fb1_ref, fw2_ref, fb2_ref,
                  o_ref,
                  c1_s, c2_s, c3_s):
    f32 = jnp.float32

    def conv_pool(slab, bw_ref, br_ref, sw_ref, sh_ref, conv_s, g):
        Wc, Nc = g["Wc"], g["Nc"]
        # Conv2d(k=3, valid): 3 MXU matmuls (bf16 in, f32 accumulate) into VMEM scratch.
        conv_s[...] = jnp.dot(slab(0), bw_ref[0], preferred_element_type=f32) + br_ref[...]
        conv_s[...] += jnp.dot(slab(1), bw_ref[1], preferred_element_type=f32)
        conv_s[...] += jnp.dot(slab(2), bw_ref[2], preferred_element_type=f32)
        # MaxPool2d(2) (floor mode): 4-way max of 2D-offset windows of the conv scratch,
        # then 0/1 selector matmuls pick the stride-2 rows (w) / lanes (co*Hc + h).
        m4 = jnp.maximum(
            jnp.maximum(conv_s[0:Wc - 1, 0:Nc - 1], conv_s[1:Wc, 0:Nc - 1]),
            jnp.maximum(conv_s[0:Wc - 1, 1:Nc], conv_s[1:Wc, 1:Nc]))
        p = jnp.dot(sw_ref[...], m4, preferred_element_type=f32)      # (Wp, Nc-1)
        p = jnp.dot(p, sh_ref[...], preferred_element_type=f32)       # (Wp, Cout*Hp)
        return jnp.maximum(p, 0.0)                                    # ReLU

    g1, g2, g3 = _G
    a1 = conv_pool(lambda kw: x_ref[0, kw:kw + g1["Wc"], :].astype(jnp.bfloat16),
                   bw1_ref, br1_ref, sw1_ref, sh1_ref, c1_s, g1)      # (79, 116)
    a2 = conv_pool(lambda kw: a1[kw:kw + g2["Wc"], :].astype(jnp.bfloat16),
                   bw2_ref, br2_ref, sw2_ref, sh2_ref, c2_s, g2)      # (38, 104)
    a3 = conv_pool(lambda kw: a2[kw:kw + g3["Wc"], :].astype(jnp.bfloat16),
                   bw3_ref, br3_ref, sw3_ref, sh3_ref, c3_s, g3)      # (18, 80)

    # fc1 with the PyTorch flatten (c*90 + h*18 + w) fused in: a3[w, c*5+h] pairs with
    # fw1 rows regrouped host-side as g_ref[w, r, :] = fw1[r*18 + w, :].
    y = fb1_ref[...]                                                  # (1, 512) f32
    for w in range(g3["Wp"]):                                         # 18 taps, unrolled
        y = y + jnp.dot(a3[w:w + 1, :].astype(jnp.bfloat16), g_ref[w],
                        preferred_element_type=f32)
    y = jnp.maximum(y, 0.0)
    out = jnp.dot(y.astype(jnp.bfloat16), fw2_ref[...],
                  preferred_element_type=f32) + fb2_ref[...]          # (1, 256), lane-dense
    o_ref[0] = out


# --------------------------------------------------------------------------------------
# Wrapper: builds banded conv weights / selectors, runs the single fused pallas_call.
# --------------------------------------------------------------------------------------
def _cnn_forward_impl(x, params):
    B = x.shape[0]
    xt = jnp.transpose(x.astype(jnp.float32), (0, 2, 1))              # (B, W=160, H=60)

    bw = [_band_weights(params[f"w{i + 1}"], i) for i in range(3)]
    br = [jnp.repeat(params[f"b{i + 1}"], _G[i]["Hc"])[None, :] for i in range(3)]

    gmat = params["fw1"].reshape(_G[2]["Nout"], _G[2]["Wp"], FC_HIDDEN)
    gmat = gmat.transpose(1, 0, 2).astype(jnp.bfloat16)               # (18, 80, 512)
    fb1 = params["fb1"][None, :]
    fw2p = jnp.zeros((FC_HIDDEN, FC_OUT_PAD), jnp.bfloat16).at[:, :LABEL_LEN].set(
        params["fw2"].astype(jnp.bfloat16))
    fb2p = jnp.zeros((1, FC_OUT_PAD), jnp.float32).at[0, :LABEL_LEN].set(params["fb2"])

    def full(arr):
        shape = tuple(arr.shape)
        return pl.BlockSpec(shape, lambda b, n=len(shape): (0,) * n)

    operands = [xt,
                bw[0], br[0], _SELW[0], _SELH[0],
                bw[1], br[1], _SELW[1], _SELH[1],
                bw[2], br[2], _SELW[2], _SELH[2],
                gmat, fb1, fw2p, fb2p]
    in_specs = ([pl.BlockSpec((1, IMG_W, IMG_H), lambda b: (b, 0, 0))]
                + [full(a) for a in operands[1:]])

    out = pl.pallas_call(
        _fused_kernel,
        out_shape=jax.ShapeDtypeStruct((B, 1, FC_OUT_PAD), jnp.float32),
        grid=(B,),
        in_specs=in_specs,
        out_specs=pl.BlockSpec((1, 1, FC_OUT_PAD), lambda b: (b, 0, 0)),
        scratch_shapes=[pltpu.VMEM((g["Wc"], g["Nc"]), jnp.float32) for g in _G],
        compiler_params=pltpu.CompilerParams(dimension_semantics=("parallel",)),
    )(*operands)

    return out[:, 0, :LABEL_LEN].reshape(B, CAPTCHA_LEN, ALPHABET_LEN)


cnn_forward = jax.jit(_cnn_forward_impl)


# --------------------------------------------------------------------------------------
# Parameters (deterministic, PyTorch-like uniform init).  Dense weights are (in, out).
# --------------------------------------------------------------------------------------
def init_params(key):
    ks = jax.random.split(key, 10)

    def u(k, shape, fan_in):
        bound = 1.0 / np.sqrt(fan_in)
        return jax.random.uniform(k, shape, jnp.float32, -bound, bound)

    return dict(
        w1=u(ks[0], (4, 1, 3, 3), 1 * 9),    b1=u(ks[1], (4,), 1 * 9),
        w2=u(ks[2], (8, 4, 3, 3), 4 * 9),    b2=u(ks[3], (8,), 4 * 9),
        w3=u(ks[4], (16, 8, 3, 3), 8 * 9),   b3=u(ks[5], (16,), 8 * 9),
        fw1=u(ks[6], (1440, 512), 1440),     fb1=u(ks[7], (512,), 1440),
        fw2=u(ks[8], (512, LABEL_LEN), 512), fb2=u(ks[9], (LABEL_LEN,), 512),
    )


# --------------------------------------------------------------------------------------
# Pure-JAX reference (for correctness check)
# --------------------------------------------------------------------------------------
def ref_forward(x, p):
    xb = x.astype(jnp.float32)[:, None, :, :]

    def layer(z, w, b):
        y = jax.lax.conv_general_dilated(
            z, w, window_strides=(1, 1), padding="VALID",
            dimension_numbers=("NCHW", "OIHW", "NCHW"),
            precision=jax.lax.Precision.HIGHEST,
        ) + b[None, :, None, None]
        y = jax.lax.reduce_window(y, -jnp.inf, jax.lax.max,
                                  (1, 1, 2, 2), (1, 1, 2, 2), "VALID")
        return jnp.maximum(y, 0.0)

    y = layer(xb, p["w1"], p["b1"])
    y = layer(y, p["w2"], p["b2"])
    y = layer(y, p["w3"], p["b3"])
    y = y.reshape(x.shape[0], -1)
    h = jnp.maximum(
        jnp.dot(y, p["fw1"], precision=jax.lax.Precision.HIGHEST) + p["fb1"], 0.0)
    o = jnp.dot(h, p["fw2"], precision=jax.lax.Precision.HIGHEST) + p["fb2"]
    return o.reshape(x.shape[0], CAPTCHA_LEN, ALPHABET_LEN)


if __name__ == "__main__":
    key = jax.random.PRNGKey(0)
    pkey, xkey = jax.random.split(key)
    params = init_params(pkey)
    x = jax.random.normal(xkey, (2, IMG_H, IMG_W), dtype=jnp.float32)

    out = jax.block_until_ready(cnn_forward(x, params))
    assert out.shape == (2, CAPTCHA_LEN, ALPHABET_LEN), out.shape

    ref = jax.block_until_ready(ref_forward(x, params))
    if not np.allclose(np.asarray(out), np.asarray(ref), atol=3e-2, rtol=3e-2):
        err = np.max(np.abs(np.asarray(out) - np.asarray(ref)))
        raise AssertionError(f"Pallas CNN output mismatches reference (max abs err {err:.4g})")

    print("KERNEL_OK")
</pallas_src>

<mosaic_0001>
module attributes {stable_mosaic.version = 11 : i64} {
  func.func @_fused_kernel(%arg0: i32, %arg1: memref<1x160x60xf32, #tpu.memory_space<vmem>>, %arg2: memref<3x60x232xbf16, #tpu.memory_space<vmem>>, %arg3: memref<1x232xf32, #tpu.memory_space<vmem>>, %arg4: memref<79x157xf32, #tpu.memory_space<vmem>>, %arg5: memref<231x116xf32, #tpu.memory_space<vmem>>, %arg6: memref<3x116x216xbf16, #tpu.memory_space<vmem>>, %arg7: memref<1x216xf32, #tpu.memory_space<vmem>>, %arg8: memref<38x76xf32, #tpu.memory_space<vmem>>, %arg9: memref<215x104xf32, #tpu.memory_space<vmem>>, %arg10: memref<3x104x176xbf16, #tpu.memory_space<vmem>>, %arg11: memref<1x176xf32, #tpu.memory_space<vmem>>, %arg12: memref<18x35xf32, #tpu.memory_space<vmem>>, %arg13: memref<175x80xf32, #tpu.memory_space<vmem>>, %arg14: memref<18x80x512xbf16, #tpu.memory_space<vmem>>, %arg15: memref<1x512xf32, #tpu.memory_space<vmem>>, %arg16: memref<512x256xbf16, #tpu.memory_space<vmem>>, %arg17: memref<1x256xf32, #tpu.memory_space<vmem>>, %arg18: memref<1x1x256xf32, #tpu.memory_space<vmem>>, %arg19: memref<158x232xf32, #tpu.memory_space<vmem>>, %arg20: memref<77x216xf32, #tpu.memory_space<vmem>>, %arg21: memref<36x176xf32, #tpu.memory_space<vmem>>) attributes {dimension_semantics = [#tpu.dimension_semantics<parallel>], iteration_bounds = array<i64: 2>, scalar_prefetch = 0 : i64, scratch_operands = 3 : i64, tpu.core_type = #tpu.core_type<tc>, window_params = [{transform_indices = @transform_0, window_bounds = array<i64: 1, 160, 60>}, {pipeline_mode = #tpu.pipeline_mode<synchronous>, transform_indices = @transform_1, window_bounds = array<i64: 3, 60, 232>}, {pipeline_mode = #tpu.pipeline_mode<synchronous>, transform_indices = @transform_2, window_bounds = array<i64: 1, 232>}, {pipeline_mode = #tpu.pipeline_mode<synchronous>, transform_indices = @transform_3, window_bounds = array<i64: 79, 157>}, {pipeline_mode = #tpu.pipeline_mode<synchronous>, transform_indices = @transform_4, window_bounds = array<i64: 231, 116>}, {pipeline_mode = #tpu.pipeline_mode<synchronous>, transform_indices = @transform_5, window_bounds = array<i64: 3, 116, 216>}, {pipeline_mode = #tpu.pipeline_mode<synchronous>, transform_indices = @transform_6, window_bounds = array<i64: 1, 216>}, {pipeline_mode = #tpu.pipeline_mode<synchronous>, transform_indices = @transform_7, window_bounds = array<i64: 38, 76>}, {pipeline_mode = #tpu.pipeline_mode<synchronous>, transform_indices = @transform_8, window_bounds = array<i64: 215, 104>}, {pipeline_mode = #tpu.pipeline_mode<synchronous>, transform_indices = @transform_9, window_bounds = array<i64: 3, 104, 176>}, {pipeline_mode = #tpu.pipeline_mode<synchronous>, transform_indices = @transform_10, window_bounds = array<i64: 1, 176>}, {pipeline_mode = #tpu.pipeline_mode<synchronous>, transform_indices = @transform_11, window_bounds = array<i64: 18, 35>}, {pipeline_mode = #tpu.pipeline_mode<synchronous>, transform_indices = @transform_12, window_bounds = array<i64: 175, 80>}, {pipeline_mode = #tpu.pipeline_mode<synchronous>, transform_indices = @transform_13, window_bounds = array<i64: 18, 80, 512>}, {pipeline_mode = #tpu.pipeline_mode<synchronous>, transform_indices = @transform_14, window_bounds = array<i64: 1, 512>}, {pipeline_mode = #tpu.pipeline_mode<synchronous>, transform_indices = @transform_15, window_bounds = array<i64: 512, 256>}, {pipeline_mode = #tpu.pipeline_mode<synchronous>, transform_indices = @transform_16, window_bounds = array<i64: 1, 256>}, {transform_indices = @transform_17, window_bounds = array<i64: 1, 1, 256>}]} {
    %c0 = arith.constant 0 : index
    %c0_0 = arith.constant 0 : index
    %c0_1 = arith.constant 0 : index
    %0 = vector.load %arg1[%c0, %c0_0, %c0_1] : memref<1x160x60xf32, #tpu.memory_space<vmem>>, vector<1x158x60xf32>
    %1 = vector.shape_cast %0 : vector<1x158x60xf32> to vector<158x60xf32>
    %2 = arith.truncf %1 : vector<158x60xf32> to vector<158x60xbf16>
    %c0_2 = arith.constant 0 : index
    %c0_3 = arith.constant 0 : index
    %c0_4 = arith.constant 0 : index
    %3 = vector.load %arg2[%c0_2, %c0_3, %c0_4] : memref<3x60x232xbf16, #tpu.memory_space<vmem>>, vector<1x60x232xbf16>
    %4 = vector.shape_cast %3 : vector<1x60x232xbf16> to vector<60x232xbf16>
    %cst = arith.constant dense<0.000000e+00> : vector<158x232xf32>
    %5 = tpu.matmul %2, %4, %cst {dimension_numbers = #tpu.dot_dimension_numbers<[1], [0], [0], [1], [0, 0, 1, 1], [], []>} : vector<158x60xbf16>, vector<60x232xbf16>, vector<158x232xf32> -> vector<158x232xf32>
    %c0_5 = arith.constant 0 : index
    %c0_6 = arith.constant 0 : index
    %6 = vector.load %arg3[%c0_5, %c0_6] : memref<1x232xf32, #tpu.memory_space<vmem>>, vector<1x232xf32>
    %7 = vector.broadcast %6 : vector<1x232xf32> to vector<158x232xf32>
    %8 = arith.addf %5, %7 : vector<158x232xf32>
    %c0_7 = arith.constant 0 : index
    %c0_8 = arith.constant 0 : index
    %9 = vector.load %arg19[%c0_7, %c0_8] : memref<158x232xf32, #tpu.memory_space<vmem>>, vector<158x232xf32>
    tpu.vector_store %arg19[%c0_7, %c0_8], %8 {strides = array<i32>} : memref<158x232xf32, #tpu.memory_space<vmem>>, vector<158x232xf32>,
    %c0_9 = arith.constant 0 : index
    %c0_10 = arith.constant 0 : index
    %10 = vector.load %arg19[%c0_9, %c0_10] : memref<158x232xf32, #tpu.memory_space<vmem>>, vector<158x232xf32>
    %c0_11 = arith.constant 0 : index
    %c1 = arith.constant 1 : index
    %c0_12 = arith.constant 0 : index
    %11 = vector.load %arg1[%c0_11, %c1, %c0_12] : memref<1x160x60xf32, #tpu.memory_space<vmem>>, vector<1x158x60xf32>
    %12 = vector.shape_cast %11 : vector<1x158x60xf32> to vector<158x60xf32>
    %13 = arith.truncf %12 : vector<158x60xf32> to vector<158x60xbf16>
    %c1_13 = arith.constant 1 : index
    %c0_14 = arith.constant 0 : index
    %c0_15 = arith.constant 0 : index
    %14 = vector.load %arg2[%c1_13, %c0_14, %c0_15] : memref<3x60x232xbf16, #tpu.memory_space<vmem>>, vector<1x60x232xbf16>
    %15 = vector.shape_cast %14 : vector<1x60x232xbf16> to vector<60x232xbf16>
    %cst_16 = arith.constant dense<0.000000e+00> : vector<158x232xf32>
    %16 = tpu.matmul %13, %15, %cst_16 {dimension_numbers = #tpu.dot_dimension_numbers<[1], [0], [0], [1], [0, 0, 1, 1], [], []>} : vector<158x60xbf16>, vector<60x232xbf16>, vector<158x232xf32> -> vector<158x232xf32>
    %17 = arith.addf %10, %16 : vector<158x232xf32>
    %c0_17 = arith.constant 0 : index
    %c0_18 = arith.constant 0 : index
    %18 = vector.load %arg19[%c0_17, %c0_18] : memref<158x232xf32, #tpu.memory_space<vmem>>, vector<158x232xf32>
    tpu.vector_store %arg19[%c0_17, %c0_18], %17 {strides = array<i32>} : memref<158x232xf32, #tpu.memory_space<vmem>>, vector<158x232xf32>,
    %c0_19 = arith.constant 0 : index
    %c0_20 = arith.constant 0 : index
    %19 = vector.load %arg19[%c0_19, %c0_20] : memref<158x232xf32, #tpu.memory_space<vmem>>, vector<158x232xf32>
    %c0_21 = arith.constant 0 : index
    %c2 = arith.constant 2 : index
    %c0_22 = arith.constant 0 : index
    %20 = vector.load %arg1[%c0_21, %c2, %c0_22] : memref<1x160x60xf32, #tpu.memory_space<vmem>>, vector<1x158x60xf32>
    %21 = vector.shape_cast %20 : vector<1x158x60xf32> to vector<158x60xf32>
    %22 = arith.truncf %21 : vector<158x60xf32> to vector<158x60xbf16>
    %c2_23 = arith.constant 2 : index
    %c0_24 = arith.constant 0 : index
    %c0_25 = arith.constant 0 : index
    %23 = vector.load %arg2[%c2_23, %c0_24, %c0_25] : memref<3x60x232xbf16, #tpu.memory_space<vmem>>, vector<1x60x232xbf16>
    %24 = vector.shape_cast %23 : vector<1x60x232xbf16> to vector<60x232xbf16>
    %cst_26 = arith.constant dense<0.000000e+00> : vector<158x232xf32>
    %25 = tpu.matmul %22, %24, %cst_26 {dimension_numbers = #tpu.dot_dimension_numbers<[1], [0], [0], [1], [0, 0, 1, 1], [], []>} : vector<158x60xbf16>, vector<60x232xbf16>, vector<158x232xf32> -> vector<158x232xf32>
    %26 = arith.addf %19, %25 : vector<158x232xf32>
    %c0_27 = arith.constant 0 : index
    %c0_28 = arith.constant 0 : index
    %27 = vector.load %arg19[%c0_27, %c0_28] : memref<158x232xf32, #tpu.memory_space<vmem>>, vector<158x232xf32>
    tpu.vector_store %arg19[%c0_27, %c0_28], %26 {strides = array<i32>} : memref<158x232xf32, #tpu.memory_space<vmem>>, vector<158x232xf32>,
    %c0_29 = arith.constant 0 : index
    %c0_30 = arith.constant 0 : index
    %28 = vector.load %arg19[%c0_29, %c0_30] : memref<158x232xf32, #tpu.memory_space<vmem>>, vector<157x231xf32>
    %c1_31 = arith.constant 1 : index
    %c0_32 = arith.constant 0 : index
    %29 = vector.load %arg19[%c1_31, %c0_32] : memref<158x232xf32, #tpu.memory_space<vmem>>, vector<157x231xf32>
    %30 = arith.maximumf %28, %29 : vector<157x231xf32>
    %c0_33 = arith.constant 0 : index
    %c1_34 = arith.constant 1 : index
    %31 = vector.load %arg19[%c0_33, %c1_34] : memref<158x232xf32, #tpu.memory_space<vmem>>, vector<157x231xf32>
    %c1_35 = arith.constant 1 : index
    %c1_36 = arith.constant 1 : index
    %32 = vector.load %arg19[%c1_35, %c1_36] : memref<158x232xf32, #tpu.memory_space<vmem>>, vector<157x231xf32>
    %33 = arith.maximumf %31, %32 : vector<157x231xf32>
    %34 = arith.maximumf %30, %33 : vector<157x231xf32>
    %c0_37 = arith.constant 0 : index
    %c0_38 = arith.constant 0 : index
    %35 = vector.load %arg4[%c0_37, %c0_38] : memref<79x157xf32, #tpu.memory_space<vmem>>, vector<79x157xf32>
    %cst_39 = arith.constant dense<0.000000e+00> : vector<79x231xf32>
    %36 = tpu.matmul %35, %34, %cst_39 {dimension_numbers = #tpu.dot_dimension_numbers<[1], [0], [0], [1], [0, 0, 1, 1], [], []>} : vector<79x157xf32>, vector<157x231xf32>, vector<79x231xf32> -> vector<79x231xf32>
    %c0_40 = arith.constant 0 : index
    %c0_41 = arith.constant 0 : index
    %37 = vector.load %arg5[%c0_40, %c0_41] : memref<231x116xf32, #tpu.memory_space<vmem>>, vector<231x116xf32>
    %cst_42 = arith.constant dense<0.000000e+00> : vector<79x116xf32>
    %38 = tpu.matmul %36, %37, %cst_42 {dimension_numbers = #tpu.dot_dimension_numbers<[1], [0], [0], [1], [0, 0, 1, 1], [], []>} : vector<79x231xf32>, vector<231x116xf32>, vector<79x116xf32> -> vector<79x116xf32>
    %cst_43 = arith.constant 0.000000e+00 : f32
    %39 = vector.broadcast %cst_43 : f32 to vector<79x116xf32>
    %40 = arith.maximumf %38, %39 : vector<79x116xf32>
    %41 = vector.extract_strided_slice %40 {offsets = [0, 0], sizes = [77, 116], strides = [1, 1]} : vector<79x116xf32> to vector<77x116xf32>
    %42 = arith.truncf %41 : vector<77x116xf32> to vector<77x116xbf16>
    %c0_44 = arith.constant 0 : index
    %c0_45 = arith.constant 0 : index
    %c0_46 = arith.constant 0 : index
    %43 = vector.load %arg6[%c0_44, %c0_45, %c0_46] : memref<3x116x216xbf16, #tpu.memory_space<vmem>>, vector<1x116x216xbf16>
    %44 = vector.shape_cast %43 : vector<1x116x216xbf16> to vector<116x216xbf16>
    %cst_47 = arith.constant dense<0.000000e+00> : vector<77x216xf32>
    %45 = tpu.matmul %42, %44, %cst_47 {dimension_numbers = #tpu.dot_dimension_numbers<[1], [0], [0], [1], [0, 0, 1, 1], [], []>} : vector<77x116xbf16>, vector<116x216xbf16>, vector<77x216xf32> -> vector<77x216xf32>
    %c0_48 = arith.constant 0 : index
    %c0_49 = arith.constant 0 : index
    %46 = vector.load %arg7[%c0_48, %c0_49] : memref<1x216xf32, #tpu.memory_space<vmem>>, vector<1x216xf32>
    %47 = vector.broadcast %46 : vector<1x216xf32> to vector<77x216xf32>
    %48 = arith.addf %45, %47 : vector<77x216xf32>
    %c0_50 = arith.constant 0 : index
    %c0_51 = arith.constant 0 : index
    %49 = vector.load %arg20[%c0_50, %c0_51] : memref<77x216xf32, #tpu.memory_space<vmem>>, vector<77x216xf32>
    tpu.vector_store %arg20[%c0_50, %c0_51], %48 {strides = array<i32>} : memref<77x216xf32, #tpu.memory_space<vmem>>, vector<77x216xf32>,
    %c0_52 = arith.constant 0 : index
    %c0_53 = arith.constant 0 : index
    %50 = vector.load %arg20[%c0_52, %c0_53] : memref<77x216xf32, #tpu.memory_space<vmem>>, vector<77x216xf32>
    %51 = vector.extract_strided_slice %40 {offsets = [1, 0], sizes = [77, 116], strides = [1, 1]} : vector<79x116xf32> to vector<77x116xf32>
    %52 = arith.truncf %51 : vector<77x116xf32> to vector<77x116xbf16>
    %c1_54 = arith.constant 1 : index
    %c0_55 = arith.constant 0 : index
    %c0_56 = arith.constant 0 : index
    %53 = vector.load %arg6[%c1_54, %c0_55, %c0_56] : memref<3x116x216xbf16, #tpu.memory_space<vmem>>, vector<1x116x216xbf16>
    %54 = vector.shape_cast %53 : vector<1x116x216xbf16> to vector<116x216xbf16>
    %cst_57 = arith.constant dense<0.000000e+00> : vector<77x216xf32>
    %55 = tpu.matmul %52, %54, %cst_57 {dimension_numbers = #tpu.dot_dimension_numbers<[1], [0], [0], [1], [0, 0, 1, 1], [], []>} : vector<77x116xbf16>, vector<116x216xbf16>, vector<77x216xf32> -> vector<77x216xf32>
    %56 = arith.addf %50, %55 : vector<77x216xf32>
    %c0_58 = arith.constant 0 : index
    %c0_59 = arith.constant 0 : index
    %57 = vector.load %arg20[%c0_58, %c0_59] : memref<77x216xf32, #tpu.memory_space<vmem>>, vector<77x216xf32>
    tpu.vector_store %arg20[%c0_58, %c0_59], %56 {strides = array<i32>} : memref<77x216xf32, #tpu.memory_space<vmem>>, vector<77x216xf32>,
    %c0_60 = arith.constant 0 : index
    %c0_61 = arith.constant 0 : index
    %58 = vector.load %arg20[%c0_60, %c0_61] : memref<77x216xf32, #tpu.memory_space<vmem>>, vector<77x216xf32>
    %59 = vector.extract_strided_slice %40 {offsets = [2, 0], sizes = [77, 116], strides = [1, 1]} : vector<79x116xf32> to vector<77x116xf32>
    %60 = arith.truncf %59 : vector<77x116xf32> to vector<77x116xbf16>
    %c2_62 = arith.constant 2 : index
    %c0_63 = arith.constant 0 : index
    %c0_64 = arith.constant 0 : index
    %61 = vector.load %arg6[%c2_62, %c0_63, %c0_64] : memref<3x116x216xbf16, #tpu.memory_space<vmem>>, vector<1x116x216xbf16>
    %62 = vector.shape_cast %61 : vector<1x116x216xbf16> to vector<116x216xbf16>
    %cst_65 = arith.constant dense<0.000000e+00> : vector<77x216xf32>
    %63 = tpu.matmul %60, %62, %cst_65 {dimension_numbers = #tpu.dot_dimension_numbers<[1], [0], [0], [1], [0, 0, 1, 1], [], []>} : vector<77x116xbf16>, vector<116x216xbf16>, vector<77x216xf32> -> vector<77x216xf32>
    %64 = arith.addf %58, %63 : vector<77x216xf32>
    %c0_66 = arith.constant 0 : index
    %c0_67 = arith.constant 0 : index
    %65 = vector.load %arg20[%c0_66, %c0_67] : memref<77x216xf32, #tpu.memory_space<vmem>>, vector<77x216xf32>
    tpu.vector_store %arg20[%c0_66, %c0_67], %64 {strides = array<i32>} : memref<77x216xf32, #tpu.memory_space<vmem>>, vector<77x216xf32>,
    %c0_68 = arith.constant 0 : index
    %c0_69 = arith.constant 0 : index
    %66 = vector.load %arg20[%c0_68, %c0_69] : memref<77x216xf32, #tpu.memory_space<vmem>>, vector<76x215xf32>
    %c1_70 = arith.constant 1 : index
    %c0_71 = arith.constant 0 : index
    %67 = vector.load %arg20[%c1_70, %c0_71] : memref<77x216xf32, #tpu.memory_space<vmem>>, vector<76x215xf32>
    %68 = arith.maximumf %66, %67 : vector<76x215xf32>
    %c0_72 = arith.constant 0 : index
    %c1_73 = arith.constant 1 : index
    %69 = vector.load %arg20[%c0_72, %c1_73] : memref<77x216xf32, #tpu.memory_space<vmem>>, vector<76x215xf32>
    %c1_74 = arith.constant 1 : index
    %c1_75 = arith.constant 1 : index
    %70 = vector.load %arg20[%c1_74, %c1_75] : memref<77x216xf32, #tpu.memory_space<vmem>>, vector<76x215xf32>
    %71 = arith.maximumf %69, %70 : vector<76x215xf32>
    %72 = arith.maximumf %68, %71 : vector<76x215xf32>
    %c0_76 = arith.constant 0 : index
    %c0_77 = arith.constant 0 : index
    %73 = vector.load %arg8[%c0_76, %c0_77] : memref<38x76xf32, #tpu.memory_space<vmem>>, vector<38x76xf32>
    %cst_78 = arith.constant dense<0.000000e+00> : vector<38x215xf32>
    %74 = tpu.matmul %73, %72, %cst_78 {dimension_numbers = #tpu.dot_dimension_numbers<[1], [0], [0], [1], [0, 0, 1, 1], [], []>} : vector<38x76xf32>, vector<76x215xf32>, vector<38x215xf32> -> vector<38x215xf32>
    %c0_79 = arith.constant 0 : index
    %c0_80 = arith.constant 0 : index
    %75 = vector.load %arg9[%c0_79, %c0_80] : memref<215x104xf32, #tpu.memory_space<vmem>>, vector<215x104xf32>
    %cst_81 = arith.constant dense<0.000000e+00> : vector<38x104xf32>
    %76 = tpu.matmul %74, %75, %cst_81 {dimension_numbers = #tpu.dot_dimension_numbers<[1], [0], [0], [1], [0, 0, 1, 1], [], []>} : vector<38x215xf32>, vector<215x104xf32>, vector<38x104xf32> -> vector<38x104xf32>
    %cst_82 = arith.constant 0.000000e+00 : f32
    %77 = vector.broadcast %cst_82 : f32 to vector<38x104xf32>
    %78 = arith.maximumf %76, %77 : vector<38x104xf32>
    %79 = vector.extract_strided_slice %78 {offsets = [0, 0], sizes = [36, 104], strides = [1, 1]} : vector<38x104xf32> to vector<36x104xf32>
    %80 = arith.truncf %79 : vector<36x104xf32> to vector<36x104xbf16>
    %c0_83 = arith.constant 0 : index
    %c0_84 = arith.constant 0 : index
    %c0_85 = arith.constant 0 : index
    %81 = vector.load %arg10[%c0_83, %c0_84, %c0_85] : memref<3x104x176xbf16, #tpu.memory_space<vmem>>, vector<1x104x176xbf16>
    %82 = vector.shape_cast %81 : vector<1x104x176xbf16> to vector<104x176xbf16>
    %cst_86 = arith.constant dense<0.000000e+00> : vector<36x176xf32>
    %83 = tpu.matmul %80, %82, %cst_86 {dimension_numbers = #tpu.dot_dimension_numbers<[1], [0], [0], [1], [0, 0, 1, 1], [], []>} : vector<36x104xbf16>, vector<104x176xbf16>, vector<36x176xf32> -> vector<36x176xf32>
    %c0_87 = arith.constant 0 : index
    %c0_88 = arith.constant 0 : index
    %84 = vector.load %arg11[%c0_87, %c0_88] : memref<1x176xf32, #tpu.memory_space<vmem>>, vector<1x176xf32>
    %85 = vector.broadcast %84 : vector<1x176xf32> to vector<36x176xf32>
    %86 = arith.addf %83, %85 : vector<36x176xf32>
    %c0_89 = arith.constant 0 : index
    %c0_90 = arith.constant 0 : index
    %87 = vector.load %arg21[%c0_89, %c0_90] : memref<36x176xf32, #tpu.memory_space<vmem>>, vector<36x176xf32>
    tpu.vector_store %arg21[%c0_89, %c0_90], %86 {strides = array<i32>} : memref<36x176xf32, #tpu.memory_space<vmem>>, vector<36x176xf32>,
    %c0_91 = arith.constant 0 : index
    %c0_92 = arith.constant 0 : index
    %88 = vector.load %arg21[%c0_91, %c0_92] : memref<36x176xf32, #tpu.memory_space<vmem>>, vector<36x176xf32>
    %89 = vector.extract_strided_slice %78 {offsets = [1, 0], sizes = [36, 104], strides = [1, 1]} : vector<38x104xf32> to vector<36x104xf32>
    %90 = arith.truncf %89 : vector<36x104xf32> to vector<36x104xbf16>
    %c1_93 = arith.constant 1 : index
    %c0_94 = arith.constant 0 : index
    %c0_95 = arith.constant 0 : index
    %91 = vector.load %arg10[%c1_93, %c0_94, %c0_95] : memref<3x104x176xbf16, #tpu.memory_space<vmem>>, vector<1x104x176xbf16>
    %92 = vector.shape_cast %91 : vector<1x104x176xbf16> to vector<104x176xbf16>
    %cst_96 = arith.constant dense<0.000000e+00> : vector<36x176xf32>
    %93 = tpu.matmul %90, %92, %cst_96 {dimension_numbers = #tpu.dot_dimension_numbers<[1], [0], [0], [1], [0, 0, 1, 1], [], []>} : vector<36x104xbf16>, vector<104x176xbf16>, vector<36x176xf32> -> vector<36x176xf32>
    %94 = arith.addf %88, %93 : vector<36x176xf32>
    %c0_97 = arith.constant 0 : index
    %c0_98 = arith.constant 0 : index
    %95 = vector.load %arg21[%c0_97, %c0_98] : memref<36x176xf32, #tpu.memory_space<vmem>>, vector<36x176xf32>
    tpu.vector_store %arg21[%c0_97, %c0_98], %94 {strides = array<i32>} : memref<36x176xf32, #tpu.memory_space<vmem>>, vector<36x176xf32>,
    %c0_99 = arith.constant 0 : index
    %c0_100 = arith.constant 0 : index
    %96 = vector.load %arg21[%c0_99, %c0_100] : memref<36x176xf32, #tpu.memory_space<vmem>>, vector<36x176xf32>
    %97 = vector.extract_strided_slice %78 {offsets = [2, 0], sizes = [36, 104], strides = [1, 1]} : vector<38x104xf32> to vector<36x104xf32>
    %98 = arith.truncf %97 : vector<36x104xf32> to vector<36x104xbf16>
    %c2_101 = arith.constant 2 : index
    %c0_102 = arith.constant 0 : index
    %c0_103 = arith.constant 0 : index
    %99 = vector.load %arg10[%c2_101, %c0_102, %c0_103] : memref<3x104x176xbf16, #tpu.memory_space<vmem>>, vector<1x104x176xbf16>
    %100 = vector.shape_cast %99 : vector<1x104x176xbf16> to vector<104x176xbf16>
    %cst_104 = arith.constant dense<0.000000e+00> : vector<36x176xf32>
    %101 = tpu.matmul %98, %100, %cst_104 {dimension_numbers = #tpu.dot_dimension_numbers<[1], [0], [0], [1], [0, 0, 1, 1], [], []>} : vector<36x104xbf16>, vector<104x176xbf16>, vector<36x176xf32> -> vector<36x176xf32>
    %102 = arith.addf %96, %101 : vector<36x176xf32>
    %c0_105 = arith.constant 0 : index
    %c0_106 = arith.constant 0 : index
    %103 = vector.load %arg21[%c0_105, %c0_106] : memref<36x176xf32, #tpu.memory_space<vmem>>, vector<36x176xf32>
    tpu.vector_store %arg21[%c0_105, %c0_106], %102 {strides = array<i32>} : memref<36x176xf32, #tpu.memory_space<vmem>>, vector<36x176xf32>,
    %c0_107 = arith.constant 0 : index
    %c0_108 = arith.constant 0 : index
    %104 = vector.load %arg21[%c0_107, %c0_108] : memref<36x176xf32, #tpu.memory_space<vmem>>, vector<35x175xf32>
    %c1_109 = arith.constant 1 : index
    %c0_110 = arith.constant 0 : index
    %105 = vector.load %arg21[%c1_109, %c0_110] : memref<36x176xf32, #tpu.memory_space<vmem>>, vector<35x175xf32>
    %106 = arith.maximumf %104, %105 : vector<35x175xf32>
    %c0_111 = arith.constant 0 : index
    %c1_112 = arith.constant 1 : index
    %107 = vector.load %arg21[%c0_111, %c1_112] : memref<36x176xf32, #tpu.memory_space<vmem>>, vector<35x175xf32>
    %c1_113 = arith.constant 1 : index
    %c1_114 = arith.constant 1 : index
    %108 = vector.load %arg21[%c1_113, %c1_114] : memref<36x176xf32, #tpu.memory_space<vmem>>, vector<35x175xf32>
    %109 = arith.maximumf %107, %108 : vector<35x175xf32>
    %110 = arith.maximumf %106, %109 : vector<35x175xf32>
    %c0_115 = arith.constant 0 : index
    %c0_116 = arith.constant 0 : index
    %111 = vector.load %arg12[%c0_115, %c0_116] : memref<18x35xf32, #tpu.memory_space<vmem>>, vector<18x35xf32>
    %cst_117 = arith.constant dense<0.000000e+00> : vector<18x175xf32>
    %112 = tpu.matmul %111, %110, %cst_117 {dimension_numbers = #tpu.dot_dimension_numbers<[1], [0], [0], [1], [0, 0, 1, 1], [], []>} : vector<18x35xf32>, vector<35x175xf32>, vector<18x175xf32> -> vector<18x175xf32>
    %c0_118 = arith.constant 0 : index
    %c0_119 = arith.constant 0 : index
    %113 = vector.load %arg13[%c0_118, %c0_119] : memref<175x80xf32, #tpu.memory_space<vmem>>, vector<175x80xf32>
    %cst_120 = arith.constant dense<0.000000e+00> : vector<18x80xf32>
    %114 = tpu.matmul %112, %113, %cst_120 {dimension_numbers = #tpu.dot_dimension_numbers<[1], [0], [0], [1], [0, 0, 1, 1], [], []>} : vector<18x175xf32>, vector<175x80xf32>, vector<18x80xf32> -> vector<18x80xf32>
    %cst_121 = arith.constant 0.000000e+00 : f32
    %115 = vector.broadcast %cst_121 : f32 to vector<18x80xf32>
    %116 = arith.maximumf %114, %115 : vector<18x80xf32>
    %c0_122 = arith.constant 0 : index
    %c0_123 = arith.constant 0 : index
    %117 = vector.load %arg15[%c0_122, %c0_123] : memref<1x512xf32, #tpu.memory_space<vmem>>, vector<1x512xf32>
    %118 = vector.extract_strided_slice %116 {offsets = [0, 0], sizes = [1, 80], strides = [1, 1]} : vector<18x80xf32> to vector<1x80xf32>
    %119 = arith.truncf %118 : vector<1x80xf32> to vector<1x80xbf16>
    %c0_124 = arith.constant 0 : index
    %c0_125 = arith.constant 0 : index
    %c0_126 = arith.constant 0 : index
    %120 = vector.load %arg14[%c0_124, %c0_125, %c0_126] : memref<18x80x512xbf16, #tpu.memory_space<vmem>>, vector<1x80x512xbf16>
    %121 = vector.shape_cast %120 : vector<1x80x512xbf16> to vector<80x512xbf16>
    %cst_127 = arith.constant dense<0.000000e+00> : vector<1x512xf32>
    %122 = tpu.matmul %119, %121, %cst_127 {dimension_numbers = #tpu.dot_dimension_numbers<[1], [0], [0], [1], [0, 0, 1, 1], [], []>} : vector<1x80xbf16>, vector<80x512xbf16>, vector<1x512xf32> -> vector<1x512xf32>
    %123 = arith.addf %117, %122 : vector<1x512xf32>
    %124 = vector.extract_strided_slice %116 {offsets = [1, 0], sizes = [1, 80], strides = [1, 1]} : vector<18x80xf32> to vector<1x80xf32>
    %125 = arith.truncf %124 : vector<1x80xf32> to vector<1x80xbf16>
    %c1_128 = arith.constant 1 : index
    %c0_129 = arith.constant 0 : index
    %c0_130 = arith.constant 0 : index
    %126 = vector.load %arg14[%c1_128, %c0_129, %c0_130] : memref<18x80x512xbf16, #tpu.memory_space<vmem>>, vector<1x80x512xbf16>
    %127 = vector.shape_cast %126 : vector<1x80x512xbf16> to vector<80x512xbf16>
    %cst_131 = arith.constant dense<0.000000e+00> : vector<1x512xf32>
    %128 = tpu.matmul %125, %127, %cst_131 {dimension_numbers = #tpu.dot_dimension_numbers<[1], [0], [0], [1], [0, 0, 1, 1], [], []>} : vector<1x80xbf16>, vector<80x512xbf16>, vector<1x512xf32> -> vector<1x512xf32>
    %129 = arith.addf %123, %128 : vector<1x512xf32>
    %130 = vector.extract_strided_slice %116 {offsets = [2, 0], sizes = [1, 80], strides = [1, 1]} : vector<18x80xf32> to vector<1x80xf32>
    %131 = arith.truncf %130 : vector<1x80xf32> to vector<1x80xbf16>
    %c2_132 = arith.constant 2 : index
    %c0_133 = arith.constant 0 : index
    %c0_134 = arith.constant 0 : index
    %132 = vector.load %arg14[%c2_132, %c0_133, %c0_134] : memref<18x80x512xbf16, #tpu.memory_space<vmem>>, vector<1x80x512xbf16>
    %133 = vector.shape_cast %132 : vector<1x80x512xbf16> to vector<80x512xbf16>
    %cst_135 = arith.constant dense<0.000000e+00> : vector<1x512xf32>
    %134 = tpu.matmul %131, %133, %cst_135 {dimension_numbers = #tpu.dot_dimension_numbers<[1], [0], [0], [1], [0, 0, 1, 1], [], []>} : vector<1x80xbf16>, vector<80x512xbf16>, vector<1x512xf32> -> vector<1x512xf32>
    %135 = arith.addf %129, %134 : vector<1x512xf32>
    %136 = vector.extract_strided_slice %116 {offsets = [3, 0], sizes = [1, 80], strides = [1, 1]} : vector<18x80xf32> to vector<1x80xf32>
    %137 = arith.truncf %136 : vector<1x80xf32> to vector<1x80xbf16>
    %c3 = arith.constant 3 : index
    %c0_136 = arith.constant 0 : index
    %c0_137 = arith.constant 0 : index
    %138 = vector.load %arg14[%c3, %c0_136, %c0_137] : memref<18x80x512xbf16, #tpu.memory_space<vmem>>, vector<1x80x512xbf16>
    %139 = vector.shape_cast %138 : vector<1x80x512xbf16> to vector<80x512xbf16>
    %cst_138 = arith.constant dense<0.000000e+00> : vector<1x512xf32>
    %140 = tpu.matmul %137, %139, %cst_138 {dimension_numbers = #tpu.dot_dimension_numbers<[1], [0], [0], [1], [0, 0, 1, 1], [], []>} : vector<1x80xbf16>, vector<80x512xbf16>, vector<1x512xf32> -> vector<1x512xf32>
    %141 = arith.addf %135, %140 : vector<1x512xf32>
    %142 = vector.extract_strided_slice %116 {offsets = [4, 0], sizes = [1, 80], strides = [1, 1]} : vector<18x80xf32> to vector<1x80xf32>
    %143 = arith.truncf %142 : vector<1x80xf32> to vector<1x80xbf16>
    %c4 = arith.constant 4 : index
    %c0_139 = arith.constant 0 : index
    %c0_140 = arith.constant 0 : index
    %144 = vector.load %arg14[%c4, %c0_139, %c0_140] : memref<18x80x512xbf16, #tpu.memory_space<vmem>>, vector<1x80x512xbf16>
    %145 = vector.shape_cast %144 : vector<1x80x512xbf16> to vector<80x512xbf16>
    %cst_141 = arith.constant dense<0.000000e+00> : vector<1x512xf32>
    %146 = tpu.matmul %143, %145, %cst_141 {dimension_numbers = #tpu.dot_dimension_numbers<[1], [0], [0], [1], [0, 0, 1, 1], [], []>} : vector<1x80xbf16>, vector<80x512xbf16>, vector<1x512xf32> -> vector<1x512xf32>
    %147 = arith.addf %141, %146 : vector<1x512xf32>
    %148 = vector.extract_strided_slice %116 {offsets = [5, 0], sizes = [1, 80], strides = [1, 1]} : vector<18x80xf32> to vector<1x80xf32>
    %149 = arith.truncf %148 : vector<1x80xf32> to vector<1x80xbf16>
    %c5 = arith.constant 5 : index
    %c0_142 = arith.constant 0 : index
    %c0_143 = arith.constant 0 : index
    %150 = vector.load %arg14[%c5, %c0_142, %c0_143] : memref<18x80x512xbf16, #tpu.memory_space<vmem>>, vector<1x80x512xbf16>
    %151 = vector.shape_cast %150 : vector<1x80x512xbf16> to vector<80x512xbf16>
    %cst_144 = arith.constant dense<0.000000e+00> : vector<1x512xf32>
    %152 = tpu.matmul %149, %151, %cst_144 {dimension_numbers = #tpu.dot_dimension_numbers<[1], [0], [0], [1], [0, 0, 1, 1], [], []>} : vector<1x80xbf16>, vector<80x512xbf16>, vector<1x512xf32> -> vector<1x512xf32>
    %153 = arith.addf %147, %152 : vector<1x512xf32>
    %154 = vector.extract_strided_slice %116 {offsets = [6, 0], sizes = [1, 80], strides = [1, 1]} : vector<18x80xf32> to vector<1x80xf32>
    %155 = arith.truncf %154 : vector<1x80xf32> to vector<1x80xbf16>
    %c6 = arith.constant 6 : index
    %c0_145 = arith.constant 0 : index
    %c0_146 = arith.constant 0 : index
    %156 = vector.load %arg14[%c6, %c0_145, %c0_146] : memref<18x80x512xbf16, #tpu.memory_space<vmem>>, vector<1x80x512xbf16>
    %157 = vector.shape_cast %156 : vector<1x80x512xbf16> to vector<80x512xbf16>
    %cst_147 = arith.constant dense<0.000000e+00> : vector<1x512xf32>
    %158 = tpu.matmul %155, %157, %cst_147 {dimension_numbers = #tpu.dot_dimension_numbers<[1], [0], [0], [1], [0, 0, 1, 1], [], []>} : vector<1x80xbf16>, vector<80x512xbf16>, vector<1x512xf32> -> vector<1x512xf32>
    %159 = arith.addf %153, %158 : vector<1x512xf32>
    %160 = vector.extract_strided_slice %116 {offsets = [7, 0], sizes = [1, 80], strides = [1, 1]} : vector<18x80xf32> to vector<1x80xf32>
    %161 = arith.truncf %160 : vector<1x80xf32> to vector<1x80xbf16>
    %c7 = arith.constant 7 : index
    %c0_148 = arith.constant 0 : index
    %c0_149 = arith.constant 0 : index
    %162 = vector.load %arg14[%c7, %c0_148, %c0_149] : memref<18x80x512xbf16, #tpu.memory_space<vmem>>, vector<1x80x512xbf16>
    %163 = vector.shape_cast %162 : vector<1x80x512xbf16> to vector<80x512xbf16>
    %cst_150 = arith.constant dense<0.000000e+00> : vector<1x512xf32>
    %164 = tpu.matmul %161, %163, %cst_150 {dimension_numbers = #tpu.dot_dimension_numbers<[1], [0], [0], [1], [0, 0, 1, 1], [], []>} : vector<1x80xbf16>, vector<80x512xbf16>, vector<1x512xf32> -> vector<1x512xf32>
    %165 = arith.addf %159, %164 : vector<1x512xf32>
    %166 = vector.extract_strided_slice %116 {offsets = [8, 0], sizes = [1, 80], strides = [1, 1]} : vector<18x80xf32> to vector<1x80xf32>
    %167 = arith.truncf %166 : vector<1x80xf32> to vector<1x80xbf16>
    %c8 = arith.constant 8 : index
    %c0_151 = arith.constant 0 : index
    %c0_152 = arith.constant 0 : index
    %168 = vector.load %arg14[%c8, %c0_151, %c0_152] : memref<18x80x512xbf16, #tpu.memory_space<vmem>>, vector<1x80x512xbf16>
    %169 = vector.shape_cast %168 : vector<1x80x512xbf16> to vector<80x512xbf16>
    %cst_153 = arith.constant dense<0.000000e+00> : vector<1x512xf32>
    %170 = tpu.matmul %167, %169, %cst_153 {dimension_numbers = #tpu.dot_dimension_numbers<[1], [0], [0], [1], [0, 0, 1, 1], [], []>} : vector<1x80xbf16>, vector<80x512xbf16>, vector<1x512xf32> -> vector<1x512xf32>
    %171 = arith.addf %165, %170 : vector<1x512xf32>
    %172 = vector.extract_strided_slice %116 {offsets = [9, 0], sizes = [1, 80], strides = [1, 1]} : vector<18x80xf32> to vector<1x80xf32>
    %173 = arith.truncf %172 : vector<1x80xf32> to vector<1x80xbf16>
    %c9 = arith.constant 9 : index
    %c0_154 = arith.constant 0 : index
    %c0_155 = arith.constant 0 : index
    %174 = vector.load %arg14[%c9, %c0_154, %c0_155] : memref<18x80x512xbf16, #tpu.memory_space<vmem>>, vector<1x80x512xbf16>
    %175 = vector.shape_cast %174 : vector<1x80x512xbf16> to vector<80x512xbf16>
    %cst_156 = arith.constant dense<0.000000e+00> : vector<1x512xf32>
    %176 = tpu.matmul %173, %175, %cst_156 {dimension_numbers = #tpu.dot_dimension_numbers<[1], [0], [0], [1], [0, 0, 1, 1], [], []>} : vector<1x80xbf16>, vector<80x512xbf16>, vector<1x512xf32> -> vector<1x512xf32>
    %177 = arith.addf %171, %176 : vector<1x512xf32>
    %178 = vector.extract_strided_slice %116 {offsets = [10, 0], sizes = [1, 80], strides = [1, 1]} : vector<18x80xf32> to vector<1x80xf32>
    %179 = arith.truncf %178 : vector<1x80xf32> to vector<1x80xbf16>
    %c10 = arith.constant 10 : index
    %c0_157 = arith.constant 0 : index
    %c0_158 = arith.constant 0 : index
    %180 = vector.load %arg14[%c10, %c0_157, %c0_158] : memref<18x80x512xbf16, #tpu.memory_space<vmem>>, vector<1x80x512xbf16>
    %181 = vector.shape_cast %180 : vector<1x80x512xbf16> to vector<80x512xbf16>
    %cst_159 = arith.constant dense<0.000000e+00> : vector<1x512xf32>
    %182 = tpu.matmul %179, %181, %cst_159 {dimension_numbers = #tpu.dot_dimension_numbers<[1], [0], [0], [1], [0, 0, 1, 1], [], []>} : vector<1x80xbf16>, vector<80x512xbf16>, vector<1x512xf32> -> vector<1x512xf32>
    %183 = arith.addf %177, %182 : vector<1x512xf32>
    %184 = vector.extract_strided_slice %116 {offsets = [11, 0], sizes = [1, 80], strides = [1, 1]} : vector<18x80xf32> to vector<1x80xf32>
    %185 = arith.truncf %184 : vector<1x80xf32> to vector<1x80xbf16>
    %c11 = arith.constant 11 : index
    %c0_160 = arith.constant 0 : index
    %c0_161 = arith.constant 0 : index
    %186 = vector.load %arg14[%c11, %c0_160, %c0_161] : memref<18x80x512xbf16, #tpu.memory_space<vmem>>, vector<1x80x512xbf16>
    %187 = vector.shape_cast %186 : vector<1x80x512xbf16> to vector<80x512xbf16>
    %cst_162 = arith.constant dense<0.000000e+00> : vector<1x512xf32>
    %188 = tpu.matmul %185, %187, %cst_162 {dimension_numbers = #tpu.dot_dimension_numbers<[1], [0], [0], [1], [0, 0, 1, 1], [], []>} : vector<1x80xbf16>, vector<80x512xbf16>, vector<1x512xf32> -> vector<1x512xf32>
    %189 = arith.addf %183, %188 : vector<1x512xf32>
    %190 = vector.extract_strided_slice %116 {offsets = [12, 0], sizes = [1, 80], strides = [1, 1]} : vector<18x80xf32> to vector<1x80xf32>
    %191 = arith.truncf %190 : vector<1x80xf32> to vector<1x80xbf16>
    %c12 = arith.constant 12 : index
    %c0_163 = arith.constant 0 : index
    %c0_164 = arith.constant 0 : index
    %192 = vector.load %arg14[%c12, %c0_163, %c0_164] : memref<18x80x512xbf16, #tpu.memory_space<vmem>>, vector<1x80x512xbf16>
    %193 = vector.shape_cast %192 : vector<1x80x512xbf16> to vector<80x512xbf16>
    %cst_165 = arith.constant dense<0.000000e+00> : vector<1x512xf32>
    %194 = tpu.matmul %191, %193, %cst_165 {dimension_numbers = #tpu.dot_dimension_numbers<[1], [0], [0], [1], [0, 0, 1, 1], [], []>} : vector<1x80xbf16>, vector<80x512xbf16>, vector<1x512xf32> -> vector<1x512xf32>
    %195 = arith.addf %189, %194 : vector<1x512xf32>
    %196 = vector.extract_strided_slice %116 {offsets = [13, 0], sizes = [1, 80], strides = [1, 1]} : vector<18x80xf32> to vector<1x80xf32>
    %197 = arith.truncf %196 : vector<1x80xf32> to vector<1x80xbf16>
    %c13 = arith.constant 13 : index
    %c0_166 = arith.constant 0 : index
    %c0_167 = arith.constant 0 : index
    %198 = vector.load %arg14[%c13, %c0_166, %c0_167] : memref<18x80x512xbf16, #tpu.memory_space<vmem>>, vector<1x80x512xbf16>
    %199 = vector.shape_cast %198 : vector<1x80x512xbf16> to vector<80x512xbf16>
    %cst_168 = arith.constant dense<0.000000e+00> : vector<1x512xf32>
    %200 = tpu.matmul %197, %199, %cst_168 {dimension_numbers = #tpu.dot_dimension_numbers<[1], [0], [0], [1], [0, 0, 1, 1], [], []>} : vector<1x80xbf16>, vector<80x512xbf16>, vector<1x512xf32> -> vector<1x512xf32>
    %201 = arith.addf %195, %200 : vector<1x512xf32>
    %202 = vector.extract_strided_slice %116 {offsets = [14, 0], sizes = [1, 80], strides = [1, 1]} : vector<18x80xf32> to vector<1x80xf32>
    %203 = arith.truncf %202 : vector<1x80xf32> to vector<1x80xbf16>
    %c14 = arith.constant 14 : index
    %c0_169 = arith.constant 0 : index
    %c0_170 = arith.constant 0 : index
    %204 = vector.load %arg14[%c14, %c0_169, %c0_170] : memref<18x80x512xbf16, #tpu.memory_space<vmem>>, vector<1x80x512xbf16>
    %205 = vector.shape_cast %204 : vector<1x80x512xbf16> to vector<80x512xbf16>
    %cst_171 = arith.constant dense<0.000000e+00> : vector<1x512xf32>
    %206 = tpu.matmul %203, %205, %cst_171 {dimension_numbers = #tpu.dot_dimension_numbers<[1], [0], [0], [1], [0, 0, 1, 1], [], []>} : vector<1x80xbf16>, vector<80x512xbf16>, vector<1x512xf32> -> vector<1x512xf32>
    %207 = arith.addf %201, %206 : vector<1x512xf32>
    %208 = vector.extract_strided_slice %116 {offsets = [15, 0], sizes = [1, 80], strides = [1, 1]} : vector<18x80xf32> to vector<1x80xf32>
    %209 = arith.truncf %208 : vector<1x80xf32> to vector<1x80xbf16>
    %c15 = arith.constant 15 : index
    %c0_172 = arith.constant 0 : index
    %c0_173 = arith.constant 0 : index
    %210 = vector.load %arg14[%c15, %c0_172, %c0_173] : memref<18x80x512xbf16, #tpu.memory_space<vmem>>, vector<1x80x512xbf16>
    %211 = vector.shape_cast %210 : vector<1x80x512xbf16> to vector<80x512xbf16>
    %cst_174 = arith.constant dense<0.000000e+00> : vector<1x512xf32>
    %212 = tpu.matmul %209, %211, %cst_174 {dimension_numbers = #tpu.dot_dimension_numbers<[1], [0], [0], [1], [0, 0, 1, 1], [], []>} : vector<1x80xbf16>, vector<80x512xbf16>, vector<1x512xf32> -> vector<1x512xf32>
    %213 = arith.addf %207, %212 : vector<1x512xf32>
    %214 = vector.extract_strided_slice %116 {offsets = [16, 0], sizes = [1, 80], strides = [1, 1]} : vector<18x80xf32> to vector<1x80xf32>
    %215 = arith.truncf %214 : vector<1x80xf32> to vector<1x80xbf16>
    %c16 = arith.constant 16 : index
    %c0_175 = arith.constant 0 : index
    %c0_176 = arith.constant 0 : index
    %216 = vector.load %arg14[%c16, %c0_175, %c0_176] : memref<18x80x512xbf16, #tpu.memory_space<vmem>>, vector<1x80x512xbf16>
    %217 = vector.shape_cast %216 : vector<1x80x512xbf16> to vector<80x512xbf16>
    %cst_177 = arith.constant dense<0.000000e+00> : vector<1x512xf32>
    %218 = tpu.matmul %215, %217, %cst_177 {dimension_numbers = #tpu.dot_dimension_numbers<[1], [0], [0], [1], [0, 0, 1, 1], [], []>} : vector<1x80xbf16>, vector<80x512xbf16>, vector<1x512xf32> -> vector<1x512xf32>
    %219 = arith.addf %213, %218 : vector<1x512xf32>
    %220 = vector.extract_strided_slice %116 {offsets = [17, 0], sizes = [1, 80], strides = [1, 1]} : vector<18x80xf32> to vector<1x80xf32>
    %221 = arith.truncf %220 : vector<1x80xf32> to vector<1x80xbf16>
    %c17 = arith.constant 17 : index
    %c0_178 = arith.constant 0 : index
    %c0_179 = arith.constant 0 : index
    %222 = vector.load %arg14[%c17, %c0_178, %c0_179] : memref<18x80x512xbf16, #tpu.memory_space<vmem>>, vector<1x80x512xbf16>
    %223 = vector.shape_cast %222 : vector<1x80x512xbf16> to vector<80x512xbf16>
    %cst_180 = arith.constant dense<0.000000e+00> : vector<1x512xf32>
    %224 = tpu.matmul %221, %223, %cst_180 {dimension_numbers = #tpu.dot_dimension_numbers<[1], [0], [0], [1], [0, 0, 1, 1], [], []>} : vector<1x80xbf16>, vector<80x512xbf16>, vector<1x512xf32> -> vector<1x512xf32>
    %225 = arith.addf %219, %224 : vector<1x512xf32>
    %cst_181 = arith.constant 0.000000e+00 : f32
    %226 = vector.broadcast %cst_181 : f32 to vector<1x512xf32>
    %227 = arith.maximumf %225, %226 : vector<1x512xf32>
    %228 = arith.truncf %227 : vector<1x512xf32> to vector<1x512xbf16>
    %c0_182 = arith.constant 0 : index
    %c0_183 = arith.constant 0 : index
    %229 = vector.load %arg16[%c0_182, %c0_183] : memref<512x256xbf16, #tpu.memory_space<vmem>>, vector<512x256xbf16>
    %cst_184 = arith.constant dense<0.000000e+00> : vector<1x256xf32>
    %230 = tpu.matmul %228, %229, %cst_184 {dimension_numbers = #tpu.dot_dimension_numbers<[1], [0], [0], [1], [0, 0, 1, 1], [], []>} : vector<1x512xbf16>, vector<512x256xbf16>, vector<1x256xf32> -> vector<1x256xf32>
    %c0_185 = arith.constant 0 : index
    %c0_186 = arith.constant 0 : index
    %231 = vector.load %arg17[%c0_185, %c0_186] : memref<1x256xf32, #tpu.memory_space<vmem>>, vector<1x256xf32>
    %232 = arith.addf %230, %231 : vector<1x256xf32>
    %c0_187 = arith.constant 0 : index
    %c0_188 = arith.constant 0 : index
    %c0_189 = arith.constant 0 : index
    %233 = vector.load %arg18[%c0_187, %c0_188, %c0_189] : memref<1x1x256xf32, #tpu.memory_space<vmem>>, vector<1x1x256xf32>
    %234 = vector.shape_cast %233 : vector<1x1x256xf32> to vector<1x256xf32>
    %235 = vector.shape_cast %232 : vector<1x256xf32> to vector<1x1x256xf32>
    tpu.vector_store %arg18[%c0_187, %c0_188, %c0_189], %235 {strides = array<i32>} : memref<1x1x256xf32, #tpu.memory_space<vmem>>, vector<1x1x256xf32>,
    return
  }
  func.func @transform_0(%arg0: i32) -> (i32, i32, i32) {
    %c0_i32 = arith.constant 0 : i32
    %c0_i32_0 = arith.constant 0 : i32
    %c0_i32_1 = arith.constant 0 : i32
    return %arg0, %c0_i32, %c0_i32_0 : i32, i32, i32
  }
  func.func @transform_1(%arg0: i32) -> (i32, i32, i32) {
    %c0_i32 = arith.constant 0 : i32
    %c0_i32_0 = arith.constant 0 : i32
    %c0_i32_1 = arith.constant 0 : i32
    %c0_i32_2 = arith.constant 0 : i32
    return %c0_i32, %c0_i32_0, %c0_i32_1 : i32, i32, i32
  }
  func.func @transform_2(%arg0: i32) -> (i32, i32) {
    %c0_i32 = arith.constant 0 : i32
    %c0_i32_0 = arith.constant 0 : i32
    %c0_i32_1 = arith.constant 0 : i32
    return %c0_i32, %c0_i32_0 : i32, i32
  }
  func.func @transform_3(%arg0: i32) -> (i32, i32) {
    %c0_i32 = arith.constant 0 : i32
    %c0_i32_0 = arith.constant 0 : i32
    %c0_i32_1 = arith.constant 0 : i32
    return %c0_i32, %c0_i32_0 : i32, i32
  }
  func.func @transform_4(%arg0: i32) -> (i32, i32) {
    %c0_i32 = arith.constant 0 : i32
    %c0_i32_0 = arith.constant 0 : i32
    %c0_i32_1 = arith.constant 0 : i32
    return %c0_i32, %c0_i32_0 : i32, i32
  }
  func.func @transform_5(%arg0: i32) -> (i32, i32, i32) {
    %c0_i32 = arith.constant 0 : i32
    %c0_i32_0 = arith.constant 0 : i32
    %c0_i32_1 = arith.constant 0 : i32
    %c0_i32_2 = arith.constant 0 : i32
    return %c0_i32, %c0_i32_0, %c0_i32_1 : i32, i32, i32
  }
  func.func @transform_6(%arg0: i32) -> (i32, i32) {
    %c0_i32 = arith.constant 0 : i32
    %c0_i32_0 = arith.constant 0 : i32
    %c0_i32_1 = arith.constant 0 : i32
    return %c0_i32, %c0_i32_0 : i32, i32
  }
  func.func @transform_7(%arg0: i32) -> (i32, i32) {
    %c0_i32 = arith.constant 0 : i32
    %c0_i32_0 = arith.constant 0 : i32
    %c0_i32_1 = arith.constant 0 : i32
    return %c0_i32, %c0_i32_0 : i32, i32
  }
  func.func @transform_8(%arg0: i32) -> (i32, i32) {
    %c0_i32 = arith.constant 0 : i32
    %c0_i32_0 = arith.constant 0 : i32
    %c0_i32_1 = arith.constant 0 : i32
    return %c0_i32, %c0_i32_0 : i32, i32
  }
  func.func @transform_9(%arg0: i32) -> (i32, i32, i32) {
    %c0_i32 = arith.constant 0 : i32
    %c0_i32_0 = arith.constant 0 : i32
    %c0_i32_1 = arith.constant 0 : i32
    %c0_i32_2 = arith.constant 0 : i32
    return %c0_i32, %c0_i32_0, %c0_i32_1 : i32, i32, i32
  }
  func.func @transform_10(%arg0: i32) -> (i32, i32) {
    %c0_i32 = arith.constant 0 : i32
    %c0_i32_0 = arith.constant 0 : i32
    %c0_i32_1 = arith.constant 0 : i32
    return %c0_i32, %c0_i32_0 : i32, i32
  }
  func.func @transform_11(%arg0: i32) -> (i32, i32) {
    %c0_i32 = arith.constant 0 : i32
    %c0_i32_0 = arith.constant 0 : i32
    %c0_i32_1 = arith.constant 0 : i32
    return %c0_i32, %c0_i32_0 : i32, i32
  }
  func.func @transform_12(%arg0: i32) -> (i32, i32) {
    %c0_i32 = arith.constant 0 : i32
    %c0_i32_0 = arith.constant 0 : i32
    %c0_i32_1 = arith.constant 0 : i32
    return %c0_i32, %c0_i32_0 : i32, i32
  }
  func.func @transform_13(%arg0: i32) -> (i32, i32, i32) {
    %c0_i32 = arith.constant 0 : i32
    %c0_i32_0 = arith.constant 0 : i32
    %c0_i32_1 = arith.constant 0 : i32
    %c0_i32_2 = arith.constant 0 : i32
    return %c0_i32, %c0_i32_0, %c0_i32_1 : i32, i32, i32
  }
  func.func @transform_14(%arg0: i32) -> (i32, i32) {
    %c0_i32 = arith.constant 0 : i32
    %c0_i32_0 = arith.constant 0 : i32
    %c0_i32_1 = arith.constant 0 : i32
    return %c0_i32, %c0_i32_0 : i32, i32
  }
  func.func @transform_15(%arg0: i32) -> (i32, i32) {
    %c0_i32 = arith.constant 0 : i32
    %c0_i32_0 = arith.constant 0 : i32
    %c0_i32_1 = arith.constant 0 : i32
    return %c0_i32, %c0_i32_0 : i32, i32
  }
  func.func @transform_16(%arg0: i32) -> (i32, i32) {
    %c0_i32 = arith.constant 0 : i32
    %c0_i32_0 = arith.constant 0 : i32
    %c0_i32_1 = arith.constant 0 : i32
    return %c0_i32, %c0_i32_0 : i32, i32
  }
  func.func @transform_17(%arg0: i32) -> (i32, i32, i32) {
    %c0_i32 = arith.constant 0 : i32
    %c0_i32_0 = arith.constant 0 : i32
    %c0_i32_1 = arith.constant 0 : i32
    return %arg0, %c0_i32, %c0_i32_0 : i32, i32, i32
  }
}

</mosaic_0001>

<llo_original>
// kernel: squeeze.1
$region0: #{squeeze.1}
  %s0 = inlined_call_operand.vmem [shape: f32[2,144], index: 0, kind: input, shape index: {}]
  %s1 = inlined_call_operand.hbm [shape: f32[2,4,36], index: 1, kind: output, shape index: {}]
  $region1: #{squeeze.1} parent=0
    #allocation0 [shape = 'u8[4096]{0}', space=vmem, size = 0x1000, scoped, tag = 'operand span for operand 1']
    #allocation1 [shape = 's32[1]{0}', space=sflag, size = 0x4, scoped, tag = 'scoped memory for squeeze.1']
    #allocation2 [shape = 'u8[8192]{0}', space=vmem, size = 0x2000, scoped, tag = 'scoped mem for output reshape']
    #allocation3 [shape = 'u8[8192]{0}', space=vmem, size = 0x2000, scoped, tag = 'scoped mem for input reshape']
    %2 = vsyncpa [#allocation1], 0
    %s4 = ssub.s32 4, 1
    %s5 = scalar_lea.vmem %s0, 2
    %v6 = vld [vmem:[%s5] sm:%s4]
    %s7 = scalar_lea.vmem [#allocation3], 8
    %8 = vst [vmem:[%s7] sm:%s4] %v6
    %v9 = vld [vmem:[%s0] sm:%s4]
    %10 = vst [vmem:[#allocation3] sm:%s4] %v9
    %v11 = vld [vmem:[#allocation3] sm:$0x3]
    %vm12 = vcmask 293888
    %13 = vst.msk [vmem:[#allocation2] ss:$8 sm:$0x3] %vm12, %v11
    %v14 = vld [vmem:[#allocation3] sm:$0x3]
    %15 = vrot.lane.b32.xlu0 %v14, 92
    %v16 = vpop.permute.xlu0 %15
    %vm17 = vcmask 293888
    %s18 = scalar_lea.vmem [#allocation2], 1
    %19 = vst.msk [vmem:[%s18] ss:$8 sm:$0x3] %vm17, %v16
    %v20 = vld [vmem:[#allocation3] sm:$0x3]
    %21 = vrot.lane.b32.xlu0 %v20, 56
    %v22 = vpop.permute.xlu0 %21
    %vm23 = vcmask 293888
    %s24 = scalar_lea.vmem [#allocation2], 2
    %25 = vst.msk [vmem:[%s24] ss:$8 sm:$0x3] %vm23, %v22
    %v26 = vld [vmem:[#allocation3] sm:$0x3]
    %s27 = scalar_lea.vmem [#allocation3], 8
    %v28 = vld [vmem:[%s27] sm:$0x3]
    %vm29 = vcmask 883712
    %v30 = vsel %vm29, %v28, %v26
    %31 = vrot.lane.b32.xlu0 %v30, 20
    %v32 = vpop.permute.xlu0 %31
    %vm33 = vcmask 162816
    %s34 = scalar_lea.vmem [#allocation2], 3
    %35 = vst.msk [vmem:[%s34] ss:$8 sm:$0x3] %vm33, %v32
    %vm36 = vcmask 294048
    %s37 = scalar_lea.vmem [#allocation2], 3
    %38 = vst.msk [vmem:[%s37] ss:$8 sm:$0x3] %vm36, %v32
    %s40 = ssub.s32 16, 1
    %v41 = vld [vmem:[#allocation2] sm:%s40]
    %s43 = ssub.s32 16, 1
    %44 = vst [vmem:[#allocation0] sm:%s43] %v41
    %s45 = scalar_lea.vmem [#allocation2], 8
    %v46 = vld [vmem:[%s45] sm:%s40]
    %s48 = ssub.s32 16, 1
    %s49 = scalar_lea.vmem [#allocation0], 4
    %50 = vst [vmem:[%s49] sm:%s48] %v46
    %52 = vsyncadd [#allocation1], 0
    %s54 = sshll.u32 [#allocation0], 4
    %s55 = int_to_ptr.vmem [resolvable:$true] %s54
    %s56 = sshll.u32 %s1, 4
    %s57 = int_to_ptr.hbm [resolvable:$true] %s56
    %59 = dma.vmem_to_hbm [thread:$0]  %s55, 128, %s57, [#allocation1]
    %61 = dma.done [#allocation1], 128
    %62 = vsyncpa [#allocation1], 1

// kernel: _cnn_forward_impl.1
$region0: #{_cnn_forward_impl.1}
  #allocation0 [shape = 'u32[]', space=smem, size = 0x4, offset = 0x4, fixed_abs, tag = 'smem constant byte address 0x4 - core index']
  #allocation1 [shape = 'u32[72,128]{1,0:T(1,128)}', space=vmem, size = 0x9000, scoped, tag = 'internal scratch']
  #allocation2 [shape = 'f32[158,232]{1,0:T(8,128)}', space=vmem, size = 0x28000, scoped, tag = 'scratch operand']
  #allocation3 [shape = 'f32[77,216]{1,0:T(8,128)}', space=vmem, size = 0x14000, scoped, tag = 'scratch operand']
  #allocation4 [shape = 'f32[36,176]{1,0:T(8,128)}', space=vmem, size = 0xa000, scoped, tag = 'scratch operand']
  %s0 = inlined_call_operand.vmem [shape: f32[2,160,60], index: 0, kind: input, shape index: {}]
  %s1 = inlined_call_operand.vmem [shape: bf16[3,60,232], index: 1, kind: input, shape index: {}]
  %s2 = inlined_call_operand.vmem [shape: f32[1,232], index: 2, kind: input, shape index: {}]
  %s3 = inlined_call_operand.vmem [shape: f32[79,157], index: 3, kind: input, shape index: {}]
  %s4 = inlined_call_operand.vmem [shape: f32[231,116], index: 4, kind: input, shape index: {}]
  %s5 = inlined_call_operand.vmem [shape: bf16[3,116,216], index: 5, kind: input, shape index: {}]
  %s6 = inlined_call_operand.vmem [shape: f32[1,216], index: 6, kind: input, shape index: {}]
  %s7 = inlined_call_operand.vmem [shape: f32[38,76], index: 7, kind: input, shape index: {}]
  %s8 = inlined_call_operand.vmem [shape: f32[215,104], index: 8, kind: input, shape index: {}]
  %s9 = inlined_call_operand.vmem [shape: bf16[3,104,176], index: 9, kind: input, shape index: {}]
  %s10 = inlined_call_operand.vmem [shape: f32[1,176], index: 10, kind: input, shape index: {}]
  %s11 = inlined_call_operand.vmem [shape: f32[18,35], index: 11, kind: input, shape index: {}]
  %s12 = inlined_call_operand.vmem [shape: f32[175,80], index: 12, kind: input, shape index: {}]
  %s13 = inlined_call_operand.vmem [shape: bf16[18,80,512], index: 13, kind: input, shape index: {}]
  %s14 = inlined_call_operand.vmem [shape: f32[1,512], index: 14, kind: input, shape index: {}]
  %s15 = inlined_call_operand.vmem [shape: bf16[512,256], index: 15, kind: input, shape index: {}]
  %s16 = inlined_call_operand.vmem [shape: f32[1,256], index: 16, kind: input, shape index: {}]
  %s17 = inlined_call_operand.vmem [shape: f32[2,1,256], index: 17, kind: output, shape index: {}]
  %s18 = sld [smem:[#allocation0]]
  $region101: #{_cnn_forward_impl.1} parent=0
    _
  %s20 = ssub.s32 1, %s18
  %s21 = scalar_select 0, %s20, %s18
  loop: start=0, step=1, limit=4
  $region2: #{_cnn_forward_impl.1} parent=0 // loop_pre_header
    _
  $region3: #{_cnn_forward_impl.1} parent=0 // loop_header
    %s23 = sphi 0, %s27
    %p24 = scmp.ge.s32.totalorder %s23, 4
    %s33 = sphi 0, %s35
    %s36 = sphi 0, %s33
    %s37 = sphi 0, %s36
    %s53 = sphi 0, %s37
    %s57 = sphi 0, %s57
    %s59 = sphi 0, %s57
    %s60 = sphi 0, %s59
    %s74 = sphi 0, %s60
    %s78 = sphi 0, %s78
    %s80 = sphi 0, %s78
    %s81 = sphi 0, %s80
    %s95 = sphi 0, %s81
    %s99 = sphi 0, %s99
    %s101 = sphi 0, %s99
    %s102 = sphi 0, %s101
    %s116 = sphi 0, %s102
    %s120 = sphi 0, %s120
    %s122 = sphi 0, %s120
    %s123 = sphi 0, %s122
    %s137 = sphi 0, %s123
    %s141 = sphi 0, %s141
    %s143 = sphi 0, %s141
    %s144 = sphi 0, %s143
    %s158 = sphi 0, %s144
    %s162 = sphi 0, %s162
    %s164 = sphi 0, %s162
    %s165 = sphi 0, %s164
    %s179 = sphi 0, %s165
    %s183 = sphi 0, %s183
    %s185 = sphi 0, %s183
    %s186 = sphi 0, %s185
    %s200 = sphi 0, %s186
    %s204 = sphi 0, %s204
    %s206 = sphi 0, %s204
    %s207 = sphi 0, %s206
    %s221 = sphi 0, %s207
    %s225 = sphi 0, %s225
    %s227 = sphi 0, %s225
    %s228 = sphi 0, %s227
    %s242 = sphi 0, %s228
    %s246 = sphi 0, %s246
    %s248 = sphi 0, %s246
    %s249 = sphi 0, %s248
    %s263 = sphi 0, %s249
    %s267 = sphi 0, %s267
    %s269 = sphi 0, %s267
    %s270 = sphi 0, %s269
    %s284 = sphi 0, %s270
    %s288 = sphi 0, %s288
    %s290 = sphi 0, %s288
    %s291 = sphi 0, %s290
    %s305 = sphi 0, %s291
    %s309 = sphi 0, %s309
    %s311 = sphi 0, %s309
    %s312 = sphi 0, %s311
    %s326 = sphi 0, %s312
    %s330 = sphi 0, %s330
    %s332 = sphi 0, %s330
    %s333 = sphi 0, %s332
    %s347 = sphi 0, %s333
    %s351 = sphi 0, %s351
    %s353 = sphi 0, %s351
    %s354 = sphi 0, %s353
    %s368 = sphi 0, %s354
    %s372 = sphi 0, %s372
    %s374 = sphi 0, %s372
    %s375 = sphi 0, %s374
    %s389 = sphi 0, %s375
    %s395 = sphi 0, %s397
    %s398 = sphi 0, %s395
    %s399 = sphi 0, %s398
    %s415 = sphi 0, %s399
  $region4: #{_cnn_forward_impl.1} parent=0 // loop_header_branch
    %26 = sbr.rel (%p24) target = $region8
  $region5: #{_cnn_forward_impl.1} parent=0 // loop_body
    %s28 = ssub.s32 %s23, 1
    %s29 = ssub.s32 %s23, 2
    %s30 = sadd.s32 %s23, 1
    %s31 = ssub.s32 %s23, %s30
    %p32 = scmp.eq.s32.totalorder %s31, 0
    %s34 = sadd.s32 %s33, 1
    %s35 = scalar_select %p32, %s33, %s34
    %p38 = pneg %p32
    %p39 = scmp.eq.s32.totalorder %s23, 1
    %p40 = por %p38, %p39
    %p41 = scmp.ne.s32.totalorder %s33, %s36
    %p42 = scmp.eq.s32.totalorder %s23, 0
    %p43 = por %p41, %p42
    %p44 = scmp.ne.s32.totalorder %s33, %s36
    %p45 = scmp.eq.s32.totalorder %s28, 1
    %p46 = por %p44, %p45
    %p47 = scmp.ne.s32.totalorder %s36, %s37
    %p48 = scmp.eq.s32.totalorder %s28, 0
    %p49 = por %p47, %p48
    %p50 = scmp.ne.s32.totalorder %s36, %s37
    %p51 = scmp.eq.s32.totalorder %s29, 1
    %p52 = por %p50, %p51
    %p54 = scmp.ne.s32.totalorder %s37, %s53
    %p55 = scmp.eq.s32.totalorder %s29, 0
    %p56 = por %p54, %p55
    %s58 = sadd.s32 %s57, 1
    %p61 = scmp.eq.s32.totalorder %s23, 1
    %p62 = scmp.ne.s32.totalorder %s57, %s59
    %p63 = scmp.eq.s32.totalorder %s23, 0
    %p64 = por %p62, %p63
    %p65 = scmp.ne.s32.totalorder %s57, %s59
    %p66 = scmp.eq.s32.totalorder %s28, 1
    %p67 = por %p65, %p66
    %p68 = scmp.ne.s32.totalorder %s59, %s60
    %p69 = scmp.eq.s32.totalorder %s28, 0
    %p70 = por %p68, %p69
    %p71 = scmp.ne.s32.totalorder %s59, %s60
    %p72 = scmp.eq.s32.totalorder %s29, 1
    %p73 = por %p71, %p72
    %p75 = scmp.ne.s32.totalorder %s60, %s74
    %p76 = scmp.eq.s32.totalorder %s29, 0
    %p77 = por %p75, %p76
    %s79 = sadd.s32 %s78, 1
    %p82 = scmp.eq.s32.totalorder %s23, 1
    %p83 = scmp.ne.s32.totalorder %s78, %s80
    %p84 = scmp.eq.s32.totalorder %s23, 0
    %p85 = por %p83, %p84
    %p86 = scmp.ne.s32.totalorder %s78, %s80
    %p87 = scmp.eq.s32.totalorder %s28, 1
    %p88 = por %p86, %p87
    %p89 = scmp.ne.s32.totalorder %s80, %s81
    %p90 = scmp.eq.s32.totalorder %s28, 0
    %p91 = por %p89, %p90
    %p92 = scmp.ne.s32.totalorder %s80, %s81
    %p93 = scmp.eq.s32.totalorder %s29, 1
    %p94 = por %p92, %p93
    %p96 = scmp.ne.s32.totalorder %s81, %s95
    %p97 = scmp.eq.s32.totalorder %s29, 0
    %p98 = por %p96, %p97
    %s100 = sadd.s32 %s99, 1
    %p103 = scmp.eq.s32.totalorder %s23, 1
    %p104 = scmp.ne.s32.totalorder %s99, %s101
    %p105 = scmp.eq.s32.totalorder %s23, 0
    %p106 = por %p104, %p105
    %p107 = scmp.ne.s32.totalorder %s99, %s101
    %p108 = scmp.eq.s32.totalorder %s28, 1
    %p109 = por %p107, %p108
    %p110 = scmp.ne.s32.totalorder %s101, %s102
    %p111 = scmp.eq.s32.totalorder %s28, 0
    %p112 = por %p110, %p111
    %p113 = scmp.ne.s32.totalorder %s101, %s102
    %p114 = scmp.eq.s32.totalorder %s29, 1
    %p115 = por %p113, %p114
    %p117 = scmp.ne.s32.totalorder %s102, %s116
    %p118 = scmp.eq.s32.totalorder %s29, 0
    %p119 = por %p117, %p118
    %s121 = sadd.s32 %s120, 1
    %p124 = scmp.eq.s32.totalorder %s23, 1
    %p125 = scmp.ne.s32.totalorder %s120, %s122
    %p126 = scmp.eq.s32.totalorder %s23, 0
    %p127 = por %p125, %p126
    %p128 = scmp.ne.s32.totalorder %s120, %s122
    %p129 = scmp.eq.s32.totalorder %s28, 1
    %p130 = por %p128, %p129
    %p131 = scmp.ne.s32.totalorder %s122, %s123
    %p132 = scmp.eq.s32.totalorder %s28, 0
    %p133 = por %p131, %p132
    %p134 = scmp.ne.s32.totalorder %s122, %s123
    %p135 = scmp.eq.s32.totalorder %s29, 1
    %p136 = por %p134, %p135
    %p138 = scmp.ne.s32.totalorder %s123, %s137
    %p139 = scmp.eq.s32.totalorder %s29, 0
    %p140 = por %p138, %p139
    %s142 = sadd.s32 %s141, 1
    %p145 = scmp.eq.s32.totalorder %s23, 1
    %p146 = scmp.ne.s32.totalorder %s141, %s143
    %p147 = scmp.eq.s32.totalorder %s23, 0
    %p148 = por %p146, %p147
    %p149 = scmp.ne.s32.totalorder %s141, %s143
    %p150 = scmp.eq.s32.totalorder %s28, 1
    %p151 = por %p149, %p150
    %p152 = scmp.ne.s32.totalorder %s143, %s144
    %p153 = scmp.eq.s32.totalorder %s28, 0
    %p154 = por %p152, %p153
    %p155 = scmp.ne.s32.totalorder %s143, %s144
    %p156 = scmp.eq.s32.totalorder %s29, 1
    %p157 = por %p155, %p156
    %p159 = scmp.ne.s32.totalorder %s144, %s158
    %p160 = scmp.eq.s32.totalorder %s29, 0
    %p161 = por %p159, %p160
    %s163 = sadd.s32 %s162, 1
    %p166 = scmp.eq.s32.totalorder %s23, 1
    %p167 = scmp.ne.s32.totalorder %s162, %s164
    %p168 = scmp.eq.s32.totalorder %s23, 0
    %p169 = por %p167, %p168
    %p170 = scmp.ne.s32.totalorder %s162, %s164
    %p171 = scmp.eq.s32.totalorder %s28, 1
    %p172 = por %p170, %p171
    %p173 = scmp.ne.s32.totalorder %s164, %s165
    %p174 = scmp.eq.s32.totalorder %s28, 0
    %p175 = por %p173, %p174
    %p176 = scmp.ne.s32.totalorder %s164, %s165
    %p177 = scmp.eq.s32.totalorder %s29, 1
    %p178 = por %p176, %p177
    %p180 = scmp.ne.s32.totalorder %s165, %s179
    %p181 = scmp.eq.s32.totalorder %s29, 0
    %p182 = por %p180, %p181
    %s184 = sadd.s32 %s183, 1
    %p187 = scmp.eq.s32.totalorder %s23, 1
    %p188 = scmp.ne.s32.totalorder %s183, %s185
    %p189 = scmp.eq.s32.totalorder %s23, 0
    %p190 = por %p188, %p189
    %p191 = scmp.ne.s32.totalorder %s183, %s185
    %p192 = scmp.eq.s32.totalorder %s28, 1
    %p193 = por %p191, %p192
    %p194 = scmp.ne.s32.totalorder %s185, %s186
    %p195 = scmp.eq.s32.totalorder %s28, 0
    %p196 = por %p194, %p195
    %p197 = scmp.ne.s32.totalorder %s185, %s186
    %p198 = scmp.eq.s32.totalorder %s29, 1
    %p199 = por %p197, %p198
    %p201 = scmp.ne.s32.totalorder %s186, %s200
    %p202 = scmp.eq.s32.totalorder %s29, 0
    %p203 = por %p201, %p202
    %s205 = sadd.s32 %s204, 1
    %p208 = scmp.eq.s32.totalorder %s23, 1
    %p209 = scmp.ne.s32.totalorder %s204, %s206
    %p210 = scmp.eq.s32.totalorder %s23, 0
    %p211 = por %p209, %p210
    %p212 = scmp.ne.s32.totalorder %s204, %s206
    %p213 = scmp.eq.s32.totalorder %s28, 1
    %p214 = por %p212, %p213
    %p215 = scmp.ne.s32.totalorder %s206, %s207
    %p216 = scmp.eq.s32.totalorder %s28, 0
    %p217 = por %p215, %p216
    %p218 = scmp.ne.s32.totalorder %s206, %s207
    %p219 = scmp.eq.s32.totalorder %s29, 1
    %p220 = por %p218, %p219
    %p222 = scmp.ne.s32.totalorder %s207, %s221
    %p223 = scmp.eq.s32.totalorder %s29, 0
    %p224 = por %p222, %p223
    %s226 = sadd.s32 %s225, 1
    %p229 = scmp.eq.s32.totalorder %s23, 1
    %p230 = scmp.ne.s32.totalorder %s225, %s227
    %p231 = scmp.eq.s32.totalorder %s23, 0
    %p232 = por %p230, %p231
    %p233 = scmp.ne.s32.totalorder %s225, %s227
    %p234 = scmp.eq.s32.totalorder %s28, 1
    %p235 = por %p233, %p234
    %p236 = scmp.ne.s32.totalorder %s227, %s228
    %p237 = scmp.eq.s32.totalorder %s28, 0
    %p238 = por %p236, %p237
    %p239 = scmp.ne.s32.totalorder %s227, %s228
    %p240 = scmp.eq.s32.totalorder %s29, 1
    %p241 = por %p239, %p240
    %p243 = scmp.ne.s32.totalorder %s228, %s242
    %p244 = scmp.eq.s32.totalorder %s29, 0
    %p245 = por %p243, %p244
    %s247 = sadd.s32 %s246, 1
    %p250 = scmp.eq.s32.totalorder %s23, 1
    %p251 = scmp.ne.s32.totalorder %s246, %s248
    %p252 = scmp.eq.s32.totalorder %s23, 0
    %p253 = por %p251, %p252
    %p254 = scmp.ne.s32.totalorder %s246, %s248
    %p255 = scmp.eq.s32.totalorder %s28, 1
    %p256 = por %p254, %p255
    %p257 = scmp.ne.s32.totalorder %s248, %s249
    %p258 = scmp.eq.s32.totalorder %s28, 0
    %p259 = por %p257, %p258
    %p260 = scmp.ne.s32.totalorder %s248, %s249
    %p261 = scmp.eq.s32.totalorder %s29, 1
    %p262 = por %p260, %p261
    %p264 = scmp.ne.s32.totalorder %s249, %s263
    %p265 = scmp.eq.s32.totalorder %s29, 0
    %p266 = por %p264, %p265
    %s268 = sadd.s32 %s267, 1
    %p271 = scmp.eq.s32.totalorder %s23, 1
    %p272 = scmp.ne.s32.totalorder %s267, %s269
    %p273 = scmp.eq.s32.totalorder %s23, 0
    %p274 = por %p272, %p273
    %p275 = scmp.ne.s32.totalorder %s267, %s269
    %p276 = scmp.eq.s32.totalorder %s28, 1
    %p277 = por %p275, %p276
    %p278 = scmp.ne.s32.totalorder %s269, %s270
    %p279 = scmp.eq.s32.totalorder %s28, 0
    %p280 = por %p278, %p279
    %p281 = scmp.ne.s32.totalorder %s269, %s270
    %p282 = scmp.eq.s32.totalorder %s29, 1
    %p283 = por %p281, %p282
    %p285 = scmp.ne.s32.totalorder %s270, %s284
    %p286 = scmp.eq.s32.totalorder %s29, 0
    %p287 = por %p285, %p286
    %s289 = sadd.s32 %s288, 1
    %p292 = scmp.eq.s32.totalorder %s23, 1
    %p293 = scmp.ne.s32.totalorder %s288, %s290
    %p294 = scmp.eq.s32.totalorder %s23, 0
    %p295 = por %p293, %p294
    %p296 = scmp.ne.s32.totalorder %s288, %s290
    %p297 = scmp.eq.s32.totalorder %s28, 1
    %p298 = por %p296, %p297
    %p299 = scmp.ne.s32.totalorder %s290, %s291
    %p300 = scmp.eq.s32.totalorder %s28, 0
    %p301 = por %p299, %p300
    %p302 = scmp.ne.s32.totalorder %s290, %s291
    %p303 = scmp.eq.s32.totalorder %s29, 1
    %p304 = por %p302, %p303
    %p306 = scmp.ne.s32.totalorder %s291, %s305
    %p307 = scmp.eq.s32.totalorder %s29, 0
    %p308 = por %p306, %p307
    %s310 = sadd.s32 %s309, 1
    %p313 = scmp.eq.s32.totalorder %s23, 1
    %p314 = scmp.ne.s32.totalorder %s309, %s311
    %p315 = scmp.eq.s32.totalorder %s23, 0
    %p316 = por %p314, %p315
    %p317 = scmp.ne.s32.totalorder %s309, %s311
    %p318 = scmp.eq.s32.totalorder %s28, 1
    %p319 = por %p317, %p318
    %p320 = scmp.ne.s32.totalorder %s311, %s312
    %p321 = scmp.eq.s32.totalorder %s28, 0
    %p322 = por %p320, %p321
    %p323 = scmp.ne.s32.totalorder %s311, %s312
    %p324 = scmp.eq.s32.totalorder %s29, 1
    %p325 = por %p323, %p324
    %p327 = scmp.ne.s32.totalorder %s312, %s326
    %p328 = scmp.eq.s32.totalorder %s29, 0
    %p329 = por %p327, %p328
    %s331 = sadd.s32 %s330, 1
    %p334 = scmp.eq.s32.totalorder %s23, 1
    %p335 = scmp.ne.s32.totalorder %s330, %s332
    %p336 = scmp.eq.s32.totalorder %s23, 0
    %p337 = por %p335, %p336
    %p338 = scmp.ne.s32.totalorder %s330, %s332
    %p339 = scmp.eq.s32.totalorder %s28, 1
    %p340 = por %p338, %p339
    %p341 = scmp.ne.s32.totalorder %s332, %s333
    %p342 = scmp.eq.s32.totalorder %s28, 0
    %p343 = por %p341, %p342
    %p344 = scmp.ne.s32.totalorder %s332, %s333
    %p345 = scmp.eq.s32.totalorder %s29, 1
    %p346 = por %p344, %p345
    %p348 = scmp.ne.s32.totalorder %s333, %s347
    %p349 = scmp.eq.s32.totalorder %s29, 0
    %p350 = por %p348, %p349
    %s352 = sadd.s32 %s351, 1
    %p355 = scmp.eq.s32.totalorder %s23, 1
    %p356 = scmp.ne.s32.totalorder %s351, %s353
    %p357 = scmp.eq.s32.totalorder %s23, 0
    %p358 = por %p356, %p357
    %p359 = scmp.ne.s32.totalorder %s351, %s353
    %p360 = scmp.eq.s32.totalorder %s28, 1
    %p361 = por %p359, %p360
    %p362 = scmp.ne.s32.totalorder %s353, %s354
    %p363 = scmp.eq.s32.totalorder %s28, 0
    %p364 = por %p362, %p363
    %p365 = scmp.ne.s32.totalorder %s353, %s354
    %p366 = scmp.eq.s32.totalorder %s29, 1
    %p367 = por %p365, %p366
    %p369 = scmp.ne.s32.totalorder %s354, %s368
    %p370 = scmp.eq.s32.totalorder %s29, 0
    %p371 = por %p369, %p370
    %s373 = sadd.s32 %s372, 1
    %p376 = scmp.eq.s32.totalorder %s23, 1
    %p377 = scmp.ne.s32.totalorder %s372, %s374
    %p378 = scmp.eq.s32.totalorder %s23, 0
    %p379 = por %p377, %p378
    %p380 = scmp.ne.s32.totalorder %s372, %s374
    %p381 = scmp.eq.s32.totalorder %s28, 1
    %p382 = por %p380, %p381
    %p383 = scmp.ne.s32.totalorder %s374, %s375
    %p384 = scmp.eq.s32.totalorder %s28, 0
    %p385 = por %p383, %p384
    %p386 = scmp.ne.s32.totalorder %s374, %s375
    %p387 = scmp.eq.s32.totalorder %s29, 1
    %p388 = por %p386, %p387
    %p390 = scmp.ne.s32.totalorder %s375, %s389
    %p391 = scmp.eq.s32.totalorder %s29, 0
    %p392 = por %p390, %p391
    %s393 = ssub.s32 %s23, %s30
    %p394 = scmp.eq.s32.totalorder %s393, 0
    %s396 = sadd.s32 %s395, 1
    %s397 = scalar_select %p394, %s395, %s396
    %p400 = pneg %p394
    %p401 = scmp.eq.s32.totalorder %s23, 1
    %p402 = por %p400, %p401
    %p403 = scmp.ne.s32.totalorder %s395, %s398
    %p404 = scmp.eq.s32.totalorder %s23, 0
    %p405 = por %p403, %p404
    %p406 = scmp.ne.s32.totalorder %s395, %s398
    %p407 = scmp.eq.s32.totalorder %s28, 1
    %p408 = por %p406, %p407
    %p409 = scmp.ne.s32.totalorder %s398, %s399
    %p410 = scmp.eq.s32.totalorder %s28, 0
    %p411 = por %p409, %p410
    %p412 = scmp.ne.s32.totalorder %s398, %s399
    %p413 = scmp.eq.s32.totalorder %s29, 1
    %p414 = por %p412, %p413
    %p416 = scmp.ne.s32.totalorder %s399, %s415
    %p417 = scmp.eq.s32.totalorder %s29, 0
    %p418 = por %p416, %p417
    %p419 = scmp.le.s32.totalorder 1, %s23
    %p420 = scmp.lt.s32.totalorder %s23, 3
    %p421 = pnand %p419, %p420
    %p422 = pneg %p421
    // Predicated region
    $region9: #{_cnn_forward_impl.1} parent=5 // pred_check
      _
    $region10: #{_cnn_forward_impl.1} parent=5 // pred_check_branch
      %424 = sbr.rel (%p421) target = $region12
    $region11: #{_cnn_forward_impl.1} parent=5 // pred_region
      %s425 = ssub.s32 %s23, 1
      // Predicated region
      $region13: #{_cnn_forward_impl.1} parent=11 // pred_check
        %p426 = pneg %p70
      $region14: #{_cnn_forward_impl.1} parent=11 // pred_check_branch
        %428 = sbr.rel (%p426) target = $region16
      $region15: #{_cnn_forward_impl.1} parent=11 // pred_region
        _
      $region16: #{_cnn_forward_impl.1} parent=11 // pred_fallthru
        _
      // Predicated region
      $region17: #{_cnn_forward_impl.1} parent=11 // pred_check
        %p429 = pneg %p91
      $region18: #{_cnn_forward_impl.1} parent=11 // pred_check_branch
        %431 = sbr.rel (%p429) target = $region20
      $region19: #{_cnn_forward_impl.1} parent=11 // pred_region
        _
      $region20: #{_cnn_forward_impl.1} parent=11 // pred_fallthru
        _
      // Predicated region
      $region21: #{_cnn_forward_impl.1} parent=11 // pred_check
        %p432 = pneg %p112
      $region22: #{_cnn_forward_impl.1} parent=11 // pred_check_branch
        %434 = sbr.rel (%p432) target = $region24
      $region23: #{_cnn_forward_impl.1} parent=11 // pred_region
        _
      $region24: #{_cnn_forward_impl.1} parent=11 // pred_fallthru
        _
      // Predicated region
      $region25: #{_cnn_forward_impl.1} parent=11 // pred_check
        %p435 = pneg %p133
      $region26: #{_cnn_forward_impl.1} parent=11 // pred_check_branch
        %437 = sbr.rel (%p435) target = $region28
      $region27: #{_cnn_forward_impl.1} parent=11 // pred_region
        _
      $region28: #{_cnn_forward_impl.1} parent=11 // pred_fallthru
        _
      // Predicated region
      $region29: #{_cnn_forward_impl.1} parent=11 // pred_check
        %p438 = pneg %p154
      $region30: #{_cnn_forward_impl.1} parent=11 // pred_check_branch
        %440 = sbr.rel (%p438) target = $region32
      $region31: #{_cnn_forward_impl.1} parent=11 // pred_region
        _
      $region32: #{_cnn_forward_impl.1} parent=11 // pred_fallthru
        _
      // Predicated region
      $region33: #{_cnn_forward_impl.1} parent=11 // pred_check
        %p441 = pneg %p175
      $region34: #{_cnn_forward_impl.1} parent=11 // pred_check_branch
        %443 = sbr.rel (%p441) target = $region36
      $region35: #{_cnn_forward_impl.1} parent=11 // pred_region
        _
      $region36: #{_cnn_forward_impl.1} parent=11 // pred_fallthru
        _
      // Predicated region
      $region37: #{_cnn_forward_impl.1} parent=11 // pred_check
        %p444 = pneg %p196
      $region38: #{_cnn_forward_impl.1} parent=11 // pred_check_branch
        %446 = sbr.rel (%p444) target = $region40
      $region39: #{_cnn_forward_impl.1} parent=11 // pred_region
        _
      $region40: #{_cnn_forward_impl.1} parent=11 // pred_fallthru
        _
      // Predicated region
      $region41: #{_cnn_forward_impl.1} parent=11 // pred_check
        %p447 = pneg %p217
      $region42: #{_cnn_forward_impl.1} parent=11 // pred_check_branch
        %449 = sbr.rel (%p447) target = $region44
      $region43: #{_cnn_forward_impl.1} parent=11 // pred_region
        _
      $region44: #{_cnn_forward_impl.1} parent=11 // pred_fallthru
        _
      // Predicated region
      $region45: #{_cnn_forward_impl.1} parent=11 // pred_check
        %p450 = pneg %p238
      $region46: #{_cnn_forward_impl.1} parent=11 // pred_check_branch
        %452 = sbr.rel (%p450) target = $region48
      $region47: #{_cnn_forward_impl.1} parent=11 // pred_region
        _
      $region48: #{_cnn_forward_impl.1} parent=11 // pred_fallthru
        _
      // Predicated region
      $region49: #{_cnn_forward_impl.1} parent=11 // pred_check
        %p453 = pneg %p259
      $region50: #{_cnn_forward_impl.1} parent=11 // pred_check_branch
        %455 = sbr.rel (%p453) target = $region52
      $region51: #{_cnn_forward_impl.1} parent=11 // pred_region
        _
      $region52: #{_cnn_forward_impl.1} parent=11 // pred_fallthru
        _
      // Predicated region
      $region53: #{_cnn_forward_impl.1} parent=11 // pred_check
        %p456 = pneg %p280
      $region54: #{_cnn_forward_impl.1} parent=11 // pred_check_branch
        %458 = sbr.rel (%p456) target = $region56
      $region55: #{_cnn_forward_impl.1} parent=11 // pred_region
        _
      $region56: #{_cnn_forward_impl.1} parent=11 // pred_fallthru
        _
      // Predicated region
      $region57: #{_cnn_forward_impl.1} parent=11 // pred_check
        %p459 = pneg %p301
      $region58: #{_cnn_forward_impl.1} parent=11 // pred_check_branch
        %461 = sbr.rel (%p459) target = $region60
      $region59: #{_cnn_forward_impl.1} parent=11 // pred_region
        _
      $region60: #{_cnn_forward_impl.1} parent=11 // pred_fallthru
        _
      // Predicated region
      $region61: #{_cnn_forward_impl.1} parent=11 // pred_check
        %p462 = pneg %p322
      $region62: #{_cnn_forward_impl.1} parent=11 // pred_check_branch
        %464 = sbr.rel (%p462) target = $region64
      $region63: #{_cnn_forward_impl.1} parent=11 // pred_region
        _
      $region64: #{_cnn_forward_impl.1} parent=11 // pred_fallthru
        _
      // Predicated region
      $region65: #{_cnn_forward_impl.1} parent=11 // pred_check
        %p465 = pneg %p343
      $region66: #{_cnn_forward_impl.1} parent=11 // pred_check_branch
        %467 = sbr.rel (%p465) target = $region68
      $region67: #{_cnn_forward_impl.1} parent=11 // pred_region
        _
      $region68: #{_cnn_forward_impl.1} parent=11 // pred_fallthru
        _
      // Predicated region
      $region69: #{_cnn_forward_impl.1} parent=11 // pred_check
        %p468 = pneg %p364
      $region70: #{_cnn_forward_impl.1} parent=11 // pred_check_branch
        %470 = sbr.rel (%p468) target = $region72
      $region71: #{_cnn_forward_impl.1} parent=11 // pred_region
        _
      $region72: #{_cnn_forward_impl.1} parent=11 // pred_fallthru
        _
      // Predicated region
      $region73: #{_cnn_forward_impl.1} parent=11 // pred_check
        %p471 = pneg %p385
      $region74: #{_cnn_forward_impl.1} parent=11 // pred_check_branch
        %473 = sbr.rel (%p471) target = $region76
      $region75: #{_cnn_forward_impl.1} parent=11 // pred_region
        _
      $region76: #{_cnn_forward_impl.1} parent=11 // pred_fallthru
        _
    $region12: #{_cnn_forward_impl.1} parent=5 // pred_fallthru
      _
    %p474 = scmp.lt.s32.totalorder %s23, 2
    // Predicated region
    $region77: #{_cnn_forward_impl.1} parent=5 // pred_check
      %p475 = pneg %p474
    $region78: #{_cnn_forward_impl.1} parent=5 // pred_check_branch
      %477 = sbr.rel (%p475) target = $region80
    $region79: #{_cnn_forward_impl.1} parent=5 // pred_region
      // Predicated region
      $region81: #{_cnn_forward_impl.1} parent=79 // pred_check
        %p478 = pneg %p43
      $region82: #{_cnn_forward_impl.1} parent=79 // pred_check_branch
        %480 = sbr.rel (%p478) target = $region84
      $region83: #{_cnn_forward_impl.1} parent=79 // pred_region
        %p481 = scmp.lt.s32.totalorder %s23, 1
        %s482 = scalar_select %p481, %s23, 1
        %s483 = smul.addr %s482, 20
        %s484 = smul.addr %s483, 8
        %s485 = scalar_lea.vmem %s0, %s484
      $region84: #{_cnn_forward_impl.1} parent=79 // pred_fallthru
        _
    $region80: #{_cnn_forward_impl.1} parent=5 // pred_fallthru
      _
    %p486 = scmp.le.s32.totalorder 1, %s23
    %p487 = scmp.lt.s32.totalorder %s23, 3
    %p488 = pnand %p486, %p487
    %p489 = pneg %p488
    // Predicated region
    $region85: #{_cnn_forward_impl.1} parent=5 // pred_check
      _
    $region86: #{_cnn_forward_impl.1} parent=5 // pred_check_branch
      %491 = sbr.rel (%p488) target = $region88
    $region87: #{_cnn_forward_impl.1} parent=5 // pred_region
      %s492 = ssub.s32 %s23, 1
      %p493 = scmp.lt.s32.totalorder %s28, 1
      %s494 = scalar_select %p493, %s28, 1
      %s495 = smul.addr %s494, 20
      %s496 = smul.addr %s495, 8
      %s497 = scalar_lea.vmem %s0, %s496
      %p498 = pneg %p49
      %p499 = pneg %p46
      %p500 = pneg %p70
      %p501 = pneg %p67
      %p502 = pneg %p91
      %p503 = pneg %p88
      %p504 = pneg %p112
      %p505 = pneg %p109
      %p506 = pneg %p133
      %p507 = pneg %p130
      %p508 = pneg %p154
      %p509 = pneg %p151
      %p510 = pneg %p175
      %p511 = pneg %p172
      %p512 = pneg %p196
      %p513 = pneg %p193
      %p514 = pneg %p217
      %p515 = pneg %p214
      %p516 = pneg %p238
      %p517 = pneg %p235
      %p518 = pneg %p259
      %p519 = pneg %p256
      %p520 = pneg %p280
      %p521 = pneg %p277
      %p522 = pneg %p301
      %p523 = pneg %p298
      %p524 = pneg %p322
      %p525 = pneg %p319
      %p526 = pneg %p343
      %p527 = pneg %p340
      %p528 = pneg %p364
      %p529 = pneg %p361
      %p530 = pneg %p385
      %p531 = pneg %p382
      %p532 = pneg %p411
      %p533 = pneg %p408
      %p534 = scmp.lt.s32.totalorder %s28, 1
      %s535 = scalar_select %p534, %s28, 1
      %s536 = smul.addr %s535, 2
      %s537 = scalar_lea.vmem %s17, %s536
      %p538 = scmp.lt.s32.totalorder %s28, 1
      %s539 = scalar_select %p538, %s28, 1
      %s540 = smul.addr %s539, 20
      %s541 = smul.addr %s540, 8
      %s542 = scalar_lea.vmem %s0, %s541
      %p543 = scmp.lt.s32.totalorder %s28, 1
      %s544 = scalar_select %p543, %s28, 1
      %s545 = smul.addr %s544, 2
      %s546 = scalar_lea.vmem %s17, %s545
      %v548 = vld [vmem:[%s542] sm:$0xff]
      %v549 = vld [vmem:[%s542 + $0x8] sm:$0xff]
      %v550 = vld [vmem:[%s542 + $0x10] sm:$0xff]
      %v551 = vld [vmem:[%s542 + $0x18] sm:$0xff]
      %v552 = vld [vmem:[%s542 + $0x20] sm:$0xff]
      %v553 = vld [vmem:[%s542 + $0x28] sm:$0xff]
      %v554 = vld [vmem:[%s542 + $0x30] sm:$0xff]
      %v555 = vld [vmem:[%s542 + $0x38] sm:$0xff]
      %v556 = vld [vmem:[%s542 + $0x40] sm:$0xff]
      %v557 = vld [vmem:[%s542 + $0x48] sm:$0xff]
      %v558 = vld [vmem:[%s542 + $0x50] sm:$0xff]
      %v559 = vld [vmem:[%s542 + $0x58] sm:$0xff]
      %v560 = vld [vmem:[%s542 + $0x60] sm:$0xff]
      %v561 = vld [vmem:[%s542 + $0x68] sm:$0xff]
      %v562 = vld [vmem:[%s542 + $0x70] sm:$0xff]
      %v563 = vld [vmem:[%s542 + $0x78] sm:$0xff]
      %v564 = vld [vmem:[%s542 + $0x80] sm:$0xff]
      %v565 = vld [vmem:[%s542 + $0x88] sm:$0xff]
      %v566 = vld [vmem:[%s542 + $0x90] sm:$0xff]
      %v567 = vld [vmem:[%s542 + $0x98] sm:$0x3f]
      %v568 = vpack.c.bf16 %v549, %v548
      %v569 = vpack.c.bf16 %v551, %v550
      %v570 = vpack.c.bf16 %v553, %v552
      %v571 = vpack.c.bf16 %v555, %v554
      %v572 = vpack.c.bf16 %v557, %v556
      %v573 = vpack.c.bf16 %v559, %v558
      %v574 = vpack.c.bf16 %v561, %v560
      %v575 = vpack.c.bf16 %v563, %v562
      %v576 = vpack.c.bf16 %v565, %v564
      %v577 = vpack.c.bf16 %v567, %v566
      %v578 = vld [vmem:[%s1] sm:$0xff]
      %v579 = vld [vmem:[%s1 + $0x8] sm:$0xff]
      %v580 = vld [vmem:[%s1 + $0x10] sm:$0xff]
      %v581 = vld [vmem:[%s1 + $0x18] sm:$0xff]
      %v582 = vld [vmem:[%s1 + $0x20] sm:$0xff]
      %v583 = vld [vmem:[%s1 + $0x28] sm:$0xff]
      %v584 = vld [vmem:[%s1 + $0x30] sm:$0xff]
      %v585 = vld [vmem:[%s1 + $0x38] sm:$0x33]
      %v586 = vld [vmem:[%s2] sm:$0x3]
      %v588 = vperm.slane %v586, 0
      %v589 = vperm.slane %v586, 1
      %v600 = vunpack.c.l.b16 %v578
      %v601 = vunpack.c.h.b16 %v578
      %v602 = vunpack.c.l.b16 %v579
      %v603 = vunpack.c.h.b16 %v579
      %v604 = vunpack.c.l.b16 %v580
      %v605 = vunpack.c.h.b16 %v580
      %v606 = vunpack.c.l.b16 %v581
      %v607 = vunpack.c.h.b16 %v581
      %v608 = vunpack.c.l.b16 %v582
      %v609 = vunpack.c.h.b16 %v582
      %v610 = vunpack.c.l.b16 %v583
      %v611 = vunpack.c.h.b16 %v583
      %v612 = vunpack.c.l.b16 %v584
      %v613 = vunpack.c.h.b16 %v584
      %v614 = vunpack.c.l.b16 %v585
      %v615 = vunpack.c.h.b16 %v585
      %v616 = vpack.c.b16 %v602, %v600
      %v617 = vpack.c.b16 %v603, %v601
      %v618 = vpack.c.b16 %v606, %v604
      %v619 = vpack.c.b16 %v607, %v605
      %v620 = vpack.c.b16 %v610, %v608
      %v621 = vpack.c.b16 %v611, %v609
      %v622 = vpack.c.b16 %v614, %v612
      %v623 = vpack.c.b16 %v615, %v613
      %vm630 = vcmask 490496
      %v632 = vsel %vm630, %v568, 0
      %v635 = vsel %vm630, %v569, 0
      %v638 = vsel %vm630, %v570, 0
      %v641 = vsel %vm630, %v571, 0
      %v644 = vsel %vm630, %v572, 0
      %v647 = vsel %vm630, %v573, 0
      %v650 = vsel %vm630, %v574, 0
      %v653 = vsel %vm630, %v575, 0
      %v656 = vsel %vm630, %v576, 0
      %v659 = vsel %vm630, %v577, 0
      %vm661 = vcmask 1045504
      %v663 = vsel %vm661, %v622, 0
      %v666 = vsel %vm661, %v623, 0
      %668 = vmatpush.bf16.msra.mxu0 0
      %669 = vmatpush.bf16.msra.mxu0 0
      %670 = vmatpush.bf16.msra.mxu0 0
      %671 = vmatpush.bf16.msra.mxu0 0
      %672 = vmatpush.bf16.msra.mxu0 %v663
      %673 = vmatpush.bf16.msra.mxu0 %v620
      %674 = vmatpush.bf16.msra.mxu0 %v618
      %675 = vmatpush.bf16.msra.mxu0 %v616
      %676 = vmatmul.bf16.gmra.mxu0 %v632
      %v677 = vpop.f32.mrf.mxu0
      %v678 = vadd.f32 %v588, %v677
      %v679 = vpop.f32.mrf.mxu0
      %v680 = vadd.f32 %v588, %v679
      %681 = vmatmul.bf16.gmra.mxu0 %v635
      %v682 = vpop.f32.mrf.mxu0
      %v683 = vadd.f32 %v588, %v682
      %v684 = vpop.f32.mrf.mxu0
      %v685 = vadd.f32 %v588, %v684
      %686 = vmatmul.bf16.gmra.mxu0 %v638
      %v687 = vpop.f32.mrf.mxu0
      %v688 = vadd.f32 %v588, %v687
      %v689 = vpop.f32.mrf.mxu0
      %v690 = vadd.f32 %v588, %v689
      %691 = vmatmul.bf16.gmra.mxu0 %v641
      %v692 = vpop.f32.mrf.mxu0
      %v693 = vadd.f32 %v588, %v692
      %v694 = vpop.f32.mrf.mxu0
      %v695 = vadd.f32 %v588, %v694
      %696 = vmatmul.bf16.gmra.mxu0 %v644
      %v697 = vpop.f32.mrf.mxu0
      %v698 = vadd.f32 %v588, %v697
      %v699 = vpop.f32.mrf.mxu0
      %v700 = vadd.f32 %v588, %v699
      %701 = vmatmul.bf16.gmra.mxu0 %v647
      %v702 = vpop.f32.mrf.mxu0
      %v703 = vadd.f32 %v588, %v702
      %v704 = vpop.f32.mrf.mxu0
      %v705 = vadd.f32 %v588, %v704
      %706 = vmatmul.bf16.gmra.mxu0 %v650
      %v707 = vpop.f32.mrf.mxu0
      %v708 = vadd.f32 %v588, %v707
      %v709 = vpop.f32.mrf.mxu0
      %v710 = vadd.f32 %v588, %v709
      %711 = vmatmul.bf16.gmra.mxu0 %v653
      %v712 = vpop.f32.mrf.mxu0
      %v713 = vadd.f32 %v588, %v712
      %v714 = vpop.f32.mrf.mxu0
      %v715 = vadd.f32 %v588, %v714
      %716 = vmatmul.bf16.gmra.mxu0 %v656
      %v717 = vpop.f32.mrf.mxu0
      %v718 = vadd.f32 %v588, %v717
      %v719 = vpop.f32.mrf.mxu0
      %v720 = vadd.f32 %v588, %v719
      %721 = vmatmul.bf16.gmra.mxu0 %v659
      %v722 = vpop.f32.mrf.mxu0
      %v723 = vadd.f32 %v588, %v722
      %v724 = vpop.f32.mrf.mxu0
      %v725 = vadd.f32 %v588, %v724
      %726 = vdwg.mxu0
      %727 = vmatpush.bf16.msra.mxu0 0
      %728 = vmatpush.bf16.msra.mxu0 0
      %729 = vmatpush.bf16.msra.mxu0 0
      %730 = vmatpush.bf16.msra.mxu0 0
      %731 = vmatpush.bf16.msra.mxu0 %v666
      %732 = vmatpush.bf16.msra.mxu0 %v621
      %733 = vmatpush.bf16.msra.mxu0 %v619
      %734 = vmatpush.bf16.msra.mxu0 %v617
      %735 = vmatmul.bf16.gmra.mxu0 %v632
      %v736 = vpop.f32.mrf.mxu0
      %v737 = vadd.f32 %v589, %v736
      %v738 = vpop.f32.mrf.mxu0
      %v739 = vadd.f32 %v589, %v738
      %740 = vmatmul.bf16.gmra.mxu0 %v635
      %v741 = vpop.f32.mrf.mxu0
      %v742 = vadd.f32 %v589, %v741
      %v743 = vpop.f32.mrf.mxu0
      %v744 = vadd.f32 %v589, %v743
      %745 = vmatmul.bf16.gmra.mxu0 %v638
      %v746 = vpop.f32.mrf.mxu0
      %v747 = vadd.f32 %v589, %v746
      %v748 = vpop.f32.mrf.mxu0
      %v749 = vadd.f32 %v589, %v748
      %750 = vmatmul.bf16.gmra.mxu0 %v641
      %v751 = vpop.f32.mrf.mxu0
      %v752 = vadd.f32 %v589, %v751
      %v753 = vpop.f32.mrf.mxu0
      %v754 = vadd.f32 %v589, %v753
      %755 = vmatmul.bf16.gmra.mxu0 %v644
      %v756 = vpop.f32.mrf.mxu0
      %v757 = vadd.f32 %v589, %v756
      %v758 = vpop.f32.mrf.mxu0
      %v759 = vadd.f32 %v589, %v758
      %760 = vmatmul.bf16.gmra.mxu0 %v647
      %v761 = vpop.f32.mrf.mxu0
      %v762 = vadd.f32 %v589, %v761
      %v763 = vpop.f32.mrf.mxu0
      %v764 = vadd.f32 %v589, %v763
      %765 = vmatmul.bf16.gmra.mxu0 %v650
      %v766 = vpop.f32.mrf.mxu0
      %v767 = vadd.f32 %v589, %v766
      %v768 = vpop.f32.mrf.mxu0
      %v769 = vadd.f32 %v589, %v768
      %770 = vmatmul.bf16.gmra.mxu0 %v653
      %v771 = vpop.f32.mrf.mxu0
      %v772 = vadd.f32 %v589, %v771
      %v773 = vpop.f32.mrf.mxu0
      %v774 = vadd.f32 %v589, %v773
      %775 = vmatmul.bf16.gmra.mxu0 %v656
      %v776 = vpop.f32.mrf.mxu0
      %v777 = vadd.f32 %v589, %v776
      %v778 = vpop.f32.mrf.mxu0
      %v779 = vadd.f32 %v589, %v778
      %780 = vmatmul.bf16.gmra.mxu0 %v659
      %v781 = vpop.f32.mrf.mxu0
      %v782 = vadd.f32 %v589, %v781
      %v783 = vpop.f32.mrf.mxu0
      %v784 = vadd.f32 %v589, %v783
      %785 = vdwg.mxu0
      %786 = vst [vmem:[#allocation2] sm:$0xff] %v678
      %vm787 = vcmask 850944
      %788 = vst.msk [vmem:[#allocation2 + $0x8] sm:$0xff] %vm787, %v737
      %789 = vst [vmem:[#allocation2 + $0x10] sm:$0xff] %v680
      %790 = vst.msk [vmem:[#allocation2 + $0x18] sm:$0xff] %vm787, %v739
      %791 = vst [vmem:[#allocation2 + $0x20] sm:$0xff] %v683
      %792 = vst.msk [vmem:[#allocation2 + $0x28] sm:$0xff] %vm787, %v742
      %793 = vst [vmem:[#allocation2 + $0x30] sm:$0xff] %v685
      %794 = vst.msk [vmem:[#allocation2 + $0x38] sm:$0xff] %vm787, %v744
      %795 = vst [vmem:[#allocation2 + $0x40] sm:$0xff] %v688
      %796 = vst.msk [vmem:[#allocation2 + $0x48] sm:$0xff] %vm787, %v747
      %797 = vst [vmem:[#allocation2 + $0x50] sm:$0xff] %v690
      %798 = vst.msk [vmem:[#allocation2 + $0x58] sm:$0xff] %vm787, %v749
      %799 = vst [vmem:[#allocation2 + $0x60] sm:$0xff] %v693
      %800 = vst.msk [vmem:[#allocation2 + $0x68] sm:$0xff] %vm787, %v752
      %801 = vst [vmem:[#allocation2 + $0x70] sm:$0xff] %v695
      %802 = vst.msk [vmem:[#allocation2 + $0x78] sm:$0xff] %vm787, %v754
      %803 = vst [vmem:[#allocation2 + $0x80] sm:$0xff] %v698
      %804 = vst.msk [vmem:[#allocation2 + $0x88] sm:$0xff] %vm787, %v757
      %805 = vst [vmem:[#allocation2 + $0x90] sm:$0xff] %v700
      %806 = vst.msk [vmem:[#allocation2 + $0x98] sm:$0xff] %vm787, %v759
      %807 = vst [vmem:[#allocation2 + $0xa0] sm:$0xff] %v703
      %808 = vst.msk [vmem:[#allocation2 + $0xa8] sm:$0xff] %vm787, %v762
      %809 = vst [vmem:[#allocation2 + $0xb0] sm:$0xff] %v705
      %810 = vst.msk [vmem:[#allocation2 + $0xb8] sm:$0xff] %vm787, %v764
      %811 = vst [vmem:[#allocation2 + $0xc0] sm:$0xff] %v708
      %812 = vst.msk [vmem:[#allocation2 + $0xc8] sm:$0xff] %vm787, %v767
      %813 = vst [vmem:[#allocation2 + $0xd0] sm:$0xff] %v710
      %814 = vst.msk [vmem:[#allocation2 + $0xd8] sm:$0xff] %vm787, %v769
      %815 = vst [vmem:[#allocation2 + $0xe0] sm:$0xff] %v713
      %816 = vst.msk [vmem:[#allocation2 + $0xe8] sm:$0xff] %vm787, %v772
      %817 = vst [vmem:[#allocation2 + $0xf0] sm:$0xff] %v715
      %818 = vst.msk [vmem:[#allocation2 + $0xf8] sm:$0xff] %vm787, %v774
      %819 = vst [vmem:[#allocation2 + $0x100] sm:$0xff] %v718
      %820 = vst.msk [vmem:[#allocation2 + $0x108] sm:$0xff] %vm787, %v777
      %821 = vst [vmem:[#allocation2 + $0x110] sm:$0xff] %v720
      %822 = vst.msk [vmem:[#allocation2 + $0x118] sm:$0xff] %vm787, %v779
      %823 = vst [vmem:[#allocation2 + $0x120] sm:$0xff] %v723
      %824 = vst.msk [vmem:[#allocation2 + $0x128] sm:$0xff] %vm787, %v782
      %825 = vst [vmem:[#allocation2 + $0x130] sm:$0x3f] %v725
      %vm826 = vcmask 848896
      %827 = vst.msk [vmem:[#allocation2 + $0x138] sm:$0x3f] %vm826, %v784
      %v828 = vld [vmem:[#allocation2] sm:$0xff]
      %v829 = vld [vmem:[#allocation2 + $0x8] sm:$0xff]
      %v830 = vld [vmem:[#allocation2 + $0x10] sm:$0xff]
      %v831 = vld [vmem:[#allocation2 + $0x18] sm:$0xff]
      %v832 = vld [vmem:[#allocation2 + $0x20] sm:$0xff]
      %v833 = vld [vmem:[#allocation2 + $0x28] sm:$0xff]
      %v834 = vld [vmem:[#allocation2 + $0x30] sm:$0xff]
      %v835 = vld [vmem:[#allocation2 + $0x38] sm:$0xff]
      %v836 = vld [vmem:[#allocation2 + $0x40] sm:$0xff]
      %v837 = vld [vmem:[#allocation2 + $0x48] sm:$0xff]
      %v838 = vld [vmem:[#allocation2 + $0x50] sm:$0xff]
      %v839 = vld [vmem:[#allocation2 + $0x58] sm:$0xff]
      %v840 = vld [vmem:[#allocation2 + $0x60] sm:$0xff]
      %v841 = vld [vmem:[#allocation2 + $0x68] sm:$0xff]
      %v842 = vld [vmem:[#allocation2 + $0x70] sm:$0xff]
      %v843 = vld [vmem:[#allocation2 + $0x78] sm:$0xff]
      %v844 = vld [vmem:[#allocation2 + $0x80] sm:$0xff]
      %v845 = vld [vmem:[#allocation2 + $0x88] sm:$0xff]
      %v846 = vld [vmem:[#allocation2 + $0x90] sm:$0xff]
      %v847 = vld [vmem:[#allocation2 + $0x98] sm:$0xff]
      %v848 = vld [vmem:[#allocation2 + $0xa0] sm:$0xff]
      %v849 = vld [vmem:[#allocation2 + $0xa8] sm:$0xff]
      %v850 = vld [vmem:[#allocation2 + $0xb0] sm:$0xff]
      %v851 = vld [vmem:[#allocation2 + $0xb8] sm:$0xff]
      %v852 = vld [vmem:[#allocation2 + $0xc0] sm:$0xff]
      %v853 = vld [vmem:[#allocation2 + $0xc8] sm:$0xff]
      %v854 = vld [vmem:[#allocation2 + $0xd0] sm:$0xff]
      %v855 = vld [vmem:[#allocation2 + $0xd8] sm:$0xff]
      %v856 = vld [vmem:[#allocation2 + $0xe0] sm:$0xff]
      %v857 = vld [vmem:[#allocation2 + $0xe8] sm:$0xff]
      %v858 = vld [vmem:[#allocation2 + $0xf0] sm:$0xff]
      %v859 = vld [vmem:[#allocation2 + $0xf8] sm:$0xff]
      %v860 = vld [vmem:[#allocation2 + $0x100] sm:$0xff]
      %v861 = vld [vmem:[#allocation2 + $0x108] sm:$0xff]
      %v862 = vld [vmem:[#allocation2 + $0x110] sm:$0xff]
      %v863 = vld [vmem:[#allocation2 + $0x118] sm:$0xff]
      %v864 = vld [vmem:[#allocation2 + $0x120] sm:$0xff]
      %v865 = vld [vmem:[#allocation2 + $0x128] sm:$0xff]
      %v866 = vld [vmem:[#allocation2 + $0x130] sm:$0x3f]
      %v867 = vld [vmem:[#allocation2 + $0x138] sm:$0x3f]
      %v868 = vld [vmem:[%s542 + $0x1] sm:$0xff]
      %v869 = vld [vmem:[%s542 + $0x9] sm:$0xff]
      %v870 = vld [vmem:[%s542 + $0x11] sm:$0xff]
      %v871 = vld [vmem:[%s542 + $0x19] sm:$0xff]
      %v872 = vld [vmem:[%s542 + $0x21] sm:$0xff]
      %v873 = vld [vmem:[%s542 + $0x29] sm:$0xff]
      %v874 = vld [vmem:[%s542 + $0x31] sm:$0xff]
      %v875 = vld [vmem:[%s542 + $0x39] sm:$0xff]
      %v876 = vld [vmem:[%s542 + $0x41] sm:$0xff]
      %v877 = vld [vmem:[%s542 + $0x49] sm:$0xff]
      %v878 = vld [vmem:[%s542 + $0x51] sm:$0xff]
      %v879 = vld [vmem:[%s542 + $0x59] sm:$0xff]
      %v880 = vld [vmem:[%s542 + $0x61] sm:$0xff]
      %v881 = vld [vmem:[%s542 + $0x69] sm:$0xff]
      %v882 = vld [vmem:[%s542 + $0x71] sm:$0xff]
      %v883 = vld [vmem:[%s542 + $0x79] sm:$0xff]
      %v884 = vld [vmem:[%s542 + $0x81] sm:$0xff]
      %v885 = vld [vmem:[%s542 + $0x89] sm:$0xff]
      %v886 = vld [vmem:[%s542 + $0x91] sm:$0xff]
      %v887 = vld [vmem:[%s542 + $0x99] sm:$0x3f]
      %v888 = vpack.c.bf16 %v869, %v868
      %v889 = vpack.c.bf16 %v871, %v870
      %v890 = vpack.c.bf16 %v873, %v872
      %v891 = vpack.c.bf16 %v875, %v874
      %v892 = vpack.c.bf16 %v877, %v876
      %v893 = vpack.c.bf16 %v879, %v878
      %v894 = vpack.c.bf16 %v881, %v880
      %v895 = vpack.c.bf16 %v883, %v882
      %v896 = vpack.c.bf16 %v885, %v884
      %v897 = vpack.c.bf16 %v887, %v886
      %s898 = scalar_lea.vmem %s1, 64
      %v899 = vld [vmem:[%s898] sm:$0xff]
      %v900 = vld [vmem:[%s898 + $0x8] sm:$0xff]
      %v901 = vld [vmem:[%s898 + $0x10] sm:$0xff]
      %v902 = vld [vmem:[%s898 + $0x18] sm:$0xff]
      %v903 = vld [vmem:[%s898 + $0x20] sm:$0xff]
      %v904 = vld [vmem:[%s898 + $0x28] sm:$0xff]
      %v905 = vld [vmem:[%s898 + $0x30] sm:$0xff]
      %v906 = vld [vmem:[%s898 + $0x38] sm:$0x33]
      %v915 = vunpack.c.l.b16 %v899
      %v916 = vunpack.c.h.b16 %v899
      %v917 = vunpack.c.l.b16 %v900
      %v918 = vunpack.c.h.b16 %v900
      %v919 = vunpack.c.l.b16 %v901
      %v920 = vunpack.c.h.b16 %v901
      %v921 = vunpack.c.l.b16 %v902
      %v922 = vunpack.c.h.b16 %v902
      %v923 = vunpack.c.l.b16 %v903
      %v924 = vunpack.c.h.b16 %v903
      %v925 = vunpack.c.l.b16 %v904
      %v926 = vunpack.c.h.b16 %v904
      %v927 = vunpack.c.l.b16 %v905
      %v928 = vunpack.c.h.b16 %v905
      %v929 = vunpack.c.l.b16 %v906
      %v930 = vunpack.c.h.b16 %v906
      %v931 = vpack.c.b16 %v917, %v915
      %v932 = vpack.c.b16 %v918, %v916
      %v933 = vpack.c.b16 %v921, %v919
      %v934 = vpack.c.b16 %v922, %v920
      %v935 = vpack.c.b16 %v925, %v923
      %v936 = vpack.c.b16 %v926, %v924
      %v937 = vpack.c.b16 %v929, %v927
      %v938 = vpack.c.b16 %v930, %v928
      %v946 = vsel %vm630, %v888, 0
      %v949 = vsel %vm630, %v889, 0
      %v952 = vsel %vm630, %v890, 0
      %v955 = vsel %vm630, %v891, 0
      %v958 = vsel %vm630, %v892, 0
      %v961 = vsel %vm630, %v893, 0
      %v964 = vsel %vm630, %v894, 0
      %v967 = vsel %vm630, %v895, 0
      %v970 = vsel %vm630, %v896, 0
      %v973 = vsel %vm630, %v897, 0
      %v976 = vsel %vm661, %v937, 0
      %v979 = vsel %vm661, %v938, 0
      %981 = vmatpush.bf16.msra.mxu0 0
      %982 = vmatpush.bf16.msra.mxu0 0
      %983 = vmatpush.bf16.msra.mxu0 0
      %984 = vmatpush.bf16.msra.mxu0 0
      %985 = vmatpush.bf16.msra.mxu0 %v976
      %986 = vmatpush.bf16.msra.mxu0 %v935
      %987 = vmatpush.bf16.msra.mxu0 %v933
      %988 = vmatpush.bf16.msra.mxu0 %v931
      %989 = vmatmul.bf16.gmra.mxu0 %v946
      %v990 = vpop.f32.mrf.mxu0
      %v991 = vadd.f32 0.0, %v990
      %v992 = vpop.f32.mrf.mxu0
      %v993 = vadd.f32 0.0, %v992
      %994 = vmatmul.bf16.gmra.mxu0 %v949
      %v995 = vpop.f32.mrf.mxu0
      %v996 = vadd.f32 0.0, %v995
      %v997 = vpop.f32.mrf.mxu0
      %v998 = vadd.f32 0.0, %v997
      %999 = vmatmul.bf16.gmra.mxu0 %v952
      %v1000 = vpop.f32.mrf.mxu0
      %v1001 = vadd.f32 0.0, %v1000
      %v1002 = vpop.f32.mrf.mxu0
      %v1003 = vadd.f32 0.0, %v1002
      %1004 = vmatmul.bf16.gmra.mxu0 %v955
      %v1005 = vpop.f32.mrf.mxu0
      %v1006 = vadd.f32 0.0, %v1005
      %v1007 = vpop.f32.mrf.mxu0
      %v1008 = vadd.f32 0.0, %v1007
      %1009 = vmatmul.bf16.gmra.mxu0 %v958
      %v1010 = vpop.f32.mrf.mxu0
      %v1011 = vadd.f32 0.0, %v1010
      %v1012 = vpop.f32.mrf.mxu0
      %v1013 = vadd.f32 0.0, %v1012
      %1014 = vmatmul.bf16.gmra.mxu0 %v961
      %v1015 = vpop.f32.mrf.mxu0
      %v1016 = vadd.f32 0.0, %v1015
      %v1017 = vpop.f32.mrf.mxu0
      %v1018 = vadd.f32 0.0, %v1017
      %1019 = vmatmul.bf16.gmra.mxu0 %v964
      %v1020 = vpop.f32.mrf.mxu0
      %v1021 = vadd.f32 0.0, %v1020
      %v1022 = vpop.f32.mrf.mxu0
      %v1023 = vadd.f32 0.0, %v1022
      %1024 = vmatmul.bf16.gmra.mxu0 %v967
      %v1025 = vpop.f32.mrf.mxu0
      %v1026 = vadd.f32 0.0, %v1025
      %v1027 = vpop.f32.mrf.mxu0
      %v1028 = vadd.f32 0.0, %v1027
      %1029 = vmatmul.bf16.gmra.mxu0 %v970
      %v1030 = vpop.f32.mrf.mxu0
      %v1031 = vadd.f32 0.0, %v1030
      %v1032 = vpop.f32.mrf.mxu0
      %v1033 = vadd.f32 0.0, %v1032
      %1034 = vmatmul.bf16.gmra.mxu0 %v973
      %v1035 = vpop.f32.mrf.mxu0
      %v1036 = vadd.f32 0.0, %v1035
      %v1037 = vpop.f32.mrf.mxu0
      %v1038 = vadd.f32 0.0, %v1037
      %1039 = vdwg.mxu0
      %1040 = vmatpush.bf16.msra.mxu0 0
      %1041 = vmatpush.bf16.msra.mxu0 0
      %1042 = vmatpush.bf16.msra.mxu0 0
      %1043 = vmatpush.bf16.msra.mxu0 0
      %1044 = vmatpush.bf16.msra.mxu0 %v979
      %1045 = vmatpush.bf16.msra.mxu0 %v936
      %1046 = vmatpush.bf16.msra.mxu0 %v934
      %1047 = vmatpush.bf16.msra.mxu0 %v932
      %1048 = vmatmul.bf16.gmra.mxu0 %v946
      %v1049 = vpop.f32.mrf.mxu0
      %v1050 = vadd.f32 0.0, %v1049
      %v1051 = vpop.f32.mrf.mxu0
      %v1052 = vadd.f32 0.0, %v1051
      %1053 = vmatmul.bf16.gmra.mxu0 %v949
      %v1054 = vpop.f32.mrf.mxu0
      %v1055 = vadd.f32 0.0, %v1054
      %v1056 = vpop.f32.mrf.mxu0
      %v1057 = vadd.f32 0.0, %v1056
      %1058 = vmatmul.bf16.gmra.mxu0 %v952
      %v1059 = vpop.f32.mrf.mxu0
      %v1060 = vadd.f32 0.0, %v1059
      %v1061 = vpop.f32.mrf.mxu0
      %v1062 = vadd.f32 0.0, %v1061
      %1063 = vmatmul.bf16.gmra.mxu0 %v955
      %v1064 = vpop.f32.mrf.mxu0
      %v1065 = vadd.f32 0.0, %v1064
      %v1066 = vpop.f32.mrf.mxu0
      %v1067 = vadd.f32 0.0, %v1066
      %1068 = vmatmul.bf16.gmra.mxu0 %v958
      %v1069 = vpop.f32.mrf.mxu0
      %v1070 = vadd.f32 0.0, %v1069
      %v1071 = vpop.f32.mrf.mxu0
      %v1072 = vadd.f32 0.0, %v1071
      %1073 = vmatmul.bf16.gmra.mxu0 %v961
      %v1074 = vpop.f32.mrf.mxu0
      %v1075 = vadd.f32 0.0, %v1074
      %v1076 = vpop.f32.mrf.mxu0
      %v1077 = vadd.f32 0.0, %v1076
      %1078 = vmatmul.bf16.gmra.mxu0 %v964
      %v1079 = vpop.f32.mrf.mxu0
      %v1080 = vadd.f32 0.0, %v1079
      %v1081 = vpop.f32.mrf.mxu0
      %v1082 = vadd.f32 0.0, %v1081
      %1083 = vmatmul.bf16.gmra.mxu0 %v967
      %v1084 = vpop.f32.mrf.mxu0
      %v1085 = vadd.f32 0.0, %v1084
      %v1086 = vpop.f32.mrf.mxu0
      %v1087 = vadd.f32 0.0, %v1086
      %1088 = vmatmul.bf16.gmra.mxu0 %v970
      %v1089 = vpop.f32.mrf.mxu0
      %v1090 = vadd.f32 0.0, %v1089
      %v1091 = vpop.f32.mrf.mxu0
      %v1092 = vadd.f32 0.0, %v1091
      %1093 = vmatmul.bf16.gmra.mxu0 %v973
      %v1094 = vpop.f32.mrf.mxu0
      %v1095 = vadd.f32 0.0, %v1094
      %v1096 = vpop.f32.mrf.mxu0
      %v1097 = vadd.f32 0.0, %v1096
      %1098 = vdwg.mxu0
      %v1099 = vadd.f32 %v828, %v991
      %v1100 = vadd.f32 %v829, %v1050
      %v1101 = vadd.f32 %v830, %v993
      %v1102 = vadd.f32 %v831, %v1052
      %v1103 = vadd.f32 %v832, %v996
      %v1104 = vadd.f32 %v833, %v1055
      %v1105 = vadd.f32 %v834, %v998
      %v1106 = vadd.f32 %v835, %v1057
      %v1107 = vadd.f32 %v836, %v1001
      %v1108 = vadd.f32 %v837, %v1060
      %v1109 = vadd.f32 %v838, %v1003
      %v1110 = vadd.f32 %v839, %v1062
      %v1111 = vadd.f32 %v840, %v1006
      %v1112 = vadd.f32 %v841, %v1065
      %v1113 = vadd.f32 %v842, %v1008
      %v1114 = vadd.f32 %v843, %v1067
      %v1115 = vadd.f32 %v844, %v1011
      %v1116 = vadd.f32 %v845, %v1070
      %v1117 = vadd.f32 %v846, %v1013
      %v1118 = vadd.f32 %v847, %v1072
      %v1119 = vadd.f32 %v848, %v1016
      %v1120 = vadd.f32 %v849, %v1075
      %v1121 = vadd.f32 %v850, %v1018
      %v1122 = vadd.f32 %v851, %v1077
      %v1123 = vadd.f32 %v852, %v1021
      %v1124 = vadd.f32 %v853, %v1080
      %v1125 = vadd.f32 %v854, %v1023
      %v1126 = vadd.f32 %v855, %v1082
      %v1127 = vadd.f32 %v856, %v1026
      %v1128 = vadd.f32 %v857, %v1085
      %v1129 = vadd.f32 %v858, %v1028
      %v1130 = vadd.f32 %v859, %v1087
      %v1131 = vadd.f32 %v860, %v1031
      %v1132 = vadd.f32 %v861, %v1090
      %v1133 = vadd.f32 %v862, %v1033
      %v1134 = vadd.f32 %v863, %v1092
      %v1135 = vadd.f32 %v864, %v1036
      %v1136 = vadd.f32 %v865, %v1095
      %v1137 = vadd.f32 %v866, %v1038
      %v1138 = vadd.f32 %v867, %v1097
      %1139 = vst [vmem:[#allocation2] sm:$0xff] %v1099
      %1140 = vst.msk [vmem:[#allocation2 + $0x8] sm:$0xff] %vm787, %v1100
      %1141 = vst [vmem:[#allocation2 + $0x10] sm:$0xff] %v1101
      %1142 = vst.msk [vmem:[#allocation2 + $0x18] sm:$0xff] %vm787, %v1102
      %1143 = vst [vmem:[#allocation2 + $0x20] sm:$0xff] %v1103
      %1144 = vst.msk [vmem:[#allocation2 + $0x28] sm:$0xff] %vm787, %v1104
      %1145 = vst [vmem:[#allocation2 + $0x30] sm:$0xff] %v1105
      %1146 = vst.msk [vmem:[#allocation2 + $0x38] sm:$0xff] %vm787, %v1106
      %1147 = vst [vmem:[#allocation2 + $0x40] sm:$0xff] %v1107
      %1148 = vst.msk [vmem:[#allocation2 + $0x48] sm:$0xff] %vm787, %v1108
      %1149 = vst [vmem:[#allocation2 + $0x50] sm:$0xff] %v1109
      %1150 = vst.msk [vmem:[#allocation2 + $0x58] sm:$0xff] %vm787, %v1110
      %1151 = vst [vmem:[#allocation2 + $0x60] sm:$0xff] %v1111
      %1152 = vst.msk [vmem:[#allocation2 + $0x68] sm:$0xff] %vm787, %v1112
      %1153 = vst [vmem:[#allocation2 + $0x70] sm:$0xff] %v1113
      %1154 = vst.msk [vmem:[#allocation2 + $0x78] sm:$0xff] %vm787, %v1114
      %1155 = vst [vmem:[#allocation2 + $0x80] sm:$0xff] %v1115
      %1156 = vst.msk [vmem:[#allocation2 + $0x88] sm:$0xff] %vm787, %v1116
      %1157 = vst [vmem:[#allocation2 + $0x90] sm:$0xff] %v1117
      %1158 = vst.msk [vmem:[#allocation2 + $0x98] sm:$0xff] %vm787, %v1118
      %1159 = vst [vmem:[#allocation2 + $0xa0] sm:$0xff] %v1119
      %1160 = vst.msk [vmem:[#allocation2 + $0xa8] sm:$0xff] %vm787, %v1120
      %1161 = vst [vmem:[#allocation2 + $0xb0] sm:$0xff] %v1121
      %1162 = vst.msk [vmem:[#allocation2 + $0xb8] sm:$0xff] %vm787, %v1122
      %1163 = vst [vmem:[#allocation2 + $0xc0] sm:$0xff] %v1123
      %1164 = vst.msk [vmem:[#allocation2 + $0xc8] sm:$0xff] %vm787, %v1124
      %1165 = vst [vmem:[#allocation2 + $0xd0] sm:$0xff] %v1125
      %1166 = vst.msk [vmem:[#allocation2 + $0xd8] sm:$0xff] %vm787, %v1126
      %1167 = vst [vmem:[#allocation2 + $0xe0] sm:$0xff] %v1127
      %1168 = vst.msk [vmem:[#allocation2 + $0xe8] sm:$0xff] %vm787, %v1128
      %1169 = vst [vmem:[#allocation2 + $0xf0] sm:$0xff] %v1129
      %1170 = vst.msk [vmem:[#allocation2 + $0xf8] sm:$0xff] %vm787, %v1130
      %1171 = vst [vmem:[#allocation2 + $0x100] sm:$0xff] %v1131
      %1172 = vst.msk [vmem:[#allocation2 + $0x108] sm:$0xff] %vm787, %v1132
      %1173 = vst [vmem:[#allocation2 + $0x110] sm:$0xff] %v1133
      %1174 = vst.msk [vmem:[#allocation2 + $0x118] sm:$0xff] %vm787, %v1134
      %1175 = vst [vmem:[#allocation2 + $0x120] sm:$0xff] %v1135
      %1176 = vst.msk [vmem:[#allocation2 + $0x128] sm:$0xff] %vm787, %v1136
      %1177 = vst [vmem:[#allocation2 + $0x130] sm:$0x3f] %v1137
      %1178 = vst.msk [vmem:[#allocation2 + $0x138] sm:$0x3f] %vm826, %v1138
      %v1179 = vld [vmem:[#allocation2] sm:$0xff]
      %v1180 = vld [vmem:[#allocation2 + $0x8] sm:$0xff]
      %v1181 = vld [vmem:[#allocation2 + $0x10] sm:$0xff]
      %v1182 = vld [vmem:[#allocation2 + $0x18] sm:$0xff]
      %v1183 = vld [vmem:[#allocation2 + $0x20] sm:$0xff]
      %v1184 = vld [vmem:[#allocation2 + $0x28] sm:$0xff]
      %v1185 = vld [vmem:[#allocation2 + $0x30] sm:$0xff]
      %v1186 = vld [vmem:[#allocation2 + $0x38] sm:$0xff]
      %v1187 = vld [vmem:[#allocation2 + $0x40] sm:$0xff]
      %v1188 = vld [vmem:[#allocation2 + $0x48] sm:$0xff]
      %v1189 = vld [vmem:[#allocation2 + $0x50] sm:$0xff]
      %v1190 = vld [vmem:[#allocation2 + $0x58] sm:$0xff]
      %v1191 = vld [vmem:[#allocation2 + $0x60] sm:$0xff]
      %v1192 = vld [vmem:[#allocation2 + $0x68] sm:$0xff]
      %v1193 = vld [vmem:[#allocation2 + $0x70] sm:$0xff]
      %v1194 = vld [vmem:[#allocation2 + $0x78] sm:$0xff]
      %v1195 = vld [vmem:[#allocation2 + $0x80] sm:$0xff]
      %v1196 = vld [vmem:[#allocation2 + $0x88] sm:$0xff]
      %v1197 = vld [vmem:[#allocation2 + $0x90] sm:$0xff]
      %v1198 = vld [vmem:[#allocation2 + $0x98] sm:$0xff]
      %v1199 = vld [vmem:[#allocation2 + $0xa0] sm:$0xff]
      %v1200 = vld [vmem:[#allocation2 + $0xa8] sm:$0xff]
      %v1201 = vld [vmem:[#allocation2 + $0xb0] sm:$0xff]
      %v1202 = vld [vmem:[#allocation2 + $0xb8] sm:$0xff]
      %v1203 = vld [vmem:[#allocation2 + $0xc0] sm:$0xff]
      %v1204 = vld [vmem:[#allocation2 + $0xc8] sm:$0xff]
      %v1205 = vld [vmem:[#allocation2 + $0xd0] sm:$0xff]
      %v1206 = vld [vmem:[#allocation2 + $0xd8] sm:$0xff]
      %v1207 = vld [vmem:[#allocation2 + $0xe0] sm:$0xff]
      %v1208 = vld [vmem:[#allocation2 + $0xe8] sm:$0xff]
      %v1209 = vld [vmem:[#allocation2 + $0xf0] sm:$0xff]
      %v1210 = vld [vmem:[#allocation2 + $0xf8] sm:$0xff]
      %v1211 = vld [vmem:[#allocation2 + $0x100] sm:$0xff]
      %v1212 = vld [vmem:[#allocation2 + $0x108] sm:$0xff]
      %v1213 = vld [vmem:[#allocation2 + $0x110] sm:$0xff]
      %v1214 = vld [vmem:[#allocation2 + $0x118] sm:$0xff]
      %v1215 = vld [vmem:[#allocation2 + $0x120] sm:$0xff]
      %v1216 = vld [vmem:[#allocation2 + $0x128] sm:$0xff]
      %v1217 = vld [vmem:[#allocation2 + $0x130] sm:$0x3f]
      %v1218 = vld [vmem:[#allocation2 + $0x138] sm:$0x3f]
      %v1219 = vld [vmem:[%s542 + $0x2] sm:$0xff]
      %v1220 = vld [vmem:[%s542 + $0xa] sm:$0xff]
      %v1221 = vld [vmem:[%s542 + $0x12] sm:$0xff]
      %v1222 = vld [vmem:[%s542 + $0x1a] sm:$0xff]
      %v1223 = vld [vmem:[%s542 + $0x22] sm:$0xff]
      %v1224 = vld [vmem:[%s542 + $0x2a] sm:$0xff]
      %v1225 = vld [vmem:[%s542 + $0x32] sm:$0xff]
      %v1226 = vld [vmem:[%s542 + $0x3a] sm:$0xff]
      %v1227 = vld [vmem:[%s542 + $0x42] sm:$0xff]
      %v1228 = vld [vmem:[%s542 + $0x4a] sm:$0xff]
      %v1229 = vld [vmem:[%s542 + $0x52] sm:$0xff]
      %v1230 = vld [vmem:[%s542 + $0x5a] sm:$0xff]
      %v1231 = vld [vmem:[%s542 + $0x62] sm:$0xff]
      %v1232 = vld [vmem:[%s542 + $0x6a] sm:$0xff]
      %v1233 = vld [vmem:[%s542 + $0x72] sm:$0xff]
      %v1234 = vld [vmem:[%s542 + $0x7a] sm:$0xff]
      %v1235 = vld [vmem:[%s542 + $0x82] sm:$0xff]
      %v1236 = vld [vmem:[%s542 + $0x8a] sm:$0xff]
      %v1237 = vld [vmem:[%s542 + $0x92] sm:$0xff]
      %v1238 = vld [vmem:[%s542 + $0x9a] sm:$0x3f]
      %v1239 = vpack.c.bf16 %v1220, %v1219
      %v1240 = vpack.c.bf16 %v1222, %v1221
      %v1241 = vpack.c.bf16 %v1224, %v1223
      %v1242 = vpack.c.bf16 %v1226, %v1225
      %v1243 = vpack.c.bf16 %v1228, %v1227
      %v1244 = vpack.c.bf16 %v1230, %v1229
      %v1245 = vpack.c.bf16 %v1232, %v1231
      %v1246 = vpack.c.bf16 %v1234, %v1233
      %v1247 = vpack.c.bf16 %v1236, %v1235
      %v1248 = vpack.c.bf16 %v1238, %v1237
      %s1249 = scalar_lea.vmem %s1, 128
      %v1250 = vld [vmem:[%s1249] sm:$0xff]
      %v1251 = vld [vmem:[%s1249 + $0x8] sm:$0xff]
      %v1252 = vld [vmem:[%s1249 + $0x10] sm:$0xff]
      %v1253 = vld [vmem:[%s1249 + $0x18] sm:$0xff]
      %v1254 = vld [vmem:[%s1249 + $0x20] sm:$0xff]
      %v1255 = vld [vmem:[%s1249 + $0x28] sm:$0xff]
      %v1256 = vld [vmem:[%s1249 + $0x30] sm:$0xff]
      %v1257 = vld [vmem:[%s1249 + $0x38] sm:$0x33]
      %v1266 = vunpack.c.l.b16 %v1250
      %v1267 = vunpack.c.h.b16 %v1250
      %v1268 = vunpack.c.l.b16 %v1251
      %v1269 = vunpack.c.h.b16 %v1251
      %v1270 = vunpack.c.l.b16 %v1252
      %v1271 = vunpack.c.h.b16 %v1252
      %v1272 = vunpack.c.l.b16 %v1253
      %v1273 = vunpack.c.h.b16 %v1253
      %v1274 = vunpack.c.l.b16 %v1254
      %v1275 = vunpack.c.h.b16 %v1254
      %v1276 = vunpack.c.l.b16 %v1255
      %v1277 = vunpack.c.h.b16 %v1255
      %v1278 = vunpack.c.l.b16 %v1256
      %v1279 = vunpack.c.h.b16 %v1256
      %v1280 = vunpack.c.l.b16 %v1257
      %v1281 = vunpack.c.h.b16 %v1257
      %v1282 = vpack.c.b16 %v1268, %v1266
      %v1283 = vpack.c.b16 %v1269, %v1267
      %v1284 = vpack.c.b16 %v1272, %v1270
      %v1285 = vpack.c.b16 %v1273, %v1271
      %v1286 = vpack.c.b16 %v1276, %v1274
      %v1287 = vpack.c.b16 %v1277, %v1275
      %v1288 = vpack.c.b16 %v1280, %v1278
      %v1289 = vpack.c.b16 %v1281, %v1279
      %v1297 = vsel %vm630, %v1239, 0
      %v1300 = vsel %vm630, %v1240, 0
      %v1303 = vsel %vm630, %v1241, 0
      %v1306 = vsel %vm630, %v1242, 0
      %v1309 = vsel %vm630, %v1243, 0
      %v1312 = vsel %vm630, %v1244, 0
      %v1315 = vsel %vm630, %v1245, 0
      %v1318 = vsel %vm630, %v1246, 0
      %v1321 = vsel %vm630, %v1247, 0
      %v1324 = vsel %vm630, %v1248, 0
      %v1327 = vsel %vm661, %v1288, 0
      %v1330 = vsel %vm661, %v1289, 0
      %1332 = vmatpush.bf16.msra.mxu0 0
      %1333 = vmatpush.bf16.msra.mxu0 0
      %1334 = vmatpush.bf16.msra.mxu0 0
      %1335 = vmatpush.bf16.msra.mxu0 0
      %1336 = vmatpush.bf16.msra.mxu0 %v1327
      %1337 = vmatpush.bf16.msra.mxu0 %v1286
      %1338 = vmatpush.bf16.msra.mxu0 %v1284
      %1339 = vmatpush.bf16.msra.mxu0 %v1282
      %1340 = vmatmul.bf16.gmra.mxu0 %v1297
      %v1341 = vpop.f32.mrf.mxu0
      %v1342 = vadd.f32 0.0, %v1341
      %v1343 = vpop.f32.mrf.mxu0
      %v1344 = vadd.f32 0.0, %v1343
      %1345 = vmatmul.bf16.gmra.mxu0 %v1300
      %v1346 = vpop.f32.mrf.mxu0
      %v1347 = vadd.f32 0.0, %v1346
      %v1348 = vpop.f32.mrf.mxu0
      %v1349 = vadd.f32 0.0, %v1348
      %1350 = vmatmul.bf16.gmra.mxu0 %v1303
      %v1351 = vpop.f32.mrf.mxu0
      %v1352 = vadd.f32 0.0, %v1351
      %v1353 = vpop.f32.mrf.mxu0
      %v1354 = vadd.f32 0.0, %v1353
      %1355 = vmatmul.bf16.gmra.mxu0 %v1306
      %v1356 = vpop.f32.mrf.mxu0
      %v1357 = vadd.f32 0.0, %v1356
      %v1358 = vpop.f32.mrf.mxu0
      %v1359 = vadd.f32 0.0, %v1358
      %1360 = vmatmul.bf16.gmra.mxu0 %v1309
      %v1361 = vpop.f32.mrf.mxu0
      %v1362 = vadd.f32 0.0, %v1361
      %v1363 = vpop.f32.mrf.mxu0
      %v1364 = vadd.f32 0.0, %v1363
      %1365 = vmatmul.bf16.gmra.mxu0 %v1312
      %v1366 = vpop.f32.mrf.mxu0
      %v1367 = vadd.f32 0.0, %v1366
      %v1368 = vpop.f32.mrf.mxu0
      %v1369 = vadd.f32 0.0, %v1368
      %1370 = vmatmul.bf16.gmra.mxu0 %v1315
      %v1371 = vpop.f32.mrf.mxu0
      %v1372 = vadd.f32 0.0, %v1371
      %v1373 = vpop.f32.mrf.mxu0
      %v1374 = vadd.f32 0.0, %v1373
      %1375 = vmatmul.bf16.gmra.mxu0 %v1318
      %v1376 = vpop.f32.mrf.mxu0
      %v1377 = vadd.f32 0.0, %v1376
      %v1378 = vpop.f32.mrf.mxu0
      %v1379 = vadd.f32 0.0, %v1378
      %1380 = vmatmul.bf16.gmra.mxu0 %v1321
      %v1381 = vpop.f32.mrf.mxu0
      %v1382 = vadd.f32 0.0, %v1381
      %v1383 = vpop.f32.mrf.mxu0
      %v1384 = vadd.f32 0.0, %v1383
      %1385 = vmatmul.bf16.gmra.mxu0 %v1324
      %v1386 = vpop.f32.mrf.mxu0
      %v1387 = vadd.f32 0.0, %v1386
      %v1388 = vpop.f32.mrf.mxu0
      %v1389 = vadd.f32 0.0, %v1388
      %1390 = vdwg.mxu0
      %1391 = vmatpush.bf16.msra.mxu0 0
      %1392 = vmatpush.bf16.msra.mxu0 0
      %1393 = vmatpush.bf16.msra.mxu0 0
      %1394 = vmatpush.bf16.msra.mxu0 0
      %1395 = vmatpush.bf16.msra.mxu0 %v1330
      %1396 = vmatpush.bf16.msra.mxu0 %v1287
      %1397 = vmatpush.bf16.msra.mxu0 %v1285
      %1398 = vmatpush.bf16.msra.mxu0 %v1283
      %1399 = vmatmul.bf16.gmra.mxu0 %v1297
      %v1400 = vpop.f32.mrf.mxu0
      %v1401 = vadd.f32 0.0, %v1400
      %v1402 = vpop.f32.mrf.mxu0
      %v1403 = vadd.f32 0.0, %v1402
      %1404 = vmatmul.bf16.gmra.mxu0 %v1300
      %v1405 = vpop.f32.mrf.mxu0
      %v1406 = vadd.f32 0.0, %v1405
      %v1407 = vpop.f32.mrf.mxu0
      %v1408 = vadd.f32 0.0, %v1407
      %1409 = vmatmul.bf16.gmra.mxu0 %v1303
      %v1410 = vpop.f32.mrf.mxu0
      %v1411 = vadd.f32 0.0, %v1410
      %v1412 = vpop.f32.mrf.mxu0
      %v1413 = vadd.f32 0.0, %v1412
      %1414 = vmatmul.bf16.gmra.mxu0 %v1306
      %v1415 = vpop.f32.mrf.mxu0
      %v1416 = vadd.f32 0.0, %v1415
      %v1417 = vpop.f32.mrf.mxu0
      %v1418 = vadd.f32 0.0, %v1417
      %1419 = vmatmul.bf16.gmra.mxu0 %v1309
      %v1420 = vpop.f32.mrf.mxu0
      %v1421 = vadd.f32 0.0, %v1420
      %v1422 = vpop.f32.mrf.mxu0
      %v1423 = vadd.f32 0.0, %v1422
      %1424 = vmatmul.bf16.gmra.mxu0 %v1312
      %v1425 = vpop.f32.mrf.mxu0
      %v1426 = vadd.f32 0.0, %v1425
      %v1427 = vpop.f32.mrf.mxu0
      %v1428 = vadd.f32 0.0, %v1427
      %1429 = vmatmul.bf16.gmra.mxu0 %v1315
      %v1430 = vpop.f32.mrf.mxu0
      %v1431 = vadd.f32 0.0, %v1430
      %v1432 = vpop.f32.mrf.mxu0
      %v1433 = vadd.f32 0.0, %v1432
      %1434 = vmatmul.bf16.gmra.mxu0 %v1318
      %v1435 = vpop.f32.mrf.mxu0
      %v1436 = vadd.f32 0.0, %v1435
      %v1437 = vpop.f32.mrf.mxu0
      %v1438 = vadd.f32 0.0, %v1437
      %1439 = vmatmul.bf16.gmra.mxu0 %v1321
      %v1440 = vpop.f32.mrf.mxu0
      %v1441 = vadd.f32 0.0, %v1440
      %v1442 = vpop.f32.mrf.mxu0
      %v1443 = vadd.f32 0.0, %v1442
      %1444 = vmatmul.bf16.gmra.mxu0 %v1324
      %v1445 = vpop.f32.mrf.mxu0
      %v1446 = vadd.f32 0.0, %v1445
      %v1447 = vpop.f32.mrf.mxu0
      %v1448 = vadd.f32 0.0, %v1447
      %1449 = vdwg.mxu0
      %v1450 = vadd.f32 %v1179, %v1342
      %v1451 = vadd.f32 %v1180, %v1401
      %v1452 = vadd.f32 %v1181, %v1344
      %v1453 = vadd.f32 %v1182, %v1403
      %v1454 = vadd.f32 %v1183, %v1347
      %v1455 = vadd.f32 %v1184, %v1406
      %v1456 = vadd.f32 %v1185, %v1349
      %v1457 = vadd.f32 %v1186, %v1408
      %v1458 = vadd.f32 %v1187, %v1352
      %v1459 = vadd.f32 %v1188, %v1411
      %v1460 = vadd.f32 %v1189, %v1354
      %v1461 = vadd.f32 %v1190, %v1413
      %v1462 = vadd.f32 %v1191, %v1357
      %v1463 = vadd.f32 %v1192, %v1416
      %v1464 = vadd.f32 %v1193, %v1359
      %v1465 = vadd.f32 %v1194, %v1418
      %v1466 = vadd.f32 %v1195, %v1362
      %v1467 = vadd.f32 %v1196, %v1421
      %v1468 = vadd.f32 %v1197, %v1364
      %v1469 = vadd.f32 %v1198, %v1423
      %v1470 = vadd.f32 %v1199, %v1367
      %v1471 = vadd.f32 %v1200, %v1426
      %v1472 = vadd.f32 %v1201, %v1369
      %v1473 = vadd.f32 %v1202, %v1428
      %v1474 = vadd.f32 %v1203, %v1372
      %v1475 = vadd.f32 %v1204, %v1431
      %v1476 = vadd.f32 %v1205, %v1374
      %v1477 = vadd.f32 %v1206, %v1433
      %v1478 = vadd.f32 %v1207, %v1377
      %v1479 = vadd.f32 %v1208, %v1436
      %v1480 = vadd.f32 %v1209, %v1379
      %v1481 = vadd.f32 %v1210, %v1438
      %v1482 = vadd.f32 %v1211, %v1382
      %v1483 = vadd.f32 %v1212, %v1441
      %v1484 = vadd.f32 %v1213, %v1384
      %v1485 = vadd.f32 %v1214, %v1443
      %v1486 = vadd.f32 %v1215, %v1387
      %v1487 = vadd.f32 %v1216, %v1446
      %v1488 = vadd.f32 %v1217, %v1389
      %v1489 = vadd.f32 %v1218, %v1448
      %1490 = vst [vmem:[#allocation2] sm:$0xff] %v1450
      %1491 = vst.msk [vmem:[#allocation2 + $0x8] sm:$0xff] %vm787, %v1451
      %1492 = vst [vmem:[#allocation2 + $0x10] sm:$0xff] %v1452
      %1493 = vst.msk [vmem:[#allocation2 + $0x18] sm:$0xff] %vm787, %v1453
      %1494 = vst [vmem:[#allocation2 + $0x20] sm:$0xff] %v1454
      %1495 = vst.msk [vmem:[#allocation2 + $0x28] sm:$0xff] %vm787, %v1455
      %1496 = vst [vmem:[#allocation2 + $0x30] sm:$0xff] %v1456
      %1497 = vst.msk [vmem:[#allocation2 + $0x38] sm:$0xff] %vm787, %v1457
      %1498 = vst [vmem:[#allocation2 + $0x40] sm:$0xff] %v1458
      %1499 = vst.msk [vmem:[#allocation2 + $0x48] sm:$0xff] %vm787, %v1459
      %1500 = vst [vmem:[#allocation2 + $0x50] sm:$0xff] %v1460
      %1501 = vst.msk [vmem:[#allocation2 + $0x58] sm:$0xff] %vm787, %v1461
      %1502 = vst [vmem:[#allocation2 + $0x60] sm:$0xff] %v1462
      %1503 = vst.msk [vmem:[#allocation2 + $0x68] sm:$0xff] %vm787, %v1463
      %1504 = vst [vmem:[#allocation2 + $0x70] sm:$0xff] %v1464
      %1505 = vst.msk [vmem:[#allocation2 + $0x78] sm:$0xff] %vm787, %v1465
      %1506 = vst [vmem:[#allocation2 + $0x80] sm:$0xff] %v1466
      %1507 = vst.msk [vmem:[#allocation2 + $0x88] sm:$0xff] %vm787, %v1467
      %1508 = vst [vmem:[#allocation2 + $0x90] sm:$0xff] %v1468
      %1509 = vst.msk [vmem:[#allocation2 + $0x98] sm:$0xff] %vm787, %v1469
      %1510 = vst [vmem:[#allocation2 + $0xa0] sm:$0xff] %v1470
      %1511 = vst.msk [vmem:[#allocation2 + $0xa8] sm:$0xff] %vm787, %v1471
      %1512 = vst [vmem:[#allocation2 + $0xb0] sm:$0xff] %v1472
      %1513 = vst.msk [vmem:[#allocation2 + $0xb8] sm:$0xff] %vm787, %v1473
      %1514 = vst [vmem:[#allocation2 + $0xc0] sm:$0xff] %v1474
      %1515 = vst.msk [vmem:[#allocation2 + $0xc8] sm:$0xff] %vm787, %v1475
      %1516 = vst [vmem:[#allocation2 + $0xd0] sm:$0xff] %v1476
      %1517 = vst.msk [vmem:[#allocation2 + $0xd8] sm:$0xff] %vm787, %v1477
      %1518 = vst [vmem:[#allocation2 + $0xe0] sm:$0xff] %v1478
      %1519 = vst.msk [vmem:[#allocation2 + $0xe8] sm:$0xff] %vm787, %v1479
      %1520 = vst [vmem:[#allocation2 + $0xf0] sm:$0xff] %v1480
      %1521 = vst.msk [vmem:[#allocation2 + $0xf8] sm:$0xff] %vm787, %v1481
      %1522 = vst [vmem:[#allocation2 + $0x100] sm:$0xff] %v1482
      %1523 = vst.msk [vmem:[#allocation2 + $0x108] sm:$0xff] %vm787, %v1483
      %1524 = vst [vmem:[#allocation2 + $0x110] sm:$0xff] %v1484
      %1525 = vst.msk [vmem:[#allocation2 + $0x118] sm:$0xff] %vm787, %v1485
      %1526 = vst [vmem:[#allocation2 + $0x120] sm:$0xff] %v1486
      %1527 = vst.msk [vmem:[#allocation2 + $0x128] sm:$0xff] %vm787, %v1487
      %1528 = vst [vmem:[#allocation2 + $0x130] sm:$0x3f] %v1488
      %1529 = vst.msk [vmem:[#allocation2 + $0x138] sm:$0x3f] %vm826, %v1489
      %v1530 = vld [vmem:[#allocation2] sm:$0xff]
      %v1531 = vld [vmem:[#allocation2 + $0x8] sm:$0xff]
      %v1532 = vld [vmem:[#allocation2 + $0x10] sm:$0xff]
      %v1533 = vld [vmem:[#allocation2 + $0x18] sm:$0xff]
      %v1534 = vld [vmem:[#allocation2 + $0x20] sm:$0xff]
      %v1535 = vld [vmem:[#allocation2 + $0x28] sm:$0xff]
      %v1536 = vld [vmem:[#allocation2 + $0x30] sm:$0xff]
      %v1537 = vld [vmem:[#allocation2 + $0x38] sm:$0xff]
      %v1538 = vld [vmem:[#allocation2 + $0x40] sm:$0xff]
      %v1539 = vld [vmem:[#allocation2 + $0x48] sm:$0xff]
      %v1540 = vld [vmem:[#allocation2 + $0x50] sm:$0xff]
      %v1541 = vld [vmem:[#allocation2 + $0x58] sm:$0xff]
      %v1542 = vld [vmem:[#allocation2 + $0x60] sm:$0xff]
      %v1543 = vld [vmem:[#allocation2 + $0x68] sm:$0xff]
      %v1544 = vld [vmem:[#allocation2 + $0x70] sm:$0xff]
      %v1545 = vld [vmem:[#allocation2 + $0x78] sm:$0xff]
      %v1546 = vld [vmem:[#allocation2 + $0x80] sm:$0xff]
      %v1547 = vld [vmem:[#allocation2 + $0x88] sm:$0xff]
      %v1548 = vld [vmem:[#allocation2 + $0x90] sm:$0xff]
      %v1549 = vld [vmem:[#allocation2 + $0x98] sm:$0xff]
      %v1550 = vld [vmem:[#allocation2 + $0xa0] sm:$0xff]
      %v1551 = vld [vmem:[#allocation2 + $0xa8] sm:$0xff]
      %v1552 = vld [vmem:[#allocation2 + $0xb0] sm:$0xff]
      %v1553 = vld [vmem:[#allocation2 + $0xb8] sm:$0xff]
      %v1554 = vld [vmem:[#allocation2 + $0xc0] sm:$0xff]
      %v1555 = vld [vmem:[#allocation2 + $0xc8] sm:$0xff]
      %v1556 = vld [vmem:[#allocation2 + $0xd0] sm:$0xff]
      %v1557 = vld [vmem:[#allocation2 + $0xd8] sm:$0xff]
      %v1558 = vld [vmem:[#allocation2 + $0xe0] sm:$0xff]
      %v1559 = vld [vmem:[#allocation2 + $0xe8] sm:$0xff]
      %v1560 = vld [vmem:[#allocation2 + $0xf0] sm:$0xff]
      %v1561 = vld [vmem:[#allocation2 + $0xf8] sm:$0xff]
      %v1562 = vld [vmem:[#allocation2 + $0x100] sm:$0xff]
      %v1563 = vld [vmem:[#allocation2 + $0x108] sm:$0xff]
      %v1564 = vld [vmem:[#allocation2 + $0x110] sm:$0xff]
      %v1565 = vld [vmem:[#allocation2 + $0x118] sm:$0xff]
      %v1566 = vld [vmem:[#allocation2 + $0x120] sm:$0xff]
      %v1567 = vld [vmem:[#allocation2 + $0x128] sm:$0xff]
      %v1568 = vld [vmem:[#allocation2 + $0x130] sm:$0x1f]
      %v1569 = vld [vmem:[#allocation2 + $0x138] sm:$0x1f]
      %v1570 = vld [vmem:[#allocation2] sm:$0xfe]
      %v1571 = vld [vmem:[#allocation2 + $0x8] sm:$0xfe]
      %v1572 = vld [vmem:[#allocation2 + $0x130] sm:$0x3f]
      %v1573 = vld [vmem:[#allocation2 + $0x138] sm:$0x3f]
      %vm1614 = vcmask 1046528
      %v1615 = vrot.slane %v1570, 1
      %v1616 = vrot.slane %v1532, 1
      %v1617 = vsel %vm1614, %v1615, %v1616
      %v1618 = vrot.slane %v1571, 1
      %v1619 = vrot.slane %v1533, 1
      %v1620 = vsel %vm1614, %v1618, %v1619
      %v1621 = vrot.slane %v1534, 1
      %v1622 = vsel %vm1614, %v1616, %v1621
      %v1623 = vrot.slane %v1535, 1
      %v1624 = vsel %vm1614, %v1619, %v1623
      %v1625 = vrot.slane %v1536, 1
      %v1626 = vsel %vm1614, %v1621, %v1625
      %v1627 = vrot.slane %v1537, 1
      %v1628 = vsel %vm1614, %v1623, %v1627
      %v1629 = vrot.slane %v1538, 1
      %v1630 = vsel %vm1614, %v1625, %v1629
      %v1631 = vrot.slane %v1539, 1
      %v1632 = vsel %vm1614, %v1627, %v1631
      %v1633 = vrot.slane %v1540, 1
      %v1634 = vsel %vm1614, %v1629, %v1633
      %v1635 = vrot.slane %v1541, 1
      %v1636 = vsel %vm1614, %v1631, %v1635
      %v1637 = vrot.slane %v1542, 1
      %v1638 = vsel %vm1614, %v1633, %v1637
      %v1639 = vrot.slane %v1543, 1
      %v1640 = vsel %vm1614, %v1635, %v1639
      %v1641 = vrot.slane %v1544, 1
      %v1642 = vsel %vm1614, %v1637, %v1641
      %v1643 = vrot.slane %v1545, 1
      %v1644 = vsel %vm1614, %v1639, %v1643
      %v1645 = vrot.slane %v1546, 1
      %v1646 = vsel %vm1614, %v1641, %v1645
      %v1647 = vrot.slane %v1547, 1
      %v1648 = vsel %vm1614, %v1643, %v1647
      %v1649 = vrot.slane %v1548, 1
      %v1650 = vsel %vm1614, %v1645, %v1649
      %v1651 = vrot.slane %v1549, 1
      %v1652 = vsel %vm1614, %v1647, %v1651
      %v1653 = vrot.slane %v1550, 1
      %v1654 = vsel %vm1614, %v1649, %v1653
      %v1655 = vrot.slane %v1551, 1
      %v1656 = vsel %vm1614, %v1651, %v1655
      %v1657 = vrot.slane %v1552, 1
      %v1658 = vsel %vm1614, %v1653, %v1657
      %v1659 = vrot.slane %v1553, 1
      %v1660 = vsel %vm1614, %v1655, %v1659
      %v1661 = vrot.slane %v1554, 1
      %v1662 = vsel %vm1614, %v1657, %v1661
      %v1663 = vrot.slane %v1555, 1
      %v1664 = vsel %vm1614, %v1659, %v1663
      %v1665 = vrot.slane %v1556, 1
      %v1666 = vsel %vm1614, %v1661, %v1665
      %v1667 = vrot.slane %v1557, 1
      %v1668 = vsel %vm1614, %v1663, %v1667
      %v1669 = vrot.slane %v1558, 1
      %v1670 = vsel %vm1614, %v1665, %v1669
      %v1671 = vrot.slane %v1559, 1
      %v1672 = vsel %vm1614, %v1667, %v1671
      %v1673 = vrot.slane %v1560, 1
      %v1674 = vsel %vm1614, %v1669, %v1673
      %v1675 = vrot.slane %v1561, 1
      %v1676 = vsel %vm1614, %v1671, %v1675
      %v1677 = vrot.slane %v1562, 1
      %v1678 = vsel %vm1614, %v1673, %v1677
      %v1679 = vrot.slane %v1563, 1
      %v1680 = vsel %vm1614, %v1675, %v1679
      %v1681 = vrot.slane %v1564, 1
      %v1682 = vsel %vm1614, %v1677, %v1681
      %v1683 = vrot.slane %v1565, 1
      %v1684 = vsel %vm1614, %v1679, %v1683
      %v1685 = vrot.slane %v1566, 1
      %v1686 = vsel %vm1614, %v1681, %v1685
      %v1687 = vrot.slane %v1567, 1
      %v1688 = vsel %vm1614, %v1683, %v1687
      %v1689 = vrot.slane %v1572, 1
      %v1690 = vsel %vm1614, %v1685, %v1689
      %v1691 = vrot.slane %v1573, 1
      %v1692 = vsel %vm1614, %v1687, %v1691
      %v1733 = vmax.f32 %v1530, %v1617
      %v1734 = vmax.f32 %v1531, %v1620
      %v1735 = vmax.f32 %v1532, %v1622
      %v1736 = vmax.f32 %v1533, %v1624
      %v1737 = vmax.f32 %v1534, %v1626
      %v1738 = vmax.f32 %v1535, %v1628
      %v1739 = vmax.f32 %v1536, %v1630
      %v1740 = vmax.f32 %v1537, %v1632
      %v1741 = vmax.f32 %v1538, %v1634
      %v1742 = vmax.f32 %v1539, %v1636
      %v1743 = vmax.f32 %v1540, %v1638
      %v1744 = vmax.f32 %v1541, %v1640
      %v1745 = vmax.f32 %v1542, %v1642
      %v1746 = vmax.f32 %v1543, %v1644
      %v1747 = vmax.f32 %v1544, %v1646
      %v1748 = vmax.f32 %v1545, %v1648
      %v1749 = vmax.f32 %v1546, %v1650
      %v1750 = vmax.f32 %v1547, %v1652
      %v1751 = vmax.f32 %v1548, %v1654
      %v1752 = vmax.f32 %v1549, %v1656
      %v1753 = vmax.f32 %v1550, %v1658
      %v1754 = vmax.f32 %v1551, %v1660
      %v1755 = vmax.f32 %v1552, %v1662
      %v1756 = vmax.f32 %v1553, %v1664
      %v1757 = vmax.f32 %v1554, %v1666
      %v1758 = vmax.f32 %v1555, %v1668
      %v1759 = vmax.f32 %v1556, %v1670
      %v1760 = vmax.f32 %v1557, %v1672
      %v1761 = vmax.f32 %v1558, %v1674
      %v1762 = vmax.f32 %v1559, %v1676
      %v1763 = vmax.f32 %v1560, %v1678
      %v1764 = vmax.f32 %v1561, %v1680
      %v1765 = vmax.f32 %v1562, %v1682
      %v1766 = vmax.f32 %v1563, %v1684
      %v1767 = vmax.f32 %v1564, %v1686
      %v1768 = vmax.f32 %v1565, %v1688
      %v1769 = vmax.f32 %v1566, %v1690
      %v1770 = vmax.f32 %v1567, %v1692
      %v1771 = vmax.f32 %v1568, %v1689
      %v1772 = vmax.f32 %v1569, %v1691
      %1813 = vrot.lane.b32.xlu0 %v1733, 127
      %v1814 = vpop.permute.xlu0 %1813
      %1815 = vrot.lane.b32.xlu0 %v1734, 127
      %v1816 = vpop.permute.xlu0 %1815
      %1817 = vrot.lane.b32.xlu0 %v1735, 127
      %v1818 = vpop.permute.xlu0 %1817
      %1819 = vrot.lane.b32.xlu0 %v1736, 127
      %v1820 = vpop.permute.xlu0 %1819
      %1821 = vrot.lane.b32.xlu0 %v1737, 127
      %v1822 = vpop.permute.xlu0 %1821
      %1823 = vrot.lane.b32.xlu0 %v1738, 127
      %v1824 = vpop.permute.xlu0 %1823
      %1825 = vrot.lane.b32.xlu0 %v1739, 127
      %v1826 = vpop.permute.xlu0 %1825
      %1827 = vrot.lane.b32.xlu0 %v1740, 127
      %v1828 = vpop.permute.xlu0 %1827
      %1829 = vrot.lane.b32.xlu0 %v1741, 127
      %v1830 = vpop.permute.xlu0 %1829
      %1831 = vrot.lane.b32.xlu0 %v1742, 127
      %v1832 = vpop.permute.xlu0 %1831
      %1833 = vrot.lane.b32.xlu0 %v1743, 127
      %v1834 = vpop.permute.xlu0 %1833
      %1835 = vrot.lane.b32.xlu0 %v1744, 127
      %v1836 = vpop.permute.xlu0 %1835
      %1837 = vrot.lane.b32.xlu0 %v1745, 127
      %v1838 = vpop.permute.xlu0 %1837
      %1839 = vrot.lane.b32.xlu0 %v1746, 127
      %v1840 = vpop.permute.xlu0 %1839
      %1841 = vrot.lane.b32.xlu0 %v1747, 127
      %v1842 = vpop.permute.xlu0 %1841
      %1843 = vrot.lane.b32.xlu0 %v1748, 127
      %v1844 = vpop.permute.xlu0 %1843
      %1845 = vrot.lane.b32.xlu0 %v1749, 127
      %v1846 = vpop.permute.xlu0 %1845
      %1847 = vrot.lane.b32.xlu0 %v1750, 127
      %v1848 = vpop.permute.xlu0 %1847
      %1849 = vrot.lane.b32.xlu0 %v1751, 127
      %v1850 = vpop.permute.xlu0 %1849
      %1851 = vrot.lane.b32.xlu0 %v1752, 127
      %v1852 = vpop.permute.xlu0 %1851
      %1853 = vrot.lane.b32.xlu0 %v1753, 127
      %v1854 = vpop.permute.xlu0 %1853
      %1855 = vrot.lane.b32.xlu0 %v1754, 127
      %v1856 = vpop.permute.xlu0 %1855
      %1857 = vrot.lane.b32.xlu0 %v1755, 127
      %v1858 = vpop.permute.xlu0 %1857
      %1859 = vrot.lane.b32.xlu0 %v1756, 127
      %v1860 = vpop.permute.xlu0 %1859
      %1861 = vrot.lane.b32.xlu0 %v1757, 127
      %v1862 = vpop.permute.xlu0 %1861
      %1863 = vrot.lane.b32.xlu0 %v1758, 127
      %v1864 = vpop.permute.xlu0 %1863
      %1865 = vrot.lane.b32.xlu0 %v1759, 127
      %v1866 = vpop.permute.xlu0 %1865
      %1867 = vrot.lane.b32.xlu0 %v1760, 127
      %v1868 = vpop.permute.xlu0 %1867
      %1869 = vrot.lane.b32.xlu0 %v1761, 127
      %v1870 = vpop.permute.xlu0 %1869
      %1871 = vrot.lane.b32.xlu0 %v1762, 127
      %v1872 = vpop.permute.xlu0 %1871
      %1873 = vrot.lane.b32.xlu0 %v1763, 127
      %v1874 = vpop.permute.xlu0 %1873
      %1875 = vrot.lane.b32.xlu0 %v1764, 127
      %v1876 = vpop.permute.xlu0 %1875
      %1877 = vrot.lane.b32.xlu0 %v1765, 127
      %v1878 = vpop.permute.xlu0 %1877
      %1879 = vrot.lane.b32.xlu0 %v1766, 127
      %v1880 = vpop.permute.xlu0 %1879
      %1881 = vrot.lane.b32.xlu0 %v1767, 127
      %v1882 = vpop.permute.xlu0 %1881
      %1883 = vrot.lane.b32.xlu0 %v1768, 127
      %v1884 = vpop.permute.xlu0 %1883
      %1885 = vrot.lane.b32.xlu0 %v1769, 127
      %v1886 = vpop.permute.xlu0 %1885
      %1887 = vrot.lane.b32.xlu0 %v1770, 127
      %v1888 = vpop.permute.xlu0 %1887
      %1889 = vrot.lane.b32.xlu0 %v1771, 127
      %v1890 = vpop.permute.xlu0 %1889
      %1891 = vrot.lane.b32.xlu0 %v1772, 127
      %v1892 = vpop.permute.xlu0 %1891
      %vm1893 = vcmask 1039360
      %v1894 = vsel %vm1893, %v1814, %v1816
      %v1895 = vsel %vm1893, %v1818, %v1820
      %v1896 = vsel %vm1893, %v1822, %v1824
      %v1897 = vsel %vm1893, %v1826, %v1828
      %v1898 = vsel %vm1893, %v1830, %v1832
      %v1899 = vsel %vm1893, %v1834, %v1836
      %v1900 = vsel %vm1893, %v1838, %v1840
      %v1901 = vsel %vm1893, %v1842, %v1844
      %v1902 = vsel %vm1893, %v1846, %v1848
      %v1903 = vsel %vm1893, %v1850, %v1852
      %v1904 = vsel %vm1893, %v1854, %v1856
      %v1905 = vsel %vm1893, %v1858, %v1860
      %v1906 = vsel %vm1893, %v1862, %v1864
      %v1907 = vsel %vm1893, %v1866, %v1868
      %v1908 = vsel %vm1893, %v1870, %v1872
      %v1909 = vsel %vm1893, %v1874, %v1876
      %v1910 = vsel %vm1893, %v1878, %v1880
      %v1911 = vsel %vm1893, %v1882, %v1884
      %v1912 = vsel %vm1893, %v1886, %v1888
      %v1913 = vsel %vm1893, %v1890, %v1892
      %v1954 = vmax.f32 %v1733, %v1894
      %v1955 = vmax.f32 %v1734, %v1816
      %v1956 = vmax.f32 %v1735, %v1895
      %v1957 = vmax.f32 %v1736, %v1820
      %v1958 = vmax.f32 %v1737, %v1896
      %v1959 = vmax.f32 %v1738, %v1824
      %v1960 = vmax.f32 %v1739, %v1897
      %v1961 = vmax.f32 %v1740, %v1828
      %v1962 = vmax.f32 %v1741, %v1898
      %v1963 = vmax.f32 %v1742, %v1832
      %v1964 = vmax.f32 %v1743, %v1899
      %v1965 = vmax.f32 %v1744, %v1836
      %v1966 = vmax.f32 %v1745, %v1900
      %v1967 = vmax.f32 %v1746, %v1840
      %v1968 = vmax.f32 %v1747, %v1901
      %v1969 = vmax.f32 %v1748, %v1844
      %v1970 = vmax.f32 %v1749, %v1902
      %v1971 = vmax.f32 %v1750, %v1848
      %v1972 = vmax.f32 %v1751, %v1903
      %v1973 = vmax.f32 %v1752, %v1852
      %v1974 = vmax.f32 %v1753, %v1904
      %v1975 = vmax.f32 %v1754, %v1856
      %v1976 = vmax.f32 %v1755, %v1905
      %v1977 = vmax.f32 %v1756, %v1860
      %v1978 = vmax.f32 %v1757, %v1906
      %v1979 = vmax.f32 %v1758, %v1864
      %v1980 = vmax.f32 %v1759, %v1907
      %v1981 = vmax.f32 %v1760, %v1868
      %v1982 = vmax.f32 %v1761, %v1908
      %v1983 = vmax.f32 %v1762, %v1872
      %v1984 = vmax.f32 %v1763, %v1909
      %v1985 = vmax.f32 %v1764, %v1876
      %v1986 = vmax.f32 %v1765, %v1910
      %v1987 = vmax.f32 %v1766, %v1880
      %v1988 = vmax.f32 %v1767, %v1911
      %v1989 = vmax.f32 %v1768, %v1884
      %v1990 = vmax.f32 %v1769, %v1912
      %v1991 = vmax.f32 %v1770, %v1888
      %v1992 = vmax.f32 %v1771, %v1913
      %v1993 = vmax.f32 %v1772, %v1892
      %v1994 = vld [vmem:[%s3] sm:$0xff]
      %v1995 = vld [vmem:[%s3 + $0x8] sm:$0xff]
      %v1996 = vld [vmem:[%s3 + $0x10] sm:$0xff]
      %v1997 = vld [vmem:[%s3 + $0x18] sm:$0xff]
      %v1998 = vld [vmem:[%s3 + $0x20] sm:$0xff]
      %v1999 = vld [vmem:[%s3 + $0x28] sm:$0xff]
      %v2000 = vld [vmem:[%s3 + $0x30] sm:$0xff]
      %v2001 = vld [vmem:[%s3 + $0x38] sm:$0xff]
      %v2002 = vld [vmem:[%s3 + $0x40] sm:$0xff]
      %v2003 = vld [vmem:[%s3 + $0x48] sm:$0xff]
      %v2004 = vld [vmem:[%s3 + $0x50] sm:$0xff]
      %v2005 = vld [vmem:[%s3 + $0x58] sm:$0xff]
      %v2006 = vld [vmem:[%s3 + $0x60] sm:$0xff]
      %v2007 = vld [vmem:[%s3 + $0x68] sm:$0xff]
      %v2008 = vld [vmem:[%s3 + $0x70] sm:$0xff]
      %v2009 = vld [vmem:[%s3 + $0x78] sm:$0xff]
      %v2010 = vld [vmem:[%s3 + $0x80] sm:$0xff]
      %v2011 = vld [vmem:[%s3 + $0x88] sm:$0xff]
      %v2012 = vld [vmem:[%s3 + $0x90] sm:$0x7f]
      %v2013 = vld [vmem:[%s3 + $0x98] sm:$0x7f]
      %vm2014 = vcmask 236544
      %v2016 = vsel %vm2014, %v1995, 0
      %v2019 = vsel %vm2014, %v1997, 0
      %v2022 = vsel %vm2014, %v1999, 0
      %v2025 = vsel %vm2014, %v2001, 0
      %v2028 = vsel %vm2014, %v2003, 0
      %v2031 = vsel %vm2014, %v2005, 0
      %v2034 = vsel %vm2014, %v2007, 0
      %v2037 = vsel %vm2014, %v2009, 0
      %v2040 = vsel %vm2014, %v2011, 0
      %v2043 = vsel %vm2014, %v2013, 0
      %vm2045 = vcmask 1044480
      %v2047 = vsel %vm2045, %v1992, 0
      %v2050 = vsel %vm2045, %v1993, 0
      %2052 = vmatpush.msra.mxu0 %v1984
      %2053 = vmatpush.msra.mxu0 %v1982
      %2054 = vmatpush.msra.mxu0 %v1980
      %2055 = vmatpush.msra.mxu0 %v1978
      %2056 = vmatpush.msra.mxu0 %v1976
      %2057 = vmatpush.msra.mxu0 %v1974
      %2058 = vmatpush.msra.mxu0 %v1972
      %2059 = vmatpush.msra.mxu0 %v1970
      %2060 = vmatpush.msra.mxu0 %v1968
      %2061 = vmatpush.msra.mxu0 %v1966
      %2062 = vmatpush.msra.mxu0 %v1964
      %2063 = vmatpush.msra.mxu0 %v1962
      %2064 = vmatpush.msra.mxu0 %v1960
      %2065 = vmatpush.msra.mxu0 %v1958
      %2066 = vmatpush.msra.mxu0 %v1956
      %2067 = vmatpush.msra.mxu0 %v1954
      %2068 = vmatmul.f32.gmra.mxu0 %v1994
      %v2069 = vpop.f32.mrf.mxu0
      %v2070 = vadd.f32 0.0, %v2069
      %2071 = vmatmul.f32.gmra.mxu0 %v1996
      %v2072 = vpop.f32.mrf.mxu0
      %v2073 = vadd.f32 0.0, %v2072
      %2074 = vmatmul.f32.gmra.mxu0 %v1998
      %v2075 = vpop.f32.mrf.mxu0
      %v2076 = vadd.f32 0.0, %v2075
      %2077 = vmatmul.f32.gmra.mxu0 %v2000
      %v2078 = vpop.f32.mrf.mxu0
      %v2079 = vadd.f32 0.0, %v2078
      %2080 = vmatmul.f32.gmra.mxu0 %v2002
      %v2081 = vpop.f32.mrf.mxu0
      %v2082 = vadd.f32 0.0, %v2081
      %2083 = vmatmul.f32.gmra.mxu0 %v2004
      %v2084 = vpop.f32.mrf.mxu0
      %v2085 = vadd.f32 0.0, %v2084
      %2086 = vmatmul.f32.gmra.mxu0 %v2006
      %v2087 = vpop.f32.mrf.mxu0
      %v2088 = vadd.f32 0.0, %v2087
      %2089 = vmatmul.f32.gmra.mxu0 %v2008
      %v2090 = vpop.f32.mrf.mxu0
      %v2091 = vadd.f32 0.0, %v2090
      %2092 = vmatmul.f32.gmra.mxu0 %v2010
      %v2093 = vpop.f32.mrf.mxu0
      %v2094 = vadd.f32 0.0, %v2093
      %2095 = vmatmul.f32.gmra.mxu0 %v2012
      %v2096 = vpop.f32.mrf.mxu0
      %v2097 = vadd.f32 0.0, %v2096
      %2098 = vdwg.mxu0
      %2099 = vmatpush.msra.mxu0 0.0
      %2100 = vmatpush.msra.mxu0 0.0
      %2101 = vmatpush.msra.mxu0 0.0
      %2102 = vmatpush.msra.mxu0 0.0
      %2103 = vmatpush.msra.mxu0 0.0
      %2104 = vmatpush.msra.mxu0 0.0
      %2105 = vmatpush.msra.mxu0 0.0
      %2106 = vmatpush.msra.mxu0 0.0
      %2107 = vmatpush.msra.mxu0 0.0
      %2108 = vmatpush.msra.mxu0 0.0
      %2109 = vmatpush.msra.mxu0 0.0
      %2110 = vmatpush.msra.mxu0 0.0
      %2111 = vmatpush.msra.mxu0 %v2047
      %2112 = vmatpush.msra.mxu0 %v1990
      %2113 = vmatpush.msra.mxu0 %v1988
      %2114 = vmatpush.msra.mxu0 %v1986
      %2115 = vmatmul.f32.gmra.mxu0 %v2016
      %v2116 = vpop.f32.mrf.mxu0
      %v2117 = vadd.f32 %v2070, %v2116
      %2118 = vmatmul.f32.gmra.mxu0 %v2019
      %v2119 = vpop.f32.mrf.mxu0
      %v2120 = vadd.f32 %v2073, %v2119
      %2121 = vmatmul.f32.gmra.mxu0 %v2022
      %v2122 = vpop.f32.mrf.mxu0
      %v2123 = vadd.f32 %v2076, %v2122
      %2124 = vmatmul.f32.gmra.mxu0 %v2025
      %v2125 = vpop.f32.mrf.mxu0
      %v2126 = vadd.f32 %v2079, %v2125
      %2127 = vmatmul.f32.gmra.mxu0 %v2028
      %v2128 = vpop.f32.mrf.mxu0
      %v2129 = vadd.f32 %v2082, %v2128
      %2130 = vmatmul.f32.gmra.mxu0 %v2031
      %v2131 = vpop.f32.mrf.mxu0
      %v2132 = vadd.f32 %v2085, %v2131
      %2133 = vmatmul.f32.gmra.mxu0 %v2034
      %v2134 = vpop.f32.mrf.mxu0
      %v2135 = vadd.f32 %v2088, %v2134
      %2136 = vmatmul.f32.gmra.mxu0 %v2037
      %v2137 = vpop.f32.mrf.mxu0
      %v2138 = vadd.f32 %v2091, %v2137
      %2139 = vmatmul.f32.gmra.mxu0 %v2040
      %v2140 = vpop.f32.mrf.mxu0
      %v2141 = vadd.f32 %v2094, %v2140
      %2142 = vmatmul.f32.gmra.mxu0 %v2043
      %v2143 = vpop.f32.mrf.mxu0
      %v2144 = vadd.f32 %v2097, %v2143
      %2145 = vdwg.mxu0
      %2146 = vmatpush.msra.mxu0 %v1985
      %2147 = vmatpush.msra.mxu0 %v1983
      %2148 = vmatpush.msra.mxu0 %v1981
      %2149 = vmatpush.msra.mxu0 %v1979
      %2150 = vmatpush.msra.mxu0 %v1977
      %2151 = vmatpush.msra.mxu0 %v1975
      %2152 = vmatpush.msra.mxu0 %v1973
      %2153 = vmatpush.msra.mxu0 %v1971
      %2154 = vmatpush.msra.mxu0 %v1969
      %2155 = vmatpush.msra.mxu0 %v1967
      %2156 = vmatpush.msra.mxu0 %v1965
      %2157 = vmatpush.msra.mxu0 %v1963
      %2158 = vmatpush.msra.mxu0 %v1961
      %2159 = vmatpush.msra.mxu0 %v1959
      %2160 = vmatpush.msra.mxu0 %v1957
      %2161 = vmatpush.msra.mxu0 %v1955
      %2162 = vmatmul.f32.gmra.mxu0 %v1994
      %v2163 = vpop.f32.mrf.mxu0
      %v2164 = vadd.f32 0.0, %v2163
      %2165 = vmatmul.f32.gmra.mxu0 %v1996
      %v2166 = vpop.f32.mrf.mxu0
      %v2167 = vadd.f32 0.0, %v2166
      %2168 = vmatmul.f32.gmra.mxu0 %v1998
      %v2169 = vpop.f32.mrf.mxu0
      %v2170 = vadd.f32 0.0, %v2169
      %2171 = vmatmul.f32.gmra.mxu0 %v2000
      %v2172 = vpop.f32.mrf.mxu0
      %v2173 = vadd.f32 0.0, %v2172
      %2174 = vmatmul.f32.gmra.mxu0 %v2002
      %v2175 = vpop.f32.mrf.mxu0
      %v2176 = vadd.f32 0.0, %v2175
      %2177 = vmatmul.f32.gmra.mxu0 %v2004
      %v2178 = vpop.f32.mrf.mxu0
      %v2179 = vadd.f32 0.0, %v2178
      %2180 = vmatmul.f32.gmra.mxu0 %v2006
      %v2181 = vpop.f32.mrf.mxu0
      %v2182 = vadd.f32 0.0, %v2181
      %2183 = vmatmul.f32.gmra.mxu0 %v2008
      %v2184 = vpop.f32.mrf.mxu0
      %v2185 = vadd.f32 0.0, %v2184
      %2186 = vmatmul.f32.gmra.mxu0 %v2010
      %v2187 = vpop.f32.mrf.mxu0
      %v2188 = vadd.f32 0.0, %v2187
      %2189 = vmatmul.f32.gmra.mxu0 %v2012
      %v2190 = vpop.f32.mrf.mxu0
      %v2191 = vadd.f32 0.0, %v2190
      %2192 = vdwg.mxu0
      %2193 = vmatpush.msra.mxu0 0.0
      %2194 = vmatpush.msra.mxu0 0.0
      %2195 = vmatpush.msra.mxu0 0.0
      %2196 = vmatpush.msra.mxu0 0.0
      %2197 = vmatpush.msra.mxu0 0.0
      %2198 = vmatpush.msra.mxu0 0.0
      %2199 = vmatpush.msra.mxu0 0.0
      %2200 = vmatpush.msra.mxu0 0.0
      %2201 = vmatpush.msra.mxu0 0.0
      %2202 = vmatpush.msra.mxu0 0.0
      %2203 = vmatpush.msra.mxu0 0.0
      %2204 = vmatpush.msra.mxu0 0.0
      %2205 = vmatpush.msra.mxu0 %v2050
      %2206 = vmatpush.msra.mxu0 %v1991
      %2207 = vmatpush.msra.mxu0 %v1989
      %2208 = vmatpush.msra.mxu0 %v1987
      %2209 = vmatmul.f32.gmra.mxu0 %v2016
      %v2210 = vpop.f32.mrf.mxu0
      %v2211 = vadd.f32 %v2164, %v2210
      %2212 = vmatmul.f32.gmra.mxu0 %v2019
      %v2213 = vpop.f32.mrf.mxu0
      %v2214 = vadd.f32 %v2167, %v2213
      %2215 = vmatmul.f32.gmra.mxu0 %v2022
      %v2216 = vpop.f32.mrf.mxu0
      %v2217 = vadd.f32 %v2170, %v2216
      %2218 = vmatmul.f32.gmra.mxu0 %v2025
      %v2219 = vpop.f32.mrf.mxu0
      %v2220 = vadd.f32 %v2173, %v2219
      %2221 = vmatmul.f32.gmra.mxu0 %v2028
      %v2222 = vpop.f32.mrf.mxu0
      %v2223 = vadd.f32 %v2176, %v2222
      %2224 = vmatmul.f32.gmra.mxu0 %v2031
      %v2225 = vpop.f32.mrf.mxu0
      %v2226 = vadd.f32 %v2179, %v2225
      %2227 = vmatmul.f32.gmra.mxu0 %v2034
      %v2228 = vpop.f32.mrf.mxu0
      %v2229 = vadd.f32 %v2182, %v2228
      %2230 = vmatmul.f32.gmra.mxu0 %v2037
      %v2231 = vpop.f32.mrf.mxu0
      %v2232 = vadd.f32 %v2185, %v2231
      %2233 = vmatmul.f32.gmra.mxu0 %v2040
      %v2234 = vpop.f32.mrf.mxu0
      %v2235 = vadd.f32 %v2188, %v2234
      %2236 = vmatmul.f32.gmra.mxu0 %v2043
      %v2237 = vpop.f32.mrf.mxu0
      %v2238 = vadd.f32 %v2191, %v2237
      %2239 = vdwg.mxu0
      %v2240 = vld [vmem:[%s4] sm:$0xff]
      %v2241 = vld [vmem:[%s4 + $0x8] sm:$0xff]
      %v2242 = vld [vmem:[%s4 + $0x10] sm:$0xff]
      %v2243 = vld [vmem:[%s4 + $0x18] sm:$0xff]
      %v2244 = vld [vmem:[%s4 + $0x20] sm:$0xff]
      %v2245 = vld [vmem:[%s4 + $0x28] sm:$0xff]
      %v2246 = vld [vmem:[%s4 + $0x30] sm:$0xff]
      %v2247 = vld [vmem:[%s4 + $0x38] sm:$0xff]
      %v2248 = vld [vmem:[%s4 + $0x40] sm:$0xff]
      %v2249 = vld [vmem:[%s4 + $0x48] sm:$0xff]
      %v2250 = vld [vmem:[%s4 + $0x50] sm:$0xff]
      %v2251 = vld [vmem:[%s4 + $0x58] sm:$0xff]
      %v2252 = vld [vmem:[%s4 + $0x60] sm:$0xff]
      %v2253 = vld [vmem:[%s4 + $0x68] sm:$0xff]
      %v2254 = vld [vmem:[%s4 + $0x70] sm:$0xff]
      %v2255 = vld [vmem:[%s4 + $0x78] sm:$0xff]
      %v2256 = vld [vmem:[%s4 + $0x80] sm:$0xff]
      %v2257 = vld [vmem:[%s4 + $0x88] sm:$0xff]
      %v2258 = vld [vmem:[%s4 + $0x90] sm:$0xff]
      %v2259 = vld [vmem:[%s4 + $0x98] sm:$0xff]
      %v2260 = vld [vmem:[%s4 + $0xa0] sm:$0xff]
      %v2261 = vld [vmem:[%s4 + $0xa8] sm:$0xff]
      %v2262 = vld [vmem:[%s4 + $0xb0] sm:$0xff]
      %v2263 = vld [vmem:[%s4 + $0xb8] sm:$0xff]
      %v2264 = vld [vmem:[%s4 + $0xc0] sm:$0xff]
      %v2265 = vld [vmem:[%s4 + $0xc8] sm:$0xff]
      %v2266 = vld [vmem:[%s4 + $0xd0] sm:$0xff]
      %v2267 = vld [vmem:[%s4 + $0xd8] sm:$0xff]
      %v2268 = vld [vmem:[%s4 + $0xe0] sm:$0x7f]
      %vm2269 = vcmask 842752
      %v2271 = vsel %vm2269, %v2211, 0
      %v2274 = vsel %vm2269, %v2214, 0
      %v2277 = vsel %vm2269, %v2217, 0
      %v2280 = vsel %vm2269, %v2220, 0
      %v2283 = vsel %vm2269, %v2223, 0
      %v2286 = vsel %vm2269, %v2226, 0
      %v2289 = vsel %vm2269, %v2229, 0
      %v2292 = vsel %vm2269, %v2232, 0
      %v2295 = vsel %vm2269, %v2235, 0
      %v2298 = vsel %vm2269, %v2238, 0
      %v2301 = vsel %vm1614, %v2268, 0
      %2303 = vmatpush.msra.mxu0 %v2255
      %2304 = vmatpush.msra.mxu0 %v2254
      %2305 = vmatpush.msra.mxu0 %v2253
      %2306 = vmatpush.msra.mxu0 %v2252
      %2307 = vmatpush.msra.mxu0 %v2251
      %2308 = vmatpush.msra.mxu0 %v2250
      %2309 = vmatpush.msra.mxu0 %v2249
      %2310 = vmatpush.msra.mxu0 %v2248
      %2311 = vmatpush.msra.mxu0 %v2247
      %2312 = vmatpush.msra.mxu0 %v2246
      %2313 = vmatpush.msra.mxu0 %v2245
      %2314 = vmatpush.msra.mxu0 %v2244
      %2315 = vmatpush.msra.mxu0 %v2243
      %2316 = vmatpush.msra.mxu0 %v2242
      %2317 = vmatpush.msra.mxu0 %v2241
      %2318 = vmatpush.msra.mxu0 %v2240
      %2319 = vmatmul.f32.gmra.mxu0 %v2117
      %v2320 = vpop.f32.mrf.mxu0
      %v2321 = vadd.f32 0.0, %v2320
      %2322 = vmatmul.f32.gmra.mxu0 %v2120
      %v2323 = vpop.f32.mrf.mxu0
      %v2324 = vadd.f32 0.0, %v2323
      %2325 = vmatmul.f32.gmra.mxu0 %v2123
      %v2326 = vpop.f32.mrf.mxu0
      %v2327 = vadd.f32 0.0, %v2326
      %2328 = vmatmul.f32.gmra.mxu0 %v2126
      %v2329 = vpop.f32.mrf.mxu0
      %v2330 = vadd.f32 0.0, %v2329
      %2331 = vmatmul.f32.gmra.mxu0 %v2129
      %v2332 = vpop.f32.mrf.mxu0
      %v2333 = vadd.f32 0.0, %v2332
      %2334 = vmatmul.f32.gmra.mxu0 %v2132
      %v2335 = vpop.f32.mrf.mxu0
      %v2336 = vadd.f32 0.0, %v2335
      %2337 = vmatmul.f32.gmra.mxu0 %v2135
      %v2338 = vpop.f32.mrf.mxu0
      %v2339 = vadd.f32 0.0, %v2338
      %2340 = vmatmul.f32.gmra.mxu0 %v2138
      %v2341 = vpop.f32.mrf.mxu0
      %v2342 = vadd.f32 0.0, %v2341
      %2343 = vmatmul.f32.gmra.mxu0 %v2141
      %v2344 = vpop.f32.mrf.mxu0
      %v2345 = vadd.f32 0.0, %v2344
      %2346 = vmatmul.f32.gmra.mxu0 %v2144
      %v2347 = vpop.f32.mrf.mxu0
      %v2348 = vadd.f32 0.0, %v2347
      %2349 = vdwg.mxu0
      %2350 = vmatpush.msra.mxu0 0.0
      %2351 = vmatpush.msra.mxu0 0.0
      %2352 = vmatpush.msra.mxu0 0.0
      %2353 = vmatpush.msra.mxu0 %v2301
      %2354 = vmatpush.msra.mxu0 %v2267
      %2355 = vmatpush.msra.mxu0 %v2266
      %2356 = vmatpush.msra.mxu0 %v2265
      %2357 = vmatpush.msra.mxu0 %v2264
      %2358 = vmatpush.msra.mxu0 %v2263
      %2359 = vmatpush.msra.mxu0 %v2262
      %2360 = vmatpush.msra.mxu0 %v2261
      %2361 = vmatpush.msra.mxu0 %v2260
      %2362 = vmatpush.msra.mxu0 %v2259
      %2363 = vmatpush.msra.mxu0 %v2258
      %2364 = vmatpush.msra.mxu0 %v2257
      %2365 = vmatpush.msra.mxu0 %v2256
      %2366 = vmatmul.f32.gmra.mxu0 %v2271
      %v2367 = vpop.f32.mrf.mxu0
      %v2368 = vadd.f32 %v2321, %v2367
      %2369 = vmatmul.f32.gmra.mxu0 %v2274
      %v2370 = vpop.f32.mrf.mxu0
      %v2371 = vadd.f32 %v2324, %v2370
      %2372 = vmatmul.f32.gmra.mxu0 %v2277
      %v2373 = vpop.f32.mrf.mxu0
      %v2374 = vadd.f32 %v2327, %v2373
      %2375 = vmatmul.f32.gmra.mxu0 %v2280
      %v2376 = vpop.f32.mrf.mxu0
      %v2377 = vadd.f32 %v2330, %v2376
      %2378 = vmatmul.f32.gmra.mxu0 %v2283
      %v2379 = vpop.f32.mrf.mxu0
      %v2380 = vadd.f32 %v2333, %v2379
      %2381 = vmatmul.f32.gmra.mxu0 %v2286
      %v2382 = vpop.f32.mrf.mxu0
      %v2383 = vadd.f32 %v2336, %v2382
      %2384 = vmatmul.f32.gmra.mxu0 %v2289
      %v2385 = vpop.f32.mrf.mxu0
      %v2386 = vadd.f32 %v2339, %v2385
      %2387 = vmatmul.f32.gmra.mxu0 %v2292
      %v2388 = vpop.f32.mrf.mxu0
      %v2389 = vadd.f32 %v2342, %v2388
      %2390 = vmatmul.f32.gmra.mxu0 %v2295
      %v2391 = vpop.f32.mrf.mxu0
      %v2392 = vadd.f32 %v2345, %v2391
      %2393 = vmatmul.f32.gmra.mxu0 %v2298
      %v2394 = vpop.f32.mrf.mxu0
      %v2395 = vadd.f32 %v2348, %v2394
      %2396 = vdwg.mxu0
      %v2397 = vmax.f32 %v2368, 0.0
      %v2398 = vmax.f32 %v2371, 0.0
      %v2399 = vmax.f32 %v2374, 0.0
      %v2400 = vmax.f32 %v2377, 0.0
      %v2401 = vmax.f32 %v2380, 0.0
      %v2402 = vmax.f32 %v2383, 0.0
      %v2403 = vmax.f32 %v2386, 0.0
      %v2404 = vmax.f32 %v2389, 0.0
      %v2405 = vmax.f32 %v2392, 0.0
      %v2406 = vmax.f32 %v2395, 0.0
      %v2407 = vpack.c.bf16 %v2398, %v2397
      %v2408 = vpack.c.bf16 %v2400, %v2399
      %v2409 = vpack.c.bf16 %v2402, %v2401
      %v2410 = vpack.c.bf16 %v2404, %v2403
      %v2411 = vpack.c.bf16 %v2406, %v2405
      %v2412 = vld [vmem:[%s5] sm:$0xff]
      %v2413 = vld [vmem:[%s5 + $0x8] sm:$0xff]
      %v2414 = vld [vmem:[%s5 + $0x10] sm:$0xff]
      %v2415 = vld [vmem:[%s5 + $0x18] sm:$0xff]
      %v2416 = vld [vmem:[%s5 + $0x20] sm:$0xff]
      %v2417 = vld [vmem:[%s5 + $0x28] sm:$0xff]
      %v2418 = vld [vmem:[%s5 + $0x30] sm:$0xff]
      %v2419 = vld [vmem:[%s5 + $0x38] sm:$0xff]
      %v2420 = vld [vmem:[%s5 + $0x40] sm:$0xff]
      %v2421 = vld [vmem:[%s5 + $0x48] sm:$0xff]
      %v2422 = vld [vmem:[%s5 + $0x50] sm:$0xff]
      %v2423 = vld [vmem:[%s5 + $0x58] sm:$0xff]
      %v2424 = vld [vmem:[%s5 + $0x60] sm:$0xff]
      %v2425 = vld [vmem:[%s5 + $0x68] sm:$0xff]
      %v2426 = vld [vmem:[%s5 + $0x70] sm:$0x33]
      %v2427 = vld [vmem:[%s6] sm:$0x3]
      %v2429 = vperm.slane %v2427, 0
      %v2430 = vperm.slane %v2427, 1
      %v2448 = vunpack.c.l.b16 %v2412
      %v2449 = vunpack.c.h.b16 %v2412
      %v2450 = vunpack.c.l.b16 %v2413
      %v2451 = vunpack.c.h.b16 %v2413
      %v2452 = vunpack.c.l.b16 %v2414
      %v2453 = vunpack.c.h.b16 %v2414
      %v2454 = vunpack.c.l.b16 %v2415
      %v2455 = vunpack.c.h.b16 %v2415
      %v2456 = vunpack.c.l.b16 %v2416
      %v2457 = vunpack.c.h.b16 %v2416
      %v2458 = vunpack.c.l.b16 %v2417
      %v2459 = vunpack.c.h.b16 %v2417
      %v2460 = vunpack.c.l.b16 %v2418
      %v2461 = vunpack.c.h.b16 %v2418
      %v2462 = vunpack.c.l.b16 %v2419
      %v2463 = vunpack.c.h.b16 %v2419
      %v2464 = vunpack.c.l.b16 %v2420
      %v2465 = vunpack.c.h.b16 %v2420
      %v2466 = vunpack.c.l.b16 %v2421
      %v2467 = vunpack.c.h.b16 %v2421
      %v2468 = vunpack.c.l.b16 %v2422
      %v2469 = vunpack.c.h.b16 %v2422
      %v2470 = vunpack.c.l.b16 %v2423
      %v2471 = vunpack.c.h.b16 %v2423
      %v2472 = vunpack.c.l.b16 %v2424
      %v2473 = vunpack.c.h.b16 %v2424
      %v2474 = vunpack.c.l.b16 %v2425
      %v2475 = vunpack.c.h.b16 %v2425
      %v2476 = vunpack.c.l.b16 %v2426
      %v2477 = vunpack.c.h.b16 %v2426
      %v2478 = vpack.c.b16 %v2450, %v2448
      %v2479 = vpack.c.b16 %v2451, %v2449
      %v2480 = vpack.c.b16 %v2454, %v2452
      %v2481 = vpack.c.b16 %v2455, %v2453
      %v2482 = vpack.c.b16 %v2458, %v2456
      %v2483 = vpack.c.b16 %v2459, %v2457
      %v2484 = vpack.c.b16 %v2462, %v2460
      %v2485 = vpack.c.b16 %v2463, %v2461
      %v2486 = vpack.c.b16 %v2466, %v2464
      %v2487 = vpack.c.b16 %v2467, %v2465
      %v2488 = vpack.c.b16 %v2470, %v2468
      %v2489 = vpack.c.b16 %v2471, %v2469
      %v2490 = vpack.c.b16 %v2474, %v2472
      %v2491 = vpack.c.b16 %v2475, %v2473
      %v2492 = vpack.c.b16 %v2476, %v2476
      %v2493 = vpack.c.b16 %v2477, %v2477
      %vm2508 = vcmask 949248
      %v2510 = vsel %vm2508, %v2407, 0
      %v2513 = vsel %vm2508, %v2408, 0
      %v2516 = vsel %vm2508, %v2409, 0
      %v2519 = vsel %vm2508, %v2410, 0
      %v2522 = vsel %vm2508, %v2411, 0
      %vm2524 = vcmask 1041408
      %v2526 = vsel %vm2524, %v2492, 0
      %v2529 = vsel %vm2524, %v2493, 0
      %2531 = vmatpush.bf16.msra.mxu0 %v2526
      %2532 = vmatpush.bf16.msra.mxu0 %v2490
      %2533 = vmatpush.bf16.msra.mxu0 %v2488
      %2534 = vmatpush.bf16.msra.mxu0 %v2486
      %2535 = vmatpush.bf16.msra.mxu0 %v2484
      %2536 = vmatpush.bf16.msra.mxu0 %v2482
      %2537 = vmatpush.bf16.msra.mxu0 %v2480
      %2538 = vmatpush.bf16.msra.mxu0 %v2478
      %2539 = vmatmul.bf16.gmra.mxu0 %v2510
      %v2540 = vpop.f32.mrf.mxu0
      %v2541 = vadd.f32 %v2429, %v2540
      %v2542 = vpop.f32.mrf.mxu0
      %v2543 = vadd.f32 %v2429, %v2542
      %2544 = vmatmul.bf16.gmra.mxu0 %v2513
      %v2545 = vpop.f32.mrf.mxu0
      %v2546 = vadd.f32 %v2429, %v2545
      %v2547 = vpop.f32.mrf.mxu0
      %v2548 = vadd.f32 %v2429, %v2547
      %2549 = vmatmul.bf16.gmra.mxu0 %v2516
      %v2550 = vpop.f32.mrf.mxu0
      %v2551 = vadd.f32 %v2429, %v2550
      %v2552 = vpop.f32.mrf.mxu0
      %v2553 = vadd.f32 %v2429, %v2552
      %2554 = vmatmul.bf16.gmra.mxu0 %v2519
      %v2555 = vpop.f32.mrf.mxu0
      %v2556 = vadd.f32 %v2429, %v2555
      %v2557 = vpop.f32.mrf.mxu0
      %v2558 = vadd.f32 %v2429, %v2557
      %2559 = vmatmul.bf16.gmra.mxu0 %v2522
      %v2560 = vpop.f32.mrf.mxu0
      %v2561 = vadd.f32 %v2429, %v2560
      %v2562 = vpop.f32.mrf.mxu0
      %v2563 = vadd.f32 %v2429, %v2562
      %2564 = vdwg.mxu0
      %2565 = vmatpush.bf16.msra.mxu0 %v2529
      %2566 = vmatpush.bf16.msra.mxu0 %v2491
      %2567 = vmatpush.bf16.msra.mxu0 %v2489
      %2568 = vmatpush.bf16.msra.mxu0 %v2487
      %2569 = vmatpush.bf16.msra.mxu0 %v2485
      %2570 = vmatpush.bf16.msra.mxu0 %v2483
      %2571 = vmatpush.bf16.msra.mxu0 %v2481
      %2572 = vmatpush.bf16.msra.mxu0 %v2479
      %2573 = vmatmul.bf16.gmra.mxu0 %v2510
      %v2574 = vpop.f32.mrf.mxu0
      %v2575 = vadd.f32 %v2430, %v2574
      %v2576 = vpop.f32.mrf.mxu0
      %v2577 = vadd.f32 %v2430, %v2576
      %2578 = vmatmul.bf16.gmra.mxu0 %v2513
      %v2579 = vpop.f32.mrf.mxu0
      %v2580 = vadd.f32 %v2430, %v2579
      %v2581 = vpop.f32.mrf.mxu0
      %v2582 = vadd.f32 %v2430, %v2581
      %2583 = vmatmul.bf16.gmra.mxu0 %v2516
      %v2584 = vpop.f32.mrf.mxu0
      %v2585 = vadd.f32 %v2430, %v2584
      %v2586 = vpop.f32.mrf.mxu0
      %v2587 = vadd.f32 %v2430, %v2586
      %2588 = vmatmul.bf16.gmra.mxu0 %v2519
      %v2589 = vpop.f32.mrf.mxu0
      %v2590 = vadd.f32 %v2430, %v2589
      %v2591 = vpop.f32.mrf.mxu0
      %v2592 = vadd.f32 %v2430, %v2591
      %2593 = vmatmul.bf16.gmra.mxu0 %v2522
      %v2594 = vpop.f32.mrf.mxu0
      %v2595 = vadd.f32 %v2430, %v2594
      %v2596 = vpop.f32.mrf.mxu0
      %v2597 = vadd.f32 %v2430, %v2596
      %2598 = vdwg.mxu0
      %2599 = vst [vmem:[#allocation3] sm:$0xff] %v2541
      %vm2600 = vcmask 719872
      %2601 = vst.msk [vmem:[#allocation3 + $0x8] sm:$0xff] %vm2600, %v2575
      %2602 = vst [vmem:[#allocation3 + $0x10] sm:$0xff] %v2543
      %2603 = vst.msk [vmem:[#allocation3 + $0x18] sm:$0xff] %vm2600, %v2577
      %2604 = vst [vmem:[#allocation3 + $0x20] sm:$0xff] %v2546
      %2605 = vst.msk [vmem:[#allocation3 + $0x28] sm:$0xff] %vm2600, %v2580
      %2606 = vst [vmem:[#allocation3 + $0x30] sm:$0xff] %v2548
      %2607 = vst.msk [vmem:[#allocation3 + $0x38] sm:$0xff] %vm2600, %v2582
      %2608 = vst [vmem:[#allocation3 + $0x40] sm:$0xff] %v2551
      %2609 = vst.msk [vmem:[#allocation3 + $0x48] sm:$0xff] %vm2600, %v2585
      %2610 = vst [vmem:[#allocation3 + $0x50] sm:$0xff] %v2553
      %2611 = vst.msk [vmem:[#allocation3 + $0x58] sm:$0xff] %vm2600, %v2587
      %2612 = vst [vmem:[#allocation3 + $0x60] sm:$0xff] %v2556
      %2613 = vst.msk [vmem:[#allocation3 + $0x68] sm:$0xff] %vm2600, %v2590
      %2614 = vst [vmem:[#allocation3 + $0x70] sm:$0xff] %v2558
      %2615 = vst.msk [vmem:[#allocation3 + $0x78] sm:$0xff] %vm2600, %v2592
      %2616 = vst [vmem:[#allocation3 + $0x80] sm:$0xff] %v2561
      %2617 = vst.msk [vmem:[#allocation3 + $0x88] sm:$0xff] %vm2600, %v2595
      %2618 = vst [vmem:[#allocation3 + $0x90] sm:$0x1f] %v2563
      %vm2619 = vcmask 716800
      %2620 = vst.msk [vmem:[#allocation3 + $0x98] sm:$0x1f] %vm2619, %v2597
      %v2621 = vld [vmem:[#allocation3] sm:$0xff]
      %v2622 = vld [vmem:[#allocation3 + $0x8] sm:$0xff]
      %v2623 = vld [vmem:[#allocation3 + $0x10] sm:$0xff]
      %v2624 = vld [vmem:[#allocation3 + $0x18] sm:$0xff]
      %v2625 = vld [vmem:[#allocation3 + $0x20] sm:$0xff]
      %v2626 = vld [vmem:[#allocation3 + $0x28] sm:$0xff]
      %v2627 = vld [vmem:[#allocation3 + $0x30] sm:$0xff]
      %v2628 = vld [vmem:[#allocation3 + $0x38] sm:$0xff]
      %v2629 = vld [vmem:[#allocation3 + $0x40] sm:$0xff]
      %v2630 = vld [vmem:[#allocation3 + $0x48] sm:$0xff]
      %v2631 = vld [vmem:[#allocation3 + $0x50] sm:$0xff]
      %v2632 = vld [vmem:[#allocation3 + $0x58] sm:$0xff]
      %v2633 = vld [vmem:[#allocation3 + $0x60] sm:$0xff]
      %v2634 = vld [vmem:[#allocation3 + $0x68] sm:$0xff]
      %v2635 = vld [vmem:[#allocation3 + $0x70] sm:$0xff]
      %v2636 = vld [vmem:[#allocation3 + $0x78] sm:$0xff]
      %v2637 = vld [vmem:[#allocation3 + $0x80] sm:$0xff]
      %v2638 = vld [vmem:[#allocation3 + $0x88] sm:$0xff]
      %v2639 = vld [vmem:[#allocation3 + $0x90] sm:$0x1f]
      %v2640 = vld [vmem:[#allocation3 + $0x98] sm:$0x1f]
      %s2641 = scalar_lea.vmem %s5, 120
      %v2642 = vld [vmem:[%s2641] sm:$0xff]
      %v2643 = vld [vmem:[%s2641 + $0x8] sm:$0xff]
      %v2644 = vld [vmem:[%s2641 + $0x10] sm:$0xff]
      %v2645 = vld [vmem:[%s2641 + $0x18] sm:$0xff]
      %v2646 = vld [vmem:[%s2641 + $0x20] sm:$0xff]
      %v2647 = vld [vmem:[%s2641 + $0x28] sm:$0xff]
      %v2648 = vld [vmem:[%s2641 + $0x30] sm:$0xff]
      %v2649 = vld [vmem:[%s2641 + $0x38] sm:$0xff]
      %v2650 = vld [vmem:[%s2641 + $0x40] sm:$0xff]
      %v2651 = vld [vmem:[%s2641 + $0x48] sm:$0xff]
      %v2652 = vld [vmem:[%s2641 + $0x50] sm:$0xff]
      %v2653 = vld [vmem:[%s2641 + $0x58] sm:$0xff]
      %v2654 = vld [vmem:[%s2641 + $0x60] sm:$0xff]
      %v2655 = vld [vmem:[%s2641 + $0x68] sm:$0xff]
      %v2656 = vld [vmem:[%s2641 + $0x70] sm:$0x33]
      %vm2657 = vsmask.f32 7424
      %v2658 = vshrl.u32 %v2407, 16
      %v2660 = vshll.u32 %v2407, 16
      %v2662 = vrot.slane %v2660, 1
      %v2663 = vor.u32 %v2658, %v2662
      %v2664 = vshll.u32 %v2408, 16
      %v2666 = vrot.slane %v2664, 1
      %v2667 = vsel %vm2657, %v2663, %v2666
      %v2668 = vshrl.u32 %v2408, 16
      %v2670 = vor.u32 %v2668, %v2666
      %v2671 = vshll.u32 %v2409, 16
      %v2673 = vrot.slane %v2671, 1
      %v2674 = vsel %vm2657, %v2670, %v2673
      %v2675 = vshrl.u32 %v2409, 16
      %v2677 = vor.u32 %v2675, %v2673
      %v2678 = vshll.u32 %v2410, 16
      %v2680 = vrot.slane %v2678, 1
      %v2681 = vsel %vm2657, %v2677, %v2680
      %v2682 = vshrl.u32 %v2410, 16
      %v2684 = vor.u32 %v2682, %v2680
      %v2685 = vshll.u32 %v2411, 16
      %v2687 = vrot.slane %v2685, 1
      %v2688 = vsel %vm2657, %v2684, %v2687
      %v2689 = vshrl.u32 %v2411, 16
      %v2691 = vor.u32 %v2689, %v2687
      %v2707 = vunpack.c.l.b16 %v2642
      %v2708 = vunpack.c.h.b16 %v2642
      %v2709 = vunpack.c.l.b16 %v2643
      %v2710 = vunpack.c.h.b16 %v2643
      %v2711 = vunpack.c.l.b16 %v2644
      %v2712 = vunpack.c.h.b16 %v2644
      %v2713 = vunpack.c.l.b16 %v2645
      %v2714 = vunpack.c.h.b16 %v2645
      %v2715 = vunpack.c.l.b16 %v2646
      %v2716 = vunpack.c.h.b16 %v2646
      %v2717 = vunpack.c.l.b16 %v2647
      %v2718 = vunpack.c.h.b16 %v2647
      %v2719 = vunpack.c.l.b16 %v2648
      %v2720 = vunpack.c.h.b16 %v2648
      %v2721 = vunpack.c.l.b16 %v2649
      %v2722 = vunpack.c.h.b16 %v2649
      %v2723 = vunpack.c.l.b16 %v2650
      %v2724 = vunpack.c.h.b16 %v2650
      %v2725 = vunpack.c.l.b16 %v2651
      %v2726 = vunpack.c.h.b16 %v2651
      %v2727 = vunpack.c.l.b16 %v2652
      %v2728 = vunpack.c.h.b16 %v2652
      %v2729 = vunpack.c.l.b16 %v2653
      %v2730 = vunpack.c.h.b16 %v2653
      %v2731 = vunpack.c.l.b16 %v2654
      %v2732 = vunpack.c.h.b16 %v2654
      %v2733 = vunpack.c.l.b16 %v2655
      %v2734 = vunpack.c.h.b16 %v2655
      %v2735 = vunpack.c.l.b16 %v2656
      %v2736 = vunpack.c.h.b16 %v2656
      %v2737 = vpack.c.b16 %v2709, %v2707
      %v2738 = vpack.c.b16 %v2710, %v2708
      %v2739 = vpack.c.b16 %v2713, %v2711
      %v2740 = vpack.c.b16 %v2714, %v2712
      %v2741 = vpack.c.b16 %v2717, %v2715
      %v2742 = vpack.c.b16 %v2718, %v2716
      %v2743 = vpack.c.b16 %v2721, %v2719
      %v2744 = vpack.c.b16 %v2722, %v2720
      %v2745 = vpack.c.b16 %v2725, %v2723
      %v2746 = vpack.c.b16 %v2726, %v2724
      %v2747 = vpack.c.b16 %v2729, %v2727
      %v2748 = vpack.c.b16 %v2730, %v2728
      %v2749 = vpack.c.b16 %v2733, %v2731
      %v2750 = vpack.c.b16 %v2734, %v2732
      %v2751 = vpack.c.b16 %v2735, %v2735
      %v2752 = vpack.c.b16 %v2736, %v2736
      %v2768 = vsel %vm2508, %v2667, 0
      %v2771 = vsel %vm2508, %v2674, 0
      %v2774 = vsel %vm2508, %v2681, 0
      %v2777 = vsel %vm2508, %v2688, 0
      %v2780 = vsel %vm2508, %v2691, 0
      %v2783 = vsel %vm2524, %v2751, 0
      %v2786 = vsel %vm2524, %v2752, 0
      %2788 = vmatpush.bf16.msra.mxu0 %v2783
      %2789 = vmatpush.bf16.msra.mxu0 %v2749
      %2790 = vmatpush.bf16.msra.mxu0 %v2747
      %2791 = vmatpush.bf16.msra.mxu0 %v2745
      %2792 = vmatpush.bf16.msra.mxu0 %v2743
      %2793 = vmatpush.bf16.msra.mxu0 %v2741
      %2794 = vmatpush.bf16.msra.mxu0 %v2739
      %2795 = vmatpush.bf16.msra.mxu0 %v2737
      %2796 = vmatmul.bf16.gmra.mxu0 %v2768
      %v2797 = vpop.f32.mrf.mxu0
      %v2798 = vadd.f32 0.0, %v2797
      %v2799 = vpop.f32.mrf.mxu0
      %v2800 = vadd.f32 0.0, %v2799
      %2801 = vmatmul.bf16.gmra.mxu0 %v2771
      %v2802 = vpop.f32.mrf.mxu0
      %v2803 = vadd.f32 0.0, %v2802
      %v2804 = vpop.f32.mrf.mxu0
      %v2805 = vadd.f32 0.0, %v2804
      %2806 = vmatmul.bf16.gmra.mxu0 %v2774
      %v2807 = vpop.f32.mrf.mxu0
      %v2808 = vadd.f32 0.0, %v2807
      %v2809 = vpop.f32.mrf.mxu0
      %v2810 = vadd.f32 0.0, %v2809
      %2811 = vmatmul.bf16.gmra.mxu0 %v2777
      %v2812 = vpop.f32.mrf.mxu0
      %v2813 = vadd.f32 0.0, %v2812
      %v2814 = vpop.f32.mrf.mxu0
      %v2815 = vadd.f32 0.0, %v2814
      %2816 = vmatmul.bf16.gmra.mxu0 %v2780
      %v2817 = vpop.f32.mrf.mxu0
      %v2818 = vadd.f32 0.0, %v2817
      %v2819 = vpop.f32.mrf.mxu0
      %v2820 = vadd.f32 0.0, %v2819
      %2821 = vdwg.mxu0
      %2822 = vmatpush.bf16.msra.mxu0 %v2786
      %2823 = vmatpush.bf16.msra.mxu0 %v2750
      %2824 = vmatpush.bf16.msra.mxu0 %v2748
      %2825 = vmatpush.bf16.msra.mxu0 %v2746
      %2826 = vmatpush.bf16.msra.mxu0 %v2744
      %2827 = vmatpush.bf16.msra.mxu0 %v2742
      %2828 = vmatpush.bf16.msra.mxu0 %v2740
      %2829 = vmatpush.bf16.msra.mxu0 %v2738
      %2830 = vmatmul.bf16.gmra.mxu0 %v2768
      %v2831 = vpop.f32.mrf.mxu0
      %v2832 = vadd.f32 0.0, %v2831
      %v2833 = vpop.f32.mrf.mxu0
      %v2834 = vadd.f32 0.0, %v2833
      %2835 = vmatmul.bf16.gmra.mxu0 %v2771
      %v2836 = vpop.f32.mrf.mxu0
      %v2837 = vadd.f32 0.0, %v2836
      %v2838 = vpop.f32.mrf.mxu0
      %v2839 = vadd.f32 0.0, %v2838
      %2840 = vmatmul.bf16.gmra.mxu0 %v2774
      %v2841 = vpop.f32.mrf.mxu0
      %v2842 = vadd.f32 0.0, %v2841
      %v2843 = vpop.f32.mrf.mxu0
      %v2844 = vadd.f32 0.0, %v2843
      %2845 = vmatmul.bf16.gmra.mxu0 %v2777
      %v2846 = vpop.f32.mrf.mxu0
      %v2847 = vadd.f32 0.0, %v2846
      %v2848 = vpop.f32.mrf.mxu0
      %v2849 = vadd.f32 0.0, %v2848
      %2850 = vmatmul.bf16.gmra.mxu0 %v2780
      %v2851 = vpop.f32.mrf.mxu0
      %v2852 = vadd.f32 0.0, %v2851
      %v2853 = vpop.f32.mrf.mxu0
      %v2854 = vadd.f32 0.0, %v2853
      %2855 = vdwg.mxu0
      %v2856 = vadd.f32 %v2621, %v2798
      %v2857 = vadd.f32 %v2622, %v2832
      %v2858 = vadd.f32 %v2623, %v2800
      %v2859 = vadd.f32 %v2624, %v2834
      %v2860 = vadd.f32 %v2625, %v2803
      %v2861 = vadd.f32 %v2626, %v2837
      %v2862 = vadd.f32 %v2627, %v2805
      %v2863 = vadd.f32 %v2628, %v2839
      %v2864 = vadd.f32 %v2629, %v2808
      %v2865 = vadd.f32 %v2630, %v2842
      %v2866 = vadd.f32 %v2631, %v2810
      %v2867 = vadd.f32 %v2632, %v2844
      %v2868 = vadd.f32 %v2633, %v2813
      %v2869 = vadd.f32 %v2634, %v2847
      %v2870 = vadd.f32 %v2635, %v2815
      %v2871 = vadd.f32 %v2636, %v2849
      %v2872 = vadd.f32 %v2637, %v2818
      %v2873 = vadd.f32 %v2638, %v2852
      %v2874 = vadd.f32 %v2639, %v2820
      %v2875 = vadd.f32 %v2640, %v2854
      %2876 = vst [vmem:[#allocation3] sm:$0xff] %v2856
      %2877 = vst.msk [vmem:[#allocation3 + $0x8] sm:$0xff] %vm2600, %v2857
      %2878 = vst [vmem:[#allocation3 + $0x10] sm:$0xff] %v2858
      %2879 = vst.msk [vmem:[#allocation3 + $0x18] sm:$0xff] %vm2600, %v2859
      %2880 = vst [vmem:[#allocation3 + $0x20] sm:$0xff] %v2860
      %2881 = vst.msk [vmem:[#allocation3 + $0x28] sm:$0xff] %vm2600, %v2861
      %2882 = vst [vmem:[#allocation3 + $0x30] sm:$0xff] %v2862
      %2883 = vst.msk [vmem:[#allocation3 + $0x38] sm:$0xff] %vm2600, %v2863
      %2884 = vst [vmem:[#allocation3 + $0x40] sm:$0xff] %v2864
      %2885 = vst.msk [vmem:[#allocation3 + $0x48] sm:$0xff] %vm2600, %v2865
      %2886 = vst [vmem:[#allocation3 + $0x50] sm:$0xff] %v2866
      %2887 = vst.msk [vmem:[#allocation3 + $0x58] sm:$0xff] %vm2600, %v2867
      %2888 = vst [vmem:[#allocation3 + $0x60] sm:$0xff] %v2868
      %2889 = vst.msk [vmem:[#allocation3 + $0x68] sm:$0xff] %vm2600, %v2869
      %2890 = vst [vmem:[#allocation3 + $0x70] sm:$0xff] %v2870
      %2891 = vst.msk [vmem:[#allocation3 + $0x78] sm:$0xff] %vm2600, %v2871
      %2892 = vst [vmem:[#allocation3 + $0x80] sm:$0xff] %v2872
      %2893 = vst.msk [vmem:[#allocation3 + $0x88] sm:$0xff] %vm2600, %v2873
      %2894 = vst [vmem:[#allocation3 + $0x90] sm:$0x1f] %v2874
      %2895 = vst.msk [vmem:[#allocation3 + $0x98] sm:$0x1f] %vm2619, %v2875
      %v2896 = vld [vmem:[#allocation3] sm:$0xff]
      %v2897 = vld [vmem:[#allocation3 + $0x8] sm:$0xff]
      %v2898 = vld [vmem:[#allocation3 + $0x10] sm:$0xff]
      %v2899 = vld [vmem:[#allocation3 + $0x18] sm:$0xff]
      %v2900 = vld [vmem:[#allocation3 + $0x20] sm:$0xff]
      %v2901 = vld [vmem:[#allocation3 + $0x28] sm:$0xff]
      %v2902 = vld [vmem:[#allocation3 + $0x30] sm:$0xff]
      %v2903 = vld [vmem:[#allocation3 + $0x38] sm:$0xff]
      %v2904 = vld [vmem:[#allocation3 + $0x40] sm:$0xff]
      %v2905 = vld [vmem:[#allocation3 + $0x48] sm:$0xff]
      %v2906 = vld [vmem:[#allocation3 + $0x50] sm:$0xff]
      %v2907 = vld [vmem:[#allocation3 + $0x58] sm:$0xff]
      %v2908 = vld [vmem:[#allocation3 + $0x60] sm:$0xff]
      %v2909 = vld [vmem:[#allocation3 + $0x68] sm:$0xff]
      %v2910 = vld [vmem:[#allocation3 + $0x70] sm:$0xff]
      %v2911 = vld [vmem:[#allocation3 + $0x78] sm:$0xff]
      %v2912 = vld [vmem:[#allocation3 + $0x80] sm:$0xff]
      %v2913 = vld [vmem:[#allocation3 + $0x88] sm:$0xff]
      %v2914 = vld [vmem:[#allocation3 + $0x90] sm:$0x1f]
      %v2915 = vld [vmem:[#allocation3 + $0x98] sm:$0x1f]
      %s2916 = scalar_lea.vmem %s5, 240
      %v2917 = vld [vmem:[%s2916] sm:$0xff]
      %v2918 = vld [vmem:[%s2916 + $0x8] sm:$0xff]
      %v2919 = vld [vmem:[%s2916 + $0x10] sm:$0xff]
      %v2920 = vld [vmem:[%s2916 + $0x18] sm:$0xff]
      %v2921 = vld [vmem:[%s2916 + $0x20] sm:$0xff]
      %v2922 = vld [vmem:[%s2916 + $0x28] sm:$0xff]
      %v2923 = vld [vmem:[%s2916 + $0x30] sm:$0xff]
      %v2924 = vld [vmem:[%s2916 + $0x38] sm:$0xff]
      %v2925 = vld [vmem:[%s2916 + $0x40] sm:$0xff]
      %v2926 = vld [vmem:[%s2916 + $0x48] sm:$0xff]
      %v2927 = vld [vmem:[%s2916 + $0x50] sm:$0xff]
      %v2928 = vld [vmem:[%s2916 + $0x58] sm:$0xff]
      %v2929 = vld [vmem:[%s2916 + $0x60] sm:$0xff]
      %v2930 = vld [vmem:[%s2916 + $0x68] sm:$0xff]
      %v2931 = vld [vmem:[%s2916 + $0x70] sm:$0x33]
      %vm2937 = vcmask 1046528
      %v2938 = vrot.slane %v2407, 1
      %v2939 = vrot.slane %v2408, 1
      %v2940 = vsel %vm2937, %v2938, %v2939
      %v2941 = vrot.slane %v2409, 1
      %v2942 = vsel %vm2937, %v2939, %v2941
      %v2943 = vrot.slane %v2410, 1
      %v2944 = vsel %vm2937, %v2941, %v2943
      %v2945 = vrot.slane %v2411, 1
      %v2946 = vsel %vm2937, %v2943, %v2945
      %v2962 = vunpack.c.l.b16 %v2917
      %v2963 = vunpack.c.h.b16 %v2917
      %v2964 = vunpack.c.l.b16 %v2918
      %v2965 = vunpack.c.h.b16 %v2918
      %v2966 = vunpack.c.l.b16 %v2919
      %v2967 = vunpack.c.h.b16 %v2919
      %v2968 = vunpack.c.l.b16 %v2920
      %v2969 = vunpack.c.h.b16 %v2920
      %v2970 = vunpack.c.l.b16 %v2921
      %v2971 = vunpack.c.h.b16 %v2921
      %v2972 = vunpack.c.l.b16 %v2922
      %v2973 = vunpack.c.h.b16 %v2922
      %v2974 = vunpack.c.l.b16 %v2923
      %v2975 = vunpack.c.h.b16 %v2923
      %v2976 = vunpack.c.l.b16 %v2924
      %v2977 = vunpack.c.h.b16 %v2924
      %v2978 = vunpack.c.l.b16 %v2925
      %v2979 = vunpack.c.h.b16 %v2925
      %v2980 = vunpack.c.l.b16 %v2926
      %v2981 = vunpack.c.h.b16 %v2926
      %v2982 = vunpack.c.l.b16 %v2927
      %v2983 = vunpack.c.h.b16 %v2927
      %v2984 = vunpack.c.l.b16 %v2928
      %v2985 = vunpack.c.h.b16 %v2928
      %v2986 = vunpack.c.l.b16 %v2929
      %v2987 = vunpack.c.h.b16 %v2929
      %v2988 = vunpack.c.l.b16 %v2930
      %v2989 = vunpack.c.h.b16 %v2930
      %v2990 = vunpack.c.l.b16 %v2931
      %v2991 = vunpack.c.h.b16 %v2931
      %v2992 = vpack.c.b16 %v2964, %v2962
      %v2993 = vpack.c.b16 %v2965, %v2963
      %v2994 = vpack.c.b16 %v2968, %v2966
      %v2995 = vpack.c.b16 %v2969, %v2967
      %v2996 = vpack.c.b16 %v2972, %v2970
      %v2997 = vpack.c.b16 %v2973, %v2971
      %v2998 = vpack.c.b16 %v2976, %v2974
      %v2999 = vpack.c.b16 %v2977, %v2975
      %v3000 = vpack.c.b16 %v2980, %v2978
      %v3001 = vpack.c.b16 %v2981, %v2979
      %v3002 = vpack.c.b16 %v2984, %v2982
      %v3003 = vpack.c.b16 %v2985, %v2983
      %v3004 = vpack.c.b16 %v2988, %v2986
      %v3005 = vpack.c.b16 %v2989, %v2987
      %v3006 = vpack.c.b16 %v2990, %v2990
      %v3007 = vpack.c.b16 %v2991, %v2991
      %v3023 = vsel %vm2508, %v2940, 0
      %v3026 = vsel %vm2508, %v2942, 0
      %v3029 = vsel %vm2508, %v2944, 0
      %v3032 = vsel %vm2508, %v2946, 0
      %v3035 = vsel %vm2508, %v2945, 0
      %v3038 = vsel %vm2524, %v3006, 0
      %v3041 = vsel %vm2524, %v3007, 0
      %3043 = vmatpush.bf16.msra.mxu0 %v3038
      %3044 = vmatpush.bf16.msra.mxu0 %v3004
      %3045 = vmatpush.bf16.msra.mxu0 %v3002
      %3046 = vmatpush.bf16.msra.mxu0 %v3000
      %3047 = vmatpush.bf16.msra.mxu0 %v2998
      %3048 = vmatpush.bf16.msra.mxu0 %v2996
      %3049 = vmatpush.bf16.msra.mxu0 %v2994
      %3050 = vmatpush.bf16.msra.mxu0 %v2992
      %3051 = vmatmul.bf16.gmra.mxu0 %v3023
      %v3052 = vpop.f32.mrf.mxu0
      %v3053 = vadd.f32 0.0, %v3052
      %v3054 = vpop.f32.mrf.mxu0
      %v3055 = vadd.f32 0.0, %v3054
      %3056 = vmatmul.bf16.gmra.mxu0 %v3026
      %v3057 = vpop.f32.mrf.mxu0
      %v3058 = vadd.f32 0.0, %v3057
      %v3059 = vpop.f32.mrf.mxu0
      %v3060 = vadd.f32 0.0, %v3059
      %3061 = vmatmul.bf16.gmra.mxu0 %v3029
      %v3062 = vpop.f32.mrf.mxu0
      %v3063 = vadd.f32 0.0, %v3062
      %v3064 = vpop.f32.mrf.mxu0
      %v3065 = vadd.f32 0.0, %v3064
      %3066 = vmatmul.bf16.gmra.mxu0 %v3032
      %v3067 = vpop.f32.mrf.mxu0
      %v3068 = vadd.f32 0.0, %v3067
      %v3069 = vpop.f32.mrf.mxu0
      %v3070 = vadd.f32 0.0, %v3069
      %3071 = vmatmul.bf16.gmra.mxu0 %v3035
      %v3072 = vpop.f32.mrf.mxu0
      %v3073 = vadd.f32 0.0, %v3072
      %v3074 = vpop.f32.mrf.mxu0
      %v3075 = vadd.f32 0.0, %v3074
      %3076 = vdwg.mxu0
      %3077 = vmatpush.bf16.msra.mxu0 %v3041
      %3078 = vmatpush.bf16.msra.mxu0 %v3005
      %3079 = vmatpush.bf16.msra.mxu0 %v3003
      %3080 = vmatpush.bf16.msra.mxu0 %v3001
      %3081 = vmatpush.bf16.msra.mxu0 %v2999
      %3082 = vmatpush.bf16.msra.mxu0 %v2997
      %3083 = vmatpush.bf16.msra.mxu0 %v2995
      %3084 = vmatpush.bf16.msra.mxu0 %v2993
      %3085 = vmatmul.bf16.gmra.mxu0 %v3023
      %v3086 = vpop.f32.mrf.mxu0
      %v3087 = vadd.f32 0.0, %v3086
      %v3088 = vpop.f32.mrf.mxu0
      %v3089 = vadd.f32 0.0, %v3088
      %3090 = vmatmul.bf16.gmra.mxu0 %v3026
      %v3091 = vpop.f32.mrf.mxu0
      %v3092 = vadd.f32 0.0, %v3091
      %v3093 = vpop.f32.mrf.mxu0
      %v3094 = vadd.f32 0.0, %v3093
      %3095 = vmatmul.bf16.gmra.mxu0 %v3029
      %v3096 = vpop.f32.mrf.mxu0
      %v3097 = vadd.f32 0.0, %v3096
      %v3098 = vpop.f32.mrf.mxu0
      %v3099 = vadd.f32 0.0, %v3098
      %3100 = vmatmul.bf16.gmra.mxu0 %v3032
      %v3101 = vpop.f32.mrf.mxu0
      %v3102 = vadd.f32 0.0, %v3101
      %v3103 = vpop.f32.mrf.mxu0
      %v3104 = vadd.f32 0.0, %v3103
      %3105 = vmatmul.bf16.gmra.mxu0 %v3035
      %v3106 = vpop.f32.mrf.mxu0
      %v3107 = vadd.f32 0.0, %v3106
      %v3108 = vpop.f32.mrf.mxu0
      %v3109 = vadd.f32 0.0, %v3108
      %3110 = vdwg.mxu0
      %v3111 = vadd.f32 %v2896, %v3053
      %v3112 = vadd.f32 %v2897, %v3087
      %v3113 = vadd.f32 %v2898, %v3055
      %v3114 = vadd.f32 %v2899, %v3089
      %v3115 = vadd.f32 %v2900, %v3058
      %v3116 = vadd.f32 %v2901, %v3092
      %v3117 = vadd.f32 %v2902, %v3060
      %v3118 = vadd.f32 %v2903, %v3094
      %v3119 = vadd.f32 %v2904, %v3063
      %v3120 = vadd.f32 %v2905, %v3097
      %v3121 = vadd.f32 %v2906, %v3065
      %v3122 = vadd.f32 %v2907, %v3099
      %v3123 = vadd.f32 %v2908, %v3068
      %v3124 = vadd.f32 %v2909, %v3102
      %v3125 = vadd.f32 %v2910, %v3070
      %v3126 = vadd.f32 %v2911, %v3104
      %v3127 = vadd.f32 %v2912, %v3073
      %v3128 = vadd.f32 %v2913, %v3107
      %v3129 = vadd.f32 %v2914, %v3075
      %v3130 = vadd.f32 %v2915, %v3109
      %3131 = vst [vmem:[#allocation3] sm:$0xff] %v3111
      %3132 = vst.msk [vmem:[#allocation3 + $0x8] sm:$0xff] %vm2600, %v3112
      %3133 = vst [vmem:[#allocation3 + $0x10] sm:$0xff] %v3113
      %3134 = vst.msk [vmem:[#allocation3 + $0x18] sm:$0xff] %vm2600, %v3114
      %3135 = vst [vmem:[#allocation3 + $0x20] sm:$0xff] %v3115
      %3136 = vst.msk [vmem:[#allocation3 + $0x28] sm:$0xff] %vm2600, %v3116
      %3137 = vst [vmem:[#allocation3 + $0x30] sm:$0xff] %v3117
      %3138 = vst.msk [vmem:[#allocation3 + $0x38] sm:$0xff] %vm2600, %v3118
      %3139 = vst [vmem:[#allocation3 + $0x40] sm:$0xff] %v3119
      %3140 = vst.msk [vmem:[#allocation3 + $0x48] sm:$0xff] %vm2600, %v3120
      %3141 = vst [vmem:[#allocation3 + $0x50] sm:$0xff] %v3121
      %3142 = vst.msk [vmem:[#allocation3 + $0x58] sm:$0xff] %vm2600, %v3122
      %3143 = vst [vmem:[#allocation3 + $0x60] sm:$0xff] %v3123
      %3144 = vst.msk [vmem:[#allocation3 + $0x68] sm:$0xff] %vm2600, %v3124
      %3145 = vst [vmem:[#allocation3 + $0x70] sm:$0xff] %v3125
      %3146 = vst.msk [vmem:[#allocation3 + $0x78] sm:$0xff] %vm2600, %v3126
      %3147 = vst [vmem:[#allocation3 + $0x80] sm:$0xff] %v3127
      %3148 = vst.msk [vmem:[#allocation3 + $0x88] sm:$0xff] %vm2600, %v3128
      %3149 = vst [vmem:[#allocation3 + $0x90] sm:$0x1f] %v3129
      %3150 = vst.msk [vmem:[#allocation3 + $0x98] sm:$0x1f] %vm2619, %v3130
      %v3151 = vld [vmem:[#allocation3] sm:$0xff]
      %v3152 = vld [vmem:[#allocation3 + $0x8] sm:$0xff]
      %v3153 = vld [vmem:[#allocation3 + $0x10] sm:$0xff]
      %v3154 = vld [vmem:[#allocation3 + $0x18] sm:$0xff]
      %v3155 = vld [vmem:[#allocation3 + $0x20] sm:$0xff]
      %v3156 = vld [vmem:[#allocation3 + $0x28] sm:$0xff]
      %v3157 = vld [vmem:[#allocation3 + $0x30] sm:$0xff]
      %v3158 = vld [vmem:[#allocation3 + $0x38] sm:$0xff]
      %v3159 = vld [vmem:[#allocation3 + $0x40] sm:$0xff]
      %v3160 = vld [vmem:[#allocation3 + $0x48] sm:$0xff]
      %v3161 = vld [vmem:[#allocation3 + $0x50] sm:$0xff]
      %v3162 = vld [vmem:[#allocation3 + $0x58] sm:$0xff]
      %v3163 = vld [vmem:[#allocation3 + $0x60] sm:$0xff]
      %v3164 = vld [vmem:[#allocation3 + $0x68] sm:$0xff]
      %v3165 = vld [vmem:[#allocation3 + $0x70] sm:$0xff]
      %v3166 = vld [vmem:[#allocation3 + $0x78] sm:$0xff]
      %v3167 = vld [vmem:[#allocation3 + $0x80] sm:$0xff]
      %v3168 = vld [vmem:[#allocation3 + $0x88] sm:$0xff]
      %v3169 = vld [vmem:[#allocation3 + $0x90] sm:$0xf]
      %v3170 = vld [vmem:[#allocation3 + $0x98] sm:$0xf]
      %v3171 = vld [vmem:[#allocation3] sm:$0xfe]
      %v3172 = vld [vmem:[#allocation3 + $0x8] sm:$0xfe]
      %v3173 = vld [vmem:[#allocation3 + $0x90] sm:$0x1f]
      %v3174 = vld [vmem:[#allocation3 + $0x98] sm:$0x1f]
      %v3195 = vrot.slane %v3171, 1
      %v3196 = vrot.slane %v3153, 1
      %v3197 = vsel %vm1614, %v3195, %v3196
      %v3198 = vrot.slane %v3172, 1
      %v3199 = vrot.slane %v3154, 1
      %v3200 = vsel %vm1614, %v3198, %v3199
      %v3201 = vrot.slane %v3155, 1
      %v3202 = vsel %vm1614, %v3196, %v3201
      %v3203 = vrot.slane %v3156, 1
      %v3204 = vsel %vm1614, %v3199, %v3203
      %v3205 = vrot.slane %v3157, 1
      %v3206 = vsel %vm1614, %v3201, %v3205
      %v3207 = vrot.slane %v3158, 1
      %v3208 = vsel %vm1614, %v3203, %v3207
      %v3209 = vrot.slane %v3159, 1
      %v3210 = vsel %vm1614, %v3205, %v3209
      %v3211 = vrot.slane %v3160, 1
      %v3212 = vsel %vm1614, %v3207, %v3211
      %v3213 = vrot.slane %v3161, 1
      %v3214 = vsel %vm1614, %v3209, %v3213
      %v3215 = vrot.slane %v3162, 1
      %v3216 = vsel %vm1614, %v3211, %v3215
      %v3217 = vrot.slane %v3163, 1
      %v3218 = vsel %vm1614, %v3213, %v3217
      %v3219 = vrot.slane %v3164, 1
      %v3220 = vsel %vm1614, %v3215, %v3219
      %v3221 = vrot.slane %v3165, 1
      %v3222 = vsel %vm1614, %v3217, %v3221
      %v3223 = vrot.slane %v3166, 1
      %v3224 = vsel %vm1614, %v3219, %v3223
      %v3225 = vrot.slane %v3167, 1
      %v3226 = vsel %vm1614, %v3221, %v3225
      %v3227 = vrot.slane %v3168, 1
      %v3228 = vsel %vm1614, %v3223, %v3227
      %v3229 = vrot.slane %v3173, 1
      %v3230 = vsel %vm1614, %v3225, %v3229
      %v3231 = vrot.slane %v3174, 1
      %v3232 = vsel %vm1614, %v3227, %v3231
      %v3253 = vmax.f32 %v3151, %v3197
      %v3254 = vmax.f32 %v3152, %v3200
      %v3255 = vmax.f32 %v3153, %v3202
      %v3256 = vmax.f32 %v3154, %v3204
      %v3257 = vmax.f32 %v3155, %v3206
      %v3258 = vmax.f32 %v3156, %v3208
      %v3259 = vmax.f32 %v3157, %v3210
      %v3260 = vmax.f32 %v3158, %v3212
      %v3261 = vmax.f32 %v3159, %v3214
      %v3262 = vmax.f32 %v3160, %v3216
      %v3263 = vmax.f32 %v3161, %v3218
      %v3264 = vmax.f32 %v3162, %v3220
      %v3265 = vmax.f32 %v3163, %v3222
      %v3266 = vmax.f32 %v3164, %v3224
      %v3267 = vmax.f32 %v3165, %v3226
      %v3268 = vmax.f32 %v3166, %v3228
      %v3269 = vmax.f32 %v3167, %v3230
      %v3270 = vmax.f32 %v3168, %v3232
      %v3271 = vmax.f32 %v3169, %v3229
      %v3272 = vmax.f32 %v3170, %v3231
      %3293 = vrot.lane.b32.xlu0 %v3253, 127
      %v3294 = vpop.permute.xlu0 %3293
      %3295 = vrot.lane.b32.xlu0 %v3254, 127
      %v3296 = vpop.permute.xlu0 %3295
      %3297 = vrot.lane.b32.xlu0 %v3255, 127
      %v3298 = vpop.permute.xlu0 %3297
      %3299 = vrot.lane.b32.xlu0 %v3256, 127
      %v3300 = vpop.permute.xlu0 %3299
      %3301 = vrot.lane.b32.xlu0 %v3257, 127
      %v3302 = vpop.permute.xlu0 %3301
      %3303 = vrot.lane.b32.xlu0 %v3258, 127
      %v3304 = vpop.permute.xlu0 %3303
      %3305 = vrot.lane.b32.xlu0 %v3259, 127
      %v3306 = vpop.permute.xlu0 %3305
      %3307 = vrot.lane.b32.xlu0 %v3260, 127
      %v3308 = vpop.permute.xlu0 %3307
      %3309 = vrot.lane.b32.xlu0 %v3261, 127
      %v3310 = vpop.permute.xlu0 %3309
      %3311 = vrot.lane.b32.xlu0 %v3262, 127
      %v3312 = vpop.permute.xlu0 %3311
      %3313 = vrot.lane.b32.xlu0 %v3263, 127
      %v3314 = vpop.permute.xlu0 %3313
      %3315 = vrot.lane.b32.xlu0 %v3264, 127
      %v3316 = vpop.permute.xlu0 %3315
      %3317 = vrot.lane.b32.xlu0 %v3265, 127
      %v3318 = vpop.permute.xlu0 %3317
      %3319 = vrot.lane.b32.xlu0 %v3266, 127
      %v3320 = vpop.permute.xlu0 %3319
      %3321 = vrot.lane.b32.xlu0 %v3267, 127
      %v3322 = vpop.permute.xlu0 %3321
      %3323 = vrot.lane.b32.xlu0 %v3268, 127
      %v3324 = vpop.permute.xlu0 %3323
      %3325 = vrot.lane.b32.xlu0 %v3269, 127
      %v3326 = vpop.permute.xlu0 %3325
      %3327 = vrot.lane.b32.xlu0 %v3270, 127
      %v3328 = vpop.permute.xlu0 %3327
      %3329 = vrot.lane.b32.xlu0 %v3271, 127
      %v3330 = vpop.permute.xlu0 %3329
      %3331 = vrot.lane.b32.xlu0 %v3272, 127
      %v3332 = vpop.permute.xlu0 %3331
      %v3333 = vsel %vm1893, %v3294, %v3296
      %v3334 = vsel %vm1893, %v3298, %v3300
      %v3335 = vsel %vm1893, %v3302, %v3304
      %v3336 = vsel %vm1893, %v3306, %v3308
      %v3337 = vsel %vm1893, %v3310, %v3312
      %v3338 = vsel %vm1893, %v3314, %v3316
      %v3339 = vsel %vm1893, %v3318, %v3320
      %v3340 = vsel %vm1893, %v3322, %v3324
      %v3341 = vsel %vm1893, %v3326, %v3328
      %v3342 = vsel %vm1893, %v3330, %v3332
      %v3363 = vmax.f32 %v3253, %v3333
      %v3364 = vmax.f32 %v3254, %v3296
      %v3365 = vmax.f32 %v3255, %v3334
      %v3366 = vmax.f32 %v3256, %v3300
      %v3367 = vmax.f32 %v3257, %v3335
      %v3368 = vmax.f32 %v3258, %v3304
      %v3369 = vmax.f32 %v3259, %v3336
      %v3370 = vmax.f32 %v3260, %v3308
      %v3371 = vmax.f32 %v3261, %v3337
      %v3372 = vmax.f32 %v3262, %v3312
      %v3373 = vmax.f32 %v3263, %v3338
      %v3374 = vmax.f32 %v3264, %v3316
      %v3375 = vmax.f32 %v3265, %v3339
      %v3376 = vmax.f32 %v3266, %v3320
      %v3377 = vmax.f32 %v3267, %v3340
      %v3378 = vmax.f32 %v3268, %v3324
      %v3379 = vmax.f32 %v3269, %v3341
      %v3380 = vmax.f32 %v3270, %v3328
      %v3381 = vmax.f32 %v3271, %v3342
      %v3382 = vmax.f32 %v3272, %v3332
      %v3383 = vld [vmem:[%s7] sm:$0xff]
      %v3384 = vld [vmem:[%s7 + $0x8] sm:$0xff]
      %v3385 = vld [vmem:[%s7 + $0x10] sm:$0xff]
      %v3386 = vld [vmem:[%s7 + $0x18] sm:$0xff]
      %v3387 = vld [vmem:[%s7 + $0x20] sm:$0x3f]
      %vm3388 = vcmask 621568
      %v3390 = vsel %vm3388, %v3383, 0
      %v3393 = vsel %vm3388, %v3384, 0
      %v3396 = vsel %vm3388, %v3385, 0
      %v3399 = vsel %vm3388, %v3386, 0
      %v3402 = vsel %vm3388, %v3387, 0
      %vm3404 = vcmask 1043456
      %v3406 = vsel %vm3404, %v3381, 0
      %v3409 = vsel %vm3404, %v3382, 0
      %3411 = vmatpush.msra.mxu0 0.0
      %3412 = vmatpush.msra.mxu0 0.0
      %3413 = vmatpush.msra.mxu0 0.0
      %3414 = vmatpush.msra.mxu0 0.0
      %3415 = vmatpush.msra.mxu0 0.0
      %3416 = vmatpush.msra.mxu0 0.0
      %3417 = vmatpush.msra.mxu0 %v3406
      %3418 = vmatpush.msra.mxu0 %v3379
      %3419 = vmatpush.msra.mxu0 %v3377
      %3420 = vmatpush.msra.mxu0 %v3375
      %3421 = vmatpush.msra.mxu0 %v3373
      %3422 = vmatpush.msra.mxu0 %v3371
      %3423 = vmatpush.msra.mxu0 %v3369
      %3424 = vmatpush.msra.mxu0 %v3367
      %3425 = vmatpush.msra.mxu0 %v3365
      %3426 = vmatpush.msra.mxu0 %v3363
      %3427 = vmatmul.f32.gmra.mxu0 %v3390
      %v3428 = vpop.f32.mrf.mxu0
      %v3429 = vadd.f32 0.0, %v3428
      %3430 = vmatmul.f32.gmra.mxu0 %v3393
      %v3431 = vpop.f32.mrf.mxu0
      %v3432 = vadd.f32 0.0, %v3431
      %3433 = vmatmul.f32.gmra.mxu0 %v3396
      %v3434 = vpop.f32.mrf.mxu0
      %v3435 = vadd.f32 0.0, %v3434
      %3436 = vmatmul.f32.gmra.mxu0 %v3399
      %v3437 = vpop.f32.mrf.mxu0
      %v3438 = vadd.f32 0.0, %v3437
      %3439 = vmatmul.f32.gmra.mxu0 %v3402
      %v3440 = vpop.f32.mrf.mxu0
      %v3441 = vadd.f32 0.0, %v3440
      %3442 = vdwg.mxu0
      %3443 = vmatpush.msra.mxu0 0.0
      %3444 = vmatpush.msra.mxu0 0.0
      %3445 = vmatpush.msra.mxu0 0.0
      %3446 = vmatpush.msra.mxu0 0.0
      %3447 = vmatpush.msra.mxu0 0.0
      %3448 = vmatpush.msra.mxu0 0.0
      %3449 = vmatpush.msra.mxu0 %v3409
      %3450 = vmatpush.msra.mxu0 %v3380
      %3451 = vmatpush.msra.mxu0 %v3378
      %3452 = vmatpush.msra.mxu0 %v3376
      %3453 = vmatpush.msra.mxu0 %v3374
      %3454 = vmatpush.msra.mxu0 %v3372
      %3455 = vmatpush.msra.mxu0 %v3370
      %3456 = vmatpush.msra.mxu0 %v3368
      %3457 = vmatpush.msra.mxu0 %v3366
      %3458 = vmatpush.msra.mxu0 %v3364
      %3459 = vmatmul.f32.gmra.mxu0 %v3390
      %v3460 = vpop.f32.mrf.mxu0
      %v3461 = vadd.f32 0.0, %v3460
      %3462 = vmatmul.f32.gmra.mxu0 %v3393
      %v3463 = vpop.f32.mrf.mxu0
      %v3464 = vadd.f32 0.0, %v3463
      %3465 = vmatmul.f32.gmra.mxu0 %v3396
      %v3466 = vpop.f32.mrf.mxu0
      %v3467 = vadd.f32 0.0, %v3466
      %3468 = vmatmul.f32.gmra.mxu0 %v3399
      %v3469 = vpop.f32.mrf.mxu0
      %v3470 = vadd.f32 0.0, %v3469
      %3471 = vmatmul.f32.gmra.mxu0 %v3402
      %v3472 = vpop.f32.mrf.mxu0
      %v3473 = vadd.f32 0.0, %v3472
      %3474 = vdwg.mxu0
      %v3475 = vld [vmem:[%s8] sm:$0xff]
      %v3476 = vld [vmem:[%s8 + $0x8] sm:$0xff]
      %v3477 = vld [vmem:[%s8 + $0x10] sm:$0xff]
      %v3478 = vld [vmem:[%s8 + $0x18] sm:$0xff]
      %v3479 = vld [vmem:[%s8 + $0x20] sm:$0xff]
      %v3480 = vld [vmem:[%s8 + $0x28] sm:$0xff]
      %v3481 = vld [vmem:[%s8 + $0x30] sm:$0xff]
      %v3482 = vld [vmem:[%s8 + $0x38] sm:$0xff]
      %v3483 = vld [vmem:[%s8 + $0x40] sm:$0xff]
      %v3484 = vld [vmem:[%s8 + $0x48] sm:$0xff]
      %v3485 = vld [vmem:[%s8 + $0x50] sm:$0xff]
      %v3486 = vld [vmem:[%s8 + $0x58] sm:$0xff]
      %v3487 = vld [vmem:[%s8 + $0x60] sm:$0xff]
      %v3488 = vld [vmem:[%s8 + $0x68] sm:$0xff]
      %v3489 = vld [vmem:[%s8 + $0x70] sm:$0xff]
      %v3490 = vld [vmem:[%s8 + $0x78] sm:$0xff]
      %v3491 = vld [vmem:[%s8 + $0x80] sm:$0xff]
      %v3492 = vld [vmem:[%s8 + $0x88] sm:$0xff]
      %v3493 = vld [vmem:[%s8 + $0x90] sm:$0xff]
      %v3494 = vld [vmem:[%s8 + $0x98] sm:$0xff]
      %v3495 = vld [vmem:[%s8 + $0xa0] sm:$0xff]
      %v3496 = vld [vmem:[%s8 + $0xa8] sm:$0xff]
      %v3497 = vld [vmem:[%s8 + $0xb0] sm:$0xff]
      %v3498 = vld [vmem:[%s8 + $0xb8] sm:$0xff]
      %v3499 = vld [vmem:[%s8 + $0xc0] sm:$0xff]
      %v3500 = vld [vmem:[%s8 + $0xc8] sm:$0xff]
      %v3501 = vld [vmem:[%s8 + $0xd0] sm:$0x7f]
      %vm3502 = vcmask 711680
      %v3504 = vsel %vm3502, %v3461, 0
      %v3507 = vsel %vm3502, %v3464, 0
      %v3510 = vsel %vm3502, %v3467, 0
      %v3513 = vsel %vm3502, %v3470, 0
      %v3516 = vsel %vm3502, %v3473, 0
      %v3519 = vsel %vm1614, %v3501, 0
      %3521 = vmatpush.msra.mxu0 %v3490
      %3522 = vmatpush.msra.mxu0 %v3489
      %3523 = vmatpush.msra.mxu0 %v3488
      %3524 = vmatpush.msra.mxu0 %v3487
      %3525 = vmatpush.msra.mxu0 %v3486
      %3526 = vmatpush.msra.mxu0 %v3485
      %3527 = vmatpush.msra.mxu0 %v3484
      %3528 = vmatpush.msra.mxu0 %v3483
      %3529 = vmatpush.msra.mxu0 %v3482
      %3530 = vmatpush.msra.mxu0 %v3481
      %3531 = vmatpush.msra.mxu0 %v3480
      %3532 = vmatpush.msra.mxu0 %v3479
      %3533 = vmatpush.msra.mxu0 %v3478
      %3534 = vmatpush.msra.mxu0 %v3477
      %3535 = vmatpush.msra.mxu0 %v3476
      %3536 = vmatpush.msra.mxu0 %v3475
      %3537 = vmatmul.f32.gmra.mxu0 %v3429
      %v3538 = vpop.f32.mrf.mxu0
      %v3539 = vadd.f32 0.0, %v3538
      %3540 = vmatmul.f32.gmra.mxu0 %v3432
      %v3541 = vpop.f32.mrf.mxu0
      %v3542 = vadd.f32 0.0, %v3541
      %3543 = vmatmul.f32.gmra.mxu0 %v3435
      %v3544 = vpop.f32.mrf.mxu0
      %v3545 = vadd.f32 0.0, %v3544
      %3546 = vmatmul.f32.gmra.mxu0 %v3438
      %v3547 = vpop.f32.mrf.mxu0
      %v3548 = vadd.f32 0.0, %v3547
      %3549 = vmatmul.f32.gmra.mxu0 %v3441
      %v3550 = vpop.f32.mrf.mxu0
      %v3551 = vadd.f32 0.0, %v3550
      %3552 = vdwg.mxu0
      %3553 = vmatpush.msra.mxu0 0.0
      %3554 = vmatpush.msra.mxu0 0.0
      %3555 = vmatpush.msra.mxu0 0.0
      %3556 = vmatpush.msra.mxu0 0.0
      %3557 = vmatpush.msra.mxu0 0.0
      %3558 = vmatpush.msra.mxu0 %v3519
      %3559 = vmatpush.msra.mxu0 %v3500
      %3560 = vmatpush.msra.mxu0 %v3499
      %3561 = vmatpush.msra.mxu0 %v3498
      %3562 = vmatpush.msra.mxu0 %v3497
      %3563 = vmatpush.msra.mxu0 %v3496
      %3564 = vmatpush.msra.mxu0 %v3495
      %3565 = vmatpush.msra.mxu0 %v3494
      %3566 = vmatpush.msra.mxu0 %v3493
      %3567 = vmatpush.msra.mxu0 %v3492
      %3568 = vmatpush.msra.mxu0 %v3491
      %3569 = vmatmul.f32.gmra.mxu0 %v3504
      %v3570 = vpop.f32.mrf.mxu0
      %v3571 = vadd.f32 %v3539, %v3570
      %3572 = vmatmul.f32.gmra.mxu0 %v3507
      %v3573 = vpop.f32.mrf.mxu0
      %v3574 = vadd.f32 %v3542, %v3573
      %3575 = vmatmul.f32.gmra.mxu0 %v3510
      %v3576 = vpop.f32.mrf.mxu0
      %v3577 = vadd.f32 %v3545, %v3576
      %3578 = vmatmul.f32.gmra.mxu0 %v3513
      %v3579 = vpop.f32.mrf.mxu0
      %v3580 = vadd.f32 %v3548, %v3579
      %3581 = vmatmul.f32.gmra.mxu0 %v3516
      %v3582 = vpop.f32.mrf.mxu0
      %v3583 = vadd.f32 %v3551, %v3582
      %3584 = vdwg.mxu0
      %v3585 = vmax.f32 %v3571, 0.0
      %v3586 = vmax.f32 %v3574, 0.0
      %v3587 = vmax.f32 %v3577, 0.0
      %v3588 = vmax.f32 %v3580, 0.0
      %v3589 = vmax.f32 %v3583, 0.0
      %v3590 = vpack.c.bf16 %v3586, %v3585
      %v3591 = vpack.c.bf16 %v3588, %v3587
      %v3592 = vpack.c.bf16 %v3589, %v3589
      %v3593 = vld [vmem:[%s9] sm:$0xff]
      %v3594 = vld [vmem:[%s9 + $0x8] sm:$0xff]
      %v3595 = vld [vmem:[%s9 + $0x10] sm:$0xff]
      %v3596 = vld [vmem:[%s9 + $0x18] sm:$0xff]
      %v3597 = vld [vmem:[%s9 + $0x20] sm:$0xff]
      %v3598 = vld [vmem:[%s9 + $0x28] sm:$0xff]
      %v3599 = vld [vmem:[%s9 + $0x30] sm:$0xff]
      %v3600 = vld [vmem:[%s9 + $0x38] sm:$0xff]
      %v3601 = vld [vmem:[%s9 + $0x40] sm:$0xff]
      %v3602 = vld [vmem:[%s9 + $0x48] sm:$0xff]
      %v3603 = vld [vmem:[%s9 + $0x50] sm:$0xff]
      %v3604 = vld [vmem:[%s9 + $0x58] sm:$0xff]
      %v3605 = vld [vmem:[%s9 + $0x60] sm:$0xff]
      %v3606 = vld [vmem:[%s10] sm:$0x3]
      %v3608 = vperm.slane %v3606, 0
      %v3609 = vperm.slane %v3606, 1
      %v3625 = vunpack.c.l.b16 %v3593
      %v3626 = vunpack.c.h.b16 %v3593
      %v3627 = vunpack.c.l.b16 %v3594
      %v3628 = vunpack.c.h.b16 %v3594
      %v3629 = vunpack.c.l.b16 %v3595
      %v3630 = vunpack.c.h.b16 %v3595
      %v3631 = vunpack.c.l.b16 %v3596
      %v3632 = vunpack.c.h.b16 %v3596
      %v3633 = vunpack.c.l.b16 %v3597
      %v3634 = vunpack.c.h.b16 %v3597
      %v3635 = vunpack.c.l.b16 %v3598
      %v3636 = vunpack.c.h.b16 %v3598
      %v3637 = vunpack.c.l.b16 %v3599
      %v3638 = vunpack.c.h.b16 %v3599
      %v3639 = vunpack.c.l.b16 %v3600
      %v3640 = vunpack.c.h.b16 %v3600
      %v3641 = vunpack.c.l.b16 %v3601
      %v3642 = vunpack.c.h.b16 %v3601
      %v3643 = vunpack.c.l.b16 %v3602
      %v3644 = vunpack.c.h.b16 %v3602
      %v3645 = vunpack.c.l.b16 %v3603
      %v3646 = vunpack.c.h.b16 %v3603
      %v3647 = vunpack.c.l.b16 %v3604
      %v3648 = vunpack.c.h.b16 %v3604
      %v3649 = vunpack.c.l.b16 %v3605
      %v3650 = vunpack.c.h.b16 %v3605
      %v3651 = vpack.c.b16 %v3627, %v3625
      %v3652 = vpack.c.b16 %v3628, %v3626
      %v3653 = vpack.c.b16 %v3631, %v3629
      %v3654 = vpack.c.b16 %v3632, %v3630
      %v3655 = vpack.c.b16 %v3635, %v3633
      %v3656 = vpack.c.b16 %v3636, %v3634
      %v3657 = vpack.c.b16 %v3639, %v3637
      %v3658 = vpack.c.b16 %v3640, %v3638
      %v3659 = vpack.c.b16 %v3643, %v3641
      %v3660 = vpack.c.b16 %v3644, %v3642
      %v3661 = vpack.c.b16 %v3647, %v3645
      %v3662 = vpack.c.b16 %v3648, %v3646
      %v3663 = vpack.c.b16 %v3649, %v3649
      %v3664 = vpack.c.b16 %v3650, %v3650
      %v3678 = vsel %vm787, %v3590, 0
      %v3681 = vsel %vm787, %v3591, 0
      %v3684 = vsel %vm787, %v3592, 0
      %v3687 = vsel %vm3404, %v3663, 0
      %v3690 = vsel %vm3404, %v3664, 0
      %3692 = vmatpush.bf16.msra.mxu0 0
      %3693 = vmatpush.bf16.msra.mxu0 %v3687
      %3694 = vmatpush.bf16.msra.mxu0 %v3661
      %3695 = vmatpush.bf16.msra.mxu0 %v3659
      %3696 = vmatpush.bf16.msra.mxu0 %v3657
      %3697 = vmatpush.bf16.msra.mxu0 %v3655
      %3698 = vmatpush.bf16.msra.mxu0 %v3653
      %3699 = vmatpush.bf16.msra.mxu0 %v3651
      %3700 = vmatmul.bf16.gmra.mxu0 %v3678
      %v3701 = vpop.f32.mrf.mxu0
      %v3702 = vadd.f32 %v3608, %v3701
      %v3703 = vpop.f32.mrf.mxu0
      %v3704 = vadd.f32 %v3608, %v3703
      %3705 = vmatmul.bf16.gmra.mxu0 %v3681
      %v3706 = vpop.f32.mrf.mxu0
      %v3707 = vadd.f32 %v3608, %v3706
      %v3708 = vpop.f32.mrf.mxu0
      %v3709 = vadd.f32 %v3608, %v3708
      %3710 = vmatmul.bf16.gmra.mxu0 %v3684
      %v3711 = vpop.f32.mrf.mxu0
      %v3712 = vadd.f32 %v3608, %v3711
      %v3713 = vpop.f32.mrf.mxu0
      %3714 = vdwg.mxu0
      %3715 = vmatpush.bf16.msra.mxu0 0
      %3716 = vmatpush.bf16.msra.mxu0 %v3690
      %3717 = vmatpush.bf16.msra.mxu0 %v3662
      %3718 = vmatpush.bf16.msra.mxu0 %v3660
      %3719 = vmatpush.bf16.msra.mxu0 %v3658
      %3720 = vmatpush.bf16.msra.mxu0 %v3656
      %3721 = vmatpush.bf16.msra.mxu0 %v3654
      %3722 = vmatpush.bf16.msra.mxu0 %v3652
      %3723 = vmatmul.bf16.gmra.mxu0 %v3678
      %v3724 = vpop.f32.mrf.mxu0
      %v3725 = vadd.f32 %v3609, %v3724
      %v3726 = vpop.f32.mrf.mxu0
      %v3727 = vadd.f32 %v3609, %v3726
      %3728 = vmatmul.bf16.gmra.mxu0 %v3681
      %v3729 = vpop.f32.mrf.mxu0
      %v3730 = vadd.f32 %v3609, %v3729
      %v3731 = vpop.f32.mrf.mxu0
      %v3732 = vadd.f32 %v3609, %v3731
      %3733 = vmatmul.bf16.gmra.mxu0 %v3684
      %v3734 = vpop.f32.mrf.mxu0
      %v3735 = vadd.f32 %v3609, %v3734
      %v3736 = vpop.f32.mrf.mxu0
      %3737 = vdwg.mxu0
      %3738 = vst [vmem:[#allocation4] sm:$0xff] %v3702
      %vm3739 = vcmask 392192
      %3740 = vst.msk [vmem:[#allocation4 + $0x8] sm:$0xff] %vm3739, %v3725
      %3741 = vst [vmem:[#allocation4 + $0x10] sm:$0xff] %v3704
      %3742 = vst.msk [vmem:[#allocation4 + $0x18] sm:$0xff] %vm3739, %v3727
      %3743 = vst [vmem:[#allocation4 + $0x20] sm:$0xff] %v3707
      %3744 = vst.msk [vmem:[#allocation4 + $0x28] sm:$0xff] %vm3739, %v3730
      %3745 = vst [vmem:[#allocation4 + $0x30] sm:$0xff] %v3709
      %3746 = vst.msk [vmem:[#allocation4 + $0x38] sm:$0xff] %vm3739, %v3732
      %3747 = vst [vmem:[#allocation4 + $0x40] sm:$0xf] %v3712
      %vm3748 = vcmask 388096
      %3749 = vst.msk [vmem:[#allocation4 + $0x48] sm:$0xf] %vm3748, %v3735
      %v3750 = vld [vmem:[#allocation4] sm:$0xff]
      %v3751 = vld [vmem:[#allocation4 + $0x8] sm:$0xff]
      %v3752 = vld [vmem:[#allocation4 + $0x10] sm:$0xff]
      %v3753 = vld [vmem:[#allocation4 + $0x18] sm:$0xff]
      %v3754 = vld [vmem:[#allocation4 + $0x20] sm:$0xff]
      %v3755 = vld [vmem:[#allocation4 + $0x28] sm:$0xff]
      %v3756 = vld [vmem:[#allocation4 + $0x30] sm:$0xff]
      %v3757 = vld [vmem:[#allocation4 + $0x38] sm:$0xff]
      %v3758 = vld [vmem:[#allocation4 + $0x40] sm:$0xf]
      %v3759 = vld [vmem:[#allocation4 + $0x48] sm:$0xf]
      %s3760 = scalar_lea.vmem %s9, 104
      %v3761 = vld [vmem:[%s3760] sm:$0xff]
      %v3762 = vld [vmem:[%s3760 + $0x8] sm:$0xff]
      %v3763 = vld [vmem:[%s3760 + $0x10] sm:$0xff]
      %v3764 = vld [vmem:[%s3760 + $0x18] sm:$0xff]
      %v3765 = vld [vmem:[%s3760 + $0x20] sm:$0xff]
      %v3766 = vld [vmem:[%s3760 + $0x28] sm:$0xff]
      %v3767 = vld [vmem:[%s3760 + $0x30] sm:$0xff]
      %v3768 = vld [vmem:[%s3760 + $0x38] sm:$0xff]
      %v3769 = vld [vmem:[%s3760 + $0x40] sm:$0xff]
      %v3770 = vld [vmem:[%s3760 + $0x48] sm:$0xff]
      %v3771 = vld [vmem:[%s3760 + $0x50] sm:$0xff]
      %v3772 = vld [vmem:[%s3760 + $0x58] sm:$0xff]
      %v3773 = vld [vmem:[%s3760 + $0x60] sm:$0xff]
      %v3774 = vshrl.u32 %v3590, 16
      %v3776 = vshll.u32 %v3590, 16
      %v3778 = vrot.slane %v3776, 1
      %v3779 = vor.u32 %v3774, %v3778
      %v3780 = vshll.u32 %v3591, 16
      %v3782 = vrot.slane %v3780, 1
      %v3783 = vsel %vm2657, %v3779, %v3782
      %v3784 = vshrl.u32 %v3591, 16
      %v3786 = vor.u32 %v3784, %v3782
      %v3787 = vshll.u32 %v3592, 16
      %v3789 = vrot.slane %v3787, 1
      %v3790 = vsel %vm2657, %v3786, %v3789
      %v3791 = vshrl.u32 %v3592, 16
      %v3793 = vor.u32 %v3791, %v3789
      %v3807 = vunpack.c.l.b16 %v3761
      %v3808 = vunpack.c.h.b16 %v3761
      %v3809 = vunpack.c.l.b16 %v3762
      %v3810 = vunpack.c.h.b16 %v3762
      %v3811 = vunpack.c.l.b16 %v3763
      %v3812 = vunpack.c.h.b16 %v3763
      %v3813 = vunpack.c.l.b16 %v3764
      %v3814 = vunpack.c.h.b16 %v3764
      %v3815 = vunpack.c.l.b16 %v3765
      %v3816 = vunpack.c.h.b16 %v3765
      %v3817 = vunpack.c.l.b16 %v3766
      %v3818 = vunpack.c.h.b16 %v3766
      %v3819 = vunpack.c.l.b16 %v3767
      %v3820 = vunpack.c.h.b16 %v3767
      %v3821 = vunpack.c.l.b16 %v3768
      %v3822 = vunpack.c.h.b16 %v3768
      %v3823 = vunpack.c.l.b16 %v3769
      %v3824 = vunpack.c.h.b16 %v3769
      %v3825 = vunpack.c.l.b16 %v3770
      %v3826 = vunpack.c.h.b16 %v3770
      %v3827 = vunpack.c.l.b16 %v3771
      %v3828 = vunpack.c.h.b16 %v3771
      %v3829 = vunpack.c.l.b16 %v3772
      %v3830 = vunpack.c.h.b16 %v3772
      %v3831 = vunpack.c.l.b16 %v3773
      %v3832 = vunpack.c.h.b16 %v3773
      %v3833 = vpack.c.b16 %v3809, %v3807
      %v3834 = vpack.c.b16 %v3810, %v3808
      %v3835 = vpack.c.b16 %v3813, %v3811
      %v3836 = vpack.c.b16 %v3814, %v3812
      %v3837 = vpack.c.b16 %v3817, %v3815
      %v3838 = vpack.c.b16 %v3818, %v3816
      %v3839 = vpack.c.b16 %v3821, %v3819
      %v3840 = vpack.c.b16 %v3822, %v3820
      %v3841 = vpack.c.b16 %v3825, %v3823
      %v3842 = vpack.c.b16 %v3826, %v3824
      %v3843 = vpack.c.b16 %v3829, %v3827
      %v3844 = vpack.c.b16 %v3830, %v3828
      %v3845 = vpack.c.b16 %v3831, %v3831
      %v3846 = vpack.c.b16 %v3832, %v3832
      %v3860 = vsel %vm787, %v3783, 0
      %v3863 = vsel %vm787, %v3790, 0
      %v3866 = vsel %vm787, %v3793, 0
      %v3869 = vsel %vm3404, %v3845, 0
      %v3872 = vsel %vm3404, %v3846, 0
      %3874 = vmatpush.bf16.msra.mxu0 0
      %3875 = vmatpush.bf16.msra.mxu0 %v3869
      %3876 = vmatpush.bf16.msra.mxu0 %v3843
      %3877 = vmatpush.bf16.msra.mxu0 %v3841
      %3878 = vmatpush.bf16.msra.mxu0 %v3839
      %3879 = vmatpush.bf16.msra.mxu0 %v3837
      %3880 = vmatpush.bf16.msra.mxu0 %v3835
      %3881 = vmatpush.bf16.msra.mxu0 %v3833
      %3882 = vmatmul.bf16.gmra.mxu0 %v3860
      %v3883 = vpop.f32.mrf.mxu0
      %v3884 = vadd.f32 0.0, %v3883
      %v3885 = vpop.f32.mrf.mxu0
      %v3886 = vadd.f32 0.0, %v3885
      %3887 = vmatmul.bf16.gmra.mxu0 %v3863
      %v3888 = vpop.f32.mrf.mxu0
      %v3889 = vadd.f32 0.0, %v3888
      %v3890 = vpop.f32.mrf.mxu0
      %v3891 = vadd.f32 0.0, %v3890
      %3892 = vmatmul.bf16.gmra.mxu0 %v3866
      %v3893 = vpop.f32.mrf.mxu0
      %v3894 = vadd.f32 0.0, %v3893
      %v3895 = vpop.f32.mrf.mxu0
      %3896 = vdwg.mxu0
      %3897 = vmatpush.bf16.msra.mxu0 0
      %3898 = vmatpush.bf16.msra.mxu0 %v3872
      %3899 = vmatpush.bf16.msra.mxu0 %v3844
      %3900 = vmatpush.bf16.msra.mxu0 %v3842
      %3901 = vmatpush.bf16.msra.mxu0 %v3840
      %3902 = vmatpush.bf16.msra.mxu0 %v3838
      %3903 = vmatpush.bf16.msra.mxu0 %v3836
      %3904 = vmatpush.bf16.msra.mxu0 %v3834
      %3905 = vmatmul.bf16.gmra.mxu0 %v3860
      %v3906 = vpop.f32.mrf.mxu0
      %v3907 = vadd.f32 0.0, %v3906
      %v3908 = vpop.f32.mrf.mxu0
      %v3909 = vadd.f32 0.0, %v3908
      %3910 = vmatmul.bf16.gmra.mxu0 %v3863
      %v3911 = vpop.f32.mrf.mxu0
      %v3912 = vadd.f32 0.0, %v3911
      %v3913 = vpop.f32.mrf.mxu0
      %v3914 = vadd.f32 0.0, %v3913
      %3915 = vmatmul.bf16.gmra.mxu0 %v3866
      %v3916 = vpop.f32.mrf.mxu0
      %v3917 = vadd.f32 0.0, %v3916
      %v3918 = vpop.f32.mrf.mxu0
      %3919 = vdwg.mxu0
      %v3920 = vadd.f32 %v3750, %v3884
      %v3921 = vadd.f32 %v3751, %v3907
      %v3922 = vadd.f32 %v3752, %v3886
      %v3923 = vadd.f32 %v3753, %v3909
      %v3924 = vadd.f32 %v3754, %v3889
      %v3925 = vadd.f32 %v3755, %v3912
      %v3926 = vadd.f32 %v3756, %v3891
      %v3927 = vadd.f32 %v3757, %v3914
      %v3928 = vadd.f32 %v3758, %v3894
      %v3929 = vadd.f32 %v3759, %v3917
      %3930 = vst [vmem:[#allocation4] sm:$0xff] %v3920
      %3931 = vst.msk [vmem:[#allocation4 + $0x8] sm:$0xff] %vm3739, %v3921
      %3932 = vst [vmem:[#allocation4 + $0x10] sm:$0xff] %v3922
      %3933 = vst.msk [vmem:[#allocation4 + $0x18] sm:$0xff] %vm3739, %v3923
      %3934 = vst [vmem:[#allocation4 + $0x20] sm:$0xff] %v3924
      %3935 = vst.msk [vmem:[#allocation4 + $0x28] sm:$0xff] %vm3739, %v3925
      %3936 = vst [vmem:[#allocation4 + $0x30] sm:$0xff] %v3926
      %3937 = vst.msk [vmem:[#allocation4 + $0x38] sm:$0xff] %vm3739, %v3927
      %3938 = vst [vmem:[#allocation4 + $0x40] sm:$0xf] %v3928
      %3939 = vst.msk [vmem:[#allocation4 + $0x48] sm:$0xf] %vm3748, %v3929
      %v3940 = vld [vmem:[#allocation4] sm:$0xff]
      %v3941 = vld [vmem:[#allocation4 + $0x8] sm:$0xff]
      %v3942 = vld [vmem:[#allocation4 + $0x10] sm:$0xff]
      %v3943 = vld [vmem:[#allocation4 + $0x18] sm:$0xff]
      %v3944 = vld [vmem:[#allocation4 + $0x20] sm:$0xff]
      %v3945 = vld [vmem:[#allocation4 + $0x28] sm:$0xff]
      %v3946 = vld [vmem:[#allocation4 + $0x30] sm:$0xff]
      %v3947 = vld [vmem:[#allocation4 + $0x38] sm:$0xff]
      %v3948 = vld [vmem:[#allocation4 + $0x40] sm:$0xf]
      %v3949 = vld [vmem:[#allocation4 + $0x48] sm:$0xf]
      %s3950 = scalar_lea.vmem %s9, 208
      %v3951 = vld [vmem:[%s3950] sm:$0xff]
      %v3952 = vld [vmem:[%s3950 + $0x8] sm:$0xff]
      %v3953 = vld [vmem:[%s3950 + $0x10] sm:$0xff]
      %v3954 = vld [vmem:[%s3950 + $0x18] sm:$0xff]
      %v3955 = vld [vmem:[%s3950 + $0x20] sm:$0xff]
      %v3956 = vld [vmem:[%s3950 + $0x28] sm:$0xff]
      %v3957 = vld [vmem:[%s3950 + $0x30] sm:$0xff]
      %v3958 = vld [vmem:[%s3950 + $0x38] sm:$0xff]
      %v3959 = vld [vmem:[%s3950 + $0x40] sm:$0xff]
      %v3960 = vld [vmem:[%s3950 + $0x48] sm:$0xff]
      %v3961 = vld [vmem:[%s3950 + $0x50] sm:$0xff]
      %v3962 = vld [vmem:[%s3950 + $0x58] sm:$0xff]
      %v3963 = vld [vmem:[%s3950 + $0x60] sm:$0xff]
      %v3967 = vrot.slane %v3590, 1
      %v3968 = vrot.slane %v3591, 1
      %v3969 = vsel %vm2937, %v3967, %v3968
      %v3970 = vrot.slane %v3592, 1
      %v3971 = vsel %vm2937, %v3968, %v3970
      %v3985 = vunpack.c.l.b16 %v3951
      %v3986 = vunpack.c.h.b16 %v3951
      %v3987 = vunpack.c.l.b16 %v3952
      %v3988 = vunpack.c.h.b16 %v3952
      %v3989 = vunpack.c.l.b16 %v3953
      %v3990 = vunpack.c.h.b16 %v3953
      %v3991 = vunpack.c.l.b16 %v3954
      %v3992 = vunpack.c.h.b16 %v3954
      %v3993 = vunpack.c.l.b16 %v3955
      %v3994 = vunpack.c.h.b16 %v3955
      %v3995 = vunpack.c.l.b16 %v3956
      %v3996 = vunpack.c.h.b16 %v3956
      %v3997 = vunpack.c.l.b16 %v3957
      %v3998 = vunpack.c.h.b16 %v3957
      %v3999 = vunpack.c.l.b16 %v3958
      %v4000 = vunpack.c.h.b16 %v3958
      %v4001 = vunpack.c.l.b16 %v3959
      %v4002 = vunpack.c.h.b16 %v3959
      %v4003 = vunpack.c.l.b16 %v3960
      %v4004 = vunpack.c.h.b16 %v3960
      %v4005 = vunpack.c.l.b16 %v3961
      %v4006 = vunpack.c.h.b16 %v3961
      %v4007 = vunpack.c.l.b16 %v3962
      %v4008 = vunpack.c.h.b16 %v3962
      %v4009 = vunpack.c.l.b16 %v3963
      %v4010 = vunpack.c.h.b16 %v3963
      %v4011 = vpack.c.b16 %v3987, %v3985
      %v4012 = vpack.c.b16 %v3988, %v3986
      %v4013 = vpack.c.b16 %v3991, %v3989
      %v4014 = vpack.c.b16 %v3992, %v3990
      %v4015 = vpack.c.b16 %v3995, %v3993
      %v4016 = vpack.c.b16 %v3996, %v3994
      %v4017 = vpack.c.b16 %v3999, %v3997
      %v4018 = vpack.c.b16 %v4000, %v3998
      %v4019 = vpack.c.b16 %v4003, %v4001
      %v4020 = vpack.c.b16 %v4004, %v4002
      %v4021 = vpack.c.b16 %v4007, %v4005
      %v4022 = vpack.c.b16 %v4008, %v4006
      %v4023 = vpack.c.b16 %v4009, %v4009
      %v4024 = vpack.c.b16 %v4010, %v4010
      %v4038 = vsel %vm787, %v3969, 0
      %v4041 = vsel %vm787, %v3971, 0
      %v4044 = vsel %vm787, %v3970, 0
      %v4047 = vsel %vm3404, %v4023, 0
      %v4050 = vsel %vm3404, %v4024, 0
      %4052 = vmatpush.bf16.msra.mxu0 0
      %4053 = vmatpush.bf16.msra.mxu0 %v4047
      %4054 = vmatpush.bf16.msra.mxu0 %v4021
      %4055 = vmatpush.bf16.msra.mxu0 %v4019
      %4056 = vmatpush.bf16.msra.mxu0 %v4017
      %4057 = vmatpush.bf16.msra.mxu0 %v4015
      %4058 = vmatpush.bf16.msra.mxu0 %v4013
      %4059 = vmatpush.bf16.msra.mxu0 %v4011
      %4060 = vmatmul.bf16.gmra.mxu0 %v4038
      %v4061 = vpop.f32.mrf.mxu0
      %v4062 = vadd.f32 0.0, %v4061
      %v4063 = vpop.f32.mrf.mxu0
      %v4064 = vadd.f32 0.0, %v4063
      %4065 = vmatmul.bf16.gmra.mxu0 %v4041
      %v4066 = vpop.f32.mrf.mxu0
      %v4067 = vadd.f32 0.0, %v4066
      %v4068 = vpop.f32.mrf.mxu0
      %v4069 = vadd.f32 0.0, %v4068
      %4070 = vmatmul.bf16.gmra.mxu0 %v4044
      %v4071 = vpop.f32.mrf.mxu0
      %v4072 = vadd.f32 0.0, %v4071
      %v4073 = vpop.f32.mrf.mxu0
      %4074 = vdwg.mxu0
      %4075 = vmatpush.bf16.msra.mxu0 0
      %4076 = vmatpush.bf16.msra.mxu0 %v4050
      %4077 = vmatpush.bf16.msra.mxu0 %v4022
      %4078 = vmatpush.bf16.msra.mxu0 %v4020
      %4079 = vmatpush.bf16.msra.mxu0 %v4018
      %4080 = vmatpush.bf16.msra.mxu0 %v4016
      %4081 = vmatpush.bf16.msra.mxu0 %v4014
      %4082 = vmatpush.bf16.msra.mxu0 %v4012
      %4083 = vmatmul.bf16.gmra.mxu0 %v4038
      %v4084 = vpop.f32.mrf.mxu0
      %v4085 = vadd.f32 0.0, %v4084
      %v4086 = vpop.f32.mrf.mxu0
      %v4087 = vadd.f32 0.0, %v4086
      %4088 = vmatmul.bf16.gmra.mxu0 %v4041
      %v4089 = vpop.f32.mrf.mxu0
      %v4090 = vadd.f32 0.0, %v4089
      %v4091 = vpop.f32.mrf.mxu0
      %v4092 = vadd.f32 0.0, %v4091
      %4093 = vmatmul.bf16.gmra.mxu0 %v4044
      %v4094 = vpop.f32.mrf.mxu0
      %v4095 = vadd.f32 0.0, %v4094
      %v4096 = vpop.f32.mrf.mxu0
      %4097 = vdwg.mxu0
      %v4098 = vadd.f32 %v3940, %v4062
      %v4099 = vadd.f32 %v3941, %v4085
      %v4100 = vadd.f32 %v3942, %v4064
      %v4101 = vadd.f32 %v3943, %v4087
      %v4102 = vadd.f32 %v3944, %v4067
      %v4103 = vadd.f32 %v3945, %v4090
      %v4104 = vadd.f32 %v3946, %v4069
      %v4105 = vadd.f32 %v3947, %v4092
      %v4106 = vadd.f32 %v3948, %v4072
      %v4107 = vadd.f32 %v3949, %v4095
      %4108 = vst [vmem:[#allocation4] sm:$0xff] %v4098
      %4109 = vst.msk [vmem:[#allocation4 + $0x8] sm:$0xff] %vm3739, %v4099
      %4110 = vst [vmem:[#allocation4 + $0x10] sm:$0xff] %v4100
      %4111 = vst.msk [vmem:[#allocation4 + $0x18] sm:$0xff] %vm3739, %v4101
      %4112 = vst [vmem:[#allocation4 + $0x20] sm:$0xff] %v4102
      %4113 = vst.msk [vmem:[#allocation4 + $0x28] sm:$0xff] %vm3739, %v4103
      %4114 = vst [vmem:[#allocation4 + $0x30] sm:$0xff] %v4104
      %4115 = vst.msk [vmem:[#allocation4 + $0x38] sm:$0xff] %vm3739, %v4105
      %4116 = vst [vmem:[#allocation4 + $0x40] sm:$0xf] %v4106
      %4117 = vst.msk [vmem:[#allocation4 + $0x48] sm:$0xf] %vm3748, %v4107
      %v4118 = vld [vmem:[#allocation4] sm:$0xff]
      %v4119 = vld [vmem:[#allocation4 + $0x8] sm:$0xff]
      %v4120 = vld [vmem:[#allocation4 + $0x10] sm:$0xff]
      %v4121 = vld [vmem:[#allocation4 + $0x18] sm:$0xff]
      %v4122 = vld [vmem:[#allocation4 + $0x20] sm:$0xff]
      %v4123 = vld [vmem:[#allocation4 + $0x28] sm:$0xff]
      %v4124 = vld [vmem:[#allocation4 + $0x30] sm:$0xff]
      %v4125 = vld [vmem:[#allocation4 + $0x38] sm:$0xff]
      %v4126 = vld [vmem:[#allocation4 + $0x40] sm:$0x7]
      %v4127 = vld [vmem:[#allocation4 + $0x48] sm:$0x7]
      %v4128 = vld [vmem:[#allocation4] sm:$0xfe]
      %v4129 = vld [vmem:[#allocation4 + $0x8] sm:$0xfe]
      %v4130 = vld [vmem:[#allocation4 + $0x40] sm:$0xf]
      %v4131 = vld [vmem:[#allocation4 + $0x48] sm:$0xf]
      %v4142 = vrot.slane %v4128, 1
      %v4143 = vrot.slane %v4120, 1
      %v4144 = vsel %vm1614, %v4142, %v4143
      %v4145 = vrot.slane %v4129, 1
      %v4146 = vrot.slane %v4121, 1
      %v4147 = vsel %vm1614, %v4145, %v4146
      %v4148 = vrot.slane %v4122, 1
      %v4149 = vsel %vm1614, %v4143, %v4148
      %v4150 = vrot.slane %v4123, 1
      %v4151 = vsel %vm1614, %v4146, %v4150
      %v4152 = vrot.slane %v4124, 1
      %v4153 = vsel %vm1614, %v4148, %v4152
      %v4154 = vrot.slane %v4125, 1
      %v4155 = vsel %vm1614, %v4150, %v4154
      %v4156 = vrot.slane %v4130, 1
      %v4157 = vsel %vm1614, %v4152, %v4156
      %v4158 = vrot.slane %v4131, 1
      %v4159 = vsel %vm1614, %v4154, %v4158
      %v4170 = vmax.f32 %v4118, %v4144
      %v4171 = vmax.f32 %v4119, %v4147
      %v4172 = vmax.f32 %v4120, %v4149
      %v4173 = vmax.f32 %v4121, %v4151
      %v4174 = vmax.f32 %v4122, %v4153
      %v4175 = vmax.f32 %v4123, %v4155
      %v4176 = vmax.f32 %v4124, %v4157
      %v4177 = vmax.f32 %v4125, %v4159
      %v4178 = vmax.f32 %v4126, %v4156
      %v4179 = vmax.f32 %v4127, %v4158
      %4190 = vrot.lane.b32.xlu0 %v4170, 127
      %v4191 = vpop.permute.xlu0 %4190
      %4192 = vrot.lane.b32.xlu0 %v4171, 127
      %v4193 = vpop.permute.xlu0 %4192
      %4194 = vrot.lane.b32.xlu0 %v4172, 127
      %v4195 = vpop.permute.xlu0 %4194
      %4196 = vrot.lane.b32.xlu0 %v4173, 127
      %v4197 = vpop.permute.xlu0 %4196
      %4198 = vrot.lane.b32.xlu0 %v4174, 127
      %v4199 = vpop.permute.xlu0 %4198
      %4200 = vrot.lane.b32.xlu0 %v4175, 127
      %v4201 = vpop.permute.xlu0 %4200
      %4202 = vrot.lane.b32.xlu0 %v4176, 127
      %v4203 = vpop.permute.xlu0 %4202
      %4204 = vrot.lane.b32.xlu0 %v4177, 127
      %v4205 = vpop.permute.xlu0 %4204
      %4206 = vrot.lane.b32.xlu0 %v4178, 127
      %v4207 = vpop.permute.xlu0 %4206
      %4208 = vrot.lane.b32.xlu0 %v4179, 127
      %v4209 = vpop.permute.xlu0 %4208
      %v4210 = vsel %vm1893, %v4191, %v4193
      %v4211 = vsel %vm1893, %v4195, %v4197
      %v4212 = vsel %vm1893, %v4199, %v4201
      %v4213 = vsel %vm1893, %v4203, %v4205
      %v4214 = vsel %vm1893, %v4207, %v4209
      %v4225 = vmax.f32 %v4170, %v4210
      %v4226 = vmax.f32 %v4171, %v4193
      %v4227 = vmax.f32 %v4172, %v4211
      %v4228 = vmax.f32 %v4173, %v4197
      %v4229 = vmax.f32 %v4174, %v4212
      %v4230 = vmax.f32 %v4175, %v4201
      %v4231 = vmax.f32 %v4176, %v4213
      %v4232 = vmax.f32 %v4177, %v4205
      %v4233 = vmax.f32 %v4178, %v4214
      %v4234 = vmax.f32 %v4179, %v4209
      %v4235 = vld [vmem:[%s11] sm:$0xff]
      %v4236 = vld [vmem:[%s11 + $0x8] sm:$0xff]
      %v4237 = vld [vmem:[%s11 + $0x10] sm:$0x3]
      %vm4238 = vcmask 285696
      %v4240 = vsel %vm4238, %v4235, 0
      %v4243 = vsel %vm4238, %v4236, 0
      %v4246 = vsel %vm4238, %v4237, 0
      %vm4248 = vcmask 1042432
      %v4250 = vsel %vm4248, %v4233, 0
      %v4253 = vsel %vm4248, %v4234, 0
      %4255 = vmatpush.msra.mxu0 0.0
      %4256 = vmatpush.msra.mxu0 0.0
      %4257 = vmatpush.msra.mxu0 0.0
      %4258 = vmatpush.msra.mxu0 0.0
      %4259 = vmatpush.msra.mxu0 0.0
      %4260 = vmatpush.msra.mxu0 0.0
      %4261 = vmatpush.msra.mxu0 0.0
      %4262 = vmatpush.msra.mxu0 0.0
      %4263 = vmatpush.msra.mxu0 0.0
      %4264 = vmatpush.msra.mxu0 0.0
      %4265 = vmatpush.msra.mxu0 0.0
      %4266 = vmatpush.msra.mxu0 %v4250
      %4267 = vmatpush.msra.mxu0 %v4231
      %4268 = vmatpush.msra.mxu0 %v4229
      %4269 = vmatpush.msra.mxu0 %v4227
      %4270 = vmatpush.msra.mxu0 %v4225
      %4271 = vmatmul.f32.gmra.mxu0 %v4240
      %v4272 = vpop.f32.mrf.mxu0
      %v4273 = vadd.f32 0.0, %v4272
      %4274 = vmatmul.f32.gmra.mxu0 %v4243
      %v4275 = vpop.f32.mrf.mxu0
      %v4276 = vadd.f32 0.0, %v4275
      %4277 = vmatmul.f32.gmra.mxu0 %v4246
      %v4278 = vpop.f32.mrf.mxu0
      %v4279 = vadd.f32 0.0, %v4278
      %4280 = vdwg.mxu0
      %4281 = vmatpush.msra.mxu0 0.0
      %4282 = vmatpush.msra.mxu0 0.0
      %4283 = vmatpush.msra.mxu0 0.0
      %4284 = vmatpush.msra.mxu0 0.0
      %4285 = vmatpush.msra.mxu0 0.0
      %4286 = vmatpush.msra.mxu0 0.0
      %4287 = vmatpush.msra.mxu0 0.0
      %4288 = vmatpush.msra.mxu0 0.0
      %4289 = vmatpush.msra.mxu0 0.0
      %4290 = vmatpush.msra.mxu0 0.0
      %4291 = vmatpush.msra.mxu0 0.0
      %4292 = vmatpush.msra.mxu0 %v4253
      %4293 = vmatpush.msra.mxu0 %v4232
      %4294 = vmatpush.msra.mxu0 %v4230
      %4295 = vmatpush.msra.mxu0 %v4228
      %4296 = vmatpush.msra.mxu0 %v4226
      %4297 = vmatmul.f32.gmra.mxu0 %v4240
      %v4298 = vpop.f32.mrf.mxu0
      %v4299 = vadd.f32 0.0, %v4298
      %4300 = vmatmul.f32.gmra.mxu0 %v4243
      %v4301 = vpop.f32.mrf.mxu0
      %v4302 = vadd.f32 0.0, %v4301
      %4303 = vmatmul.f32.gmra.mxu0 %v4246
      %v4304 = vpop.f32.mrf.mxu0
      %v4305 = vadd.f32 0.0, %v4304
      %4306 = vdwg.mxu0
      %v4307 = vld [vmem:[%s12] sm:$0xff]
      %v4308 = vld [vmem:[%s12 + $0x8] sm:$0xff]
      %v4309 = vld [vmem:[%s12 + $0x10] sm:$0xff]
      %v4310 = vld [vmem:[%s12 + $0x18] sm:$0xff]
      %v4311 = vld [vmem:[%s12 + $0x20] sm:$0xff]
      %v4312 = vld [vmem:[%s12 + $0x28] sm:$0xff]
      %v4313 = vld [vmem:[%s12 + $0x30] sm:$0xff]
      %v4314 = vld [vmem:[%s12 + $0x38] sm:$0xff]
      %v4315 = vld [vmem:[%s12 + $0x40] sm:$0xff]
      %v4316 = vld [vmem:[%s12 + $0x48] sm:$0xff]
      %v4317 = vld [vmem:[%s12 + $0x50] sm:$0xff]
      %v4318 = vld [vmem:[%s12 + $0x58] sm:$0xff]
      %v4319 = vld [vmem:[%s12 + $0x60] sm:$0xff]
      %v4320 = vld [vmem:[%s12 + $0x68] sm:$0xff]
      %v4321 = vld [vmem:[%s12 + $0x70] sm:$0xff]
      %v4322 = vld [vmem:[%s12 + $0x78] sm:$0xff]
      %v4323 = vld [vmem:[%s12 + $0x80] sm:$0xff]
      %v4324 = vld [vmem:[%s12 + $0x88] sm:$0xff]
      %v4325 = vld [vmem:[%s12 + $0x90] sm:$0xff]
      %v4326 = vld [vmem:[%s12 + $0x98] sm:$0xff]
      %v4327 = vld [vmem:[%s12 + $0xa0] sm:$0xff]
      %v4328 = vld [vmem:[%s12 + $0xa8] sm:$0x7f]
      %vm4329 = vcmask 384000
      %v4331 = vsel %vm4329, %v4299, 0
      %v4334 = vsel %vm4329, %v4302, 0
      %v4337 = vsel %vm4329, %v4305, 0
      %v4340 = vsel %vm1614, %v4328, 0
      %4342 = vmatpush.msra.mxu0 %v4322
      %4343 = vmatpush.msra.mxu0 %v4321
      %4344 = vmatpush.msra.mxu0 %v4320
      %4345 = vmatpush.msra.mxu0 %v4319
      %4346 = vmatpush.msra.mxu0 %v4318
      %4347 = vmatpush.msra.mxu0 %v4317
      %4348 = vmatpush.msra.mxu0 %v4316
      %4349 = vmatpush.msra.mxu0 %v4315
      %4350 = vmatpush.msra.mxu0 %v4314
      %4351 = vmatpush.msra.mxu0 %v4313
      %4352 = vmatpush.msra.mxu0 %v4312
      %4353 = vmatpush.msra.mxu0 %v4311
      %4354 = vmatpush.msra.mxu0 %v4310
      %4355 = vmatpush.msra.mxu0 %v4309
      %4356 = vmatpush.msra.mxu0 %v4308
      %4357 = vmatpush.msra.mxu0 %v4307
      %4358 = vmatmul.f32.gmra.mxu0 %v4273
      %v4359 = vpop.f32.mrf.mxu0
      %v4360 = vadd.f32 0.0, %v4359
      %4361 = vmatmul.f32.gmra.mxu0 %v4276
      %v4362 = vpop.f32.mrf.mxu0
      %v4363 = vadd.f32 0.0, %v4362
      %4364 = vmatmul.f32.gmra.mxu0 %v4279
      %v4365 = vpop.f32.mrf.mxu0
      %v4366 = vadd.f32 0.0, %v4365
      %4367 = vdwg.mxu0
      %4368 = vmatpush.msra.mxu0 0.0
      %4369 = vmatpush.msra.mxu0 0.0
      %4370 = vmatpush.msra.mxu0 0.0
      %4371 = vmatpush.msra.mxu0 0.0
      %4372 = vmatpush.msra.mxu0 0.0
      %4373 = vmatpush.msra.mxu0 0.0
      %4374 = vmatpush.msra.mxu0 0.0
      %4375 = vmatpush.msra.mxu0 0.0
      %4376 = vmatpush.msra.mxu0 0.0
      %4377 = vmatpush.msra.mxu0 0.0
      %4378 = vmatpush.msra.mxu0 %v4340
      %4379 = vmatpush.msra.mxu0 %v4327
      %4380 = vmatpush.msra.mxu0 %v4326
      %4381 = vmatpush.msra.mxu0 %v4325
      %4382 = vmatpush.msra.mxu0 %v4324
      %4383 = vmatpush.msra.mxu0 %v4323
      %4384 = vmatmul.f32.gmra.mxu0 %v4331
      %v4385 = vpop.f32.mrf.mxu0
      %v4386 = vadd.f32 %v4360, %v4385
      %4387 = vmatmul.f32.gmra.mxu0 %v4334
      %v4388 = vpop.f32.mrf.mxu0
      %v4389 = vadd.f32 %v4363, %v4388
      %4390 = vmatmul.f32.gmra.mxu0 %v4337
      %v4391 = vpop.f32.mrf.mxu0
      %v4392 = vadd.f32 %v4366, %v4391
      %4393 = vdwg.mxu0
      %v4394 = vmax.f32 %v4386, 0.0
      %v4395 = vmax.f32 %v4389, 0.0
      %v4396 = vmax.f32 %v4392, 0.0
      %v4397 = vld [vmem:[%s14] sm:$0xf]
      %v4398 = vpack.c.bf16 %v4394, %v4394
      %v4399 = vld [vmem:[%s13] sm:$0xff]
      %v4400 = vld [vmem:[%s13 + $0x8] sm:$0xff]
      %v4401 = vld [vmem:[%s13 + $0x10] sm:$0xff]
      %v4402 = vld [vmem:[%s13 + $0x18] sm:$0xff]
      %v4403 = vld [vmem:[%s13 + $0x20] sm:$0xff]
      %v4404 = vld [vmem:[%s13 + $0x28] sm:$0xff]
      %v4405 = vld [vmem:[%s13 + $0x30] sm:$0xff]
      %v4406 = vld [vmem:[%s13 + $0x38] sm:$0xff]
      %v4407 = vld [vmem:[%s13 + $0x40] sm:$0xff]
      %v4408 = vld [vmem:[%s13 + $0x48] sm:$0xff]
      %v4409 = vld [vmem:[%s13 + $0x50] sm:$0xff]
      %v4410 = vld [vmem:[%s13 + $0x58] sm:$0xff]
      %v4411 = vld [vmem:[%s13 + $0x60] sm:$0xff]
      %v4412 = vld [vmem:[%s13 + $0x68] sm:$0xff]
      %v4413 = vld [vmem:[%s13 + $0x70] sm:$0xff]
      %v4414 = vld [vmem:[%s13 + $0x78] sm:$0xff]
      %v4415 = vld [vmem:[%s13 + $0x80] sm:$0xff]
      %v4416 = vld [vmem:[%s13 + $0x88] sm:$0xff]
      %v4417 = vld [vmem:[%s13 + $0x90] sm:$0xff]
      %v4418 = vld [vmem:[%s13 + $0x98] sm:$0xff]
      %v4439 = vunpack.c.l.b16 %v4399
      %v4440 = vunpack.c.h.b16 %v4399
      %v4441 = vunpack.c.l.b16 %v4400
      %v4442 = vunpack.c.h.b16 %v4400
      %v4443 = vunpack.c.l.b16 %v4401
      %v4444 = vunpack.c.h.b16 %v4401
      %v4445 = vunpack.c.l.b16 %v4402
      %v4446 = vunpack.c.h.b16 %v4402
      %v4447 = vunpack.c.l.b16 %v4403
      %v4448 = vunpack.c.h.b16 %v4403
      %v4449 = vunpack.c.l.b16 %v4404
      %v4450 = vunpack.c.h.b16 %v4404
      %v4451 = vunpack.c.l.b16 %v4405
      %v4452 = vunpack.c.h.b16 %v4405
      %v4453 = vunpack.c.l.b16 %v4406
      %v4454 = vunpack.c.h.b16 %v4406
      %v4455 = vunpack.c.l.b16 %v4407
      %v4456 = vunpack.c.h.b16 %v4407
      %v4457 = vunpack.c.l.b16 %v4408
      %v4458 = vunpack.c.h.b16 %v4408
      %v4459 = vunpack.c.l.b16 %v4409
      %v4460 = vunpack.c.h.b16 %v4409
      %v4461 = vunpack.c.l.b16 %v4410
      %v4462 = vunpack.c.h.b16 %v4410
      %v4463 = vunpack.c.l.b16 %v4411
      %v4464 = vunpack.c.h.b16 %v4411
      %v4465 = vunpack.c.l.b16 %v4412
      %v4466 = vunpack.c.h.b16 %v4412
      %v4467 = vunpack.c.l.b16 %v4413
      %v4468 = vunpack.c.h.b16 %v4413
      %v4469 = vunpack.c.l.b16 %v4414
      %v4470 = vunpack.c.h.b16 %v4414
      %v4471 = vunpack.c.l.b16 %v4415
      %v4472 = vunpack.c.h.b16 %v4415
      %v4473 = vunpack.c.l.b16 %v4416
      %v4474 = vunpack.c.h.b16 %v4416
      %v4475 = vunpack.c.l.b16 %v4417
      %v4476 = vunpack.c.h.b16 %v4417
      %v4477 = vunpack.c.l.b16 %v4418
      %v4478 = vunpack.c.h.b16 %v4418
      %v4479 = vpack.c.b16 %v4443, %v4439
      %v4480 = vpack.c.b16 %v4444, %v4440
      %v4481 = vpack.c.b16 %v4445, %v4441
      %v4482 = vpack.c.b16 %v4446, %v4442
      %v4483 = vpack.c.b16 %v4451, %v4447
      %v4484 = vpack.c.b16 %v4452, %v4448
      %v4485 = vpack.c.b16 %v4453, %v4449
      %v4486 = vpack.c.b16 %v4454, %v4450
      %v4487 = vpack.c.b16 %v4459, %v4455
      %v4488 = vpack.c.b16 %v4460, %v4456
      %v4489 = vpack.c.b16 %v4461, %v4457
      %v4490 = vpack.c.b16 %v4462, %v4458
      %v4491 = vpack.c.b16 %v4467, %v4463
      %v4492 = vpack.c.b16 %v4468, %v4464
      %v4493 = vpack.c.b16 %v4469, %v4465
      %v4494 = vpack.c.b16 %v4470, %v4466
      %v4495 = vpack.c.b16 %v4475, %v4471
      %v4496 = vpack.c.b16 %v4476, %v4472
      %v4497 = vpack.c.b16 %v4477, %v4473
      %v4498 = vpack.c.b16 %v4478, %v4474
      %vm4519 = vcmask 654336
      %v4521 = vsel %vm4519, %v4398, 0
      %4523 = vmatpush.bf16.msra.mxu0 0
      %4524 = vmatpush.bf16.msra.mxu0 0
      %4525 = vmatpush.bf16.msra.mxu0 0
      %4526 = vmatpush.bf16.msra.mxu0 %v4495
      %4527 = vmatpush.bf16.msra.mxu0 %v4491
      %4528 = vmatpush.bf16.msra.mxu0 %v4487
      %4529 = vmatpush.bf16.msra.mxu0 %v4483
      %4530 = vmatpush.bf16.msra.mxu0 %v4479
      %4531 = vmatmul.bf16.gmra.mxu0 %v4521
      %v4532 = vpop.f32.mrf.mxu0
      %v4533 = vadd.f32 0.0, %v4532
      %v4534 = vpop.f32.mrf.mxu0
      %4535 = vdwg.mxu0
      %4536 = vmatpush.bf16.msra.mxu0 0
      %4537 = vmatpush.bf16.msra.mxu0 0
      %4538 = vmatpush.bf16.msra.mxu0 0
      %4539 = vmatpush.bf16.msra.mxu0 %v4496
      %4540 = vmatpush.bf16.msra.mxu0 %v4492
      %4541 = vmatpush.bf16.msra.mxu0 %v4488
      %4542 = vmatpush.bf16.msra.mxu0 %v4484
      %4543 = vmatpush.bf16.msra.mxu0 %v4480
      %4544 = vmatmul.bf16.gmra.mxu0 %v4521
      %v4545 = vpop.f32.mrf.mxu0
      %v4546 = vadd.f32 0.0, %v4545
      %v4547 = vpop.f32.mrf.mxu0
      %4548 = vdwg.mxu0
      %4549 = vmatpush.bf16.msra.mxu0 0
      %4550 = vmatpush.bf16.msra.mxu0 0
      %4551 = vmatpush.bf16.msra.mxu0 0
      %4552 = vmatpush.bf16.msra.mxu0 %v4497
      %4553 = vmatpush.bf16.msra.mxu0 %v4493
      %4554 = vmatpush.bf16.msra.mxu0 %v4489
      %4555 = vmatpush.bf16.msra.mxu0 %v4485
      %4556 = vmatpush.bf16.msra.mxu0 %v4481
      %4557 = vmatmul.bf16.gmra.mxu0 %v4521
      %v4558 = vpop.f32.mrf.mxu0
      %v4559 = vadd.f32 0.0, %v4558
      %v4560 = vpop.f32.mrf.mxu0
      %4561 = vdwg.mxu0
      %4562 = vmatpush.bf16.msra.mxu0 0
      %4563 = vmatpush.bf16.msra.mxu0 0
      %4564 = vmatpush.bf16.msra.mxu0 0
      %4565 = vmatpush.bf16.msra.mxu0 %v4498
      %4566 = vmatpush.bf16.msra.mxu0 %v4494
      %4567 = vmatpush.bf16.msra.mxu0 %v4490
      %4568 = vmatpush.bf16.msra.mxu0 %v4486
      %4569 = vmatpush.bf16.msra.mxu0 %v4482
      %4570 = vmatmul.bf16.gmra.mxu0 %v4521
      %v4571 = vpop.f32.mrf.mxu0
      %v4572 = vadd.f32 0.0, %v4571
      %v4573 = vpop.f32.mrf.mxu0
      %4574 = vdwg.mxu0
      %v4579 = vrot.slane %v4546, 7
      %v4580 = vrot.slane %v4559, 6
      %v4581 = vrot.slane %v4572, 5
      %vm4582 = vcmask 1040384
      %v4583 = vsel %vm4582, %v4533, %v4579
      %vm4584 = vcmask 1042434
      %v4585 = vsel %vm4584, %v4580, %v4581
      %v4586 = vsel %vm2524, %v4583, %v4585
      %v4588 = vadd.f32 %v4397, %v4586
      %s4589 = scalar_lea.vmem %s13, 160
      %v4590 = vld [vmem:[%s4589] sm:$0xff]
      %v4591 = vld [vmem:[%s4589 + $0x8] sm:$0xff]
      %v4592 = vld [vmem:[%s4589 + $0x10] sm:$0xff]
      %v4593 = vld [vmem:[%s4589 + $0x18] sm:$0xff]
      %v4594 = vld [vmem:[%s4589 + $0x20] sm:$0xff]
      %v4595 = vld [vmem:[%s4589 + $0x28] sm:$0xff]
      %v4596 = vld [vmem:[%s4589 + $0x30] sm:$0xff]
      %v4597 = vld [vmem:[%s4589 + $0x38] sm:$0xff]
      %v4598 = vld [vmem:[%s4589 + $0x40] sm:$0xff]
      %v4599 = vld [vmem:[%s4589 + $0x48] sm:$0xff]
      %v4600 = vld [vmem:[%s4589 + $0x50] sm:$0xff]
      %v4601 = vld [vmem:[%s4589 + $0x58] sm:$0xff]
      %v4602 = vld [vmem:[%s4589 + $0x60] sm:$0xff]
      %v4603 = vld [vmem:[%s4589 + $0x68] sm:$0xff]
      %v4604 = vld [vmem:[%s4589 + $0x70] sm:$0xff]
      %v4605 = vld [vmem:[%s4589 + $0x78] sm:$0xff]
      %v4606 = vld [vmem:[%s4589 + $0x80] sm:$0xff]
      %v4607 = vld [vmem:[%s4589 + $0x88] sm:$0xff]
      %v4608 = vld [vmem:[%s4589 + $0x90] sm:$0xff]
      %v4609 = vld [vmem:[%s4589 + $0x98] sm:$0xff]
      %v4610 = vshrl.u32 %v4398, 16
      %v4632 = vunpack.c.l.b16 %v4590
      %v4633 = vunpack.c.h.b16 %v4590
      %v4634 = vunpack.c.l.b16 %v4591
      %v4635 = vunpack.c.h.b16 %v4591
      %v4636 = vunpack.c.l.b16 %v4592
      %v4637 = vunpack.c.h.b16 %v4592
      %v4638 = vunpack.c.l.b16 %v4593
      %v4639 = vunpack.c.h.b16 %v4593
      %v4640 = vunpack.c.l.b16 %v4594
      %v4641 = vunpack.c.h.b16 %v4594
      %v4642 = vunpack.c.l.b16 %v4595
      %v4643 = vunpack.c.h.b16 %v4595
      %v4644 = vunpack.c.l.b16 %v4596
      %v4645 = vunpack.c.h.b16 %v4596
      %v4646 = vunpack.c.l.b16 %v4597
      %v4647 = vunpack.c.h.b16 %v4597
      %v4648 = vunpack.c.l.b16 %v4598
      %v4649 = vunpack.c.h.b16 %v4598
      %v4650 = vunpack.c.l.b16 %v4599
      %v4651 = vunpack.c.h.b16 %v4599
      %v4652 = vunpack.c.l.b16 %v4600
      %v4653 = vunpack.c.h.b16 %v4600
      %v4654 = vunpack.c.l.b16 %v4601
      %v4655 = vunpack.c.h.b16 %v4601
      %v4656 = vunpack.c.l.b16 %v4602
      %v4657 = vunpack.c.h.b16 %v4602
      %v4658 = vunpack.c.l.b16 %v4603
      %v4659 = vunpack.c.h.b16 %v4603
      %v4660 = vunpack.c.l.b16 %v4604
      %v4661 = vunpack.c.h.b16 %v4604
      %v4662 = vunpack.c.l.b16 %v4605
      %v4663 = vunpack.c.h.b16 %v4605
      %v4664 = vunpack.c.l.b16 %v4606
      %v4665 = vunpack.c.h.b16 %v4606
      %v4666 = vunpack.c.l.b16 %v4607
      %v4667 = vunpack.c.h.b16 %v4607
      %v4668 = vunpack.c.l.b16 %v4608
      %v4669 = vunpack.c.h.b16 %v4608
      %v4670 = vunpack.c.l.b16 %v4609
      %v4671 = vunpack.c.h.b16 %v4609
      %v4672 = vpack.c.b16 %v4636, %v4632
      %v4673 = vpack.c.b16 %v4637, %v4633
      %v4674 = vpack.c.b16 %v4638, %v4634
      %v4675 = vpack.c.b16 %v4639, %v4635
      %v4676 = vpack.c.b16 %v4644, %v4640
      %v4677 = vpack.c.b16 %v4645, %v4641
      %v4678 = vpack.c.b16 %v4646, %v4642
      %v4679 = vpack.c.b16 %v4647, %v4643
      %v4680 = vpack.c.b16 %v4652, %v4648
      %v4681 = vpack.c.b16 %v4653, %v4649
      %v4682 = vpack.c.b16 %v4654, %v4650
      %v4683 = vpack.c.b16 %v4655, %v4651
      %v4684 = vpack.c.b16 %v4660, %v4656
      %v4685 = vpack.c.b16 %v4661, %v4657
      %v4686 = vpack.c.b16 %v4662, %v4658
      %v4687 = vpack.c.b16 %v4663, %v4659
      %v4688 = vpack.c.b16 %v4668, %v4664
      %v4689 = vpack.c.b16 %v4669, %v4665
      %v4690 = vpack.c.b16 %v4670, %v4666
      %v4691 = vpack.c.b16 %v4671, %v4667
      %v4713 = vsel %vm4519, %v4610, 0
      %4715 = vmatpush.bf16.msra.mxu0 0
      %4716 = vmatpush.bf16.msra.mxu0 0
      %4717 = vmatpush.bf16.msra.mxu0 0
      %4718 = vmatpush.bf16.msra.mxu0 %v4688
      %4719 = vmatpush.bf16.msra.mxu0 %v4684
      %4720 = vmatpush.bf16.msra.mxu0 %v4680
      %4721 = vmatpush.bf16.msra.mxu0 %v4676
      %4722 = vmatpush.bf16.msra.mxu0 %v4672
      %4723 = vmatmul.bf16.gmra.mxu0 %v4713
      %v4724 = vpop.f32.mrf.mxu0
      %v4725 = vadd.f32 0.0, %v4724
      %v4726 = vpop.f32.mrf.mxu0
      %4727 = vdwg.mxu0
      %4728 = vmatpush.bf16.msra.mxu0 0
      %4729 = vmatpush.bf16.msra.mxu0 0
      %4730 = vmatpush.bf16.msra.mxu0 0
      %4731 = vmatpush.bf16.msra.mxu0 %v4689
      %4732 = vmatpush.bf16.msra.mxu0 %v4685
      %4733 = vmatpush.bf16.msra.mxu0 %v4681
      %4734 = vmatpush.bf16.msra.mxu0 %v4677
      %4735 = vmatpush.bf16.msra.mxu0 %v4673
      %4736 = vmatmul.bf16.gmra.mxu0 %v4713
      %v4737 = vpop.f32.mrf.mxu0
      %v4738 = vadd.f32 0.0, %v4737
      %v4739 = vpop.f32.mrf.mxu0
      %4740 = vdwg.mxu0
      %4741 = vmatpush.bf16.msra.mxu0 0
      %4742 = vmatpush.bf16.msra.mxu0 0
      %4743 = vmatpush.bf16.msra.mxu0 0
      %4744 = vmatpush.bf16.msra.mxu0 %v4690
      %4745 = vmatpush.bf16.msra.mxu0 %v4686
      %4746 = vmatpush.bf16.msra.mxu0 %v4682
      %4747 = vmatpush.bf16.msra.mxu0 %v4678
      %4748 = vmatpush.bf16.msra.mxu0 %v4674
      %4749 = vmatmul.bf16.gmra.mxu0 %v4713
      %v4750 = vpop.f32.mrf.mxu0
      %v4751 = vadd.f32 0.0, %v4750
      %v4752 = vpop.f32.mrf.mxu0
      %4753 = vdwg.mxu0
      %4754 = vmatpush.bf16.msra.mxu0 0
      %4755 = vmatpush.bf16.msra.mxu0 0
      %4756 = vmatpush.bf16.msra.mxu0 0
      %4757 = vmatpush.bf16.msra.mxu0 %v4691
      %4758 = vmatpush.bf16.msra.mxu0 %v4687
      %4759 = vmatpush.bf16.msra.mxu0 %v4683
      %4760 = vmatpush.bf16.msra.mxu0 %v4679
      %4761 = vmatpush.bf16.msra.mxu0 %v4675
      %4762 = vmatmul.bf16.gmra.mxu0 %v4713
      %v4763 = vpop.f32.mrf.mxu0
      %v4764 = vadd.f32 0.0, %v4763
      %v4765 = vpop.f32.mrf.mxu0
      %4766 = vdwg.mxu0
      %v4771 = vrot.slane %v4738, 7
      %v4772 = vrot.slane %v4751, 6
      %v4773 = vrot.slane %v4764, 5
      %v4774 = vsel %vm4582, %v4725, %v4771
      %v4775 = vsel %vm4584, %v4772, %v4773
      %v4776 = vsel %vm2524, %v4774, %v4775
      %v4778 = vadd.f32 %v4588, %v4776
      %s4779 = scalar_lea.vmem %s13, 320
      %v4780 = vld [vmem:[%s4779] sm:$0xff]
      %v4781 = vld [vmem:[%s4779 + $0x8] sm:$0xff]
      %v4782 = vld [vmem:[%s4779 + $0x10] sm:$0xff]
      %v4783 = vld [vmem:[%s4779 + $0x18] sm:$0xff]
      %v4784 = vld [vmem:[%s4779 + $0x20] sm:$0xff]
      %v4785 = vld [vmem:[%s4779 + $0x28] sm:$0xff]
      %v4786 = vld [vmem:[%s4779 + $0x30] sm:$0xff]
      %v4787 = vld [vmem:[%s4779 + $0x38] sm:$0xff]
      %v4788 = vld [vmem:[%s4779 + $0x40] sm:$0xff]
      %v4789 = vld [vmem:[%s4779 + $0x48] sm:$0xff]
      %v4790 = vld [vmem:[%s4779 + $0x50] sm:$0xff]
      %v4791 = vld [vmem:[%s4779 + $0x58] sm:$0xff]
      %v4792 = vld [vmem:[%s4779 + $0x60] sm:$0xff]
      %v4793 = vld [vmem:[%s4779 + $0x68] sm:$0xff]
      %v4794 = vld [vmem:[%s4779 + $0x70] sm:$0xff]
      %v4795 = vld [vmem:[%s4779 + $0x78] sm:$0xff]
      %v4796 = vld [vmem:[%s4779 + $0x80] sm:$0xff]
      %v4797 = vld [vmem:[%s4779 + $0x88] sm:$0xff]
      %v4798 = vld [vmem:[%s4779 + $0x90] sm:$0xff]
      %v4799 = vld [vmem:[%s4779 + $0x98] sm:$0xff]
      %v4801 = vrot.slane %v4398, 1
      %v4822 = vunpack.c.l.b16 %v4780
      %v4823 = vunpack.c.h.b16 %v4780
      %v4824 = vunpack.c.l.b16 %v4781
      %v4825 = vunpack.c.h.b16 %v4781
      %v4826 = vunpack.c.l.b16 %v4782
      %v4827 = vunpack.c.h.b16 %v4782
      %v4828 = vunpack.c.l.b16 %v4783
      %v4829 = vunpack.c.h.b16 %v4783
      %v4830 = vunpack.c.l.b16 %v4784
      %v4831 = vunpack.c.h.b16 %v4784
      %v4832 = vunpack.c.l.b16 %v4785
      %v4833 = vunpack.c.h.b16 %v4785
      %v4834 = vunpack.c.l.b16 %v4786
      %v4835 = vunpack.c.h.b16 %v4786
      %v4836 = vunpack.c.l.b16 %v4787
      %v4837 = vunpack.c.h.b16 %v4787
      %v4838 = vunpack.c.l.b16 %v4788
      %v4839 = vunpack.c.h.b16 %v4788
      %v4840 = vunpack.c.l.b16 %v4789
      %v4841 = vunpack.c.h.b16 %v4789
      %v4842 = vunpack.c.l.b16 %v4790
      %v4843 = vunpack.c.h.b16 %v4790
      %v4844 = vunpack.c.l.b16 %v4791
      %v4845 = vunpack.c.h.b16 %v4791
      %v4846 = vunpack.c.l.b16 %v4792
      %v4847 = vunpack.c.h.b16 %v4792
      %v4848 = vunpack.c.l.b16 %v4793
      %v4849 = vunpack.c.h.b16 %v4793
      %v4850 = vunpack.c.l.b16 %v4794
      %v4851 = vunpack.c.h.b16 %v4794
      %v4852 = vunpack.c.l.b16 %v4795
      %v4853 = vunpack.c.h.b16 %v4795
      %v4854 = vunpack.c.l.b16 %v4796
      %v4855 = vunpack.c.h.b16 %v4796
      %v4856 = vunpack.c.l.b16 %v4797
      %v4857 = vunpack.c.h.b16 %v4797
      %v4858 = vunpack.c.l.b16 %v4798
      %v4859 = vunpack.c.h.b16 %v4798
      %v4860 = vunpack.c.l.b16 %v4799
      %v4861 = vunpack.c.h.b16 %v4799
      %v4862 = vpack.c.b16 %v4826, %v4822
      %v4863 = vpack.c.b16 %v4827, %v4823
      %v4864 = vpack.c.b16 %v4828, %v4824
      %v4865 = vpack.c.b16 %v4829, %v4825
      %v4866 = vpack.c.b16 %v4834, %v4830
      %v4867 = vpack.c.b16 %v4835, %v4831
      %v4868 = vpack.c.b16 %v4836, %v4832
      %v4869 = vpack.c.b16 %v4837, %v4833
      %v4870 = vpack.c.b16 %v4842, %v4838
      %v4871 = vpack.c.b16 %v4843, %v4839
      %v4872 = vpack.c.b16 %v4844, %v4840
      %v4873 = vpack.c.b16 %v4845, %v4841
      %v4874 = vpack.c.b16 %v4850, %v4846
      %v4875 = vpack.c.b16 %v4851, %v4847
      %v4876 = vpack.c.b16 %v4852, %v4848
      %v4877 = vpack.c.b16 %v4853, %v4849
      %v4878 = vpack.c.b16 %v4858, %v4854
      %v4879 = vpack.c.b16 %v4859, %v4855
      %v4880 = vpack.c.b16 %v4860, %v4856
      %v4881 = vpack.c.b16 %v4861, %v4857
      %v4903 = vsel %vm4519, %v4801, 0
      %4905 = vmatpush.bf16.msra.mxu0 0
      %4906 = vmatpush.bf16.msra.mxu0 0
      %4907 = vmatpush.bf16.msra.mxu0 0
      %4908 = vmatpush.bf16.msra.mxu0 %v4878
      %4909 = vmatpush.bf16.msra.mxu0 %v4874
      %4910 = vmatpush.bf16.msra.mxu0 %v4870
      %4911 = vmatpush.bf16.msra.mxu0 %v4866
      %4912 = vmatpush.bf16.msra.mxu0 %v4862
      %4913 = vmatmul.bf16.gmra.mxu0 %v4903
      %v4914 = vpop.f32.mrf.mxu0
      %v4915 = vadd.f32 0.0, %v4914
      %v4916 = vpop.f32.mrf.mxu0
      %4917 = vdwg.mxu0
      %4918 = vmatpush.bf16.msra.mxu0 0
      %4919 = vmatpush.bf16.msra.mxu0 0
      %4920 = vmatpush.bf16.msra.mxu0 0
      %4921 = vmatpush.bf16.msra.mxu0 %v4879
      %4922 = vmatpush.bf16.msra.mxu0 %v4875
      %4923 = vmatpush.bf16.msra.mxu0 %v4871
      %4924 = vmatpush.bf16.msra.mxu0 %v4867
      %4925 = vmatpush.bf16.msra.mxu0 %v4863
      %4926 = vmatmul.bf16.gmra.mxu0 %v4903
      %v4927 = vpop.f32.mrf.mxu0
      %v4928 = vadd.f32 0.0, %v4927
      %v4929 = vpop.f32.mrf.mxu0
      %4930 = vdwg.mxu0
      %4931 = vmatpush.bf16.msra.mxu0 0
      %4932 = vmatpush.bf16.msra.mxu0 0
      %4933 = vmatpush.bf16.msra.mxu0 0
      %4934 = vmatpush.bf16.msra.mxu0 %v4880
      %4935 = vmatpush.bf16.msra.mxu0 %v4876
      %4936 = vmatpush.bf16.msra.mxu0 %v4872
      %4937 = vmatpush.bf16.msra.mxu0 %v4868
      %4938 = vmatpush.bf16.msra.mxu0 %v4864
      %4939 = vmatmul.bf16.gmra.mxu0 %v4903
      %v4940 = vpop.f32.mrf.mxu0
      %v4941 = vadd.f32 0.0, %v4940
      %v4942 = vpop.f32.mrf.mxu0
      %4943 = vdwg.mxu0
      %4944 = vmatpush.bf16.msra.mxu0 0
      %4945 = vmatpush.bf16.msra.mxu0 0
      %4946 = vmatpush.bf16.msra.mxu0 0
      %4947 = vmatpush.bf16.msra.mxu0 %v4881
      %4948 = vmatpush.bf16.msra.mxu0 %v4877
      %4949 = vmatpush.bf16.msra.mxu0 %v4873
      %4950 = vmatpush.bf16.msra.mxu0 %v4869
      %4951 = vmatpush.bf16.msra.mxu0 %v4865
      %4952 = vmatmul.bf16.gmra.mxu0 %v4903
      %v4953 = vpop.f32.mrf.mxu0
      %v4954 = vadd.f32 0.0, %v4953
      %v4955 = vpop.f32.mrf.mxu0
      %4956 = vdwg.mxu0
      %v4961 = vrot.slane %v4928, 7
      %v4962 = vrot.slane %v4941, 6
      %v4963 = vrot.slane %v4954, 5
      %v4964 = vsel %vm4582, %v4915, %v4961
      %v4965 = vsel %vm4584, %v4962, %v4963
      %v4966 = vsel %vm2524, %v4964, %v4965
      %v4968 = vadd.f32 %v4778, %v4966
      %s4969 = scalar_lea.vmem %s13, 480
      %v4970 = vld [vmem:[%s4969] sm:$0xff]
      %v4971 = vld [vmem:[%s4969 + $0x8] sm:$0xff]
      %v4972 = vld [vmem:[%s4969 + $0x10] sm:$0xff]
      %v4973 = vld [vmem:[%s4969 + $0x18] sm:$0xff]
      %v4974 = vld [vmem:[%s4969 + $0x20] sm:$0xff]
      %v4975 = vld [vmem:[%s4969 + $0x28] sm:$0xff]
      %v4976 = vld [vmem:[%s4969 + $0x30] sm:$0xff]
      %v4977 = vld [vmem:[%s4969 + $0x38] sm:$0xff]
      %v4978 = vld [vmem:[%s4969 + $0x40] sm:$0xff]
      %v4979 = vld [vmem:[%s4969 + $0x48] sm:$0xff]
      %v4980 = vld [vmem:[%s4969 + $0x50] sm:$0xff]
      %v4981 = vld [vmem:[%s4969 + $0x58] sm:$0xff]
      %v4982 = vld [vmem:[%s4969 + $0x60] sm:$0xff]
      %v4983 = vld [vmem:[%s4969 + $0x68] sm:$0xff]
      %v4984 = vld [vmem:[%s4969 + $0x70] sm:$0xff]
      %v4985 = vld [vmem:[%s4969 + $0x78] sm:$0xff]
      %v4986 = vld [vmem:[%s4969 + $0x80] sm:$0xff]
      %v4987 = vld [vmem:[%s4969 + $0x88] sm:$0xff]
      %v4988 = vld [vmem:[%s4969 + $0x90] sm:$0xff]
      %v4989 = vld [vmem:[%s4969 + $0x98] sm:$0xff]
      %v4990 = vrot.slane %v4610, 1
      %v5011 = vunpack.c.l.b16 %v4970
      %v5012 = vunpack.c.h.b16 %v4970
      %v5013 = vunpack.c.l.b16 %v4971
      %v5014 = vunpack.c.h.b16 %v4971
      %v5015 = vunpack.c.l.b16 %v4972
      %v5016 = vunpack.c.h.b16 %v4972
      %v5017 = vunpack.c.l.b16 %v4973
      %v5018 = vunpack.c.h.b16 %v4973
      %v5019 = vunpack.c.l.b16 %v4974
      %v5020 = vunpack.c.h.b16 %v4974
      %v5021 = vunpack.c.l.b16 %v4975
      %v5022 = vunpack.c.h.b16 %v4975
      %v5023 = vunpack.c.l.b16 %v4976
      %v5024 = vunpack.c.h.b16 %v4976
      %v5025 = vunpack.c.l.b16 %v4977
      %v5026 = vunpack.c.h.b16 %v4977
      %v5027 = vunpack.c.l.b16 %v4978
      %v5028 = vunpack.c.h.b16 %v4978
      %v5029 = vunpack.c.l.b16 %v4979
      %v5030 = vunpack.c.h.b16 %v4979
      %v5031 = vunpack.c.l.b16 %v4980
      %v5032 = vunpack.c.h.b16 %v4980
      %v5033 = vunpack.c.l.b16 %v4981
      %v5034 = vunpack.c.h.b16 %v4981
      %v5035 = vunpack.c.l.b16 %v4982
      %v5036 = vunpack.c.h.b16 %v4982
      %v5037 = vunpack.c.l.b16 %v4983
      %v5038 = vunpack.c.h.b16 %v4983
      %v5039 = vunpack.c.l.b16 %v4984
      %v5040 = vunpack.c.h.b16 %v4984
      %v5041 = vunpack.c.l.b16 %v4985
      %v5042 = vunpack.c.h.b16 %v4985
      %v5043 = vunpack.c.l.b16 %v4986
      %v5044 = vunpack.c.h.b16 %v4986
      %v5045 = vunpack.c.l.b16 %v4987
      %v5046 = vunpack.c.h.b16 %v4987
      %v5047 = vunpack.c.l.b16 %v4988
      %v5048 = vunpack.c.h.b16 %v4988
      %v5049 = vunpack.c.l.b16 %v4989
      %v5050 = vunpack.c.h.b16 %v4989
      %v5051 = vpack.c.b16 %v5015, %v5011
      %v5052 = vpack.c.b16 %v5016, %v5012
      %v5053 = vpack.c.b16 %v5017, %v5013
      %v5054 = vpack.c.b16 %v5018, %v5014
      %v5055 = vpack.c.b16 %v5023, %v5019
      %v5056 = vpack.c.b16 %v5024, %v5020
      %v5057 = vpack.c.b16 %v5025, %v5021
      %v5058 = vpack.c.b16 %v5026, %v5022
      %v5059 = vpack.c.b16 %v5031, %v5027
      %v5060 = vpack.c.b16 %v5032, %v5028
      %v5061 = vpack.c.b16 %v5033, %v5029
      %v5062 = vpack.c.b16 %v5034, %v5030
      %v5063 = vpack.c.b16 %v5039, %v5035
      %v5064 = vpack.c.b16 %v5040, %v5036
      %v5065 = vpack.c.b16 %v5041, %v5037
      %v5066 = vpack.c.b16 %v5042, %v5038
      %v5067 = vpack.c.b16 %v5047, %v5043
      %v5068 = vpack.c.b16 %v5048, %v5044
      %v5069 = vpack.c.b16 %v5049, %v5045
      %v5070 = vpack.c.b16 %v5050, %v5046
      %v5092 = vsel %vm4519, %v4990, 0
      %5094 = vmatpush.bf16.msra.mxu0 0
      %5095 = vmatpush.bf16.msra.mxu0 0
      %5096 = vmatpush.bf16.msra.mxu0 0
      %5097 = vmatpush.bf16.msra.mxu0 %v5067
      %5098 = vmatpush.bf16.msra.mxu0 %v5063
      %5099 = vmatpush.bf16.msra.mxu0 %v5059
      %5100 = vmatpush.bf16.msra.mxu0 %v5055
      %5101 = vmatpush.bf16.msra.mxu0 %v5051
      %5102 = vmatmul.bf16.gmra.mxu0 %v5092
      %v5103 = vpop.f32.mrf.mxu0
      %v5104 = vadd.f32 0.0, %v5103
      %v5105 = vpop.f32.mrf.mxu0
      %5106 = vdwg.mxu0
      %5107 = vmatpush.bf16.msra.mxu0 0
      %5108 = vmatpush.bf16.msra.mxu0 0
      %5109 = vmatpush.bf16.msra.mxu0 0
      %5110 = vmatpush.bf16.msra.mxu0 %v5068
      %5111 = vmatpush.bf16.msra.mxu0 %v5064
      %5112 = vmatpush.bf16.msra.mxu0 %v5060
      %5113 = vmatpush.bf16.msra.mxu0 %v5056
      %5114 = vmatpush.bf16.msra.mxu0 %v5052
      %5115 = vmatmul.bf16.gmra.mxu0 %v5092
      %v5116 = vpop.f32.mrf.mxu0
      %v5117 = vadd.f32 0.0, %v5116
      %v5118 = vpop.f32.mrf.mxu0
      %5119 = vdwg.mxu0
      %5120 = vmatpush.bf16.msra.mxu0 0
      %5121 = vmatpush.bf16.msra.mxu0 0
      %5122 = vmatpush.bf16.msra.mxu0 0
      %5123 = vmatpush.bf16.msra.mxu0 %v5069
      %5124 = vmatpush.bf16.msra.mxu0 %v5065
      %5125 = vmatpush.bf16.msra.mxu0 %v5061
      %5126 = vmatpush.bf16.msra.mxu0 %v5057
      %5127 = vmatpush.bf16.msra.mxu0 %v5053
      %5128 = vmatmul.bf16.gmra.mxu0 %v5092
      %v5129 = vpop.f32.mrf.mxu0
      %v5130 = vadd.f32 0.0, %v5129
      %v5131 = vpop.f32.mrf.mxu0
      %5132 = vdwg.mxu0
      %5133 = vmatpush.bf16.msra.mxu0 0
      %5134 = vmatpush.bf16.msra.mxu0 0
      %5135 = vmatpush.bf16.msra.mxu0 0
      %5136 = vmatpush.bf16.msra.mxu0 %v5070
      %5137 = vmatpush.bf16.msra.mxu0 %v5066
      %5138 = vmatpush.bf16.msra.mxu0 %v5062
      %5139 = vmatpush.bf16.msra.mxu0 %v5058
      %5140 = vmatpush.bf16.msra.mxu0 %v5054
      %5141 = vmatmul.bf16.gmra.mxu0 %v5092
      %v5142 = vpop.f32.mrf.mxu0
      %v5143 = vadd.f32 0.0, %v5142
      %v5144 = vpop.f32.mrf.mxu0
      %5145 = vdwg.mxu0
      %v5150 = vrot.slane %v5117, 7
      %v5151 = vrot.slane %v5130, 6
      %v5152 = vrot.slane %v5143, 5
      %v5153 = vsel %vm4582, %v5104, %v5150
      %v5154 = vsel %vm4584, %v5151, %v5152
      %v5155 = vsel %vm2524, %v5153, %v5154
      %v5157 = vadd.f32 %v4968, %v5155
      %s5158 = scalar_lea.vmem %s13, 640
      %v5159 = vld [vmem:[%s5158] sm:$0xff]
      %v5160 = vld [vmem:[%s5158 + $0x8] sm:$0xff]
      %v5161 = vld [vmem:[%s5158 + $0x10] sm:$0xff]
      %v5162 = vld [vmem:[%s5158 + $0x18] sm:$0xff]
      %v5163 = vld [vmem:[%s5158 + $0x20] sm:$0xff]
      %v5164 = vld [vmem:[%s5158 + $0x28] sm:$0xff]
      %v5165 = vld [vmem:[%s5158 + $0x30] sm:$0xff]
      %v5166 = vld [vmem:[%s5158 + $0x38] sm:$0xff]
      %v5167 = vld [vmem:[%s5158 + $0x40] sm:$0xff]
      %v5168 = vld [vmem:[%s5158 + $0x48] sm:$0xff]
      %v5169 = vld [vmem:[%s5158 + $0x50] sm:$0xff]
      %v5170 = vld [vmem:[%s5158 + $0x58] sm:$0xff]
      %v5171 = vld [vmem:[%s5158 + $0x60] sm:$0xff]
      %v5172 = vld [vmem:[%s5158 + $0x68] sm:$0xff]
      %v5173 = vld [vmem:[%s5158 + $0x70] sm:$0xff]
      %v5174 = vld [vmem:[%s5158 + $0x78] sm:$0xff]
      %v5175 = vld [vmem:[%s5158 + $0x80] sm:$0xff]
      %v5176 = vld [vmem:[%s5158 + $0x88] sm:$0xff]
      %v5177 = vld [vmem:[%s5158 + $0x90] sm:$0xff]
      %v5178 = vld [vmem:[%s5158 + $0x98] sm:$0xff]
      %v5179 = vrot.slane %v4398, 2
      %v5200 = vunpack.c.l.b16 %v5159
      %v5201 = vunpack.c.h.b16 %v5159
      %v5202 = vunpack.c.l.b16 %v5160
      %v5203 = vunpack.c.h.b16 %v5160
      %v5204 = vunpack.c.l.b16 %v5161
      %v5205 = vunpack.c.h.b16 %v5161
      %v5206 = vunpack.c.l.b16 %v5162
      %v5207 = vunpack.c.h.b16 %v5162
      %v5208 = vunpack.c.l.b16 %v5163
      %v5209 = vunpack.c.h.b16 %v5163
      %v5210 = vunpack.c.l.b16 %v5164
      %v5211 = vunpack.c.h.b16 %v5164
      %v5212 = vunpack.c.l.b16 %v5165
      %v5213 = vunpack.c.h.b16 %v5165
      %v5214 = vunpack.c.l.b16 %v5166
      %v5215 = vunpack.c.h.b16 %v5166
      %v5216 = vunpack.c.l.b16 %v5167
      %v5217 = vunpack.c.h.b16 %v5167
      %v5218 = vunpack.c.l.b16 %v5168
      %v5219 = vunpack.c.h.b16 %v5168
      %v5220 = vunpack.c.l.b16 %v5169
      %v5221 = vunpack.c.h.b16 %v5169
      %v5222 = vunpack.c.l.b16 %v5170
      %v5223 = vunpack.c.h.b16 %v5170
      %v5224 = vunpack.c.l.b16 %v5171
      %v5225 = vunpack.c.h.b16 %v5171
      %v5226 = vunpack.c.l.b16 %v5172
      %v5227 = vunpack.c.h.b16 %v5172
      %v5228 = vunpack.c.l.b16 %v5173
      %v5229 = vunpack.c.h.b16 %v5173
      %v5230 = vunpack.c.l.b16 %v5174
      %v5231 = vunpack.c.h.b16 %v5174
      %v5232 = vunpack.c.l.b16 %v5175
      %v5233 = vunpack.c.h.b16 %v5175
      %v5234 = vunpack.c.l.b16 %v5176
      %v5235 = vunpack.c.h.b16 %v5176
      %v5236 = vunpack.c.l.b16 %v5177
      %v5237 = vunpack.c.h.b16 %v5177
      %v5238 = vunpack.c.l.b16 %v5178
      %v5239 = vunpack.c.h.b16 %v5178
      %v5240 = vpack.c.b16 %v5204, %v5200
      %v5241 = vpack.c.b16 %v5205, %v5201
      %v5242 = vpack.c.b16 %v5206, %v5202
      %v5243 = vpack.c.b16 %v5207, %v5203
      %v5244 = vpack.c.b16 %v5212, %v5208
      %v5245 = vpack.c.b16 %v5213, %v5209
      %v5246 = vpack.c.b16 %v5214, %v5210
      %v5247 = vpack.c.b16 %v5215, %v5211
      %v5248 = vpack.c.b16 %v5220, %v5216
      %v5249 = vpack.c.b16 %v5221, %v5217
      %v5250 = vpack.c.b16 %v5222, %v5218
      %v5251 = vpack.c.b16 %v5223, %v5219
      %v5252 = vpack.c.b16 %v5228, %v5224
      %v5253 = vpack.c.b16 %v5229, %v5225
      %v5254 = vpack.c.b16 %v5230, %v5226
      %v5255 = vpack.c.b16 %v5231, %v5227
      %v5256 = vpack.c.b16 %v5236, %v5232
      %v5257 = vpack.c.b16 %v5237, %v5233
      %v5258 = vpack.c.b16 %v5238, %v5234
      %v5259 = vpack.c.b16 %v5239, %v5235
      %v5281 = vsel %vm4519, %v5179, 0
      %5283 = vmatpush.bf16.msra.mxu0 0
      %5284 = vmatpush.bf16.msra.mxu0 0
      %5285 = vmatpush.bf16.msra.mxu0 0
      %5286 = vmatpush.bf16.msra.mxu0 %v5256
      %5287 = vmatpush.bf16.msra.mxu0 %v5252
      %5288 = vmatpush.bf16.msra.mxu0 %v5248
      %5289 = vmatpush.bf16.msra.mxu0 %v5244
      %5290 = vmatpush.bf16.msra.mxu0 %v5240
      %5291 = vmatmul.bf16.gmra.mxu0 %v5281
      %v5292 = vpop.f32.mrf.mxu0
      %v5293 = vadd.f32 0.0, %v5292
      %v5294 = vpop.f32.mrf.mxu0
      %5295 = vdwg.mxu0
      %5296 = vmatpush.bf16.msra.mxu0 0
      %5297 = vmatpush.bf16.msra.mxu0 0
      %5298 = vmatpush.bf16.msra.mxu0 0
      %5299 = vmatpush.bf16.msra.mxu0 %v5257
      %5300 = vmatpush.bf16.msra.mxu0 %v5253
      %5301 = vmatpush.bf16.msra.mxu0 %v5249
      %5302 = vmatpush.bf16.msra.mxu0 %v5245
      %5303 = vmatpush.bf16.msra.mxu0 %v5241
      %5304 = vmatmul.bf16.gmra.mxu0 %v5281
      %v5305 = vpop.f32.mrf.mxu0
      %v5306 = vadd.f32 0.0, %v5305
      %v5307 = vpop.f32.mrf.mxu0
      %5308 = vdwg.mxu0
      %5309 = vmatpush.bf16.msra.mxu0 0
      %5310 = vmatpush.bf16.msra.mxu0 0
      %5311 = vmatpush.bf16.msra.mxu0 0
      %5312 = vmatpush.bf16.msra.mxu0 %v5258
      %5313 = vmatpush.bf16.msra.mxu0 %v5254
      %5314 = vmatpush.bf16.msra.mxu0 %v5250
      %5315 = vmatpush.bf16.msra.mxu0 %v5246
      %5316 = vmatpush.bf16.msra.mxu0 %v5242
      %5317 = vmatmul.bf16.gmra.mxu0 %v5281
      %v5318 = vpop.f32.mrf.mxu0
      %v5319 = vadd.f32 0.0, %v5318
      %v5320 = vpop.f32.mrf.mxu0
      %5321 = vdwg.mxu0
      %5322 = vmatpush.bf16.msra.mxu0 0
      %5323 = vmatpush.bf16.msra.mxu0 0
      %5324 = vmatpush.bf16.msra.mxu0 0
      %5325 = vmatpush.bf16.msra.mxu0 %v5259
      %5326 = vmatpush.bf16.msra.mxu0 %v5255
      %5327 = vmatpush.bf16.msra.mxu0 %v5251
      %5328 = vmatpush.bf16.msra.mxu0 %v5247
      %5329 = vmatpush.bf16.msra.mxu0 %v5243
      %5330 = vmatmul.bf16.gmra.mxu0 %v5281
      %v5331 = vpop.f32.mrf.mxu0
      %v5332 = vadd.f32 0.0, %v5331
      %v5333 = vpop.f32.mrf.mxu0
      %5334 = vdwg.mxu0
      %v5339 = vrot.slane %v5306, 7
      %v5340 = vrot.slane %v5319, 6
      %v5341 = vrot.slane %v5332, 5
      %v5342 = vsel %vm4582, %v5293, %v5339
      %v5343 = vsel %vm4584, %v5340, %v5341
      %v5344 = vsel %vm2524, %v5342, %v5343
      %v5346 = vadd.f32 %v5157, %v5344
      %s5347 = scalar_lea.vmem %s13, 800
      %v5348 = vld [vmem:[%s5347] sm:$0xff]
      %v5349 = vld [vmem:[%s5347 + $0x8] sm:$0xff]
      %v5350 = vld [vmem:[%s5347 + $0x10] sm:$0xff]
      %v5351 = vld [vmem:[%s5347 + $0x18] sm:$0xff]
      %v5352 = vld [vmem:[%s5347 + $0x20] sm:$0xff]
      %v5353 = vld [vmem:[%s5347 + $0x28] sm:$0xff]
      %v5354 = vld [vmem:[%s5347 + $0x30] sm:$0xff]
      %v5355 = vld [vmem:[%s5347 + $0x38] sm:$0xff]
      %v5356 = vld [vmem:[%s5347 + $0x40] sm:$0xff]
      %v5357 = vld [vmem:[%s5347 + $0x48] sm:$0xff]
      %v5358 = vld [vmem:[%s5347 + $0x50] sm:$0xff]
      %v5359 = vld [vmem:[%s5347 + $0x58] sm:$0xff]
      %v5360 = vld [vmem:[%s5347 + $0x60] sm:$0xff]
      %v5361 = vld [vmem:[%s5347 + $0x68] sm:$0xff]
      %v5362 = vld [vmem:[%s5347 + $0x70] sm:$0xff]
      %v5363 = vld [vmem:[%s5347 + $0x78] sm:$0xff]
      %v5364 = vld [vmem:[%s5347 + $0x80] sm:$0xff]
      %v5365 = vld [vmem:[%s5347 + $0x88] sm:$0xff]
      %v5366 = vld [vmem:[%s5347 + $0x90] sm:$0xff]
      %v5367 = vld [vmem:[%s5347 + $0x98] sm:$0xff]
      %v5368 = vrot.slane %v4610, 2
      %v5389 = vunpack.c.l.b16 %v5348
      %v5390 = vunpack.c.h.b16 %v5348
      %v5391 = vunpack.c.l.b16 %v5349
      %v5392 = vunpack.c.h.b16 %v5349
      %v5393 = vunpack.c.l.b16 %v5350
      %v5394 = vunpack.c.h.b16 %v5350
      %v5395 = vunpack.c.l.b16 %v5351
      %v5396 = vunpack.c.h.b16 %v5351
      %v5397 = vunpack.c.l.b16 %v5352
      %v5398 = vunpack.c.h.b16 %v5352
      %v5399 = vunpack.c.l.b16 %v5353
      %v5400 = vunpack.c.h.b16 %v5353
      %v5401 = vunpack.c.l.b16 %v5354
      %v5402 = vunpack.c.h.b16 %v5354
      %v5403 = vunpack.c.l.b16 %v5355
      %v5404 = vunpack.c.h.b16 %v5355
      %v5405 = vunpack.c.l.b16 %v5356
      %v5406 = vunpack.c.h.b16 %v5356
      %v5407 = vunpack.c.l.b16 %v5357
      %v5408 = vunpack.c.h.b16 %v5357
      %v5409 = vunpack.c.l.b16 %v5358
      %v5410 = vunpack.c.h.b16 %v5358
      %v5411 = vunpack.c.l.b16 %v5359
      %v5412 = vunpack.c.h.b16 %v5359
      %v5413 = vunpack.c.l.b16 %v5360
      %v5414 = vunpack.c.h.b16 %v5360
      %v5415 = vunpack.c.l.b16 %v5361
      %v5416 = vunpack.c.h.b16 %v5361
      %v5417 = vunpack.c.l.b16 %v5362
      %v5418 = vunpack.c.h.b16 %v5362
      %v5419 = vunpack.c.l.b16 %v5363
      %v5420 = vunpack.c.h.b16 %v5363
      %v5421 = vunpack.c.l.b16 %v5364
      %v5422 = vunpack.c.h.b16 %v5364
      %v5423 = vunpack.c.l.b16 %v5365
      %v5424 = vunpack.c.h.b16 %v5365
      %v5425 = vunpack.c.l.b16 %v5366
      %v5426 = vunpack.c.h.b16 %v5366
      %v5427 = vunpack.c.l.b16 %v5367
      %v5428 = vunpack.c.h.b16 %v5367
      %v5429 = vpack.c.b16 %v5393, %v5389
      %v5430 = vpack.c.b16 %v5394, %v5390
      %v5431 = vpack.c.b16 %v5395, %v5391
      %v5432 = vpack.c.b16 %v5396, %v5392
      %v5433 = vpack.c.b16 %v5401, %v5397
      %v5434 = vpack.c.b16 %v5402, %v5398
      %v5435 = vpack.c.b16 %v5403, %v5399
      %v5436 = vpack.c.b16 %v5404, %v5400
      %v5437 = vpack.c.b16 %v5409, %v5405
      %v5438 = vpack.c.b16 %v5410, %v5406
      %v5439 = vpack.c.b16 %v5411, %v5407
      %v5440 = vpack.c.b16 %v5412, %v5408
      %v5441 = vpack.c.b16 %v5417, %v5413
      %v5442 = vpack.c.b16 %v5418, %v5414
      %v5443 = vpack.c.b16 %v5419, %v5415
      %v5444 = vpack.c.b16 %v5420, %v5416
      %v5445 = vpack.c.b16 %v5425, %v5421
      %v5446 = vpack.c.b16 %v5426, %v5422
      %v5447 = vpack.c.b16 %v5427, %v5423
      %v5448 = vpack.c.b16 %v5428, %v5424
      %v5470 = vsel %vm4519, %v5368, 0
      %5472 = vmatpush.bf16.msra.mxu0 0
      %5473 = vmatpush.bf16.msra.mxu0 0
      %5474 = vmatpush.bf16.msra.mxu0 0
      %5475 = vmatpush.bf16.msra.mxu0 %v5445
      %5476 = vmatpush.bf16.msra.mxu0 %v5441
      %5477 = vmatpush.bf16.msra.mxu0 %v5437
      %5478 = vmatpush.bf16.msra.mxu0 %v5433
      %5479 = vmatpush.bf16.msra.mxu0 %v5429
      %5480 = vmatmul.bf16.gmra.mxu0 %v5470
      %v5481 = vpop.f32.mrf.mxu0
      %v5482 = vadd.f32 0.0, %v5481
      %v5483 = vpop.f32.mrf.mxu0
      %5484 = vdwg.mxu0
      %5485 = vmatpush.bf16.msra.mxu0 0
      %5486 = vmatpush.bf16.msra.mxu0 0
      %5487 = vmatpush.bf16.msra.mxu0 0
      %5488 = vmatpush.bf16.msra.mxu0 %v5446
      %5489 = vmatpush.bf16.msra.mxu0 %v5442
      %5490 = vmatpush.bf16.msra.mxu0 %v5438
      %5491 = vmatpush.bf16.msra.mxu0 %v5434
      %5492 = vmatpush.bf16.msra.mxu0 %v5430
      %5493 = vmatmul.bf16.gmra.mxu0 %v5470
      %v5494 = vpop.f32.mrf.mxu0
      %v5495 = vadd.f32 0.0, %v5494
      %v5496 = vpop.f32.mrf.mxu0
      %5497 = vdwg.mxu0
      %5498 = vmatpush.bf16.msra.mxu0 0
      %5499 = vmatpush.bf16.msra.mxu0 0
      %5500 = vmatpush.bf16.msra.mxu0 0
      %5501 = vmatpush.bf16.msra.mxu0 %v5447
      %5502 = vmatpush.bf16.msra.mxu0 %v5443
      %5503 = vmatpush.bf16.msra.mxu0 %v5439
      %5504 = vmatpush.bf16.msra.mxu0 %v5435
      %5505 = vmatpush.bf16.msra.mxu0 %v5431
      %5506 = vmatmul.bf16.gmra.mxu0 %v5470
      %v5507 = vpop.f32.mrf.mxu0
      %v5508 = vadd.f32 0.0, %v5507
      %v5509 = vpop.f32.mrf.mxu0
      %5510 = vdwg.mxu0
      %5511 = vmatpush.bf16.msra.mxu0 0
      %5512 = vmatpush.bf16.msra.mxu0 0
      %5513 = vmatpush.bf16.msra.mxu0 0
      %5514 = vmatpush.bf16.msra.mxu0 %v5448
      %5515 = vmatpush.bf16.msra.mxu0 %v5444
      %5516 = vmatpush.bf16.msra.mxu0 %v5440
      %5517 = vmatpush.bf16.msra.mxu0 %v5436
      %5518 = vmatpush.bf16.msra.mxu0 %v5432
      %5519 = vmatmul.bf16.gmra.mxu0 %v5470
      %v5520 = vpop.f32.mrf.mxu0
      %v5521 = vadd.f32 0.0, %v5520
      %v5522 = vpop.f32.mrf.mxu0
      %5523 = vdwg.mxu0
      %v5528 = vrot.slane %v5495, 7
      %v5529 = vrot.slane %v5508, 6
      %v5530 = vrot.slane %v5521, 5
      %v5531 = vsel %vm4582, %v5482, %v5528
      %v5532 = vsel %vm4584, %v5529, %v5530
      %v5533 = vsel %vm2524, %v5531, %v5532
      %v5535 = vadd.f32 %v5346, %v5533
      %s5536 = scalar_lea.vmem %s13, 960
      %v5537 = vld [vmem:[%s5536] sm:$0xff]
      %v5538 = vld [vmem:[%s5536 + $0x8] sm:$0xff]
      %v5539 = vld [vmem:[%s5536 + $0x10] sm:$0xff]
      %v5540 = vld [vmem:[%s5536 + $0x18] sm:$0xff]
      %v5541 = vld [vmem:[%s5536 + $0x20] sm:$0xff]
      %v5542 = vld [vmem:[%s5536 + $0x28] sm:$0xff]
      %v5543 = vld [vmem:[%s5536 + $0x30] sm:$0xff]
      %v5544 = vld [vmem:[%s5536 + $0x38] sm:$0xff]
      %v5545 = vld [vmem:[%s5536 + $0x40] sm:$0xff]
      %v5546 = vld [vmem:[%s5536 + $0x48] sm:$0xff]
      %v5547 = vld [vmem:[%s5536 + $0x50] sm:$0xff]
      %v5548 = vld [vmem:[%s5536 + $0x58] sm:$0xff]
      %v5549 = vld [vmem:[%s5536 + $0x60] sm:$0xff]
      %v5550 = vld [vmem:[%s5536 + $0x68] sm:$0xff]
      %v5551 = vld [vmem:[%s5536 + $0x70] sm:$0xff]
      %v5552 = vld [vmem:[%s5536 + $0x78] sm:$0xff]
      %v5553 = vld [vmem:[%s5536 + $0x80] sm:$0xff]
      %v5554 = vld [vmem:[%s5536 + $0x88] sm:$0xff]
      %v5555 = vld [vmem:[%s5536 + $0x90] sm:$0xff]
      %v5556 = vld [vmem:[%s5536 + $0x98] sm:$0xff]
      %v5557 = vrot.slane %v4398, 3
      %v5578 = vunpack.c.l.b16 %v5537
      %v5579 = vunpack.c.h.b16 %v5537
      %v5580 = vunpack.c.l.b16 %v5538
      %v5581 = vunpack.c.h.b16 %v5538
      %v5582 = vunpack.c.l.b16 %v5539
      %v5583 = vunpack.c.h.b16 %v5539
      %v5584 = vunpack.c.l.b16 %v5540
      %v5585 = vunpack.c.h.b16 %v5540
      %v5586 = vunpack.c.l.b16 %v5541
      %v5587 = vunpack.c.h.b16 %v5541
      %v5588 = vunpack.c.l.b16 %v5542
      %v5589 = vunpack.c.h.b16 %v5542
      %v5590 = vunpack.c.l.b16 %v5543
      %v5591 = vunpack.c.h.b16 %v5543
      %v5592 = vunpack.c.l.b16 %v5544
      %v5593 = vunpack.c.h.b16 %v5544
      %v5594 = vunpack.c.l.b16 %v5545
      %v5595 = vunpack.c.h.b16 %v5545
      %v5596 = vunpack.c.l.b16 %v5546
      %v5597 = vunpack.c.h.b16 %v5546
      %v5598 = vunpack.c.l.b16 %v5547
      %v5599 = vunpack.c.h.b16 %v5547
      %v5600 = vunpack.c.l.b16 %v5548
      %v5601 = vunpack.c.h.b16 %v5548
      %v5602 = vunpack.c.l.b16 %v5549
      %v5603 = vunpack.c.h.b16 %v5549
      %v5604 = vunpack.c.l.b16 %v5550
      %v5605 = vunpack.c.h.b16 %v5550
      %v5606 = vunpack.c.l.b16 %v5551
      %v5607 = vunpack.c.h.b16 %v5551
      %v5608 = vunpack.c.l.b16 %v5552
      %v5609 = vunpack.c.h.b16 %v5552
      %v5610 = vunpack.c.l.b16 %v5553
      %v5611 = vunpack.c.h.b16 %v5553
      %v5612 = vunpack.c.l.b16 %v5554
      %v5613 = vunpack.c.h.b16 %v5554
      %v5614 = vunpack.c.l.b16 %v5555
      %v5615 = vunpack.c.h.b16 %v5555
      %v5616 = vunpack.c.l.b16 %v5556
      %v5617 = vunpack.c.h.b16 %v5556
      %v5618 = vpack.c.b16 %v5582, %v5578
      %v5619 = vpack.c.b16 %v5583, %v5579
      %v5620 = vpack.c.b16 %v5584, %v5580
      %v5621 = vpack.c.b16 %v5585, %v5581
      %v5622 = vpack.c.b16 %v5590, %v5586
      %v5623 = vpack.c.b16 %v5591, %v5587
      %v5624 = vpack.c.b16 %v5592, %v5588
      %v5625 = vpack.c.b16 %v5593, %v5589
      %v5626 = vpack.c.b16 %v5598, %v5594
      %v5627 = vpack.c.b16 %v5599, %v5595
      %v5628 = vpack.c.b16 %v5600, %v5596
      %v5629 = vpack.c.b16 %v5601, %v5597
      %v5630 = vpack.c.b16 %v5606, %v5602
      %v5631 = vpack.c.b16 %v5607, %v5603
      %v5632 = vpack.c.b16 %v5608, %v5604
      %v5633 = vpack.c.b16 %v5609, %v5605
      %v5634 = vpack.c.b16 %v5614, %v5610
      %v5635 = vpack.c.b16 %v5615, %v5611
      %v5636 = vpack.c.b16 %v5616, %v5612
      %v5637 = vpack.c.b16 %v5617, %v5613
      %v5659 = vsel %vm4519, %v5557, 0
      %5661 = vmatpush.bf16.msra.mxu0 0
      %5662 = vmatpush.bf16.msra.mxu0 0
      %5663 = vmatpush.bf16.msra.mxu0 0
      %5664 = vmatpush.bf16.msra.mxu0 %v5634
      %5665 = vmatpush.bf16.msra.mxu0 %v5630
      %5666 = vmatpush.bf16.msra.mxu0 %v5626
      %5667 = vmatpush.bf16.msra.mxu0 %v5622
      %5668 = vmatpush.bf16.msra.mxu0 %v5618
      %5669 = vmatmul.bf16.gmra.mxu0 %v5659
      %v5670 = vpop.f32.mrf.mxu0
      %v5671 = vadd.f32 0.0, %v5670
      %v5672 = vpop.f32.mrf.mxu0
      %5673 = vdwg.mxu0
      %5674 = vmatpush.bf16.msra.mxu0 0
      %5675 = vmatpush.bf16.msra.mxu0 0
      %5676 = vmatpush.bf16.msra.mxu0 0
      %5677 = vmatpush.bf16.msra.mxu0 %v5635
      %5678 = vmatpush.bf16.msra.mxu0 %v5631
      %5679 = vmatpush.bf16.msra.mxu0 %v5627
      %5680 = vmatpush.bf16.msra.mxu0 %v5623
      %5681 = vmatpush.bf16.msra.mxu0 %v5619
      %5682 = vmatmul.bf16.gmra.mxu0 %v5659
      %v5683 = vpop.f32.mrf.mxu0
      %v5684 = vadd.f32 0.0, %v5683
      %v5685 = vpop.f32.mrf.mxu0
      %5686 = vdwg.mxu0
      %5687 = vmatpush.bf16.msra.mxu0 0
      %5688 = vmatpush.bf16.msra.mxu0 0
      %5689 = vmatpush.bf16.msra.mxu0 0
      %5690 = vmatpush.bf16.msra.mxu0 %v5636
      %5691 = vmatpush.bf16.msra.mxu0 %v5632
      %5692 = vmatpush.bf16.msra.mxu0 %v5628
      %5693 = vmatpush.bf16.msra.mxu0 %v5624
      %5694 = vmatpush.bf16.msra.mxu0 %v5620
      %5695 = vmatmul.bf16.gmra.mxu0 %v5659
      %v5696 = vpop.f32.mrf.mxu0
      %v5697 = vadd.f32 0.0, %v5696
      %v5698 = vpop.f32.mrf.mxu0
      %5699 = vdwg.mxu0
      %5700 = vmatpush.bf16.msra.mxu0 0
      %5701 = vmatpush.bf16.msra.mxu0 0
      %5702 = vmatpush.bf16.msra.mxu0 0
      %5703 = vmatpush.bf16.msra.mxu0 %v5637
      %5704 = vmatpush.bf16.msra.mxu0 %v5633
      %5705 = vmatpush.bf16.msra.mxu0 %v5629
      %5706 = vmatpush.bf16.msra.mxu0 %v5625
      %5707 = vmatpush.bf16.msra.mxu0 %v5621
      %5708 = vmatmul.bf16.gmra.mxu0 %v5659
      %v5709 = vpop.f32.mrf.mxu0
      %v5710 = vadd.f32 0.0, %v5709
      %v5711 = vpop.f32.mrf.mxu0
      %5712 = vdwg.mxu0
      %v5717 = vrot.slane %v5684, 7
      %v5718 = vrot.slane %v5697, 6
      %v5719 = vrot.slane %v5710, 5
      %v5720 = vsel %vm4582, %v5671, %v5717
      %v5721 = vsel %vm4584, %v5718, %v5719
      %v5722 = vsel %vm2524, %v5720, %v5721
      %v5724 = vadd.f32 %v5535, %v5722
      %s5725 = scalar_lea.vmem %s13, 1120
      %v5726 = vld [vmem:[%s5725] sm:$0xff]
      %v5727 = vld [vmem:[%s5725 + $0x8] sm:$0xff]
      %v5728 = vld [vmem:[%s5725 + $0x10] sm:$0xff]
      %v5729 = vld [vmem:[%s5725 + $0x18] sm:$0xff]
      %v5730 = vld [vmem:[%s5725 + $0x20] sm:$0xff]
      %v5731 = vld [vmem:[%s5725 + $0x28] sm:$0xff]
      %v5732 = vld [vmem:[%s5725 + $0x30] sm:$0xff]
      %v5733 = vld [vmem:[%s5725 + $0x38] sm:$0xff]
      %v5734 = vld [vmem:[%s5725 + $0x40] sm:$0xff]
      %v5735 = vld [vmem:[%s5725 + $0x48] sm:$0xff]
      %v5736 = vld [vmem:[%s5725 + $0x50] sm:$0xff]
      %v5737 = vld [vmem:[%s5725 + $0x58] sm:$0xff]
      %v5738 = vld [vmem:[%s5725 + $0x60] sm:$0xff]
      %v5739 = vld [vmem:[%s5725 + $0x68] sm:$0xff]
      %v5740 = vld [vmem:[%s5725 + $0x70] sm:$0xff]
      %v5741 = vld [vmem:[%s5725 + $0x78] sm:$0xff]
      %v5742 = vld [vmem:[%s5725 + $0x80] sm:$0xff]
      %v5743 = vld [vmem:[%s5725 + $0x88] sm:$0xff]
      %v5744 = vld [vmem:[%s5725 + $0x90] sm:$0xff]
      %v5745 = vld [vmem:[%s5725 + $0x98] sm:$0xff]
      %v5746 = vrot.slane %v4610, 3
      %v5767 = vunpack.c.l.b16 %v5726
      %v5768 = vunpack.c.h.b16 %v5726
      %v5769 = vunpack.c.l.b16 %v5727
      %v5770 = vunpack.c.h.b16 %v5727
      %v5771 = vunpack.c.l.b16 %v5728
      %v5772 = vunpack.c.h.b16 %v5728
      %v5773 = vunpack.c.l.b16 %v5729
      %v5774 = vunpack.c.h.b16 %v5729
      %v5775 = vunpack.c.l.b16 %v5730
      %v5776 = vunpack.c.h.b16 %v5730
      %v5777 = vunpack.c.l.b16 %v5731
      %v5778 = vunpack.c.h.b16 %v5731
      %v5779 = vunpack.c.l.b16 %v5732
      %v5780 = vunpack.c.h.b16 %v5732
      %v5781 = vunpack.c.l.b16 %v5733
      %v5782 = vunpack.c.h.b16 %v5733
      %v5783 = vunpack.c.l.b16 %v5734
      %v5784 = vunpack.c.h.b16 %v5734
      %v5785 = vunpack.c.l.b16 %v5735
      %v5786 = vunpack.c.h.b16 %v5735
      %v5787 = vunpack.c.l.b16 %v5736
      %v5788 = vunpack.c.h.b16 %v5736
      %v5789 = vunpack.c.l.b16 %v5737
      %v5790 = vunpack.c.h.b16 %v5737
      %v5791 = vunpack.c.l.b16 %v5738
      %v5792 = vunpack.c.h.b16 %v5738
      %v5793 = vunpack.c.l.b16 %v5739
      %v5794 = vunpack.c.h.b16 %v5739
      %v5795 = vunpack.c.l.b16 %v5740
      %v5796 = vunpack.c.h.b16 %v5740
      %v5797 = vunpack.c.l.b16 %v5741
      %v5798 = vunpack.c.h.b16 %v5741
      %v5799 = vunpack.c.l.b16 %v5742
      %v5800 = vunpack.c.h.b16 %v5742
      %v5801 = vunpack.c.l.b16 %v5743
      %v5802 = vunpack.c.h.b16 %v5743
      %v5803 = vunpack.c.l.b16 %v5744
      %v5804 = vunpack.c.h.b16 %v5744
      %v5805 = vunpack.c.l.b16 %v5745
      %v5806 = vunpack.c.h.b16 %v5745
      %v5807 = vpack.c.b16 %v5771, %v5767
      %v5808 = vpack.c.b16 %v5772, %v5768
      %v5809 = vpack.c.b16 %v5773, %v5769
      %v5810 = vpack.c.b16 %v5774, %v5770
      %v5811 = vpack.c.b16 %v5779, %v5775
      %v5812 = vpack.c.b16 %v5780, %v5776
      %v5813 = vpack.c.b16 %v5781, %v5777
      %v5814 = vpack.c.b16 %v5782, %v5778
      %v5815 = vpack.c.b16 %v5787, %v5783
      %v5816 = vpack.c.b16 %v5788, %v5784
      %v5817 = vpack.c.b16 %v5789, %v5785
      %v5818 = vpack.c.b16 %v5790, %v5786
      %v5819 = vpack.c.b16 %v5795, %v5791
      %v5820 = vpack.c.b16 %v5796, %v5792
      %v5821 = vpack.c.b16 %v5797, %v5793
      %v5822 = vpack.c.b16 %v5798, %v5794
      %v5823 = vpack.c.b16 %v5803, %v5799
      %v5824 = vpack.c.b16 %v5804, %v5800
      %v5825 = vpack.c.b16 %v5805, %v5801
      %v5826 = vpack.c.b16 %v5806, %v5802
      %v5848 = vsel %vm4519, %v5746, 0
      %5850 = vmatpush.bf16.msra.mxu0 0
      %5851 = vmatpush.bf16.msra.mxu0 0
      %5852 = vmatpush.bf16.msra.mxu0 0
      %5853 = vmatpush.bf16.msra.mxu0 %v5823
      %5854 = vmatpush.bf16.msra.mxu0 %v5819
      %5855 = vmatpush.bf16.msra.mxu0 %v5815
      %5856 = vmatpush.bf16.msra.mxu0 %v5811
      %5857 = vmatpush.bf16.msra.mxu0 %v5807
      %5858 = vmatmul.bf16.gmra.mxu0 %v5848
      %v5859 = vpop.f32.mrf.mxu0
      %v5860 = vadd.f32 0.0, %v5859
      %v5861 = vpop.f32.mrf.mxu0
      %5862 = vdwg.mxu0
      %5863 = vmatpush.bf16.msra.mxu0 0
      %5864 = vmatpush.bf16.msra.mxu0 0
      %5865 = vmatpush.bf16.msra.mxu0 0
      %5866 = vmatpush.bf16.msra.mxu0 %v5824
      %5867 = vmatpush.bf16.msra.mxu0 %v5820
      %5868 = vmatpush.bf16.msra.mxu0 %v5816
      %5869 = vmatpush.bf16.msra.mxu0 %v5812
      %5870 = vmatpush.bf16.msra.mxu0 %v5808
      %5871 = vmatmul.bf16.gmra.mxu0 %v5848
      %v5872 = vpop.f32.mrf.mxu0
      %v5873 = vadd.f32 0.0, %v5872
      %v5874 = vpop.f32.mrf.mxu0
      %5875 = vdwg.mxu0
      %5876 = vmatpush.bf16.msra.mxu0 0
      %5877 = vmatpush.bf16.msra.mxu0 0
      %5878 = vmatpush.bf16.msra.mxu0 0
      %5879 = vmatpush.bf16.msra.mxu0 %v5825
      %5880 = vmatpush.bf16.msra.mxu0 %v5821
      %5881 = vmatpush.bf16.msra.mxu0 %v5817
      %5882 = vmatpush.bf16.msra.mxu0 %v5813
      %5883 = vmatpush.bf16.msra.mxu0 %v5809
      %5884 = vmatmul.bf16.gmra.mxu0 %v5848
      %v5885 = vpop.f32.mrf.mxu0
      %v5886 = vadd.f32 0.0, %v5885
      %v5887 = vpop.f32.mrf.mxu0
      %5888 = vdwg.mxu0
      %5889 = vmatpush.bf16.msra.mxu0 0
      %5890 = vmatpush.bf16.msra.mxu0 0
      %5891 = vmatpush.bf16.msra.mxu0 0
      %5892 = vmatpush.bf16.msra.mxu0 %v5826
      %5893 = vmatpush.bf16.msra.mxu0 %v5822
      %5894 = vmatpush.bf16.msra.mxu0 %v5818
      %5895 = vmatpush.bf16.msra.mxu0 %v5814
      %5896 = vmatpush.bf16.msra.mxu0 %v5810
      %5897 = vmatmul.bf16.gmra.mxu0 %v5848
      %v5898 = vpop.f32.mrf.mxu0
      %v5899 = vadd.f32 0.0, %v5898
      %v5900 = vpop.f32.mrf.mxu0
      %5901 = vdwg.mxu0
      %v5906 = vrot.slane %v5873, 7
      %v5907 = vrot.slane %v5886, 6
      %v5908 = vrot.slane %v5899, 5
      %v5909 = vsel %vm4582, %v5860, %v5906
      %v5910 = vsel %vm4584, %v5907, %v5908
      %v5911 = vsel %vm2524, %v5909, %v5910
      %v5913 = vadd.f32 %v5724, %v5911
      %v5914 = vpack.c.bf16 %v4395, %v4395
      %s5915 = scalar_lea.vmem %s13, 1280
      %v5916 = vld [vmem:[%s5915] sm:$0xff]
      %v5917 = vld [vmem:[%s5915 + $0x8] sm:$0xff]
      %v5918 = vld [vmem:[%s5915 + $0x10] sm:$0xff]
      %v5919 = vld [vmem:[%s5915 + $0x18] sm:$0xff]
      %v5920 = vld [vmem:[%s5915 + $0x20] sm:$0xff]
      %v5921 = vld [vmem:[%s5915 + $0x28] sm:$0xff]
      %v5922 = vld [vmem:[%s5915 + $0x30] sm:$0xff]
      %v5923 = vld [vmem:[%s5915 + $0x38] sm:$0xff]
      %v5924 = vld [vmem:[%s5915 + $0x40] sm:$0xff]
      %v5925 = vld [vmem:[%s5915 + $0x48] sm:$0xff]
      %v5926 = vld [vmem:[%s5915 + $0x50] sm:$0xff]
      %v5927 = vld [vmem:[%s5915 + $0x58] sm:$0xff]
      %v5928 = vld [vmem:[%s5915 + $0x60] sm:$0xff]
      %v5929 = vld [vmem:[%s5915 + $0x68] sm:$0xff]
      %v5930 = vld [vmem:[%s5915 + $0x70] sm:$0xff]
      %v5931 = vld [vmem:[%s5915 + $0x78] sm:$0xff]
      %v5932 = vld [vmem:[%s5915 + $0x80] sm:$0xff]
      %v5933 = vld [vmem:[%s5915 + $0x88] sm:$0xff]
      %v5934 = vld [vmem:[%s5915 + $0x90] sm:$0xff]
      %v5935 = vld [vmem:[%s5915 + $0x98] sm:$0xff]
      %v5956 = vunpack.c.l.b16 %v5916
      %v5957 = vunpack.c.h.b16 %v5916
      %v5958 = vunpack.c.l.b16 %v5917
      %v5959 = vunpack.c.h.b16 %v5917
      %v5960 = vunpack.c.l.b16 %v5918
      %v5961 = vunpack.c.h.b16 %v5918
      %v5962 = vunpack.c.l.b16 %v5919
      %v5963 = vunpack.c.h.b16 %v5919
      %v5964 = vunpack.c.l.b16 %v5920
      %v5965 = vunpack.c.h.b16 %v5920
      %v5966 = vunpack.c.l.b16 %v5921
      %v5967 = vunpack.c.h.b16 %v5921
      %v5968 = vunpack.c.l.b16 %v5922
      %v5969 = vunpack.c.h.b16 %v5922
      %v5970 = vunpack.c.l.b16 %v5923
      %v5971 = vunpack.c.h.b16 %v5923
      %v5972 = vunpack.c.l.b16 %v5924
      %v5973 = vunpack.c.h.b16 %v5924
      %v5974 = vunpack.c.l.b16 %v5925
      %v5975 = vunpack.c.h.b16 %v5925
      %v5976 = vunpack.c.l.b16 %v5926
      %v5977 = vunpack.c.h.b16 %v5926
      %v5978 = vunpack.c.l.b16 %v5927
      %v5979 = vunpack.c.h.b16 %v5927
      %v5980 = vunpack.c.l.b16 %v5928
      %v5981 = vunpack.c.h.b16 %v5928
      %v5982 = vunpack.c.l.b16 %v5929
      %v5983 = vunpack.c.h.b16 %v5929
      %v5984 = vunpack.c.l.b16 %v5930
      %v5985 = vunpack.c.h.b16 %v5930
      %v5986 = vunpack.c.l.b16 %v5931
      %v5987 = vunpack.c.h.b16 %v5931
      %v5988 = vunpack.c.l.b16 %v5932
      %v5989 = vunpack.c.h.b16 %v5932
      %v5990 = vunpack.c.l.b16 %v5933
      %v5991 = vunpack.c.h.b16 %v5933
      %v5992 = vunpack.c.l.b16 %v5934
      %v5993 = vunpack.c.h.b16 %v5934
      %v5994 = vunpack.c.l.b16 %v5935
      %v5995 = vunpack.c.h.b16 %v5935
      %v5996 = vpack.c.b16 %v5960, %v5956
      %v5997 = vpack.c.b16 %v5961, %v5957
      %v5998 = vpack.c.b16 %v5962, %v5958
      %v5999 = vpack.c.b16 %v5963, %v5959
      %v6000 = vpack.c.b16 %v5968, %v5964
      %v6001 = vpack.c.b16 %v5969, %v5965
      %v6002 = vpack.c.b16 %v5970, %v5966
      %v6003 = vpack.c.b16 %v5971, %v5967
      %v6004 = vpack.c.b16 %v5976, %v5972
      %v6005 = vpack.c.b16 %v5977, %v5973
      %v6006 = vpack.c.b16 %v5978, %v5974
      %v6007 = vpack.c.b16 %v5979, %v5975
      %v6008 = vpack.c.b16 %v5984, %v5980
      %v6009 = vpack.c.b16 %v5985, %v5981
      %v6010 = vpack.c.b16 %v5986, %v5982
      %v6011 = vpack.c.b16 %v5987, %v5983
      %v6012 = vpack.c.b16 %v5992, %v5988
      %v6013 = vpack.c.b16 %v5993, %v5989
      %v6014 = vpack.c.b16 %v5994, %v5990
      %v6015 = vpack.c.b16 %v5995, %v5991
      %v6037 = vsel %vm4519, %v5914, 0
      %6039 = vmatpush.bf16.msra.mxu0 0
      %6040 = vmatpush.bf16.msra.mxu0 0
      %6041 = vmatpush.bf16.msra.mxu0 0
      %6042 = vmatpush.bf16.msra.mxu0 %v6012
      %6043 = vmatpush.bf16.msra.mxu0 %v6008
      %6044 = vmatpush.bf16.msra.mxu0 %v6004
      %6045 = vmatpush.bf16.msra.mxu0 %v6000
      %6046 = vmatpush.bf16.msra.mxu0 %v5996
      %6047 = vmatmul.bf16.gmra.mxu0 %v6037
      %v6048 = vpop.f32.mrf.mxu0
      %v6049 = vadd.f32 0.0, %v6048
      %v6050 = vpop.f32.mrf.mxu0
      %6051 = vdwg.mxu0
      %6052 = vmatpush.bf16.msra.mxu0 0
      %6053 = vmatpush.bf16.msra.mxu0 0
      %6054 = vmatpush.bf16.msra.mxu0 0
      %6055 = vmatpush.bf16.msra.mxu0 %v6013
      %6056 = vmatpush.bf16.msra.mxu0 %v6009
      %6057 = vmatpush.bf16.msra.mxu0 %v6005
      %6058 = vmatpush.bf16.msra.mxu0 %v6001
      %6059 = vmatpush.bf16.msra.mxu0 %v5997
      %6060 = vmatmul.bf16.gmra.mxu0 %v6037
      %v6061 = vpop.f32.mrf.mxu0
      %v6062 = vadd.f32 0.0, %v6061
      %v6063 = vpop.f32.mrf.mxu0
      %6064 = vdwg.mxu0
      %6065 = vmatpush.bf16.msra.mxu0 0
      %6066 = vmatpush.bf16.msra.mxu0 0
      %6067 = vmatpush.bf16.msra.mxu0 0
      %6068 = vmatpush.bf16.msra.mxu0 %v6014
      %6069 = vmatpush.bf16.msra.mxu0 %v6010
      %6070 = vmatpush.bf16.msra.mxu0 %v6006
      %6071 = vmatpush.bf16.msra.mxu0 %v6002
      %6072 = vmatpush.bf16.msra.mxu0 %v5998
      %6073 = vmatmul.bf16.gmra.mxu0 %v6037
      %v6074 = vpop.f32.mrf.mxu0
      %v6075 = vadd.f32 0.0, %v6074
      %v6076 = vpop.f32.mrf.mxu0
      %6077 = vdwg.mxu0
      %6078 = vmatpush.bf16.msra.mxu0 0
      %6079 = vmatpush.bf16.msra.mxu0 0
      %6080 = vmatpush.bf16.msra.mxu0 0
      %6081 = vmatpush.bf16.msra.mxu0 %v6015
      %6082 = vmatpush.bf16.msra.mxu0 %v6011
      %6083 = vmatpush.bf16.msra.mxu0 %v6007
      %6084 = vmatpush.bf16.msra.mxu0 %v6003
      %6085 = vmatpush.bf16.msra.mxu0 %v5999
      %6086 = vmatmul.bf16.gmra.mxu0 %v6037
      %v6087 = vpop.f32.mrf.mxu0
      %v6088 = vadd.f32 0.0, %v6087
      %v6089 = vpop.f32.mrf.mxu0
      %6090 = vdwg.mxu0
      %v6095 = vrot.slane %v6062, 7
      %v6096 = vrot.slane %v6075, 6
      %v6097 = vrot.slane %v6088, 5
      %v6098 = vsel %vm4582, %v6049, %v6095
      %v6099 = vsel %vm4584, %v6096, %v6097
      %v6100 = vsel %vm2524, %v6098, %v6099
      %v6102 = vadd.f32 %v5913, %v6100
      %s6103 = scalar_lea.vmem %s13, 1440
      %v6104 = vld [vmem:[%s6103] sm:$0xff]
      %v6105 = vld [vmem:[%s6103 + $0x8] sm:$0xff]
      %v6106 = vld [vmem:[%s6103 + $0x10] sm:$0xff]
      %v6107 = vld [vmem:[%s6103 + $0x18] sm:$0xff]
      %v6108 = vld [vmem:[%s6103 + $0x20] sm:$0xff]
      %v6109 = vld [vmem:[%s6103 + $0x28] sm:$0xff]
      %v6110 = vld [vmem:[%s6103 + $0x30] sm:$0xff]
      %v6111 = vld [vmem:[%s6103 + $0x38] sm:$0xff]
      %v6112 = vld [vmem:[%s6103 + $0x40] sm:$0xff]
      %v6113 = vld [vmem:[%s6103 + $0x48] sm:$0xff]
      %v6114 = vld [vmem:[%s6103 + $0x50] sm:$0xff]
      %v6115 = vld [vmem:[%s6103 + $0x58] sm:$0xff]
      %v6116 = vld [vmem:[%s6103 + $0x60] sm:$0xff]
      %v6117 = vld [vmem:[%s6103 + $0x68] sm:$0xff]
      %v6118 = vld [vmem:[%s6103 + $0x70] sm:$0xff]
      %v6119 = vld [vmem:[%s6103 + $0x78] sm:$0xff]
      %v6120 = vld [vmem:[%s6103 + $0x80] sm:$0xff]
      %v6121 = vld [vmem:[%s6103 + $0x88] sm:$0xff]
      %v6122 = vld [vmem:[%s6103 + $0x90] sm:$0xff]
      %v6123 = vld [vmem:[%s6103 + $0x98] sm:$0xff]
      %v6124 = vshrl.u32 %v5914, 16
      %v6146 = vunpack.c.l.b16 %v6104
      %v6147 = vunpack.c.h.b16 %v6104
      %v6148 = vunpack.c.l.b16 %v6105
      %v6149 = vunpack.c.h.b16 %v6105
      %v6150 = vunpack.c.l.b16 %v6106
      %v6151 = vunpack.c.h.b16 %v6106
      %v6152 = vunpack.c.l.b16 %v6107
      %v6153 = vunpack.c.h.b16 %v6107
      %v6154 = vunpack.c.l.b16 %v6108
      %v6155 = vunpack.c.h.b16 %v6108
      %v6156 = vunpack.c.l.b16 %v6109
      %v6157 = vunpack.c.h.b16 %v6109
      %v6158 = vunpack.c.l.b16 %v6110
      %v6159 = vunpack.c.h.b16 %v6110
      %v6160 = vunpack.c.l.b16 %v6111
      %v6161 = vunpack.c.h.b16 %v6111
      %v6162 = vunpack.c.l.b16 %v6112
      %v6163 = vunpack.c.h.b16 %v6112
      %v6164 = vunpack.c.l.b16 %v6113
      %v6165 = vunpack.c.h.b16 %v6113
      %v6166 = vunpack.c.l.b16 %v6114
      %v6167 = vunpack.c.h.b16 %v6114
      %v6168 = vunpack.c.l.b16 %v6115
      %v6169 = vunpack.c.h.b16 %v6115
      %v6170 = vunpack.c.l.b16 %v6116
      %v6171 = vunpack.c.h.b16 %v6116
      %v6172 = vunpack.c.l.b16 %v6117
      %v6173 = vunpack.c.h.b16 %v6117
      %v6174 = vunpack.c.l.b16 %v6118
      %v6175 = vunpack.c.h.b16 %v6118
      %v6176 = vunpack.c.l.b16 %v6119
      %v6177 = vunpack.c.h.b16 %v6119
      %v6178 = vunpack.c.l.b16 %v6120
      %v6179 = vunpack.c.h.b16 %v6120
      %v6180 = vunpack.c.l.b16 %v6121
      %v6181 = vunpack.c.h.b16 %v6121
      %v6182 = vunpack.c.l.b16 %v6122
      %v6183 = vunpack.c.h.b16 %v6122
      %v6184 = vunpack.c.l.b16 %v6123
      %v6185 = vunpack.c.h.b16 %v6123
      %v6186 = vpack.c.b16 %v6150, %v6146
      %v6187 = vpack.c.b16 %v6151, %v6147
      %v6188 = vpack.c.b16 %v6152, %v6148
      %v6189 = vpack.c.b16 %v6153, %v6149
      %v6190 = vpack.c.b16 %v6158, %v6154
      %v6191 = vpack.c.b16 %v6159, %v6155
      %v6192 = vpack.c.b16 %v6160, %v6156
      %v6193 = vpack.c.b16 %v6161, %v6157
      %v6194 = vpack.c.b16 %v6166, %v6162
      %v6195 = vpack.c.b16 %v6167, %v6163
      %v6196 = vpack.c.b16 %v6168, %v6164
      %v6197 = vpack.c.b16 %v6169, %v6165
      %v6198 = vpack.c.b16 %v6174, %v6170
      %v6199 = vpack.c.b16 %v6175, %v6171
      %v6200 = vpack.c.b16 %v6176, %v6172
      %v6201 = vpack.c.b16 %v6177, %v6173
      %v6202 = vpack.c.b16 %v6182, %v6178
      %v6203 = vpack.c.b16 %v6183, %v6179
      %v6204 = vpack.c.b16 %v6184, %v6180
      %v6205 = vpack.c.b16 %v6185, %v6181
      %v6227 = vsel %vm4519, %v6124, 0
      %6229 = vmatpush.bf16.msra.mxu0 0
      %6230 = vmatpush.bf16.msra.mxu0 0
      %6231 = vmatpush.bf16.msra.mxu0 0
      %6232 = vmatpush.bf16.msra.mxu0 %v6202
      %6233 = vmatpush.bf16.msra.mxu0 %v6198
      %6234 = vmatpush.bf16.msra.mxu0 %v6194
      %6235 = vmatpush.bf16.msra.mxu0 %v6190
      %6236 = vmatpush.bf16.msra.mxu0 %v6186
      %6237 = vmatmul.bf16.gmra.mxu0 %v6227
      %v6238 = vpop.f32.mrf.mxu0
      %v6239 = vadd.f32 0.0, %v6238
      %v6240 = vpop.f32.mrf.mxu0
      %6241 = vdwg.mxu0
      %6242 = vmatpush.bf16.msra.mxu0 0
      %6243 = vmatpush.bf16.msra.mxu0 0
      %6244 = vmatpush.bf16.msra.mxu0 0
      %6245 = vmatpush.bf16.msra.mxu0 %v6203
      %6246 = vmatpush.bf16.msra.mxu0 %v6199
      %6247 = vmatpush.bf16.msra.mxu0 %v6195
      %6248 = vmatpush.bf16.msra.mxu0 %v6191
      %6249 = vmatpush.bf16.msra.mxu0 %v6187
      %6250 = vmatmul.bf16.gmra.mxu0 %v6227
      %v6251 = vpop.f32.mrf.mxu0
      %v6252 = vadd.f32 0.0, %v6251
      %v6253 = vpop.f32.mrf.mxu0
      %6254 = vdwg.mxu0
      %6255 = vmatpush.bf16.msra.mxu0 0
      %6256 = vmatpush.bf16.msra.mxu0 0
      %6257 = vmatpush.bf16.msra.mxu0 0
      %6258 = vmatpush.bf16.msra.mxu0 %v6204
      %6259 = vmatpush.bf16.msra.mxu0 %v6200
      %6260 = vmatpush.bf16.msra.mxu0 %v6196
      %6261 = vmatpush.bf16.msra.mxu0 %v6192
      %6262 = vmatpush.bf16.msra.mxu0 %v6188
      %6263 = vmatmul.bf16.gmra.mxu0 %v6227
      %v6264 = vpop.f32.mrf.mxu0
      %v6265 = vadd.f32 0.0, %v6264
      %v6266 = vpop.f32.mrf.mxu0
      %6267 = vdwg.mxu0
      %6268 = vmatpush.bf16.msra.mxu0 0
      %6269 = vmatpush.bf16.msra.mxu0 0
      %6270 = vmatpush.bf16.msra.mxu0 0
      %6271 = vmatpush.bf16.msra.mxu0 %v6205
      %6272 = vmatpush.bf16.msra.mxu0 %v6201
      %6273 = vmatpush.bf16.msra.mxu0 %v6197
      %6274 = vmatpush.bf16.msra.mxu0 %v6193
      %6275 = vmatpush.bf16.msra.mxu0 %v6189
      %6276 = vmatmul.bf16.gmra.mxu0 %v6227
      %v6277 = vpop.f32.mrf.mxu0
      %v6278 = vadd.f32 0.0, %v6277
      %v6279 = vpop.f32.mrf.mxu0
      %6280 = vdwg.mxu0
      %v6285 = vrot.slane %v6252, 7
      %v6286 = vrot.slane %v6265, 6
      %v6287 = vrot.slane %v6278, 5
      %v6288 = vsel %vm4582, %v6239, %v6285
      %v6289 = vsel %vm4584, %v6286, %v6287
      %v6290 = vsel %vm2524, %v6288, %v6289
      %v6292 = vadd.f32 %v6102, %v6290
      %s6293 = scalar_lea.vmem %s13, 1600
      %v6294 = vld [vmem:[%s6293] sm:$0xff]
      %v6295 = vld [vmem:[%s6293 + $0x8] sm:$0xff]
      %v6296 = vld [vmem:[%s6293 + $0x10] sm:$0xff]
      %v6297 = vld [vmem:[%s6293 + $0x18] sm:$0xff]
      %v6298 = vld [vmem:[%s6293 + $0x20] sm:$0xff]
      %v6299 = vld [vmem:[%s6293 + $0x28] sm:$0xff]
      %v6300 = vld [vmem:[%s6293 + $0x30] sm:$0xff]
      %v6301 = vld [vmem:[%s6293 + $0x38] sm:$0xff]
      %v6302 = vld [vmem:[%s6293 + $0x40] sm:$0xff]
      %v6303 = vld [vmem:[%s6293 + $0x48] sm:$0xff]
      %v6304 = vld [vmem:[%s6293 + $0x50] sm:$0xff]
      %v6305 = vld [vmem:[%s6293 + $0x58] sm:$0xff]
      %v6306 = vld [vmem:[%s6293 + $0x60] sm:$0xff]
      %v6307 = vld [vmem:[%s6293 + $0x68] sm:$0xff]
      %v6308 = vld [vmem:[%s6293 + $0x70] sm:$0xff]
      %v6309 = vld [vmem:[%s6293 + $0x78] sm:$0xff]
      %v6310 = vld [vmem:[%s6293 + $0x80] sm:$0xff]
      %v6311 = vld [vmem:[%s6293 + $0x88] sm:$0xff]
      %v6312 = vld [vmem:[%s6293 + $0x90] sm:$0xff]
      %v6313 = vld [vmem:[%s6293 + $0x98] sm:$0xff]
      %v6315 = vrot.slane %v5914, 1
      %v6336 = vunpack.c.l.b16 %v6294
      %v6337 = vunpack.c.h.b16 %v6294
      %v6338 = vunpack.c.l.b16 %v6295
      %v6339 = vunpack.c.h.b16 %v6295
      %v6340 = vunpack.c.l.b16 %v6296
      %v6341 = vunpack.c.h.b16 %v6296
      %v6342 = vunpack.c.l.b16 %v6297
      %v6343 = vunpack.c.h.b16 %v6297
      %v6344 = vunpack.c.l.b16 %v6298
      %v6345 = vunpack.c.h.b16 %v6298
      %v6346 = vunpack.c.l.b16 %v6299
      %v6347 = vunpack.c.h.b16 %v6299
      %v6348 = vunpack.c.l.b16 %v6300
      %v6349 = vunpack.c.h.b16 %v6300
      %v6350 = vunpack.c.l.b16 %v6301
      %v6351 = vunpack.c.h.b16 %v6301
      %v6352 = vunpack.c.l.b16 %v6302
      %v6353 = vunpack.c.h.b16 %v6302
      %v6354 = vunpack.c.l.b16 %v6303
      %v6355 = vunpack.c.h.b16 %v6303
      %v6356 = vunpack.c.l.b16 %v6304
      %v6357 = vunpack.c.h.b16 %v6304
      %v6358 = vunpack.c.l.b16 %v6305
      %v6359 = vunpack.c.h.b16 %v6305
      %v6360 = vunpack.c.l.b16 %v6306
      %v6361 = vunpack.c.h.b16 %v6306
      %v6362 = vunpack.c.l.b16 %v6307
      %v6363 = vunpack.c.h.b16 %v6307
      %v6364 = vunpack.c.l.b16 %v6308
      %v6365 = vunpack.c.h.b16 %v6308
      %v6366 = vunpack.c.l.b16 %v6309
      %v6367 = vunpack.c.h.b16 %v6309
      %v6368 = vunpack.c.l.b16 %v6310
      %v6369 = vunpack.c.h.b16 %v6310
      %v6370 = vunpack.c.l.b16 %v6311
      %v6371 = vunpack.c.h.b16 %v6311
      %v6372 = vunpack.c.l.b16 %v6312
      %v6373 = vunpack.c.h.b16 %v6312
      %v6374 = vunpack.c.l.b16 %v6313
      %v6375 = vunpack.c.h.b16 %v6313
      %v6376 = vpack.c.b16 %v6340, %v6336
      %v6377 = vpack.c.b16 %v6341, %v6337
      %v6378 = vpack.c.b16 %v6342, %v6338
      %v6379 = vpack.c.b16 %v6343, %v6339
      %v6380 = vpack.c.b16 %v6348, %v6344
      %v6381 = vpack.c.b16 %v6349, %v6345
      %v6382 = vpack.c.b16 %v6350, %v6346
      %v6383 = vpack.c.b16 %v6351, %v6347
      %v6384 = vpack.c.b16 %v6356, %v6352
      %v6385 = vpack.c.b16 %v6357, %v6353
      %v6386 = vpack.c.b16 %v6358, %v6354
      %v6387 = vpack.c.b16 %v6359, %v6355
      %v6388 = vpack.c.b16 %v6364, %v6360
      %v6389 = vpack.c.b16 %v6365, %v6361
      %v6390 = vpack.c.b16 %v6366, %v6362
      %v6391 = vpack.c.b16 %v6367, %v6363
      %v6392 = vpack.c.b16 %v6372, %v6368
      %v6393 = vpack.c.b16 %v6373, %v6369
      %v6394 = vpack.c.b16 %v6374, %v6370
      %v6395 = vpack.c.b16 %v6375, %v6371
      %v6417 = vsel %vm4519, %v6315, 0
      %6419 = vmatpush.bf16.msra.mxu0 0
      %6420 = vmatpush.bf16.msra.mxu0 0
      %6421 = vmatpush.bf16.msra.mxu0 0
      %6422 = vmatpush.bf16.msra.mxu0 %v6392
      %6423 = vmatpush.bf16.msra.mxu0 %v6388
      %6424 = vmatpush.bf16.msra.mxu0 %v6384
      %6425 = vmatpush.bf16.msra.mxu0 %v6380
      %6426 = vmatpush.bf16.msra.mxu0 %v6376
      %6427 = vmatmul.bf16.gmra.mxu0 %v6417
      %v6428 = vpop.f32.mrf.mxu0
      %v6429 = vadd.f32 0.0, %v6428
      %v6430 = vpop.f32.mrf.mxu0
      %6431 = vdwg.mxu0
      %6432 = vmatpush.bf16.msra.mxu0 0
      %6433 = vmatpush.bf16.msra.mxu0 0
      %6434 = vmatpush.bf16.msra.mxu0 0
      %6435 = vmatpush.bf16.msra.mxu0 %v6393
      %6436 = vmatpush.bf16.msra.mxu0 %v6389
      %6437 = vmatpush.bf16.msra.mxu0 %v6385
      %6438 = vmatpush.bf16.msra.mxu0 %v6381
      %6439 = vmatpush.bf16.msra.mxu0 %v6377
      %6440 = vmatmul.bf16.gmra.mxu0 %v6417
      %v6441 = vpop.f32.mrf.mxu0
      %v6442 = vadd.f32 0.0, %v6441
      %v6443 = vpop.f32.mrf.mxu0
      %6444 = vdwg.mxu0
      %6445 = vmatpush.bf16.msra.mxu0 0
      %6446 = vmatpush.bf16.msra.mxu0 0
      %6447 = vmatpush.bf16.msra.mxu0 0
      %6448 = vmatpush.bf16.msra.mxu0 %v6394
      %6449 = vmatpush.bf16.msra.mxu0 %v6390
      %6450 = vmatpush.bf16.msra.mxu0 %v6386
      %6451 = vmatpush.bf16.msra.mxu0 %v6382
      %6452 = vmatpush.bf16.msra.mxu0 %v6378
      %6453 = vmatmul.bf16.gmra.mxu0 %v6417
      %v6454 = vpop.f32.mrf.mxu0
      %v6455 = vadd.f32 0.0, %v6454
      %v6456 = vpop.f32.mrf.mxu0
      %6457 = vdwg.mxu0
      %6458 = vmatpush.bf16.msra.mxu0 0
      %6459 = vmatpush.bf16.msra.mxu0 0
      %6460 = vmatpush.bf16.msra.mxu0 0
      %6461 = vmatpush.bf16.msra.mxu0 %v6395
      %6462 = vmatpush.bf16.msra.mxu0 %v6391
      %6463 = vmatpush.bf16.msra.mxu0 %v6387
      %6464 = vmatpush.bf16.msra.mxu0 %v6383
      %6465 = vmatpush.bf16.msra.mxu0 %v6379
      %6466 = vmatmul.bf16.gmra.mxu0 %v6417
      %v6467 = vpop.f32.mrf.mxu0
      %v6468 = vadd.f32 0.0, %v6467
      %v6469 = vpop.f32.mrf.mxu0
      %6470 = vdwg.mxu0
      %v6475 = vrot.slane %v6442, 7
      %v6476 = vrot.slane %v6455, 6
      %v6477 = vrot.slane %v6468, 5
      %v6478 = vsel %vm4582, %v6429, %v6475
      %v6479 = vsel %vm4584, %v6476, %v6477
      %v6480 = vsel %vm2524, %v6478, %v6479
      %v6482 = vadd.f32 %v6292, %v6480
      %s6483 = scalar_lea.vmem %s13, 1760
      %v6484 = vld [vmem:[%s6483] sm:$0xff]
      %v6485 = vld [vmem:[%s6483 + $0x8] sm:$0xff]
      %v6486 = vld [vmem:[%s6483 + $0x10] sm:$0xff]
      %v6487 = vld [vmem:[%s6483 + $0x18] sm:$0xff]
      %v6488 = vld [vmem:[%s6483 + $0x20] sm:$0xff]
      %v6489 = vld [vmem:[%s6483 + $0x28] sm:$0xff]
      %v6490 = vld [vmem:[%s6483 + $0x30] sm:$0xff]
      %v6491 = vld [vmem:[%s6483 + $0x38] sm:$0xff]
      %v6492 = vld [vmem:[%s6483 + $0x40] sm:$0xff]
      %v6493 = vld [vmem:[%s6483 + $0x48] sm:$0xff]
      %v6494 = vld [vmem:[%s6483 + $0x50] sm:$0xff]
      %v6495 = vld [vmem:[%s6483 + $0x58] sm:$0xff]
      %v6496 = vld [vmem:[%s6483 + $0x60] sm:$0xff]
      %v6497 = vld [vmem:[%s6483 + $0x68] sm:$0xff]
      %v6498 = vld [vmem:[%s6483 + $0x70] sm:$0xff]
      %v6499 = vld [vmem:[%s6483 + $0x78] sm:$0xff]
      %v6500 = vld [vmem:[%s6483 + $0x80] sm:$0xff]
      %v6501 = vld [vmem:[%s6483 + $0x88] sm:$0xff]
      %v6502 = vld [vmem:[%s6483 + $0x90] sm:$0xff]
      %v6503 = vld [vmem:[%s6483 + $0x98] sm:$0xff]
      %v6504 = vrot.slane %v6124, 1
      %v6525 = vunpack.c.l.b16 %v6484
      %v6526 = vunpack.c.h.b16 %v6484
      %v6527 = vunpack.c.l.b16 %v6485
      %v6528 = vunpack.c.h.b16 %v6485
      %v6529 = vunpack.c.l.b16 %v6486
      %v6530 = vunpack.c.h.b16 %v6486
      %v6531 = vunpack.c.l.b16 %v6487
      %v6532 = vunpack.c.h.b16 %v6487
      %v6533 = vunpack.c.l.b16 %v6488
      %v6534 = vunpack.c.h.b16 %v6488
      %v6535 = vunpack.c.l.b16 %v6489
      %v6536 = vunpack.c.h.b16 %v6489
      %v6537 = vunpack.c.l.b16 %v6490
      %v6538 = vunpack.c.h.b16 %v6490
      %v6539 = vunpack.c.l.b16 %v6491
      %v6540 = vunpack.c.h.b16 %v6491
      %v6541 = vunpack.c.l.b16 %v6492
      %v6542 = vunpack.c.h.b16 %v6492
      %v6543 = vunpack.c.l.b16 %v6493
      %v6544 = vunpack.c.h.b16 %v6493
      %v6545 = vunpack.c.l.b16 %v6494
      %v6546 = vunpack.c.h.b16 %v6494
      %v6547 = vunpack.c.l.b16 %v6495
      %v6548 = vunpack.c.h.b16 %v6495
      %v6549 = vunpack.c.l.b16 %v6496
      %v6550 = vunpack.c.h.b16 %v6496
      %v6551 = vunpack.c.l.b16 %v6497
      %v6552 = vunpack.c.h.b16 %v6497
      %v6553 = vunpack.c.l.b16 %v6498
      %v6554 = vunpack.c.h.b16 %v6498
      %v6555 = vunpack.c.l.b16 %v6499
      %v6556 = vunpack.c.h.b16 %v6499
      %v6557 = vunpack.c.l.b16 %v6500
      %v6558 = vunpack.c.h.b16 %v6500
      %v6559 = vunpack.c.l.b16 %v6501
      %v6560 = vunpack.c.h.b16 %v6501
      %v6561 = vunpack.c.l.b16 %v6502
      %v6562 = vunpack.c.h.b16 %v6502
      %v6563 = vunpack.c.l.b16 %v6503
      %v6564 = vunpack.c.h.b16 %v6503
      %v6565 = vpack.c.b16 %v6529, %v6525
      %v6566 = vpack.c.b16 %v6530, %v6526
      %v6567 = vpack.c.b16 %v6531, %v6527
      %v6568 = vpack.c.b16 %v6532, %v6528
      %v6569 = vpack.c.b16 %v6537, %v6533
      %v6570 = vpack.c.b16 %v6538, %v6534
      %v6571 = vpack.c.b16 %v6539, %v6535
      %v6572 = vpack.c.b16 %v6540, %v6536
      %v6573 = vpack.c.b16 %v6545, %v6541
      %v6574 = vpack.c.b16 %v6546, %v6542
      %v6575 = vpack.c.b16 %v6547, %v6543
      %v6576 = vpack.c.b16 %v6548, %v6544
      %v6577 = vpack.c.b16 %v6553, %v6549
      %v6578 = vpack.c.b16 %v6554, %v6550
      %v6579 = vpack.c.b16 %v6555, %v6551
      %v6580 = vpack.c.b16 %v6556, %v6552
      %v6581 = vpack.c.b16 %v6561, %v6557
      %v6582 = vpack.c.b16 %v6562, %v6558
      %v6583 = vpack.c.b16 %v6563, %v6559
      %v6584 = vpack.c.b16 %v6564, %v6560
      %v6606 = vsel %vm4519, %v6504, 0
      %6608 = vmatpush.bf16.msra.mxu0 0
      %6609 = vmatpush.bf16.msra.mxu0 0
      %6610 = vmatpush.bf16.msra.mxu0 0
      %6611 = vmatpush.bf16.msra.mxu0 %v6581
      %6612 = vmatpush.bf16.msra.mxu0 %v6577
      %6613 = vmatpush.bf16.msra.mxu0 %v6573
      %6614 = vmatpush.bf16.msra.mxu0 %v6569
      %6615 = vmatpush.bf16.msra.mxu0 %v6565
      %6616 = vmatmul.bf16.gmra.mxu0 %v6606
      %v6617 = vpop.f32.mrf.mxu0
      %v6618 = vadd.f32 0.0, %v6617
      %v6619 = vpop.f32.mrf.mxu0
      %6620 = vdwg.mxu0
      %6621 = vmatpush.bf16.msra.mxu0 0
      %6622 = vmatpush.bf16.msra.mxu0 0
      %6623 = vmatpush.bf16.msra.mxu0 0
      %6624 = vmatpush.bf16.msra.mxu0 %v6582
      %6625 = vmatpush.bf16.msra.mxu0 %v6578
      %6626 = vmatpush.bf16.msra.mxu0 %v6574
      %6627 = vmatpush.bf16.msra.mxu0 %v6570
      %6628 = vmatpush.bf16.msra.mxu0 %v6566
      %6629 = vmatmul.bf16.gmra.mxu0 %v6606
      %v6630 = vpop.f32.mrf.mxu0
      %v6631 = vadd.f32 0.0, %v6630
      %v6632 = vpop.f32.mrf.mxu0
      %6633 = vdwg.mxu0
      %6634 = vmatpush.bf16.msra.mxu0 0
      %6635 = vmatpush.bf16.msra.mxu0 0
      %6636 = vmatpush.bf16.msra.mxu0 0
      %6637 = vmatpush.bf16.msra.mxu0 %v6583
      %6638 = vmatpush.bf16.msra.mxu0 %v6579
      %6639 = vmatpush.bf16.msra.mxu0 %v6575
      %6640 = vmatpush.bf16.msra.mxu0 %v6571
      %6641 = vmatpush.bf16.msra.mxu0 %v6567
      %6642 = vmatmul.bf16.gmra.mxu0 %v6606
      %v6643 = vpop.f32.mrf.mxu0
      %v6644 = vadd.f32 0.0, %v6643
      %v6645 = vpop.f32.mrf.mxu0
      %6646 = vdwg.mxu0
      %6647 = vmatpush.bf16.msra.mxu0 0
      %6648 = vmatpush.bf16.msra.mxu0 0
      %6649 = vmatpush.bf16.msra.mxu0 0
      %6650 = vmatpush.bf16.msra.mxu0 %v6584
      %6651 = vmatpush.bf16.msra.mxu0 %v6580
      %6652 = vmatpush.bf16.msra.mxu0 %v6576
      %6653 = vmatpush.bf16.msra.mxu0 %v6572
      %6654 = vmatpush.bf16.msra.mxu0 %v6568
      %6655 = vmatmul.bf16.gmra.mxu0 %v6606
      %v6656 = vpop.f32.mrf.mxu0
      %v6657 = vadd.f32 0.0, %v6656
      %v6658 = vpop.f32.mrf.mxu0
      %6659 = vdwg.mxu0
      %v6664 = vrot.slane %v6631, 7
      %v6665 = vrot.slane %v6644, 6
      %v6666 = vrot.slane %v6657, 5
      %v6667 = vsel %vm4582, %v6618, %v6664
      %v6668 = vsel %vm4584, %v6665, %v6666
      %v6669 = vsel %vm2524, %v6667, %v6668
      %v6671 = vadd.f32 %v6482, %v6669
      %s6672 = scalar_lea.vmem %s13, 1920
      %v6673 = vld [vmem:[%s6672] sm:$0xff]
      %v6674 = vld [vmem:[%s6672 + $0x8] sm:$0xff]
      %v6675 = vld [vmem:[%s6672 + $0x10] sm:$0xff]
      %v6676 = vld [vmem:[%s6672 + $0x18] sm:$0xff]
      %v6677 = vld [vmem:[%s6672 + $0x20] sm:$0xff]
      %v6678 = vld [vmem:[%s6672 + $0x28] sm:$0xff]
      %v6679 = vld [vmem:[%s6672 + $0x30] sm:$0xff]
      %v6680 = vld [vmem:[%s6672 + $0x38] sm:$0xff]
      %v6681 = vld [vmem:[%s6672 + $0x40] sm:$0xff]
      %v6682 = vld [vmem:[%s6672 + $0x48] sm:$0xff]
      %v6683 = vld [vmem:[%s6672 + $0x50] sm:$0xff]
      %v6684 = vld [vmem:[%s6672 + $0x58] sm:$0xff]
      %v6685 = vld [vmem:[%s6672 + $0x60] sm:$0xff]
      %v6686 = vld [vmem:[%s6672 + $0x68] sm:$0xff]
      %v6687 = vld [vmem:[%s6672 + $0x70] sm:$0xff]
      %v6688 = vld [vmem:[%s6672 + $0x78] sm:$0xff]
      %v6689 = vld [vmem:[%s6672 + $0x80] sm:$0xff]
      %v6690 = vld [vmem:[%s6672 + $0x88] sm:$0xff]
      %v6691 = vld [vmem:[%s6672 + $0x90] sm:$0xff]
      %v6692 = vld [vmem:[%s6672 + $0x98] sm:$0xff]
      %v6693 = vrot.slane %v5914, 2
      %v6714 = vunpack.c.l.b16 %v6673
      %v6715 = vunpack.c.h.b16 %v6673
      %v6716 = vunpack.c.l.b16 %v6674
      %v6717 = vunpack.c.h.b16 %v6674
      %v6718 = vunpack.c.l.b16 %v6675
      %v6719 = vunpack.c.h.b16 %v6675
      %v6720 = vunpack.c.l.b16 %v6676
      %v6721 = vunpack.c.h.b16 %v6676
      %v6722 = vunpack.c.l.b16 %v6677
      %v6723 = vunpack.c.h.b16 %v6677
      %v6724 = vunpack.c.l.b16 %v6678
      %v6725 = vunpack.c.h.b16 %v6678
      %v6726 = vunpack.c.l.b16 %v6679
      %v6727 = vunpack.c.h.b16 %v6679
      %v6728 = vunpack.c.l.b16 %v6680
      %v6729 = vunpack.c.h.b16 %v6680
      %v6730 = vunpack.c.l.b16 %v6681
      %v6731 = vunpack.c.h.b16 %v6681
      %v6732 = vunpack.c.l.b16 %v6682
      %v6733 = vunpack.c.h.b16 %v6682
      %v6734 = vunpack.c.l.b16 %v6683
      %v6735 = vunpack.c.h.b16 %v6683
      %v6736 = vunpack.c.l.b16 %v6684
      %v6737 = vunpack.c.h.b16 %v6684
      %v6738 = vunpack.c.l.b16 %v6685
      %v6739 = vunpack.c.h.b16 %v6685
      %v6740 = vunpack.c.l.b16 %v6686
      %v6741 = vunpack.c.h.b16 %v6686
      %v6742 = vunpack.c.l.b16 %v6687
      %v6743 = vunpack.c.h.b16 %v6687
      %v6744 = vunpack.c.l.b16 %v6688
      %v6745 = vunpack.c.h.b16 %v6688
      %v6746 = vunpack.c.l.b16 %v6689
      %v6747 = vunpack.c.h.b16 %v6689
      %v6748 = vunpack.c.l.b16 %v6690
      %v6749 = vunpack.c.h.b16 %v6690
      %v6750 = vunpack.c.l.b16 %v6691
      %v6751 = vunpack.c.h.b16 %v6691
      %v6752 = vunpack.c.l.b16 %v6692
      %v6753 = vunpack.c.h.b16 %v6692
      %v6754 = vpack.c.b16 %v6718, %v6714
      %v6755 = vpack.c.b16 %v6719, %v6715
      %v6756 = vpack.c.b16 %v6720, %v6716
      %v6757 = vpack.c.b16 %v6721, %v6717
      %v6758 = vpack.c.b16 %v6726, %v6722
      %v6759 = vpack.c.b16 %v6727, %v6723
      %v6760 = vpack.c.b16 %v6728, %v6724
      %v6761 = vpack.c.b16 %v6729, %v6725
      %v6762 = vpack.c.b16 %v6734, %v6730
      %v6763 = vpack.c.b16 %v6735, %v6731
      %v6764 = vpack.c.b16 %v6736, %v6732
      %v6765 = vpack.c.b16 %v6737, %v6733
      %v6766 = vpack.c.b16 %v6742, %v6738
      %v6767 = vpack.c.b16 %v6743, %v6739
      %v6768 = vpack.c.b16 %v6744, %v6740
      %v6769 = vpack.c.b16 %v6745, %v6741
      %v6770 = vpack.c.b16 %v6750, %v6746
      %v6771 = vpack.c.b16 %v6751, %v6747
      %v6772 = vpack.c.b16 %v6752, %v6748
      %v6773 = vpack.c.b16 %v6753, %v6749
      %v6795 = vsel %vm4519, %v6693, 0
      %6797 = vmatpush.bf16.msra.mxu0 0
      %6798 = vmatpush.bf16.msra.mxu0 0
      %6799 = vmatpush.bf16.msra.mxu0 0
      %6800 = vmatpush.bf16.msra.mxu0 %v6770
      %6801 = vmatpush.bf16.msra.mxu0 %v6766
      %6802 = vmatpush.bf16.msra.mxu0 %v6762
      %6803 = vmatpush.bf16.msra.mxu0 %v6758
      %6804 = vmatpush.bf16.msra.mxu0 %v6754
      %6805 = vmatmul.bf16.gmra.mxu0 %v6795
      %v6806 = vpop.f32.mrf.mxu0
      %v6807 = vadd.f32 0.0, %v6806
      %v6808 = vpop.f32.mrf.mxu0
      %6809 = vdwg.mxu0
      %6810 = vmatpush.bf16.msra.mxu0 0
      %6811 = vmatpush.bf16.msra.mxu0 0
      %6812 = vmatpush.bf16.msra.mxu0 0
      %6813 = vmatpush.bf16.msra.mxu0 %v6771
      %6814 = vmatpush.bf16.msra.mxu0 %v6767
      %6815 = vmatpush.bf16.msra.mxu0 %v6763
      %6816 = vmatpush.bf16.msra.mxu0 %v6759
      %6817 = vmatpush.bf16.msra.mxu0 %v6755
      %6818 = vmatmul.bf16.gmra.mxu0 %v6795
      %v6819 = vpop.f32.mrf.mxu0
      %v6820 = vadd.f32 0.0, %v6819
      %v6821 = vpop.f32.mrf.mxu0
      %6822 = vdwg.mxu0
      %6823 = vmatpush.bf16.msra.mxu0 0
      %6824 = vmatpush.bf16.msra.mxu0 0
      %6825 = vmatpush.bf16.msra.mxu0 0
      %6826 = vmatpush.bf16.msra.mxu0 %v6772
      %6827 = vmatpush.bf16.msra.mxu0 %v6768
      %6828 = vmatpush.bf16.msra.mxu0 %v6764
      %6829 = vmatpush.bf16.msra.mxu0 %v6760
      %6830 = vmatpush.bf16.msra.mxu0 %v6756
      %6831 = vmatmul.bf16.gmra.mxu0 %v6795
      %v6832 = vpop.f32.mrf.mxu0
      %v6833 = vadd.f32 0.0, %v6832
      %v6834 = vpop.f32.mrf.mxu0
      %6835 = vdwg.mxu0
      %6836 = vmatpush.bf16.msra.mxu0 0
      %6837 = vmatpush.bf16.msra.mxu0 0
      %6838 = vmatpush.bf16.msra.mxu0 0
      %6839 = vmatpush.bf16.msra.mxu0 %v6773
      %6840 = vmatpush.bf16.msra.mxu0 %v6769
      %6841 = vmatpush.bf16.msra.mxu0 %v6765
      %6842 = vmatpush.bf16.msra.mxu0 %v6761
      %6843 = vmatpush.bf16.msra.mxu0 %v6757
      %6844 = vmatmul.bf16.gmra.mxu0 %v6795
      %v6845 = vpop.f32.mrf.mxu0
      %v6846 = vadd.f32 0.0, %v6845
      %v6847 = vpop.f32.mrf.mxu0
      %6848 = vdwg.mxu0
      %v6853 = vrot.slane %v6820, 7
      %v6854 = vrot.slane %v6833, 6
      %v6855 = vrot.slane %v6846, 5
      %v6856 = vsel %vm4582, %v6807, %v6853
      %v6857 = vsel %vm4584, %v6854, %v6855
      %v6858 = vsel %vm2524, %v6856, %v6857
      %v6860 = vadd.f32 %v6671, %v6858
      %s6861 = scalar_lea.vmem %s13, 2080
      %v6862 = vld [vmem:[%s6861] sm:$0xff]
      %v6863 = vld [vmem:[%s6861 + $0x8] sm:$0xff]
      %v6864 = vld [vmem:[%s6861 + $0x10] sm:$0xff]
      %v6865 = vld [vmem:[%s6861 + $0x18] sm:$0xff]
      %v6866 = vld [vmem:[%s6861 + $0x20] sm:$0xff]
      %v6867 = vld [vmem:[%s6861 + $0x28] sm:$0xff]
      %v6868 = vld [vmem:[%s6861 + $0x30] sm:$0xff]
      %v6869 = vld [vmem:[%s6861 + $0x38] sm:$0xff]
      %v6870 = vld [vmem:[%s6861 + $0x40] sm:$0xff]
      %v6871 = vld [vmem:[%s6861 + $0x48] sm:$0xff]
      %v6872 = vld [vmem:[%s6861 + $0x50] sm:$0xff]
      %v6873 = vld [vmem:[%s6861 + $0x58] sm:$0xff]
      %v6874 = vld [vmem:[%s6861 + $0x60] sm:$0xff]
      %v6875 = vld [vmem:[%s6861 + $0x68] sm:$0xff]
      %v6876 = vld [vmem:[%s6861 + $0x70] sm:$0xff]
      %v6877 = vld [vmem:[%s6861 + $0x78] sm:$0xff]
      %v6878 = vld [vmem:[%s6861 + $0x80] sm:$0xff]
      %v6879 = vld [vmem:[%s6861 + $0x88] sm:$0xff]
      %v6880 = vld [vmem:[%s6861 + $0x90] sm:$0xff]
      %v6881 = vld [vmem:[%s6861 + $0x98] sm:$0xff]
      %v6882 = vrot.slane %v6124, 2
      %v6903 = vunpack.c.l.b16 %v6862
      %v6904 = vunpack.c.h.b16 %v6862
      %v6905 = vunpack.c.l.b16 %v6863
      %v6906 = vunpack.c.h.b16 %v6863
      %v6907 = vunpack.c.l.b16 %v6864
      %v6908 = vunpack.c.h.b16 %v6864
      %v6909 = vunpack.c.l.b16 %v6865
      %v6910 = vunpack.c.h.b16 %v6865
      %v6911 = vunpack.c.l.b16 %v6866
      %v6912 = vunpack.c.h.b16 %v6866
      %v6913 = vunpack.c.l.b16 %v6867
      %v6914 = vunpack.c.h.b16 %v6867
      %v6915 = vunpack.c.l.b16 %v6868
      %v6916 = vunpack.c.h.b16 %v6868
      %v6917 = vunpack.c.l.b16 %v6869
      %v6918 = vunpack.c.h.b16 %v6869
      %v6919 = vunpack.c.l.b16 %v6870
      %v6920 = vunpack.c.h.b16 %v6870
      %v6921 = vunpack.c.l.b16 %v6871
      %v6922 = vunpack.c.h.b16 %v6871
      %v6923 = vunpack.c.l.b16 %v6872
      %v6924 = vunpack.c.h.b16 %v6872
      %v6925 = vunpack.c.l.b16 %v6873
      %v6926 = vunpack.c.h.b16 %v6873
      %v6927 = vunpack.c.l.b16 %v6874
      %v6928 = vunpack.c.h.b16 %v6874
      %v6929 = vunpack.c.l.b16 %v6875
      %v6930 = vunpack.c.h.b16 %v6875
      %v6931 = vunpack.c.l.b16 %v6876
      %v6932 = vunpack.c.h.b16 %v6876
      %v6933 = vunpack.c.l.b16 %v6877
      %v6934 = vunpack.c.h.b16 %v6877
      %v6935 = vunpack.c.l.b16 %v6878
      %v6936 = vunpack.c.h.b16 %v6878
      %v6937 = vunpack.c.l.b16 %v6879
      %v6938 = vunpack.c.h.b16 %v6879
      %v6939 = vunpack.c.l.b16 %v6880
      %v6940 = vunpack.c.h.b16 %v6880
      %v6941 = vunpack.c.l.b16 %v6881
      %v6942 = vunpack.c.h.b16 %v6881
      %v6943 = vpack.c.b16 %v6907, %v6903
      %v6944 = vpack.c.b16 %v6908, %v6904
      %v6945 = vpack.c.b16 %v6909, %v6905
      %v6946 = vpack.c.b16 %v6910, %v6906
      %v6947 = vpack.c.b16 %v6915, %v6911
      %v6948 = vpack.c.b16 %v6916, %v6912
      %v6949 = vpack.c.b16 %v6917, %v6913
      %v6950 = vpack.c.b16 %v6918, %v6914
      %v6951 = vpack.c.b16 %v6923, %v6919
      %v6952 = vpack.c.b16 %v6924, %v6920
      %v6953 = vpack.c.b16 %v6925, %v6921
      %v6954 = vpack.c.b16 %v6926, %v6922
      %v6955 = vpack.c.b16 %v6931, %v6927
      %v6956 = vpack.c.b16 %v6932, %v6928
      %v6957 = vpack.c.b16 %v6933, %v6929
      %v6958 = vpack.c.b16 %v6934, %v6930
      %v6959 = vpack.c.b16 %v6939, %v6935
      %v6960 = vpack.c.b16 %v6940, %v6936
      %v6961 = vpack.c.b16 %v6941, %v6937
      %v6962 = vpack.c.b16 %v6942, %v6938
      %v6984 = vsel %vm4519, %v6882, 0
      %6986 = vmatpush.bf16.msra.mxu0 0
      %6987 = vmatpush.bf16.msra.mxu0 0
      %6988 = vmatpush.bf16.msra.mxu0 0
      %6989 = vmatpush.bf16.msra.mxu0 %v6959
      %6990 = vmatpush.bf16.msra.mxu0 %v6955
      %6991 = vmatpush.bf16.msra.mxu0 %v6951
      %6992 = vmatpush.bf16.msra.mxu0 %v6947
      %6993 = vmatpush.bf16.msra.mxu0 %v6943
      %6994 = vmatmul.bf16.gmra.mxu0 %v6984
      %v6995 = vpop.f32.mrf.mxu0
      %v6996 = vadd.f32 0.0, %v6995
      %v6997 = vpop.f32.mrf.mxu0
      %6998 = vdwg.mxu0
      %6999 = vmatpush.bf16.msra.mxu0 0
      %7000 = vmatpush.bf16.msra.mxu0 0
      %7001 = vmatpush.bf16.msra.mxu0 0
      %7002 = vmatpush.bf16.msra.mxu0 %v6960
      %7003 = vmatpush.bf16.msra.mxu0 %v6956
      %7004 = vmatpush.bf16.msra.mxu0 %v6952
      %7005 = vmatpush.bf16.msra.mxu0 %v6948
      %7006 = vmatpush.bf16.msra.mxu0 %v6944
      %7007 = vmatmul.bf16.gmra.mxu0 %v6984
      %v7008 = vpop.f32.mrf.mxu0
      %v7009 = vadd.f32 0.0, %v7008
      %v7010 = vpop.f32.mrf.mxu0
      %7011 = vdwg.mxu0
      %7012 = vmatpush.bf16.msra.mxu0 0
      %7013 = vmatpush.bf16.msra.mxu0 0
      %7014 = vmatpush.bf16.msra.mxu0 0
      %7015 = vmatpush.bf16.msra.mxu0 %v6961
      %7016 = vmatpush.bf16.msra.mxu0 %v6957
      %7017 = vmatpush.bf16.msra.mxu0 %v6953
      %7018 = vmatpush.bf16.msra.mxu0 %v6949
      %7019 = vmatpush.bf16.msra.mxu0 %v6945
      %7020 = vmatmul.bf16.gmra.mxu0 %v6984
      %v7021 = vpop.f32.mrf.mxu0
      %v7022 = vadd.f32 0.0, %v7021
      %v7023 = vpop.f32.mrf.mxu0
      %7024 = vdwg.mxu0
      %7025 = vmatpush.bf16.msra.mxu0 0
      %7026 = vmatpush.bf16.msra.mxu0 0
      %7027 = vmatpush.bf16.msra.mxu0 0
      %7028 = vmatpush.bf16.msra.mxu0 %v6962
      %7029 = vmatpush.bf16.msra.mxu0 %v6958
      %7030 = vmatpush.bf16.msra.mxu0 %v6954
      %7031 = vmatpush.bf16.msra.mxu0 %v6950
      %7032 = vmatpush.bf16.msra.mxu0 %v6946
      %7033 = vmatmul.bf16.gmra.mxu0 %v6984
      %v7034 = vpop.f32.mrf.mxu0
      %v7035 = vadd.f32 0.0, %v7034
      %v7036 = vpop.f32.mrf.mxu0
      %7037 = vdwg.mxu0
      %v7042 = vrot.slane %v7009, 7
      %v7043 = vrot.slane %v7022, 6
      %v7044 = vrot.slane %v7035, 5
      %v7045 = vsel %vm4582, %v6996, %v7042
      %v7046 = vsel %vm4584, %v7043, %v7044
      %v7047 = vsel %vm2524, %v7045, %v7046
      %v7049 = vadd.f32 %v6860, %v7047
      %s7050 = scalar_lea.vmem %s13, 2240
      %v7051 = vld [vmem:[%s7050] sm:$0xff]
      %v7052 = vld [vmem:[%s7050 + $0x8] sm:$0xff]
      %v7053 = vld [vmem:[%s7050 + $0x10] sm:$0xff]
      %v7054 = vld [vmem:[%s7050 + $0x18] sm:$0xff]
      %v7055 = vld [vmem:[%s7050 + $0x20] sm:$0xff]
      %v7056 = vld [vmem:[%s7050 + $0x28] sm:$0xff]
      %v7057 = vld [vmem:[%s7050 + $0x30] sm:$0xff]
      %v7058 = vld [vmem:[%s7050 + $0x38] sm:$0xff]
      %v7059 = vld [vmem:[%s7050 + $0x40] sm:$0xff]
      %v7060 = vld [vmem:[%s7050 + $0x48] sm:$0xff]
      %v7061 = vld [vmem:[%s7050 + $0x50] sm:$0xff]
      %v7062 = vld [vmem:[%s7050 + $0x58] sm:$0xff]
      %v7063 = vld [vmem:[%s7050 + $0x60] sm:$0xff]
      %v7064 = vld [vmem:[%s7050 + $0x68] sm:$0xff]
      %v7065 = vld [vmem:[%s7050 + $0x70] sm:$0xff]
      %v7066 = vld [vmem:[%s7050 + $0x78] sm:$0xff]
      %v7067 = vld [vmem:[%s7050 + $0x80] sm:$0xff]
      %v7068 = vld [vmem:[%s7050 + $0x88] sm:$0xff]
      %v7069 = vld [vmem:[%s7050 + $0x90] sm:$0xff]
      %v7070 = vld [vmem:[%s7050 + $0x98] sm:$0xff]
      %v7071 = vrot.slane %v5914, 3
      %v7092 = vunpack.c.l.b16 %v7051
      %v7093 = vunpack.c.h.b16 %v7051
      %v7094 = vunpack.c.l.b16 %v7052
      %v7095 = vunpack.c.h.b16 %v7052
      %v7096 = vunpack.c.l.b16 %v7053
      %v7097 = vunpack.c.h.b16 %v7053
      %v7098 = vunpack.c.l.b16 %v7054
      %v7099 = vunpack.c.h.b16 %v7054
      %v7100 = vunpack.c.l.b16 %v7055
      %v7101 = vunpack.c.h.b16 %v7055
      %v7102 = vunpack.c.l.b16 %v7056
      %v7103 = vunpack.c.h.b16 %v7056
      %v7104 = vunpack.c.l.b16 %v7057
      %v7105 = vunpack.c.h.b16 %v7057
      %v7106 = vunpack.c.l.b16 %v7058
      %v7107 = vunpack.c.h.b16 %v7058
      %v7108 = vunpack.c.l.b16 %v7059
      %v7109 = vunpack.c.h.b16 %v7059
      %v7110 = vunpack.c.l.b16 %v7060
      %v7111 = vunpack.c.h.b16 %v7060
      %v7112 = vunpack.c.l.b16 %v7061
      %v7113 = vunpack.c.h.b16 %v7061
      %v7114 = vunpack.c.l.b16 %v7062
      %v7115 = vunpack.c.h.b16 %v7062
      %v7116 = vunpack.c.l.b16 %v7063
      %v7117 = vunpack.c.h.b16 %v7063
      %v7118 = vunpack.c.l.b16 %v7064
      %v7119 = vunpack.c.h.b16 %v7064
      %v7120 = vunpack.c.l.b16 %v7065
      %v7121 = vunpack.c.h.b16 %v7065
      %v7122 = vunpack.c.l.b16 %v7066
      %v7123 = vunpack.c.h.b16 %v7066
      %v7124 = vunpack.c.l.b16 %v7067
      %v7125 = vunpack.c.h.b16 %v7067
      %v7126 = vunpack.c.l.b16 %v7068
      %v7127 = vunpack.c.h.b16 %v7068
      %v7128 = vunpack.c.l.b16 %v7069
      %v7129 = vunpack.c.h.b16 %v7069
      %v7130 = vunpack.c.l.b16 %v7070
      %v7131 = vunpack.c.h.b16 %v7070
      %v7132 = vpack.c.b16 %v7096, %v7092
      %v7133 = vpack.c.b16 %v7097, %v7093
      %v7134 = vpack.c.b16 %v7098, %v7094
      %v7135 = vpack.c.b16 %v7099, %v7095
      %v7136 = vpack.c.b16 %v7104, %v7100
      %v7137 = vpack.c.b16 %v7105, %v7101
      %v7138 = vpack.c.b16 %v7106, %v7102
      %v7139 = vpack.c.b16 %v7107, %v7103
      %v7140 = vpack.c.b16 %v7112, %v7108
      %v7141 = vpack.c.b16 %v7113, %v7109
      %v7142 = vpack.c.b16 %v7114, %v7110
      %v7143 = vpack.c.b16 %v7115, %v7111
      %v7144 = vpack.c.b16 %v7120, %v7116
      %v7145 = vpack.c.b16 %v7121, %v7117
      %v7146 = vpack.c.b16 %v7122, %v7118
      %v7147 = vpack.c.b16 %v7123, %v7119
      %v7148 = vpack.c.b16 %v7128, %v7124
      %v7149 = vpack.c.b16 %v7129, %v7125
      %v7150 = vpack.c.b16 %v7130, %v7126
      %v7151 = vpack.c.b16 %v7131, %v7127
      %v7173 = vsel %vm4519, %v7071, 0
      %7175 = vmatpush.bf16.msra.mxu0 0
      %7176 = vmatpush.bf16.msra.mxu0 0
      %7177 = vmatpush.bf16.msra.mxu0 0
      %7178 = vmatpush.bf16.msra.mxu0 %v7148
      %7179 = vmatpush.bf16.msra.mxu0 %v7144
      %7180 = vmatpush.bf16.msra.mxu0 %v7140
      %7181 = vmatpush.bf16.msra.mxu0 %v7136
      %7182 = vmatpush.bf16.msra.mxu0 %v7132
      %7183 = vmatmul.bf16.gmra.mxu0 %v7173
      %v7184 = vpop.f32.mrf.mxu0
      %v7185 = vadd.f32 0.0, %v7184
      %v7186 = vpop.f32.mrf.mxu0
      %7187 = vdwg.mxu0
      %7188 = vmatpush.bf16.msra.mxu0 0
      %7189 = vmatpush.bf16.msra.mxu0 0
      %7190 = vmatpush.bf16.msra.mxu0 0
      %7191 = vmatpush.bf16.msra.mxu0 %v7149
      %7192 = vmatpush.bf16.msra.mxu0 %v7145
      %7193 = vmatpush.bf16.msra.mxu0 %v7141
      %7194 = vmatpush.bf16.msra.mxu0 %v7137
      %7195 = vmatpush.bf16.msra.mxu0 %v7133
      %7196 = vmatmul.bf16.gmra.mxu0 %v7173
      %v7197 = vpop.f32.mrf.mxu0
      %v7198 = vadd.f32 0.0, %v7197
      %v7199 = vpop.f32.mrf.mxu0
      %7200 = vdwg.mxu0
      %7201 = vmatpush.bf16.msra.mxu0 0
      %7202 = vmatpush.bf16.msra.mxu0 0
      %7203 = vmatpush.bf16.msra.mxu0 0
      %7204 = vmatpush.bf16.msra.mxu0 %v7150
      %7205 = vmatpush.bf16.msra.mxu0 %v7146
      %7206 = vmatpush.bf16.msra.mxu0 %v7142
      %7207 = vmatpush.bf16.msra.mxu0 %v7138
      %7208 = vmatpush.bf16.msra.mxu0 %v7134
      %7209 = vmatmul.bf16.gmra.mxu0 %v7173
      %v7210 = vpop.f32.mrf.mxu0
      %v7211 = vadd.f32 0.0, %v7210
      %v7212 = vpop.f32.mrf.mxu0
      %7213 = vdwg.mxu0
      %7214 = vmatpush.bf16.msra.mxu0 0
      %7215 = vmatpush.bf16.msra.mxu0 0
      %7216 = vmatpush.bf16.msra.mxu0 0
      %7217 = vmatpush.bf16.msra.mxu0 %v7151
      %7218 = vmatpush.bf16.msra.mxu0 %v7147
      %7219 = vmatpush.bf16.msra.mxu0 %v7143
      %7220 = vmatpush.bf16.msra.mxu0 %v7139
      %7221 = vmatpush.bf16.msra.mxu0 %v7135
      %7222 = vmatmul.bf16.gmra.mxu0 %v7173
      %v7223 = vpop.f32.mrf.mxu0
      %v7224 = vadd.f32 0.0, %v7223
      %v7225 = vpop.f32.mrf.mxu0
      %7226 = vdwg.mxu0
      %v7231 = vrot.slane %v7198, 7
      %v7232 = vrot.slane %v7211, 6
      %v7233 = vrot.slane %v7224, 5
      %v7234 = vsel %vm4582, %v7185, %v7231
      %v7235 = vsel %vm4584, %v7232, %v7233
      %v7236 = vsel %vm2524, %v7234, %v7235
      %v7238 = vadd.f32 %v7049, %v7236
      %s7239 = scalar_lea.vmem %s13, 2400
      %v7240 = vld [vmem:[%s7239] sm:$0xff]
      %v7241 = vld [vmem:[%s7239 + $0x8] sm:$0xff]
      %v7242 = vld [vmem:[%s7239 + $0x10] sm:$0xff]
      %v7243 = vld [vmem:[%s7239 + $0x18] sm:$0xff]
      %v7244 = vld [vmem:[%s7239 + $0x20] sm:$0xff]
      %v7245 = vld [vmem:[%s7239 + $0x28] sm:$0xff]
      %v7246 = vld [vmem:[%s7239 + $0x30] sm:$0xff]
      %v7247 = vld [vmem:[%s7239 + $0x38] sm:$0xff]
      %v7248 = vld [vmem:[%s7239 + $0x40] sm:$0xff]
      %v7249 = vld [vmem:[%s7239 + $0x48] sm:$0xff]
      %v7250 = vld [vmem:[%s7239 + $0x50] sm:$0xff]
      %v7251 = vld [vmem:[%s7239 + $0x58] sm:$0xff]
      %v7252 = vld [vmem:[%s7239 + $0x60] sm:$0xff]
      %v7253 = vld [vmem:[%s7239 + $0x68] sm:$0xff]
      %v7254 = vld [vmem:[%s7239 + $0x70] sm:$0xff]
      %v7255 = vld [vmem:[%s7239 + $0x78] sm:$0xff]
      %v7256 = vld [vmem:[%s7239 + $0x80] sm:$0xff]
      %v7257 = vld [vmem:[%s7239 + $0x88] sm:$0xff]
      %v7258 = vld [vmem:[%s7239 + $0x90] sm:$0xff]
      %v7259 = vld [vmem:[%s7239 + $0x98] sm:$0xff]
      %v7260 = vrot.slane %v6124, 3
      %v7281 = vunpack.c.l.b16 %v7240
      %v7282 = vunpack.c.h.b16 %v7240
      %v7283 = vunpack.c.l.b16 %v7241
      %v7284 = vunpack.c.h.b16 %v7241
      %v7285 = vunpack.c.l.b16 %v7242
      %v7286 = vunpack.c.h.b16 %v7242
      %v7287 = vunpack.c.l.b16 %v7243
      %v7288 = vunpack.c.h.b16 %v7243
      %v7289 = vunpack.c.l.b16 %v7244
      %v7290 = vunpack.c.h.b16 %v7244
      %v7291 = vunpack.c.l.b16 %v7245
      %v7292 = vunpack.c.h.b16 %v7245
      %v7293 = vunpack.c.l.b16 %v7246
      %v7294 = vunpack.c.h.b16 %v7246
      %v7295 = vunpack.c.l.b16 %v7247
      %v7296 = vunpack.c.h.b16 %v7247
      %v7297 = vunpack.c.l.b16 %v7248
      %v7298 = vunpack.c.h.b16 %v7248
      %v7299 = vunpack.c.l.b16 %v7249
      %v7300 = vunpack.c.h.b16 %v7249
      %v7301 = vunpack.c.l.b16 %v7250
      %v7302 = vunpack.c.h.b16 %v7250
      %v7303 = vunpack.c.l.b16 %v7251
      %v7304 = vunpack.c.h.b16 %v7251
      %v7305 = vunpack.c.l.b16 %v7252
      %v7306 = vunpack.c.h.b16 %v7252
      %v7307 = vunpack.c.l.b16 %v7253
      %v7308 = vunpack.c.h.b16 %v7253
      %v7309 = vunpack.c.l.b16 %v7254
      %v7310 = vunpack.c.h.b16 %v7254
      %v7311 = vunpack.c.l.b16 %v7255
      %v7312 = vunpack.c.h.b16 %v7255
      %v7313 = vunpack.c.l.b16 %v7256
      %v7314 = vunpack.c.h.b16 %v7256
      %v7315 = vunpack.c.l.b16 %v7257
      %v7316 = vunpack.c.h.b16 %v7257
      %v7317 = vunpack.c.l.b16 %v7258
      %v7318 = vunpack.c.h.b16 %v7258
      %v7319 = vunpack.c.l.b16 %v7259
      %v7320 = vunpack.c.h.b16 %v7259
      %v7321 = vpack.c.b16 %v7285, %v7281
      %v7322 = vpack.c.b16 %v7286, %v7282
      %v7323 = vpack.c.b16 %v7287, %v7283
      %v7324 = vpack.c.b16 %v7288, %v7284
      %v7325 = vpack.c.b16 %v7293, %v7289
      %v7326 = vpack.c.b16 %v7294, %v7290
      %v7327 = vpack.c.b16 %v7295, %v7291
      %v7328 = vpack.c.b16 %v7296, %v7292
      %v7329 = vpack.c.b16 %v7301, %v7297
      %v7330 = vpack.c.b16 %v7302, %v7298
      %v7331 = vpack.c.b16 %v7303, %v7299
      %v7332 = vpack.c.b16 %v7304, %v7300
      %v7333 = vpack.c.b16 %v7309, %v7305
      %v7334 = vpack.c.b16 %v7310, %v7306
      %v7335 = vpack.c.b16 %v7311, %v7307
      %v7336 = vpack.c.b16 %v7312, %v7308
      %v7337 = vpack.c.b16 %v7317, %v7313
      %v7338 = vpack.c.b16 %v7318, %v7314
      %v7339 = vpack.c.b16 %v7319, %v7315
      %v7340 = vpack.c.b16 %v7320, %v7316
      %v7362 = vsel %vm4519, %v7260, 0
      %7364 = vmatpush.bf16.msra.mxu0 0
      %7365 = vmatpush.bf16.msra.mxu0 0
      %7366 = vmatpush.bf16.msra.mxu0 0
      %7367 = vmatpush.bf16.msra.mxu0 %v7337
      %7368 = vmatpush.bf16.msra.mxu0 %v7333
      %7369 = vmatpush.bf16.msra.mxu0 %v7329
      %7370 = vmatpush.bf16.msra.mxu0 %v7325
      %7371 = vmatpush.bf16.msra.mxu0 %v7321
      %7372 = vmatmul.bf16.gmra.mxu0 %v7362
      %v7373 = vpop.f32.mrf.mxu0
      %v7374 = vadd.f32 0.0, %v7373
      %v7375 = vpop.f32.mrf.mxu0
      %7376 = vdwg.mxu0
      %7377 = vmatpush.bf16.msra.mxu0 0
      %7378 = vmatpush.bf16.msra.mxu0 0
      %7379 = vmatpush.bf16.msra.mxu0 0
      %7380 = vmatpush.bf16.msra.mxu0 %v7338
      %7381 = vmatpush.bf16.msra.mxu0 %v7334
      %7382 = vmatpush.bf16.msra.mxu0 %v7330
      %7383 = vmatpush.bf16.msra.mxu0 %v7326
      %7384 = vmatpush.bf16.msra.mxu0 %v7322
      %7385 = vmatmul.bf16.gmra.mxu0 %v7362
      %v7386 = vpop.f32.mrf.mxu0
      %v7387 = vadd.f32 0.0, %v7386
      %v7388 = vpop.f32.mrf.mxu0
      %7389 = vdwg.mxu0
      %7390 = vmatpush.bf16.msra.mxu0 0
      %7391 = vmatpush.bf16.msra.mxu0 0
      %7392 = vmatpush.bf16.msra.mxu0 0
      %7393 = vmatpush.bf16.msra.mxu0 %v7339
      %7394 = vmatpush.bf16.msra.mxu0 %v7335
      %7395 = vmatpush.bf16.msra.mxu0 %v7331
      %7396 = vmatpush.bf16.msra.mxu0 %v7327
      %7397 = vmatpush.bf16.msra.mxu0 %v7323
      %7398 = vmatmul.bf16.gmra.mxu0 %v7362
      %v7399 = vpop.f32.mrf.mxu0
      %v7400 = vadd.f32 0.0, %v7399
      %v7401 = vpop.f32.mrf.mxu0
      %7402 = vdwg.mxu0
      %7403 = vmatpush.bf16.msra.mxu0 0
      %7404 = vmatpush.bf16.msra.mxu0 0
      %7405 = vmatpush.bf16.msra.mxu0 0
      %7406 = vmatpush.bf16.msra.mxu0 %v7340
      %7407 = vmatpush.bf16.msra.mxu0 %v7336
      %7408 = vmatpush.bf16.msra.mxu0 %v7332
      %7409 = vmatpush.bf16.msra.mxu0 %v7328
      %7410 = vmatpush.bf16.msra.mxu0 %v7324
      %7411 = vmatmul.bf16.gmra.mxu0 %v7362
      %v7412 = vpop.f32.mrf.mxu0
      %v7413 = vadd.f32 0.0, %v7412
      %v7414 = vpop.f32.mrf.mxu0
      %7415 = vdwg.mxu0
      %v7420 = vrot.slane %v7387, 7
      %v7421 = vrot.slane %v7400, 6
      %v7422 = vrot.slane %v7413, 5
      %v7423 = vsel %vm4582, %v7374, %v7420
      %v7424 = vsel %vm4584, %v7421, %v7422
      %v7425 = vsel %vm2524, %v7423, %v7424
      %v7427 = vadd.f32 %v7238, %v7425
      %v7428 = vpack.c.bf16 %v4396, %v4396
      %s7429 = scalar_lea.vmem %s13, 2560
      %v7430 = vld [vmem:[%s7429] sm:$0xff]
      %v7431 = vld [vmem:[%s7429 + $0x8] sm:$0xff]
      %v7432 = vld [vmem:[%s7429 + $0x10] sm:$0xff]
      %v7433 = vld [vmem:[%s7429 + $0x18] sm:$0xff]
      %v7434 = vld [vmem:[%s7429 + $0x20] sm:$0xff]
      %v7435 = vld [vmem:[%s7429 + $0x28] sm:$0xff]
      %v7436 = vld [vmem:[%s7429 + $0x30] sm:$0xff]
      %v7437 = vld [vmem:[%s7429 + $0x38] sm:$0xff]
      %v7438 = vld [vmem:[%s7429 + $0x40] sm:$0xff]
      %v7439 = vld [vmem:[%s7429 + $0x48] sm:$0xff]
      %v7440 = vld [vmem:[%s7429 + $0x50] sm:$0xff]
      %v7441 = vld [vmem:[%s7429 + $0x58] sm:$0xff]
      %v7442 = vld [vmem:[%s7429 + $0x60] sm:$0xff]
      %v7443 = vld [vmem:[%s7429 + $0x68] sm:$0xff]
      %v7444 = vld [vmem:[%s7429 + $0x70] sm:$0xff]
      %v7445 = vld [vmem:[%s7429 + $0x78] sm:$0xff]
      %v7446 = vld [vmem:[%s7429 + $0x80] sm:$0xff]
      %v7447 = vld [vmem:[%s7429 + $0x88] sm:$0xff]
      %v7448 = vld [vmem:[%s7429 + $0x90] sm:$0xff]
      %v7449 = vld [vmem:[%s7429 + $0x98] sm:$0xff]
      %v7470 = vunpack.c.l.b16 %v7430
      %v7471 = vunpack.c.h.b16 %v7430
      %v7472 = vunpack.c.l.b16 %v7431
      %v7473 = vunpack.c.h.b16 %v7431
      %v7474 = vunpack.c.l.b16 %v7432
      %v7475 = vunpack.c.h.b16 %v7432
      %v7476 = vunpack.c.l.b16 %v7433
      %v7477 = vunpack.c.h.b16 %v7433
      %v7478 = vunpack.c.l.b16 %v7434
      %v7479 = vunpack.c.h.b16 %v7434
      %v7480 = vunpack.c.l.b16 %v7435
      %v7481 = vunpack.c.h.b16 %v7435
      %v7482 = vunpack.c.l.b16 %v7436
      %v7483 = vunpack.c.h.b16 %v7436
      %v7484 = vunpack.c.l.b16 %v7437
      %v7485 = vunpack.c.h.b16 %v7437
      %v7486 = vunpack.c.l.b16 %v7438
      %v7487 = vunpack.c.h.b16 %v7438
      %v7488 = vunpack.c.l.b16 %v7439
      %v7489 = vunpack.c.h.b16 %v7439
      %v7490 = vunpack.c.l.b16 %v7440
      %v7491 = vunpack.c.h.b16 %v7440
      %v7492 = vunpack.c.l.b16 %v7441
      %v7493 = vunpack.c.h.b16 %v7441
      %v7494 = vunpack.c.l.b16 %v7442
      %v7495 = vunpack.c.h.b16 %v7442
      %v7496 = vunpack.c.l.b16 %v7443
      %v7497 = vunpack.c.h.b16 %v7443
      %v7498 = vunpack.c.l.b16 %v7444
      %v7499 = vunpack.c.h.b16 %v7444
      %v7500 = vunpack.c.l.b16 %v7445
      %v7501 = vunpack.c.h.b16 %v7445
      %v7502 = vunpack.c.l.b16 %v7446
      %v7503 = vunpack.c.h.b16 %v7446
      %v7504 = vunpack.c.l.b16 %v7447
      %v7505 = vunpack.c.h.b16 %v7447
      %v7506 = vunpack.c.l.b16 %v7448
      %v7507 = vunpack.c.h.b16 %v7448
      %v7508 = vunpack.c.l.b16 %v7449
      %v7509 = vunpack.c.h.b16 %v7449
      %v7510 = vpack.c.b16 %v7474, %v7470
      %v7511 = vpack.c.b16 %v7475, %v7471
      %v7512 = vpack.c.b16 %v7476, %v7472
      %v7513 = vpack.c.b16 %v7477, %v7473
      %v7514 = vpack.c.b16 %v7482, %v7478
      %v7515 = vpack.c.b16 %v7483, %v7479
      %v7516 = vpack.c.b16 %v7484, %v7480
      %v7517 = vpack.c.b16 %v7485, %v7481
      %v7518 = vpack.c.b16 %v7490, %v7486
      %v7519 = vpack.c.b16 %v7491, %v7487
      %v7520 = vpack.c.b16 %v7492, %v7488
      %v7521 = vpack.c.b16 %v7493, %v7489
      %v7522 = vpack.c.b16 %v7498, %v7494
      %v7523 = vpack.c.b16 %v7499, %v7495
      %v7524 = vpack.c.b16 %v7500, %v7496
      %v7525 = vpack.c.b16 %v7501, %v7497
      %v7526 = vpack.c.b16 %v7506, %v7502
      %v7527 = vpack.c.b16 %v7507, %v7503
      %v7528 = vpack.c.b16 %v7508, %v7504
      %v7529 = vpack.c.b16 %v7509, %v7505
      %v7551 = vsel %vm4519, %v7428, 0
      %7553 = vmatpush.bf16.msra.mxu0 0
      %7554 = vmatpush.bf16.msra.mxu0 0
      %7555 = vmatpush.bf16.msra.mxu0 0
      %7556 = vmatpush.bf16.msra.mxu0 %v7526
      %7557 = vmatpush.bf16.msra.mxu0 %v7522
      %7558 = vmatpush.bf16.msra.mxu0 %v7518
      %7559 = vmatpush.bf16.msra.mxu0 %v7514
      %7560 = vmatpush.bf16.msra.mxu0 %v7510
      %7561 = vmatmul.bf16.gmra.mxu0 %v7551
      %v7562 = vpop.f32.mrf.mxu0
      %v7563 = vadd.f32 0.0, %v7562
      %v7564 = vpop.f32.mrf.mxu0
      %7565 = vdwg.mxu0
      %7566 = vmatpush.bf16.msra.mxu0 0
      %7567 = vmatpush.bf16.msra.mxu0 0
      %7568 = vmatpush.bf16.msra.mxu0 0
      %7569 = vmatpush.bf16.msra.mxu0 %v7527
      %7570 = vmatpush.bf16.msra.mxu0 %v7523
      %7571 = vmatpush.bf16.msra.mxu0 %v7519
      %7572 = vmatpush.bf16.msra.mxu0 %v7515
      %7573 = vmatpush.bf16.msra.mxu0 %v7511
      %7574 = vmatmul.bf16.gmra.mxu0 %v7551
      %v7575 = vpop.f32.mrf.mxu0
      %v7576 = vadd.f32 0.0, %v7575
      %v7577 = vpop.f32.mrf.mxu0
      %7578 = vdwg.mxu0
      %7579 = vmatpush.bf16.msra.mxu0 0
      %7580 = vmatpush.bf16.msra.mxu0 0
      %7581 = vmatpush.bf16.msra.mxu0 0
      %7582 = vmatpush.bf16.msra.mxu0 %v7528
      %7583 = vmatpush.bf16.msra.mxu0 %v7524
      %7584 = vmatpush.bf16.msra.mxu0 %v7520
      %7585 = vmatpush.bf16.msra.mxu0 %v7516
      %7586 = vmatpush.bf16.msra.mxu0 %v7512
      %7587 = vmatmul.bf16.gmra.mxu0 %v7551
      %v7588 = vpop.f32.mrf.mxu0
      %v7589 = vadd.f32 0.0, %v7588
      %v7590 = vpop.f32.mrf.mxu0
      %7591 = vdwg.mxu0
      %7592 = vmatpush.bf16.msra.mxu0 0
      %7593 = vmatpush.bf16.msra.mxu0 0
      %7594 = vmatpush.bf16.msra.mxu0 0
      %7595 = vmatpush.bf16.msra.mxu0 %v7529
      %7596 = vmatpush.bf16.msra.mxu0 %v7525
      %7597 = vmatpush.bf16.msra.mxu0 %v7521
      %7598 = vmatpush.bf16.msra.mxu0 %v7517
      %7599 = vmatpush.bf16.msra.mxu0 %v7513
      %7600 = vmatmul.bf16.gmra.mxu0 %v7551
      %v7601 = vpop.f32.mrf.mxu0
      %v7602 = vadd.f32 0.0, %v7601
      %v7603 = vpop.f32.mrf.mxu0
      %7604 = vdwg.mxu0
      %v7609 = vrot.slane %v7576, 7
      %v7610 = vrot.slane %v7589, 6
      %v7611 = vrot.slane %v7602, 5
      %v7612 = vsel %vm4582, %v7563, %v7609
      %v7613 = vsel %vm4584, %v7610, %v7611
      %v7614 = vsel %vm2524, %v7612, %v7613
      %v7616 = vadd.f32 %v7427, %v7614
      %s7617 = scalar_lea.vmem %s13, 2720
      %v7618 = vld [vmem:[%s7617] sm:$0xff]
      %v7619 = vld [vmem:[%s7617 + $0x8] sm:$0xff]
      %v7620 = vld [vmem:[%s7617 + $0x10] sm:$0xff]
      %v7621 = vld [vmem:[%s7617 + $0x18] sm:$0xff]
      %v7622 = vld [vmem:[%s7617 + $0x20] sm:$0xff]
      %v7623 = vld [vmem:[%s7617 + $0x28] sm:$0xff]
      %v7624 = vld [vmem:[%s7617 + $0x30] sm:$0xff]
      %v7625 = vld [vmem:[%s7617 + $0x38] sm:$0xff]
      %v7626 = vld [vmem:[%s7617 + $0x40] sm:$0xff]
      %v7627 = vld [vmem:[%s7617 + $0x48] sm:$0xff]
      %v7628 = vld [vmem:[%s7617 + $0x50] sm:$0xff]
      %v7629 = vld [vmem:[%s7617 + $0x58] sm:$0xff]
      %v7630 = vld [vmem:[%s7617 + $0x60] sm:$0xff]
      %v7631 = vld [vmem:[%s7617 + $0x68] sm:$0xff]
      %v7632 = vld [vmem:[%s7617 + $0x70] sm:$0xff]
      %v7633 = vld [vmem:[%s7617 + $0x78] sm:$0xff]
      %v7634 = vld [vmem:[%s7617 + $0x80] sm:$0xff]
      %v7635 = vld [vmem:[%s7617 + $0x88] sm:$0xff]
      %v7636 = vld [vmem:[%s7617 + $0x90] sm:$0xff]
      %v7637 = vld [vmem:[%s7617 + $0x98] sm:$0xff]
      %v7638 = vshrl.u32 %v7428, 16
      %v7660 = vunpack.c.l.b16 %v7618
      %v7661 = vunpack.c.h.b16 %v7618
      %v7662 = vunpack.c.l.b16 %v7619
      %v7663 = vunpack.c.h.b16 %v7619
      %v7664 = vunpack.c.l.b16 %v7620
      %v7665 = vunpack.c.h.b16 %v7620
      %v7666 = vunpack.c.l.b16 %v7621
      %v7667 = vunpack.c.h.b16 %v7621
      %v7668 = vunpack.c.l.b16 %v7622
      %v7669 = vunpack.c.h.b16 %v7622
      %v7670 = vunpack.c.l.b16 %v7623
      %v7671 = vunpack.c.h.b16 %v7623
      %v7672 = vunpack.c.l.b16 %v7624
      %v7673 = vunpack.c.h.b16 %v7624
      %v7674 = vunpack.c.l.b16 %v7625
      %v7675 = vunpack.c.h.b16 %v7625
      %v7676 = vunpack.c.l.b16 %v7626
      %v7677 = vunpack.c.h.b16 %v7626
      %v7678 = vunpack.c.l.b16 %v7627
      %v7679 = vunpack.c.h.b16 %v7627
      %v7680 = vunpack.c.l.b16 %v7628
      %v7681 = vunpack.c.h.b16 %v7628
      %v7682 = vunpack.c.l.b16 %v7629
      %v7683 = vunpack.c.h.b16 %v7629
      %v7684 = vunpack.c.l.b16 %v7630
      %v7685 = vunpack.c.h.b16 %v7630
      %v7686 = vunpack.c.l.b16 %v7631
      %v7687 = vunpack.c.h.b16 %v7631
      %v7688 = vunpack.c.l.b16 %v7632
      %v7689 = vunpack.c.h.b16 %v7632
      %v7690 = vunpack.c.l.b16 %v7633
      %v7691 = vunpack.c.h.b16 %v7633
      %v7692 = vunpack.c.l.b16 %v7634
      %v7693 = vunpack.c.h.b16 %v7634
      %v7694 = vunpack.c.l.b16 %v7635
      %v7695 = vunpack.c.h.b16 %v7635
      %v7696 = vunpack.c.l.b16 %v7636
      %v7697 = vunpack.c.h.b16 %v7636
      %v7698 = vunpack.c.l.b16 %v7637
      %v7699 = vunpack.c.h.b16 %v7637
      %v7700 = vpack.c.b16 %v7664, %v7660
      %v7701 = vpack.c.b16 %v7665, %v7661
      %v7702 = vpack.c.b16 %v7666, %v7662
      %v7703 = vpack.c.b16 %v7667, %v7663
      %v7704 = vpack.c.b16 %v7672, %v7668
      %v7705 = vpack.c.b16 %v7673, %v7669
      %v7706 = vpack.c.b16 %v7674, %v7670
      %v7707 = vpack.c.b16 %v7675, %v7671
      %v7708 = vpack.c.b16 %v7680, %v7676
      %v7709 = vpack.c.b16 %v7681, %v7677
      %v7710 = vpack.c.b16 %v7682, %v7678
      %v7711 = vpack.c.b16 %v7683, %v7679
      %v7712 = vpack.c.b16 %v7688, %v7684
      %v7713 = vpack.c.b16 %v7689, %v7685
      %v7714 = vpack.c.b16 %v7690, %v7686
      %v7715 = vpack.c.b16 %v7691, %v7687
      %v7716 = vpack.c.b16 %v7696, %v7692
      %v7717 = vpack.c.b16 %v7697, %v7693
      %v7718 = vpack.c.b16 %v7698, %v7694
      %v7719 = vpack.c.b16 %v7699, %v7695
      %v7741 = vsel %vm4519, %v7638, 0
      %7743 = vmatpush.bf16.msra.mxu0 0
      %7744 = vmatpush.bf16.msra.mxu0 0
      %7745 = vmatpush.bf16.msra.mxu0 0
      %7746 = vmatpush.bf16.msra.mxu0 %v7716
      %7747 = vmatpush.bf16.msra.mxu0 %v7712
      %7748 = vmatpush.bf16.msra.mxu0 %v7708
      %7749 = vmatpush.bf16.msra.mxu0 %v7704
      %7750 = vmatpush.bf16.msra.mxu0 %v7700
      %7751 = vmatmul.bf16.gmra.mxu0 %v7741
      %v7752 = vpop.f32.mrf.mxu0
      %v7753 = vadd.f32 0.0, %v7752
      %v7754 = vpop.f32.mrf.mxu0
      %7755 = vdwg.mxu0
      %7756 = vmatpush.bf16.msra.mxu0 0
      %7757 = vmatpush.bf16.msra.mxu0 0
      %7758 = vmatpush.bf16.msra.mxu0 0
      %7759 = vmatpush.bf16.msra.mxu0 %v7717
      %7760 = vmatpush.bf16.msra.mxu0 %v7713
      %7761 = vmatpush.bf16.msra.mxu0 %v7709
      %7762 = vmatpush.bf16.msra.mxu0 %v7705
      %7763 = vmatpush.bf16.msra.mxu0 %v7701
      %7764 = vmatmul.bf16.gmra.mxu0 %v7741
      %v7765 = vpop.f32.mrf.mxu0
      %v7766 = vadd.f32 0.0, %v7765
      %v7767 = vpop.f32.mrf.mxu0
      %7768 = vdwg.mxu0
      %7769 = vmatpush.bf16.msra.mxu0 0
      %7770 = vmatpush.bf16.msra.mxu0 0
      %7771 = vmatpush.bf16.msra.mxu0 0
      %7772 = vmatpush.bf16.msra.mxu0 %v7718
      %7773 = vmatpush.bf16.msra.mxu0 %v7714
      %7774 = vmatpush.bf16.msra.mxu0 %v7710
      %7775 = vmatpush.bf16.msra.mxu0 %v7706
      %7776 = vmatpush.bf16.msra.mxu0 %v7702
      %7777 = vmatmul.bf16.gmra.mxu0 %v7741
      %v7778 = vpop.f32.mrf.mxu0
      %v7779 = vadd.f32 0.0, %v7778
      %v7780 = vpop.f32.mrf.mxu0
      %7781 = vdwg.mxu0
      %7782 = vmatpush.bf16.msra.mxu0 0
      %7783 = vmatpush.bf16.msra.mxu0 0
      %7784 = vmatpush.bf16.msra.mxu0 0
      %7785 = vmatpush.bf16.msra.mxu0 %v7719
      %7786 = vmatpush.bf16.msra.mxu0 %v7715
      %7787 = vmatpush.bf16.msra.mxu0 %v7711
      %7788 = vmatpush.bf16.msra.mxu0 %v7707
      %7789 = vmatpush.bf16.msra.mxu0 %v7703
      %7790 = vmatmul.bf16.gmra.mxu0 %v7741
      %v7791 = vpop.f32.mrf.mxu0
      %v7792 = vadd.f32 0.0, %v7791
      %v7793 = vpop.f32.mrf.mxu0
      %7794 = vdwg.mxu0
      %v7799 = vrot.slane %v7766, 7
      %v7800 = vrot.slane %v7779, 6
      %v7801 = vrot.slane %v7792, 5
      %v7802 = vsel %vm4582, %v7753, %v7799
      %v7803 = vsel %vm4584, %v7800, %v7801
      %v7804 = vsel %vm2524, %v7802, %v7803
      %v7806 = vadd.f32 %v7616, %v7804
      %v7807 = vmax.f32 %v7806, 0.0
      %v7809 = vperm.slane %v7807, 0
      %v7810 = vperm.slane %v7807, 1
      %v7811 = vperm.slane %v7807, 2
      %v7812 = vperm.slane %v7807, 3
      %v7817 = vpack.c.bf16 %v7809, %v7809
      %v7818 = vpack.c.bf16 %v7810, %v7810
      %v7819 = vpack.c.bf16 %v7811, %v7811
      %v7820 = vpack.c.bf16 %v7812, %v7812
      %v7821 = vld [vmem:[%s15] sm:$0xff]
      %v7822 = vld [vmem:[%s15 + $0x8] sm:$0xff]
      %v7823 = vld [vmem:[%s15 + $0x10] sm:$0xff]
      %v7824 = vld [vmem:[%s15 + $0x18] sm:$0xff]
      %v7825 = vld [vmem:[%s15 + $0x20] sm:$0xff]
      %v7826 = vld [vmem:[%s15 + $0x28] sm:$0xff]
      %v7827 = vld [vmem:[%s15 + $0x30] sm:$0xff]
      %v7828 = vld [vmem:[%s15 + $0x38] sm:$0xff]
      %v7829 = vld [vmem:[%s15 + $0x40] sm:$0xff]
      %v7830 = vld [vmem:[%s15 + $0x48] sm:$0xff]
      %v7831 = vld [vmem:[%s15 + $0x50] sm:$0xff]
      %v7832 = vld [vmem:[%s15 + $0x58] sm:$0xff]
      %v7833 = vld [vmem:[%s15 + $0x60] sm:$0xff]
      %v7834 = vld [vmem:[%s15 + $0x68] sm:$0xff]
      %v7835 = vld [vmem:[%s15 + $0x70] sm:$0xff]
      %v7836 = vld [vmem:[%s15 + $0x78] sm:$0xff]
      %v7837 = vld [vmem:[%s15 + $0x80] sm:$0xff]
      %v7838 = vld [vmem:[%s15 + $0x88] sm:$0xff]
      %v7839 = vld [vmem:[%s15 + $0x90] sm:$0xff]
      %v7840 = vld [vmem:[%s15 + $0x98] sm:$0xff]
      %v7841 = vld [vmem:[%s15 + $0xa0] sm:$0xff]
      %v7842 = vld [vmem:[%s15 + $0xa8] sm:$0xff]
      %v7843 = vld [vmem:[%s15 + $0xb0] sm:$0xff]
      %v7844 = vld [vmem:[%s15 + $0xb8] sm:$0xff]
      %v7845 = vld [vmem:[%s15 + $0xc0] sm:$0xff]
      %v7846 = vld [vmem:[%s15 + $0xc8] sm:$0xff]
      %v7847 = vld [vmem:[%s15 + $0xd0] sm:$0xff]
      %v7848 = vld [vmem:[%s15 + $0xd8] sm:$0xff]
      %v7849 = vld [vmem:[%s15 + $0xe0] sm:$0xff]
      %v7850 = vld [vmem:[%s15 + $0xe8] sm:$0xff]
      %v7851 = vld [vmem:[%s15 + $0xf0] sm:$0xff]
      %v7852 = vld [vmem:[%s15 + $0xf8] sm:$0xff]
      %v7853 = vld [vmem:[%s15 + $0x100] sm:$0xff]
      %v7854 = vld [vmem:[%s15 + $0x108] sm:$0xff]
      %v7855 = vld [vmem:[%s15 + $0x110] sm:$0xff]
      %v7856 = vld [vmem:[%s15 + $0x118] sm:$0xff]
      %v7857 = vld [vmem:[%s15 + $0x120] sm:$0xff]
      %v7858 = vld [vmem:[%s15 + $0x128] sm:$0xff]
      %v7859 = vld [vmem:[%s15 + $0x130] sm:$0xff]
      %v7860 = vld [vmem:[%s15 + $0x138] sm:$0xff]
      %v7861 = vld [vmem:[%s15 + $0x140] sm:$0xff]
      %v7862 = vld [vmem:[%s15 + $0x148] sm:$0xff]
      %v7863 = vld [vmem:[%s15 + $0x150] sm:$0xff]
      %v7864 = vld [vmem:[%s15 + $0x158] sm:$0xff]
      %v7865 = vld [vmem:[%s15 + $0x160] sm:$0xff]
      %v7866 = vld [vmem:[%s15 + $0x168] sm:$0xff]
      %v7867 = vld [vmem:[%s15 + $0x170] sm:$0xff]
      %v7868 = vld [vmem:[%s15 + $0x178] sm:$0xff]
      %v7869 = vld [vmem:[%s15 + $0x180] sm:$0xff]
      %v7870 = vld [vmem:[%s15 + $0x188] sm:$0xff]
      %v7871 = vld [vmem:[%s15 + $0x190] sm:$0xff]
      %v7872 = vld [vmem:[%s15 + $0x198] sm:$0xff]
      %v7873 = vld [vmem:[%s15 + $0x1a0] sm:$0xff]
      %v7874 = vld [vmem:[%s15 + $0x1a8] sm:$0xff]
      %v7875 = vld [vmem:[%s15 + $0x1b0] sm:$0xff]
      %v7876 = vld [vmem:[%s15 + $0x1b8] sm:$0xff]
      %v7877 = vld [vmem:[%s15 + $0x1c0] sm:$0xff]
      %v7878 = vld [vmem:[%s15 + $0x1c8] sm:$0xff]
      %v7879 = vld [vmem:[%s15 + $0x1d0] sm:$0xff]
      %v7880 = vld [vmem:[%s15 + $0x1d8] sm:$0xff]
      %v7881 = vld [vmem:[%s15 + $0x1e0] sm:$0xff]
      %v7882 = vld [vmem:[%s15 + $0x1e8] sm:$0xff]
      %v7883 = vld [vmem:[%s15 + $0x1f0] sm:$0xff]
      %v7884 = vld [vmem:[%s15 + $0x1f8] sm:$0xff]
      %v7885 = vld [vmem:[%s16] sm:$0x3]
      %v7950 = vunpack.c.l.b16 %v7821
      %v7951 = vunpack.c.h.b16 %v7821
      %v7952 = vunpack.c.l.b16 %v7822
      %v7953 = vunpack.c.h.b16 %v7822
      %v7954 = vunpack.c.l.b16 %v7823
      %v7955 = vunpack.c.h.b16 %v7823
      %v7956 = vunpack.c.l.b16 %v7824
      %v7957 = vunpack.c.h.b16 %v7824
      %v7958 = vunpack.c.l.b16 %v7825
      %v7959 = vunpack.c.h.b16 %v7825
      %v7960 = vunpack.c.l.b16 %v7826
      %v7961 = vunpack.c.h.b16 %v7826
      %v7962 = vunpack.c.l.b16 %v7827
      %v7963 = vunpack.c.h.b16 %v7827
      %v7964 = vunpack.c.l.b16 %v7828
      %v7965 = vunpack.c.h.b16 %v7828
      %v7966 = vunpack.c.l.b16 %v7829
      %v7967 = vunpack.c.h.b16 %v7829
      %v7968 = vunpack.c.l.b16 %v7830
      %v7969 = vunpack.c.h.b16 %v7830
      %v7970 = vunpack.c.l.b16 %v7831
      %v7971 = vunpack.c.h.b16 %v7831
      %v7972 = vunpack.c.l.b16 %v7832
      %v7973 = vunpack.c.h.b16 %v7832
      %v7974 = vunpack.c.l.b16 %v7833
      %v7975 = vunpack.c.h.b16 %v7833
      %v7976 = vunpack.c.l.b16 %v7834
      %v7977 = vunpack.c.h.b16 %v7834
      %v7978 = vunpack.c.l.b16 %v7835
      %v7979 = vunpack.c.h.b16 %v7835
      %v7980 = vunpack.c.l.b16 %v7836
      %v7981 = vunpack.c.h.b16 %v7836
      %v7982 = vunpack.c.l.b16 %v7837
      %v7983 = vunpack.c.h.b16 %v7837
      %v7984 = vunpack.c.l.b16 %v7838
      %v7985 = vunpack.c.h.b16 %v7838
      %v7986 = vunpack.c.l.b16 %v7839
      %v7987 = vunpack.c.h.b16 %v7839
      %v7988 = vunpack.c.l.b16 %v7840
      %v7989 = vunpack.c.h.b16 %v7840
      %v7990 = vunpack.c.l.b16 %v7841
      %v7991 = vunpack.c.h.b16 %v7841
      %v7992 = vunpack.c.l.b16 %v7842
      %v7993 = vunpack.c.h.b16 %v7842
      %v7994 = vunpack.c.l.b16 %v7843
      %v7995 = vunpack.c.h.b16 %v7843
      %v7996 = vunpack.c.l.b16 %v7844
      %v7997 = vunpack.c.h.b16 %v7844
      %v7998 = vunpack.c.l.b16 %v7845
      %v7999 = vunpack.c.h.b16 %v7845
      %v8000 = vunpack.c.l.b16 %v7846
      %v8001 = vunpack.c.h.b16 %v7846
      %v8002 = vunpack.c.l.b16 %v7847
      %v8003 = vunpack.c.h.b16 %v7847
      %v8004 = vunpack.c.l.b16 %v7848
      %v8005 = vunpack.c.h.b16 %v7848
      %v8006 = vunpack.c.l.b16 %v7849
      %v8007 = vunpack.c.h.b16 %v7849
      %v8008 = vunpack.c.l.b16 %v7850
      %v8009 = vunpack.c.h.b16 %v7850
      %v8010 = vunpack.c.l.b16 %v7851
      %v8011 = vunpack.c.h.b16 %v7851
      %v8012 = vunpack.c.l.b16 %v7852
      %v8013 = vunpack.c.h.b16 %v7852
      %v8014 = vunpack.c.l.b16 %v7853
      %v8015 = vunpack.c.h.b16 %v7853
      %v8016 = vunpack.c.l.b16 %v7854
      %v8017 = vunpack.c.h.b16 %v7854
      %v8018 = vunpack.c.l.b16 %v7855
      %v8019 = vunpack.c.h.b16 %v7855
      %v8020 = vunpack.c.l.b16 %v7856
      %v8021 = vunpack.c.h.b16 %v7856
      %v8022 = vunpack.c.l.b16 %v7857
      %v8023 = vunpack.c.h.b16 %v7857
      %v8024 = vunpack.c.l.b16 %v7858
      %v8025 = vunpack.c.h.b16 %v7858
      %v8026 = vunpack.c.l.b16 %v7859
      %v8027 = vunpack.c.h.b16 %v7859
      %v8028 = vunpack.c.l.b16 %v7860
      %v8029 = vunpack.c.h.b16 %v7860
      %v8030 = vunpack.c.l.b16 %v7861
      %v8031 = vunpack.c.h.b16 %v7861
      %v8032 = vunpack.c.l.b16 %v7862
      %v8033 = vunpack.c.h.b16 %v7862
      %v8034 = vunpack.c.l.b16 %v7863
      %v8035 = vunpack.c.h.b16 %v7863
      %v8036 = vunpack.c.l.b16 %v7864
      %v8037 = vunpack.c.h.b16 %v7864
      %v8038 = vunpack.c.l.b16 %v7865
      %v8039 = vunpack.c.h.b16 %v7865
      %v8040 = vunpack.c.l.b16 %v7866
      %v8041 = vunpack.c.h.b16 %v7866
      %v8042 = vunpack.c.l.b16 %v7867
      %v8043 = vunpack.c.h.b16 %v7867
      %v8044 = vunpack.c.l.b16 %v7868
      %v8045 = vunpack.c.h.b16 %v7868
      %v8046 = vunpack.c.l.b16 %v7869
      %v8047 = vunpack.c.h.b16 %v7869
      %v8048 = vunpack.c.l.b16 %v7870
      %v8049 = vunpack.c.h.b16 %v7870
      %v8050 = vunpack.c.l.b16 %v7871
      %v8051 = vunpack.c.h.b16 %v7871
      %v8052 = vunpack.c.l.b16 %v7872
      %v8053 = vunpack.c.h.b16 %v7872
      %v8054 = vunpack.c.l.b16 %v7873
      %v8055 = vunpack.c.h.b16 %v7873
      %v8056 = vunpack.c.l.b16 %v7874
      %v8057 = vunpack.c.h.b16 %v7874
      %v8058 = vunpack.c.l.b16 %v7875
      %v8059 = vunpack.c.h.b16 %v7875
      %v8060 = vunpack.c.l.b16 %v7876
      %v8061 = vunpack.c.h.b16 %v7876
      %v8062 = vunpack.c.l.b16 %v7877
      %v8063 = vunpack.c.h.b16 %v7877
      %v8064 = vunpack.c.l.b16 %v7878
      %v8065 = vunpack.c.h.b16 %v7878
      %v8066 = vunpack.c.l.b16 %v7879
      %v8067 = vunpack.c.h.b16 %v7879
      %v8068 = vunpack.c.l.b16 %v7880
      %v8069 = vunpack.c.h.b16 %v7880
      %v8070 = vunpack.c.l.b16 %v7881
      %v8071 = vunpack.c.h.b16 %v7881
      %v8072 = vunpack.c.l.b16 %v7882
      %v8073 = vunpack.c.h.b16 %v7882
      %v8074 = vunpack.c.l.b16 %v7883
      %v8075 = vunpack.c.h.b16 %v7883
      %v8076 = vunpack.c.l.b16 %v7884
      %v8077 = vunpack.c.h.b16 %v7884
      %v8078 = vpack.c.b16 %v7952, %v7950
      %v8079 = vpack.c.b16 %v7953, %v7951
      %v8080 = vpack.c.b16 %v7956, %v7954
      %v8081 = vpack.c.b16 %v7957, %v7955
      %v8082 = vpack.c.b16 %v7960, %v7958
      %v8083 = vpack.c.b16 %v7961, %v7959
      %v8084 = vpack.c.b16 %v7964, %v7962
      %v8085 = vpack.c.b16 %v7965, %v7963
      %v8086 = vpack.c.b16 %v7968, %v7966
      %v8087 = vpack.c.b16 %v7969, %v7967
      %v8088 = vpack.c.b16 %v7972, %v7970
      %v8089 = vpack.c.b16 %v7973, %v7971
      %v8090 = vpack.c.b16 %v7976, %v7974
      %v8091 = vpack.c.b16 %v7977, %v7975
      %v8092 = vpack.c.b16 %v7980, %v7978
      %v8093 = vpack.c.b16 %v7981, %v7979
      %v8094 = vpack.c.b16 %v7984, %v7982
      %v8095 = vpack.c.b16 %v7985, %v7983
      %v8096 = vpack.c.b16 %v7988, %v7986
      %v8097 = vpack.c.b16 %v7989, %v7987
      %v8098 = vpack.c.b16 %v7992, %v7990
      %v8099 = vpack.c.b16 %v7993, %v7991
      %v8100 = vpack.c.b16 %v7996, %v7994
      %v8101 = vpack.c.b16 %v7997, %v7995
      %v8102 = vpack.c.b16 %v8000, %v7998
      %v8103 = vpack.c.b16 %v8001, %v7999
      %v8104 = vpack.c.b16 %v8004, %v8002
      %v8105 = vpack.c.b16 %v8005, %v8003
      %v8106 = vpack.c.b16 %v8008, %v8006
      %v8107 = vpack.c.b16 %v8009, %v8007
      %v8108 = vpack.c.b16 %v8012, %v8010
      %v8109 = vpack.c.b16 %v8013, %v8011
      %v8110 = vpack.c.b16 %v8016, %v8014
      %v8111 = vpack.c.b16 %v8017, %v8015
      %v8112 = vpack.c.b16 %v8020, %v8018
      %v8113 = vpack.c.b16 %v8021, %v8019
      %v8114 = vpack.c.b16 %v8024, %v8022
      %v8115 = vpack.c.b16 %v8025, %v8023
      %v8116 = vpack.c.b16 %v8028, %v8026
      %v8117 = vpack.c.b16 %v8029, %v8027
      %v8118 = vpack.c.b16 %v8032, %v8030
      %v8119 = vpack.c.b16 %v8033, %v8031
      %v8120 = vpack.c.b16 %v8036, %v8034
      %v8121 = vpack.c.b16 %v8037, %v8035
      %v8122 = vpack.c.b16 %v8040, %v8038
      %v8123 = vpack.c.b16 %v8041, %v8039
      %v8124 = vpack.c.b16 %v8044, %v8042
      %v8125 = vpack.c.b16 %v8045, %v8043
      %v8126 = vpack.c.b16 %v8048, %v8046
      %v8127 = vpack.c.b16 %v8049, %v8047
      %v8128 = vpack.c.b16 %v8052, %v8050
      %v8129 = vpack.c.b16 %v8053, %v8051
      %v8130 = vpack.c.b16 %v8056, %v8054
      %v8131 = vpack.c.b16 %v8057, %v8055
      %v8132 = vpack.c.b16 %v8060, %v8058
      %v8133 = vpack.c.b16 %v8061, %v8059
      %v8134 = vpack.c.b16 %v8064, %v8062
      %v8135 = vpack.c.b16 %v8065, %v8063
      %v8136 = vpack.c.b16 %v8068, %v8066
      %v8137 = vpack.c.b16 %v8069, %v8067
      %v8138 = vpack.c.b16 %v8072, %v8070
      %v8139 = vpack.c.b16 %v8073, %v8071
      %v8140 = vpack.c.b16 %v8076, %v8074
      %v8141 = vpack.c.b16 %v8077, %v8075
      %v8207 = vperm.slane %v7885, 0
      %v8208 = vperm.slane %v7885, 1
      %8211 = vmatpush.bf16.msra.mxu0 %v8092
      %8212 = vmatpush.bf16.msra.mxu0 %v8090
      %8213 = vmatpush.bf16.msra.mxu0 %v8088
      %8214 = vmatpush.bf16.msra.mxu0 %v8086
      %8215 = vmatpush.bf16.msra.mxu0 %v8084
      %8216 = vmatpush.bf16.msra.mxu0 %v8082
      %8217 = vmatpush.bf16.msra.mxu0 %v8080
      %8218 = vmatpush.bf16.msra.mxu0 %v8078
      %8219 = vmatmul.bf16.gmra.mxu0 %v7817
      %v8220 = vpop.f32.mrf.mxu0
      %v8221 = vadd.f32 %v8207, %v8220
      %v8222 = vpop.f32.mrf.mxu0
      %8223 = vdwg.mxu0
      %8224 = vmatpush.bf16.msra.mxu0 %v8108
      %8225 = vmatpush.bf16.msra.mxu0 %v8106
      %8226 = vmatpush.bf16.msra.mxu0 %v8104
      %8227 = vmatpush.bf16.msra.mxu0 %v8102
      %8228 = vmatpush.bf16.msra.mxu0 %v8100
      %8229 = vmatpush.bf16.msra.mxu0 %v8098
      %8230 = vmatpush.bf16.msra.mxu0 %v8096
      %8231 = vmatpush.bf16.msra.mxu0 %v8094
      %8232 = vmatmul.bf16.gmra.mxu0 %v7818
      %v8233 = vpop.f32.mrf.mxu0
      %v8234 = vadd.f32 %v8221, %v8233
      %v8235 = vpop.f32.mrf.mxu0
      %8236 = vdwg.mxu0
      %8237 = vmatpush.bf16.msra.mxu0 %v8124
      %8238 = vmatpush.bf16.msra.mxu0 %v8122
      %8239 = vmatpush.bf16.msra.mxu0 %v8120
      %8240 = vmatpush.bf16.msra.mxu0 %v8118
      %8241 = vmatpush.bf16.msra.mxu0 %v8116
      %8242 = vmatpush.bf16.msra.mxu0 %v8114
      %8243 = vmatpush.bf16.msra.mxu0 %v8112
      %8244 = vmatpush.bf16.msra.mxu0 %v8110
      %8245 = vmatmul.bf16.gmra.mxu0 %v7819
      %v8246 = vpop.f32.mrf.mxu0
      %v8247 = vadd.f32 %v8234, %v8246
      %v8248 = vpop.f32.mrf.mxu0
      %8249 = vdwg.mxu0
      %8250 = vmatpush.bf16.msra.mxu0 %v8140
      %8251 = vmatpush.bf16.msra.mxu0 %v8138
      %8252 = vmatpush.bf16.msra.mxu0 %v8136
      %8253 = vmatpush.bf16.msra.mxu0 %v8134
      %8254 = vmatpush.bf16.msra.mxu0 %v8132
      %8255 = vmatpush.bf16.msra.mxu0 %v8130
      %8256 = vmatpush.bf16.msra.mxu0 %v8128
      %8257 = vmatpush.bf16.msra.mxu0 %v8126
      %8258 = vmatmul.bf16.gmra.mxu0 %v7820
      %v8259 = vpop.f32.mrf.mxu0
      %v8260 = vadd.f32 %v8247, %v8259
      %v8261 = vpop.f32.mrf.mxu0
      %8262 = vdwg.mxu0
      %8263 = vmatpush.bf16.msra.mxu0 %v8093
      %8264 = vmatpush.bf16.msra.mxu0 %v8091
      %8265 = vmatpush.bf16.msra.mxu0 %v8089
      %8266 = vmatpush.bf16.msra.mxu0 %v8087
      %8267 = vmatpush.bf16.msra.mxu0 %v8085
      %8268 = vmatpush.bf16.msra.mxu0 %v8083
      %8269 = vmatpush.bf16.msra.mxu0 %v8081
      %8270 = vmatpush.bf16.msra.mxu0 %v8079
      %8271 = vmatmul.bf16.gmra.mxu0 %v7817
      %v8272 = vpop.f32.mrf.mxu0
      %v8273 = vadd.f32 %v8208, %v8272
      %v8274 = vpop.f32.mrf.mxu0
      %8275 = vdwg.mxu0
      %8276 = vmatpush.bf16.msra.mxu0 %v8109
      %8277 = vmatpush.bf16.msra.mxu0 %v8107
      %8278 = vmatpush.bf16.msra.mxu0 %v8105
      %8279 = vmatpush.bf16.msra.mxu0 %v8103
      %8280 = vmatpush.bf16.msra.mxu0 %v8101
      %8281 = vmatpush.bf16.msra.mxu0 %v8099
      %8282 = vmatpush.bf16.msra.mxu0 %v8097
      %8283 = vmatpush.bf16.msra.mxu0 %v8095
      %8284 = vmatmul.bf16.gmra.mxu0 %v7818
      %v8285 = vpop.f32.mrf.mxu0
      %v8286 = vadd.f32 %v8273, %v8285
      %v8287 = vpop.f32.mrf.mxu0
      %8288 = vdwg.mxu0
      %8289 = vmatpush.bf16.msra.mxu0 %v8125
      %8290 = vmatpush.bf16.msra.mxu0 %v8123
      %8291 = vmatpush.bf16.msra.mxu0 %v8121
      %8292 = vmatpush.bf16.msra.mxu0 %v8119
      %8293 = vmatpush.bf16.msra.mxu0 %v8117
      %8294 = vmatpush.bf16.msra.mxu0 %v8115
      %8295 = vmatpush.bf16.msra.mxu0 %v8113
      %8296 = vmatpush.bf16.msra.mxu0 %v8111
      %8297 = vmatmul.bf16.gmra.mxu0 %v7819
      %v8298 = vpop.f32.mrf.mxu0
      %v8299 = vadd.f32 %v8286, %v8298
      %v8300 = vpop.f32.mrf.mxu0
      %8301 = vdwg.mxu0
      %8302 = vmatpush.bf16.msra.mxu0 %v8141
      %8303 = vmatpush.bf16.msra.mxu0 %v8139
      %8304 = vmatpush.bf16.msra.mxu0 %v8137
      %8305 = vmatpush.bf16.msra.mxu0 %v8135
      %8306 = vmatpush.bf16.msra.mxu0 %v8133
      %8307 = vmatpush.bf16.msra.mxu0 %v8131
      %8308 = vmatpush.bf16.msra.mxu0 %v8129
      %8309 = vmatpush.bf16.msra.mxu0 %v8127
      %8310 = vmatmul.bf16.gmra.mxu0 %v7820
      %v8311 = vpop.f32.mrf.mxu0
      %v8312 = vadd.f32 %v8299, %v8311
      %v8313 = vpop.f32.mrf.mxu0
      %8314 = vdwg.mxu0
      %v8317 = vrot.slane %v8312, 7
      %v8318 = vsel %vm4582, %v8260, %v8317
      %v8320 = vlaneseq
      %vm8321 = vcmp.ge.s32.totalorder %v8320, 0
      %vm8322 = vcmp.lt.s32.totalorder %v8320, 256
      %vm8323 = vmand %vm8321, %vm8322
      %8324 = vst.msk [vmem:[%s546] sm:$0x3] %vm8323, %v8318
      %p8325 = scmp.lt.s32.totalorder %s28, 1
      %s8326 = scalar_select %p8325, %s28, 1
      %s8327 = smul.addr %s8326, 2
      %s8328 = scalar_lea.vmem %s17, %s8327
      // Predicated region
      $region89: #{_cnn_forward_impl.1} parent=87 // pred_check
        %p8329 = pneg %p408
      $region90: #{_cnn_forward_impl.1} parent=87 // pred_check_branch
        %8331 = sbr.rel (%p8329) target = $region92
      $region91: #{_cnn_forward_impl.1} parent=87 // pred_region
        _
      $region92: #{_cnn_forward_impl.1} parent=87 // pred_fallthru
        _
    $region88: #{_cnn_forward_impl.1} parent=5 // pred_fallthru
      _
    %p8332 = scmp.le.s32.totalorder 2, %s23
    // Predicated region
    $region93: #{_cnn_forward_impl.1} parent=5 // pred_check
      %p8333 = pneg %p8332
    $region94: #{_cnn_forward_impl.1} parent=5 // pred_check_branch
      %8335 = sbr.rel (%p8333) target = $region96
    $region95: #{_cnn_forward_impl.1} parent=5 // pred_region
      %s8336 = ssub.s32 %s23, 2
      // Predicated region
      $region97: #{_cnn_forward_impl.1} parent=95 // pred_check
        %p8337 = pneg %p414
      $region98: #{_cnn_forward_impl.1} parent=95 // pred_check_branch
        %8339 = sbr.rel (%p8337) target = $region100
      $region99: #{_cnn_forward_impl.1} parent=95 // pred_region
        %p8340 = scmp.lt.s32.totalorder %s29, 1
        %s8341 = scalar_select %p8340, %s29, 1
        %s8342 = smul.addr %s8341, 2
        %s8343 = scalar_lea.vmem %s17, %s8342
      $region100: #{_cnn_forward_impl.1} parent=95 // pred_fallthru
        _
    $region96: #{_cnn_forward_impl.1} parent=5 // pred_fallthru
      _
  $region6: #{_cnn_forward_impl.1} parent=0 // loop_footer
    %s27 = sadd.s32 1, %s23
  $region7: #{_cnn_forward_impl.1} parent=0 // loop_footer_branch
    %22 = sbr.rel target = $region3
  $region8: #{_cnn_forward_impl.1} parent=0 // loop_exit
    _

</llo_original>
